<compile_context>
chip_gen: v7x
topology: tpu7x:2x2x1
jax: 0.10.0
libtpu: 0.0.40
codegen_flags: <defaults>
</compile_context>

<pallas_src>
import functools

import jax
import jax.numpy as jnp
from jax import lax
from jax.experimental import pallas as pl
from jax.experimental.pallas import tpu as pltpu

# Hard-coded by the rearrange(c=3, h=16, s=16) in Attention_D.forward:
ATTN_HEADS = 16
HEAD_DIM = 16
DIM = ATTN_HEADS * HEAD_DIM          # 256
# __init__ default; only used for the softmax scale (dim // num_heads) ** -0.5.
CFG_NUM_HEADS = 8


def _choose_batch_block(batch, n_tok, target_lanes=256):
    """How many images to fold into one grid step.

    Preference: (1) lane width Bb*N a multiple of 128 (unmasked stores, full MXU columns),
    (2) >= 2 grid steps so both v7x TensorCores get work, (3) lane width near target_lanes
    (fills the MXU without blowing up VMEM / wasted cross-image score work).
    """
    best_bb, best_key = 1, None
    for bb in range(1, batch + 1):
        if batch % bb:
            continue
        lanes = bb * n_tok
        key = (lanes % 128 == 0, (batch // bb) >= 2, -abs(lanes - target_lanes))
        if best_key is None or key > best_key:
            best_bb, best_key = bb, key
    return best_bb


def _attention_kernel(*refs, scale, heads_per_chunk, use_bias):
    """One batch-fold (Bb images) per grid step, channel-major throughout.

    refs = (x_ref, wqkv_ref, wproj_ref, bproj_ref, [bias_ref], o_ref)
      x_ref    : (1, C, L)  L = Bb*N tokens on lanes, channels on sublanes
      wqkv_ref : (3C, C)    torch (out, in) layout
      wproj_ref: (C, C)
      bproj_ref: (C, 1)     f32
      bias_ref : (L, L)     0 / -1e30 block-diagonal mask (only when Bb > 1)
      o_ref    : (1, C, L)
    """
    if use_bias:
        x_ref, wqkv_ref, wproj_ref, bproj_ref, bias_ref, o_ref = refs
    else:
        x_ref, wqkv_ref, wproj_ref, bproj_ref, o_ref = refs
        bias_ref = None

    x = x_ref[0]                          # (C, L)
    wqkv = wqkv_ref[...]                  # (3C, C)
    wproj = wproj_ref[...]                # (C, C)
    bproj = bproj_ref[...]                # (C, 1) f32
    C, L = x.shape
    cdt = x.dtype                         # MXU input dtype (bf16 by default)
    hd = HEAD_DIM
    hc = heads_per_chunk

    # QKV projection, channel-major: (3C, C) @ (C, L) -> (3C, L), f32 accumulation.
    qkv = jnp.dot(wqkv, x, preferred_element_type=jnp.float32)

    bias = bias_ref[...] if use_bias else None   # hoisted out of the chunk loop

    ctx_chunks = []
    for h0 in range(0, ATTN_HEADS, hc):          # static loop; chunks are independent so the
        r, nr = h0 * hd, hc * hd                 # scheduler interleaves MXU with VPU/EUP softmax
        # Head split: free row slice + sublane reshape (rows ordered 3-major, head, dim).
        q_c = (qkv[0 * C + r:0 * C + r + nr] * scale).astype(cdt).reshape(hc, hd, L)
        k_c = qkv[1 * C + r:1 * C + r + nr].astype(cdt).reshape(hc, hd, L)
        v_c = qkv[2 * C + r:2 * C + r + nr].astype(cdt).reshape(hc, hd, L)

        # Scores without transposing q: contract head_dim (sublane dim) on both operands.
        s = lax.dot_general(q_c, k_c, (((1,), (1,)), ((0,), (0,))),
                            preferred_element_type=jnp.float32)        # (hc, L, L)
        if bias is not None:
            s = s + bias                                               # kill cross-image scores

        # Numerically stable softmax over keys (lanes); reciprocal on the EUP.
        s = s - jnp.max(s, axis=-1, keepdims=True)
        p = jnp.exp(s)
        p = p * pl.reciprocal(jnp.sum(p, axis=-1, keepdims=True), approx=True)
        # TODO(synk): attn_drop omitted (module default p=0.0 -> identity).

        # Context, channel-major: ctx[h, d, i] = sum_j v[h, d, j] * p[h, i, j].
        ctx = lax.dot_general(v_c, p.astype(cdt), (((2,), (2,)), ((0,), (0,))),
                              preferred_element_type=jnp.float32)      # (hc, hd, L)
        ctx_chunks.append(ctx.reshape(nr, L).astype(cdt))

    ctx_all = jnp.concatenate(ctx_chunks, axis=0)                      # (C, L), head-major rows

    # Output projection + bias: (C, C) @ (C, L) + (C, 1) -> (C, L).
    out = jnp.dot(wproj, ctx_all, preferred_element_type=jnp.float32) + bproj
    # TODO(synk): proj_drop omitted (module default p=0.0 -> identity).
    o_ref[0] = out.astype(o_ref.dtype)


def attention_d_forward(x, params, *, compute_dtype=jnp.bfloat16,
                        heads_per_chunk=4, batch_block=None):
    """Attention_D.forward. x: (B, C, H, W), C must equal 256."""
    B, C, H, W = x.shape
    assert C == DIM, f"Attention_D hard-codes 16 heads x 16 dims; C must be {DIM}"
    assert ATTN_HEADS % heads_per_chunk == 0
    N = H * W
    scale = float(C // CFG_NUM_HEADS) ** -0.5

    bb = batch_block if batch_block is not None else _choose_batch_block(B, N)
    assert B % bb == 0
    G, L = B // bb, bb * N

    # Layout plumbing (wrapper-side, one-time): lane-dense slab (G, C, Bb*N).
    xs = x.astype(compute_dtype) if compute_dtype is not None else x
    xs = xs.reshape(G, bb, C, N)
    xs = jnp.transpose(xs, (0, 2, 1, 3)).reshape(G, C, L)

    w_qkv, w_proj = params["w_qkv"], params["w_proj"]                  # torch (out, in) layout
    b_proj = params["b_proj"].reshape(C, 1).astype(jnp.float32)
    if compute_dtype is not None:
        w_qkv = w_qkv.astype(compute_dtype)
        w_proj = w_proj.astype(compute_dtype)

    inputs = [xs, w_qkv, w_proj, b_proj]
    in_specs = [
        pl.BlockSpec((1, C, L), lambda g: (g, 0, 0)),
        pl.BlockSpec((3 * C, C), lambda g: (0, 0)),   # constant -> stays VMEM-resident
        pl.BlockSpec((C, C), lambda g: (0, 0)),
        pl.BlockSpec((C, 1), lambda g: (0, 0)),
    ]
    use_bias = bb > 1
    if use_bias:
        img = jnp.arange(L, dtype=jnp.int32) // N
        attn_bias = jnp.where(img[:, None] == img[None, :], 0.0, -1e30).astype(jnp.float32)
        inputs.append(attn_bias)
        in_specs.append(pl.BlockSpec((L, L), lambda g: (0, 0)))

    itm_c = jnp.dtype(xs.dtype).itemsize
    itm_o = jnp.dtype(x.dtype).itemsize
    cost = pl.CostEstimate(
        flops=2 * C * B * N * (4 * C + 2 * L),
        transcendentals=ATTN_HEADS * L * B * N,
        bytes_accessed=(B * C * N * (itm_c + itm_o) + 4 * C * C * itm_c + 4 * C
                        + (L * L * 4 if use_bias else 0)),
    )

    kernel = functools.partial(_attention_kernel, scale=scale,
                               heads_per_chunk=heads_per_chunk, use_bias=use_bias)
    out3 = pl.pallas_call(
        kernel,
        out_shape=jax.ShapeDtypeStruct((G, C, L), x.dtype),
        grid=(G,),
        in_specs=in_specs,
        out_specs=pl.BlockSpec((1, C, L), lambda g: (g, 0, 0)),
        compiler_params=pltpu.CompilerParams(dimension_semantics=("parallel",)),
        cost_estimate=cost,
    )(*inputs)
    # TODO(synk): very large feature maps (f32 scores ~ 4*H*L^2 bytes nearing VMEM) would need
    # a key-tiled / online-softmax path; not required at these sizes.

    out = out3.reshape(G, C, bb, N)
    out = jnp.transpose(out, (0, 2, 1, 3)).reshape(B, C, H, W)
    return out


# ----------------------------------------------------------------------------
# Pure-JAX reference (mirrors the PyTorch forward) for verification.
# ----------------------------------------------------------------------------
def _attention_d_ref(x, params):
    B, C, H, W = x.shape
    N = H * W
    scale = (C // CFG_NUM_HEADS) ** -0.5
    xt = x.reshape(B, C, N).transpose(0, 2, 1)                        # (B, N, C)
    qkv = xt @ params["w_qkv"].T                                      # (B, N, 3C)
    qkv = qkv.reshape(B, N, 3, ATTN_HEADS, HEAD_DIM).transpose(2, 0, 3, 1, 4)
    q, k, v = qkv[0], qkv[1], qkv[2]                                  # (B, 16, N, 16)
    attn = jnp.einsum("bhnd,bhmd->bhnm", q, k) * scale
    attn = jax.nn.softmax(attn, axis=-1)
    ctx = jnp.einsum("bhnm,bhmd->bhnd", attn, v)
    ctx = ctx.transpose(0, 2, 1, 3).reshape(B, N, C)
    y = ctx @ params["w_proj"].T + params["b_proj"]
    return y.transpose(0, 2, 1).reshape(B, C, H, W)


def init_params(key, dim):
    """Synthetic weights, shapes/layout exactly as the nn.Module (torch (out, in))."""
    k1, k2, k3 = jax.random.split(key, 3)
    w_qkv = 0.02 * jax.random.normal(k1, (3 * dim, dim), jnp.float32)   # Linear(dim, 3*dim, bias=False)
    w_proj = 0.02 * jax.random.normal(k2, (dim, dim), jnp.float32)      # Linear(dim, dim).weight
    b_proj = 0.01 * jax.random.normal(k3, (dim,), jnp.float32)          # Linear(dim, dim).bias
    return {"w_qkv": w_qkv, "w_proj": w_proj, "b_proj": b_proj}


if __name__ == "__main__":
    key = jax.random.PRNGKey(0)
    kx, kp = jax.random.split(key)

    B, C, H, W = 2, DIM, 8, 8      # C = 256 is forced by the rearrange(h=16, s=16)
    x = jax.random.normal(kx, (B, C, H, W), jnp.float32)
    params = init_params(kp, C)
    ref = _attention_d_ref(x, params)

    # Default path: bf16 MXU inputs, f32 accumulation, batch-folded lane-dense layout
    # (B=2, N=64 -> Bb=2, L=128, grid=(1,)).
    fwd = jax.jit(attention_d_forward)
    out = jax.block_until_ready(fwd(x, params))
    assert out.shape == (B, C, H, W)
    err = float(jnp.max(jnp.abs(out - ref)))
    assert jnp.allclose(out, ref, atol=3e-2, rtol=3e-2), err

    # Full-f32 MXU path — tighter tolerance.
    fwd_f32 = jax.jit(functools.partial(attention_d_forward, compute_dtype=jnp.float32))
    out_f32 = jax.block_until_ready(fwd_f32(x, params))
    err_f32 = float(jnp.max(jnp.abs(out_f32 - ref)))
    assert jnp.allclose(out_f32, ref, atol=2e-3, rtol=2e-3), err_f32

    # Second shape exercising a multi-step parallel grid (B=4 -> Bb=2, L=128, grid=(2,)).
    x4 = jax.random.normal(kx, (4, DIM, 8, 8), jnp.float32)
    ref4 = _attention_d_ref(x4, params)
    out4 = jax.block_until_ready(jax.jit(attention_d_forward)(x4, params))
    err4 = float(jnp.max(jnp.abs(out4 - ref4)))
    assert jnp.allclose(out4, ref4, atol=3e-2, rtol=3e-2), err4

    print("KERNEL_OK")
</pallas_src>

<mosaic_0001>
module attributes {stable_mosaic.version = 11 : i64} {
  func.func @_attention_kernel(%arg0: i32, %arg1: memref<1x256x128xbf16, #tpu.memory_space<vmem>>, %arg2: memref<768x256xbf16, #tpu.memory_space<vmem>>, %arg3: memref<256x256xbf16, #tpu.memory_space<vmem>>, %arg4: memref<256x1xf32, #tpu.memory_space<vmem>>, %arg5: memref<128x128xf32, #tpu.memory_space<vmem>>, %arg6: memref<1x256x128xf32, #tpu.memory_space<vmem>>) attributes {dimension_semantics = [#tpu.dimension_semantics<parallel>], iteration_bounds = array<i64: 1>, scalar_prefetch = 0 : i64, scratch_operands = 0 : i64, tpu.core_type = #tpu.core_type<tc>, window_params = [{transform_indices = @transform_0, window_bounds = array<i64: 1, 256, 128>}, {pipeline_mode = #tpu.pipeline_mode<synchronous>, transform_indices = @transform_1, window_bounds = array<i64: 768, 256>}, {pipeline_mode = #tpu.pipeline_mode<synchronous>, transform_indices = @transform_2, window_bounds = array<i64: 256, 256>}, {pipeline_mode = #tpu.pipeline_mode<synchronous>, transform_indices = @transform_3, window_bounds = array<i64: 256, 1>}, {pipeline_mode = #tpu.pipeline_mode<synchronous>, transform_indices = @transform_4, window_bounds = array<i64: 128, 128>}, {transform_indices = @transform_5, window_bounds = array<i64: 1, 256, 128>}]} {
    %c0 = arith.constant 0 : index
    %c0_0 = arith.constant 0 : index
    %c0_1 = arith.constant 0 : index
    %0 = vector.load %arg1[%c0, %c0_0, %c0_1] : memref<1x256x128xbf16, #tpu.memory_space<vmem>>, vector<1x256x128xbf16>
    %1 = vector.shape_cast %0 : vector<1x256x128xbf16> to vector<256x128xbf16>
    %c0_2 = arith.constant 0 : index
    %c0_3 = arith.constant 0 : index
    %2 = vector.load %arg2[%c0_2, %c0_3] : memref<768x256xbf16, #tpu.memory_space<vmem>>, vector<768x256xbf16>
    %c0_4 = arith.constant 0 : index
    %c0_5 = arith.constant 0 : index
    %3 = vector.load %arg3[%c0_4, %c0_5] : memref<256x256xbf16, #tpu.memory_space<vmem>>, vector<256x256xbf16>
    %c0_6 = arith.constant 0 : index
    %c0_7 = arith.constant 0 : index
    %4 = vector.load %arg4[%c0_6, %c0_7] : memref<256x1xf32, #tpu.memory_space<vmem>>, vector<256x1xf32>
    %cst = arith.constant dense<0.000000e+00> : vector<768x128xf32>
    %5 = tpu.matmul %2, %1, %cst {dimension_numbers = #tpu.dot_dimension_numbers<[1], [0], [0], [1], [0, 0, 1, 1], [], []>} : vector<768x256xbf16>, vector<256x128xbf16>, vector<768x128xf32> -> vector<768x128xf32>
    %c0_8 = arith.constant 0 : index
    %c0_9 = arith.constant 0 : index
    %6 = vector.load %arg5[%c0_8, %c0_9] : memref<128x128xf32, #tpu.memory_space<vmem>>, vector<128x128xf32>
    %7 = vector.extract_strided_slice %5 {offsets = [0, 0], sizes = [64, 128], strides = [1, 1]} : vector<768x128xf32> to vector<64x128xf32>
    %cst_10 = arith.constant 0.176776692 : f32
    %8 = vector.broadcast %cst_10 : f32 to vector<64x128xf32>
    %9 = arith.mulf %7, %8 : vector<64x128xf32>
    %10 = arith.truncf %9 : vector<64x128xf32> to vector<64x128xbf16>
    %11 = vector.shape_cast %10 : vector<64x128xbf16> to vector<4x16x128xbf16>
    %12 = vector.extract_strided_slice %5 {offsets = [256, 0], sizes = [64, 128], strides = [1, 1]} : vector<768x128xf32> to vector<64x128xf32>
    %13 = arith.truncf %12 : vector<64x128xf32> to vector<64x128xbf16>
    %14 = vector.shape_cast %13 : vector<64x128xbf16> to vector<4x16x128xbf16>
    %15 = vector.extract_strided_slice %5 {offsets = [512, 0], sizes = [64, 128], strides = [1, 1]} : vector<768x128xf32> to vector<64x128xf32>
    %16 = arith.truncf %15 : vector<64x128xf32> to vector<64x128xbf16>
    %17 = vector.shape_cast %16 : vector<64x128xbf16> to vector<4x16x128xbf16>
    %cst_11 = arith.constant dense<0.000000e+00> : vector<4x128x128xf32>
    %18 = tpu.matmul %11, %14, %cst_11 {dimension_numbers = #tpu.dot_dimension_numbers<[1], [1], [2], [2], [0, 0, 0, 2, 1, 2], [0], [0]>} : vector<4x16x128xbf16>, vector<4x16x128xbf16>, vector<4x128x128xf32> -> vector<4x128x128xf32>
    %19 = vector.shape_cast %6 : vector<128x128xf32> to vector<1x128x128xf32>
    %20 = vector.broadcast %19 : vector<1x128x128xf32> to vector<4x128x128xf32>
    %21 = arith.addf %18, %20 : vector<4x128x128xf32>
    %cst_12 = arith.constant dense<0xFF800000> : vector<4x128xf32>
    %22 = vector.multi_reduction <maximumf>, %21, %cst_12 [2] : vector<4x128x128xf32> to vector<4x128xf32>
    %23 = vector.shape_cast %22 : vector<4x128xf32> to vector<4x128x1xf32>
    %24 = vector.broadcast %23 : vector<4x128x1xf32> to vector<4x128x128xf32>
    %25 = arith.subf %21, %24 : vector<4x128x128xf32>
    %26 = math.exp %25 : vector<4x128x128xf32>
    %cst_13 = arith.constant dense<0.000000e+00> : vector<4x128xf32>
    %27 = vector.multi_reduction <add>, %26, %cst_13 [2] : vector<4x128x128xf32> to vector<4x128xf32>
    %28 = vector.shape_cast %27 : vector<4x128xf32> to vector<4x128x1xf32>
    %29 = tpu.reciprocal %28 {approx = true} : vector<4x128x1xf32> -> vector<4x128x1xf32>
    %30 = vector.broadcast %29 : vector<4x128x1xf32> to vector<4x128x128xf32>
    %31 = arith.mulf %26, %30 : vector<4x128x128xf32>
    %32 = arith.truncf %31 : vector<4x128x128xf32> to vector<4x128x128xbf16>
    %cst_14 = arith.constant dense<0.000000e+00> : vector<4x16x128xf32>
    %33 = tpu.matmul %17, %32, %cst_14 {dimension_numbers = #tpu.dot_dimension_numbers<[2], [2], [1], [1], [0, 0, 0, 1, 1, 1], [0], [0]>} : vector<4x16x128xbf16>, vector<4x128x128xbf16>, vector<4x16x128xf32> -> vector<4x16x128xf32>
    %34 = vector.shape_cast %33 : vector<4x16x128xf32> to vector<64x128xf32>
    %35 = arith.truncf %34 : vector<64x128xf32> to vector<64x128xbf16>
    %36 = vector.extract_strided_slice %5 {offsets = [64, 0], sizes = [64, 128], strides = [1, 1]} : vector<768x128xf32> to vector<64x128xf32>
    %cst_15 = arith.constant 0.176776692 : f32
    %37 = vector.broadcast %cst_15 : f32 to vector<64x128xf32>
    %38 = arith.mulf %36, %37 : vector<64x128xf32>
    %39 = arith.truncf %38 : vector<64x128xf32> to vector<64x128xbf16>
    %40 = vector.shape_cast %39 : vector<64x128xbf16> to vector<4x16x128xbf16>
    %41 = vector.extract_strided_slice %5 {offsets = [320, 0], sizes = [64, 128], strides = [1, 1]} : vector<768x128xf32> to vector<64x128xf32>
    %42 = arith.truncf %41 : vector<64x128xf32> to vector<64x128xbf16>
    %43 = vector.shape_cast %42 : vector<64x128xbf16> to vector<4x16x128xbf16>
    %44 = vector.extract_strided_slice %5 {offsets = [576, 0], sizes = [64, 128], strides = [1, 1]} : vector<768x128xf32> to vector<64x128xf32>
    %45 = arith.truncf %44 : vector<64x128xf32> to vector<64x128xbf16>
    %46 = vector.shape_cast %45 : vector<64x128xbf16> to vector<4x16x128xbf16>
    %cst_16 = arith.constant dense<0.000000e+00> : vector<4x128x128xf32>
    %47 = tpu.matmul %40, %43, %cst_16 {dimension_numbers = #tpu.dot_dimension_numbers<[1], [1], [2], [2], [0, 0, 0, 2, 1, 2], [0], [0]>} : vector<4x16x128xbf16>, vector<4x16x128xbf16>, vector<4x128x128xf32> -> vector<4x128x128xf32>
    %48 = vector.shape_cast %6 : vector<128x128xf32> to vector<1x128x128xf32>
    %49 = vector.broadcast %48 : vector<1x128x128xf32> to vector<4x128x128xf32>
    %50 = arith.addf %47, %49 : vector<4x128x128xf32>
    %cst_17 = arith.constant dense<0xFF800000> : vector<4x128xf32>
    %51 = vector.multi_reduction <maximumf>, %50, %cst_17 [2] : vector<4x128x128xf32> to vector<4x128xf32>
    %52 = vector.shape_cast %51 : vector<4x128xf32> to vector<4x128x1xf32>
    %53 = vector.broadcast %52 : vector<4x128x1xf32> to vector<4x128x128xf32>
    %54 = arith.subf %50, %53 : vector<4x128x128xf32>
    %55 = math.exp %54 : vector<4x128x128xf32>
    %cst_18 = arith.constant dense<0.000000e+00> : vector<4x128xf32>
    %56 = vector.multi_reduction <add>, %55, %cst_18 [2] : vector<4x128x128xf32> to vector<4x128xf32>
    %57 = vector.shape_cast %56 : vector<4x128xf32> to vector<4x128x1xf32>
    %58 = tpu.reciprocal %57 {approx = true} : vector<4x128x1xf32> -> vector<4x128x1xf32>
    %59 = vector.broadcast %58 : vector<4x128x1xf32> to vector<4x128x128xf32>
    %60 = arith.mulf %55, %59 : vector<4x128x128xf32>
    %61 = arith.truncf %60 : vector<4x128x128xf32> to vector<4x128x128xbf16>
    %cst_19 = arith.constant dense<0.000000e+00> : vector<4x16x128xf32>
    %62 = tpu.matmul %46, %61, %cst_19 {dimension_numbers = #tpu.dot_dimension_numbers<[2], [2], [1], [1], [0, 0, 0, 1, 1, 1], [0], [0]>} : vector<4x16x128xbf16>, vector<4x128x128xbf16>, vector<4x16x128xf32> -> vector<4x16x128xf32>
    %63 = vector.shape_cast %62 : vector<4x16x128xf32> to vector<64x128xf32>
    %64 = arith.truncf %63 : vector<64x128xf32> to vector<64x128xbf16>
    %65 = vector.extract_strided_slice %5 {offsets = [128, 0], sizes = [64, 128], strides = [1, 1]} : vector<768x128xf32> to vector<64x128xf32>
    %cst_20 = arith.constant 0.176776692 : f32
    %66 = vector.broadcast %cst_20 : f32 to vector<64x128xf32>
    %67 = arith.mulf %65, %66 : vector<64x128xf32>
    %68 = arith.truncf %67 : vector<64x128xf32> to vector<64x128xbf16>
    %69 = vector.shape_cast %68 : vector<64x128xbf16> to vector<4x16x128xbf16>
    %70 = vector.extract_strided_slice %5 {offsets = [384, 0], sizes = [64, 128], strides = [1, 1]} : vector<768x128xf32> to vector<64x128xf32>
    %71 = arith.truncf %70 : vector<64x128xf32> to vector<64x128xbf16>
    %72 = vector.shape_cast %71 : vector<64x128xbf16> to vector<4x16x128xbf16>
    %73 = vector.extract_strided_slice %5 {offsets = [640, 0], sizes = [64, 128], strides = [1, 1]} : vector<768x128xf32> to vector<64x128xf32>
    %74 = arith.truncf %73 : vector<64x128xf32> to vector<64x128xbf16>
    %75 = vector.shape_cast %74 : vector<64x128xbf16> to vector<4x16x128xbf16>
    %cst_21 = arith.constant dense<0.000000e+00> : vector<4x128x128xf32>
    %76 = tpu.matmul %69, %72, %cst_21 {dimension_numbers = #tpu.dot_dimension_numbers<[1], [1], [2], [2], [0, 0, 0, 2, 1, 2], [0], [0]>} : vector<4x16x128xbf16>, vector<4x16x128xbf16>, vector<4x128x128xf32> -> vector<4x128x128xf32>
    %77 = vector.shape_cast %6 : vector<128x128xf32> to vector<1x128x128xf32>
    %78 = vector.broadcast %77 : vector<1x128x128xf32> to vector<4x128x128xf32>
    %79 = arith.addf %76, %78 : vector<4x128x128xf32>
    %cst_22 = arith.constant dense<0xFF800000> : vector<4x128xf32>
    %80 = vector.multi_reduction <maximumf>, %79, %cst_22 [2] : vector<4x128x128xf32> to vector<4x128xf32>
    %81 = vector.shape_cast %80 : vector<4x128xf32> to vector<4x128x1xf32>
    %82 = vector.broadcast %81 : vector<4x128x1xf32> to vector<4x128x128xf32>
    %83 = arith.subf %79, %82 : vector<4x128x128xf32>
    %84 = math.exp %83 : vector<4x128x128xf32>
    %cst_23 = arith.constant dense<0.000000e+00> : vector<4x128xf32>
    %85 = vector.multi_reduction <add>, %84, %cst_23 [2] : vector<4x128x128xf32> to vector<4x128xf32>
    %86 = vector.shape_cast %85 : vector<4x128xf32> to vector<4x128x1xf32>
    %87 = tpu.reciprocal %86 {approx = true} : vector<4x128x1xf32> -> vector<4x128x1xf32>
    %88 = vector.broadcast %87 : vector<4x128x1xf32> to vector<4x128x128xf32>
    %89 = arith.mulf %84, %88 : vector<4x128x128xf32>
    %90 = arith.truncf %89 : vector<4x128x128xf32> to vector<4x128x128xbf16>
    %cst_24 = arith.constant dense<0.000000e+00> : vector<4x16x128xf32>
    %91 = tpu.matmul %75, %90, %cst_24 {dimension_numbers = #tpu.dot_dimension_numbers<[2], [2], [1], [1], [0, 0, 0, 1, 1, 1], [0], [0]>} : vector<4x16x128xbf16>, vector<4x128x128xbf16>, vector<4x16x128xf32> -> vector<4x16x128xf32>
    %92 = vector.shape_cast %91 : vector<4x16x128xf32> to vector<64x128xf32>
    %93 = arith.truncf %92 : vector<64x128xf32> to vector<64x128xbf16>
    %94 = vector.extract_strided_slice %5 {offsets = [192, 0], sizes = [64, 128], strides = [1, 1]} : vector<768x128xf32> to vector<64x128xf32>
    %cst_25 = arith.constant 0.176776692 : f32
    %95 = vector.broadcast %cst_25 : f32 to vector<64x128xf32>
    %96 = arith.mulf %94, %95 : vector<64x128xf32>
    %97 = arith.truncf %96 : vector<64x128xf32> to vector<64x128xbf16>
    %98 = vector.shape_cast %97 : vector<64x128xbf16> to vector<4x16x128xbf16>
    %99 = vector.extract_strided_slice %5 {offsets = [448, 0], sizes = [64, 128], strides = [1, 1]} : vector<768x128xf32> to vector<64x128xf32>
    %100 = arith.truncf %99 : vector<64x128xf32> to vector<64x128xbf16>
    %101 = vector.shape_cast %100 : vector<64x128xbf16> to vector<4x16x128xbf16>
    %102 = vector.extract_strided_slice %5 {offsets = [704, 0], sizes = [64, 128], strides = [1, 1]} : vector<768x128xf32> to vector<64x128xf32>
    %103 = arith.truncf %102 : vector<64x128xf32> to vector<64x128xbf16>
    %104 = vector.shape_cast %103 : vector<64x128xbf16> to vector<4x16x128xbf16>
    %cst_26 = arith.constant dense<0.000000e+00> : vector<4x128x128xf32>
    %105 = tpu.matmul %98, %101, %cst_26 {dimension_numbers = #tpu.dot_dimension_numbers<[1], [1], [2], [2], [0, 0, 0, 2, 1, 2], [0], [0]>} : vector<4x16x128xbf16>, vector<4x16x128xbf16>, vector<4x128x128xf32> -> vector<4x128x128xf32>
    %106 = vector.shape_cast %6 : vector<128x128xf32> to vector<1x128x128xf32>
    %107 = vector.broadcast %106 : vector<1x128x128xf32> to vector<4x128x128xf32>
    %108 = arith.addf %105, %107 : vector<4x128x128xf32>
    %cst_27 = arith.constant dense<0xFF800000> : vector<4x128xf32>
    %109 = vector.multi_reduction <maximumf>, %108, %cst_27 [2] : vector<4x128x128xf32> to vector<4x128xf32>
    %110 = vector.shape_cast %109 : vector<4x128xf32> to vector<4x128x1xf32>
    %111 = vector.broadcast %110 : vector<4x128x1xf32> to vector<4x128x128xf32>
    %112 = arith.subf %108, %111 : vector<4x128x128xf32>
    %113 = math.exp %112 : vector<4x128x128xf32>
    %cst_28 = arith.constant dense<0.000000e+00> : vector<4x128xf32>
    %114 = vector.multi_reduction <add>, %113, %cst_28 [2] : vector<4x128x128xf32> to vector<4x128xf32>
    %115 = vector.shape_cast %114 : vector<4x128xf32> to vector<4x128x1xf32>
    %116 = tpu.reciprocal %115 {approx = true} : vector<4x128x1xf32> -> vector<4x128x1xf32>
    %117 = vector.broadcast %116 : vector<4x128x1xf32> to vector<4x128x128xf32>
    %118 = arith.mulf %113, %117 : vector<4x128x128xf32>
    %119 = arith.truncf %118 : vector<4x128x128xf32> to vector<4x128x128xbf16>
    %cst_29 = arith.constant dense<0.000000e+00> : vector<4x16x128xf32>
    %120 = tpu.matmul %104, %119, %cst_29 {dimension_numbers = #tpu.dot_dimension_numbers<[2], [2], [1], [1], [0, 0, 0, 1, 1, 1], [0], [0]>} : vector<4x16x128xbf16>, vector<4x128x128xbf16>, vector<4x16x128xf32> -> vector<4x16x128xf32>
    %121 = vector.shape_cast %120 : vector<4x16x128xf32> to vector<64x128xf32>
    %122 = arith.truncf %121 : vector<64x128xf32> to vector<64x128xbf16>
    %123 = tpu.concatenate %35, %64, %93, %122 in 0 : vector<64x128xbf16>, vector<64x128xbf16>, vector<64x128xbf16>, vector<64x128xbf16> -> vector<256x128xbf16>
    %cst_30 = arith.constant dense<0.000000e+00> : vector<256x128xf32>
    %124 = tpu.matmul %3, %123, %cst_30 {dimension_numbers = #tpu.dot_dimension_numbers<[1], [0], [0], [1], [0, 0, 1, 1], [], []>} : vector<256x256xbf16>, vector<256x128xbf16>, vector<256x128xf32> -> vector<256x128xf32>
    %125 = vector.broadcast %4 : vector<256x1xf32> to vector<256x128xf32>
    %126 = arith.addf %124, %125 : vector<256x128xf32>
    %c0_31 = arith.constant 0 : index
    %c0_32 = arith.constant 0 : index
    %c0_33 = arith.constant 0 : index
    %127 = vector.load %arg6[%c0_31, %c0_32, %c0_33] : memref<1x256x128xf32, #tpu.memory_space<vmem>>, vector<1x256x128xf32>
    %128 = vector.shape_cast %127 : vector<1x256x128xf32> to vector<256x128xf32>
    %129 = vector.shape_cast %126 : vector<256x128xf32> to vector<1x256x128xf32>
    tpu.vector_store %arg6[%c0_31, %c0_32, %c0_33], %129 {strides = array<i32>} : memref<1x256x128xf32, #tpu.memory_space<vmem>>, vector<1x256x128xf32>,
    return
  }
  func.func @transform_0(%arg0: i32) -> (i32, i32, i32) {
    %c0_i32 = arith.constant 0 : i32
    %c0_i32_0 = arith.constant 0 : i32
    %c0_i32_1 = arith.constant 0 : i32
    return %arg0, %c0_i32, %c0_i32_0 : i32, i32, i32
  }
  func.func @transform_1(%arg0: i32) -> (i32, i32) {
    %c0_i32 = arith.constant 0 : i32
    %c0_i32_0 = arith.constant 0 : i32
    %c0_i32_1 = arith.constant 0 : i32
    return %c0_i32, %c0_i32_0 : i32, i32
  }
  func.func @transform_2(%arg0: i32) -> (i32, i32) {
    %c0_i32 = arith.constant 0 : i32
    %c0_i32_0 = arith.constant 0 : i32
    %c0_i32_1 = arith.constant 0 : i32
    return %c0_i32, %c0_i32_0 : i32, i32
  }
  func.func @transform_3(%arg0: i32) -> (i32, i32) {
    %c0_i32 = arith.constant 0 : i32
    %c0_i32_0 = arith.constant 0 : i32
    %c0_i32_1 = arith.constant 0 : i32
    return %c0_i32, %c0_i32_0 : i32, i32
  }
  func.func @transform_4(%arg0: i32) -> (i32, i32) {
    %c0_i32 = arith.constant 0 : i32
    %c0_i32_0 = arith.constant 0 : i32
    %c0_i32_1 = arith.constant 0 : i32
    return %c0_i32, %c0_i32_0 : i32, i32
  }
  func.func @transform_5(%arg0: i32) -> (i32, i32, i32) {
    %c0_i32 = arith.constant 0 : i32
    %c0_i32_0 = arith.constant 0 : i32
    %c0_i32_1 = arith.constant 0 : i32
    return %arg0, %c0_i32, %c0_i32_0 : i32, i32, i32
  }
}

</mosaic_0001>

<llo_original>
// kernel: attention_d_forward.1
$region0: #{attention_d_forward.1}
  #allocation0 [shape = 'u32[]', space=smem, size = 0x4, offset = 0x4, fixed_abs, tag = 'smem constant byte address 0x4 - core index']
  #allocation1 [shape = 'u32[144,128]{1,0:T(1,128)}', space=vmem, size = 0x12000, scoped, tag = 'internal scratch']
  %s0 = inlined_call_operand.vmem [shape: bf16[1,256,128], index: 0, kind: input, shape index: {}]
  %s1 = inlined_call_operand.vmem [shape: bf16[768,256], index: 1, kind: input, shape index: {}]
  %s2 = inlined_call_operand.vmem [shape: bf16[256,256], index: 2, kind: input, shape index: {}]
  %s3 = inlined_call_operand.vmem [shape: f32[256,1], index: 3, kind: input, shape index: {}]
  %s4 = inlined_call_operand.vmem [shape: f32[128,128], index: 4, kind: input, shape index: {}]
  %s5 = inlined_call_operand.vmem [shape: f32[1,256,128], index: 5, kind: output, shape index: {}]
  %s6 = sld [smem:[#allocation0]]
  $region30: #{attention_d_forward.1} parent=0
    _
  %s8 = ssub.s32 1, %s6
  %s9 = scalar_select 0, %s8, %s6
  // Predicated region
  $region2: #{attention_d_forward.1} parent=0 // pred_check
    _
  $region3: #{attention_d_forward.1} parent=0 // pred_check_branch
    %11 = sbr.rel (0) target = $region5
  $region4: #{attention_d_forward.1} parent=0 // pred_region
    _
  $region5: #{attention_d_forward.1} parent=0 // pred_fallthru
    _
  // Predicated region
  $region6: #{attention_d_forward.1} parent=0 // pred_check
    _
  $region7: #{attention_d_forward.1} parent=0 // pred_check_branch
    %13 = sbr.rel (0) target = $region9
  $region8: #{attention_d_forward.1} parent=0 // pred_region
    _
  $region9: #{attention_d_forward.1} parent=0 // pred_fallthru
    _
  // Predicated region
  $region10: #{attention_d_forward.1} parent=0 // pred_check
    _
  $region11: #{attention_d_forward.1} parent=0 // pred_check_branch
    %15 = sbr.rel (0) target = $region13
  $region12: #{attention_d_forward.1} parent=0 // pred_region
    _
  $region13: #{attention_d_forward.1} parent=0 // pred_fallthru
    _
  // Predicated region
  $region14: #{attention_d_forward.1} parent=0 // pred_check
    _
  $region15: #{attention_d_forward.1} parent=0 // pred_check_branch
    %17 = sbr.rel (0) target = $region17
  $region16: #{attention_d_forward.1} parent=0 // pred_region
    _
  $region17: #{attention_d_forward.1} parent=0 // pred_fallthru
    _
  // Predicated region
  $region18: #{attention_d_forward.1} parent=0 // pred_check
    _
  $region19: #{attention_d_forward.1} parent=0 // pred_check_branch
    %19 = sbr.rel (0) target = $region21
  $region20: #{attention_d_forward.1} parent=0 // pred_region
    _
  $region21: #{attention_d_forward.1} parent=0 // pred_fallthru
    _
  %v21 = vld [vmem:[%s0] sm:$0xf]
  %v22 = vld [vmem:[%s0 + $0x4] sm:$0xf]
  %v23 = vld [vmem:[%s0 + $0x8] sm:$0xf]
  %v24 = vld [vmem:[%s0 + $0xc] sm:$0xf]
  %v25 = vld [vmem:[%s0 + $0x10] sm:$0xf]
  %v26 = vld [vmem:[%s0 + $0x14] sm:$0xf]
  %v27 = vld [vmem:[%s0 + $0x18] sm:$0xf]
  %v28 = vld [vmem:[%s0 + $0x1c] sm:$0xf]
  %v29 = vld [vmem:[%s0 + $0x20] sm:$0xf]
  %v30 = vld [vmem:[%s0 + $0x24] sm:$0xf]
  %v31 = vld [vmem:[%s0 + $0x28] sm:$0xf]
  %v32 = vld [vmem:[%s0 + $0x2c] sm:$0xf]
  %v33 = vld [vmem:[%s0 + $0x30] sm:$0xf]
  %v34 = vld [vmem:[%s0 + $0x34] sm:$0xf]
  %v35 = vld [vmem:[%s0 + $0x38] sm:$0xf]
  %v36 = vld [vmem:[%s0 + $0x3c] sm:$0xf]
  %v37 = vld [vmem:[%s0 + $0x40] sm:$0xf]
  %v38 = vld [vmem:[%s0 + $0x44] sm:$0xf]
  %v39 = vld [vmem:[%s0 + $0x48] sm:$0xf]
  %v40 = vld [vmem:[%s0 + $0x4c] sm:$0xf]
  %v41 = vld [vmem:[%s0 + $0x50] sm:$0xf]
  %v42 = vld [vmem:[%s0 + $0x54] sm:$0xf]
  %v43 = vld [vmem:[%s0 + $0x58] sm:$0xf]
  %v44 = vld [vmem:[%s0 + $0x5c] sm:$0xf]
  %v45 = vld [vmem:[%s0 + $0x60] sm:$0xf]
  %v46 = vld [vmem:[%s0 + $0x64] sm:$0xf]
  %v47 = vld [vmem:[%s0 + $0x68] sm:$0xf]
  %v48 = vld [vmem:[%s0 + $0x6c] sm:$0xf]
  %v49 = vld [vmem:[%s0 + $0x70] sm:$0xf]
  %v50 = vld [vmem:[%s0 + $0x74] sm:$0xf]
  %v51 = vld [vmem:[%s0 + $0x78] sm:$0xf]
  %v52 = vld [vmem:[%s0 + $0x7c] sm:$0xf]
  %v53 = vld [vmem:[%s1] sm:$0xff]
  %v54 = vld [vmem:[%s1 + $0x8] sm:$0xff]
  %v55 = vld [vmem:[%s1 + $0x10] sm:$0xff]
  %v56 = vld [vmem:[%s1 + $0x18] sm:$0xff]
  %v57 = vld [vmem:[%s1 + $0x20] sm:$0xff]
  %v58 = vld [vmem:[%s1 + $0x28] sm:$0xff]
  %v59 = vld [vmem:[%s1 + $0x30] sm:$0xff]
  %v60 = vld [vmem:[%s1 + $0x38] sm:$0xff]
  %v61 = vld [vmem:[%s1 + $0x40] sm:$0xff]
  %v62 = vld [vmem:[%s1 + $0x48] sm:$0xff]
  %v63 = vld [vmem:[%s1 + $0x50] sm:$0xff]
  %v64 = vld [vmem:[%s1 + $0x58] sm:$0xff]
  %v65 = vld [vmem:[%s1 + $0x60] sm:$0xff]
  %v66 = vld [vmem:[%s1 + $0x68] sm:$0xff]
  %v67 = vld [vmem:[%s1 + $0x70] sm:$0xff]
  %v68 = vld [vmem:[%s1 + $0x78] sm:$0xff]
  %v69 = vld [vmem:[%s1 + $0x80] sm:$0xff]
  %v70 = vld [vmem:[%s1 + $0x88] sm:$0xff]
  %v71 = vld [vmem:[%s1 + $0x90] sm:$0xff]
  %v72 = vld [vmem:[%s1 + $0x98] sm:$0xff]
  %v73 = vld [vmem:[%s1 + $0xa0] sm:$0xff]
  %v74 = vld [vmem:[%s1 + $0xa8] sm:$0xff]
  %v75 = vld [vmem:[%s1 + $0xb0] sm:$0xff]
  %v76 = vld [vmem:[%s1 + $0xb8] sm:$0xff]
  %v77 = vld [vmem:[%s1 + $0xc0] sm:$0xff]
  %v78 = vld [vmem:[%s1 + $0xc8] sm:$0xff]
  %v79 = vld [vmem:[%s1 + $0xd0] sm:$0xff]
  %v80 = vld [vmem:[%s1 + $0xd8] sm:$0xff]
  %v81 = vld [vmem:[%s1 + $0xe0] sm:$0xff]
  %v82 = vld [vmem:[%s1 + $0xe8] sm:$0xff]
  %v83 = vld [vmem:[%s1 + $0xf0] sm:$0xff]
  %v84 = vld [vmem:[%s1 + $0xf8] sm:$0xff]
  %v85 = vld [vmem:[%s1 + $0x100] sm:$0xff]
  %v86 = vld [vmem:[%s1 + $0x108] sm:$0xff]
  %v87 = vld [vmem:[%s1 + $0x110] sm:$0xff]
  %v88 = vld [vmem:[%s1 + $0x118] sm:$0xff]
  %v89 = vld [vmem:[%s1 + $0x120] sm:$0xff]
  %v90 = vld [vmem:[%s1 + $0x128] sm:$0xff]
  %v91 = vld [vmem:[%s1 + $0x130] sm:$0xff]
  %v92 = vld [vmem:[%s1 + $0x138] sm:$0xff]
  %v93 = vld [vmem:[%s1 + $0x140] sm:$0xff]
  %v94 = vld [vmem:[%s1 + $0x148] sm:$0xff]
  %v95 = vld [vmem:[%s1 + $0x150] sm:$0xff]
  %v96 = vld [vmem:[%s1 + $0x158] sm:$0xff]
  %v97 = vld [vmem:[%s1 + $0x160] sm:$0xff]
  %v98 = vld [vmem:[%s1 + $0x168] sm:$0xff]
  %v99 = vld [vmem:[%s1 + $0x170] sm:$0xff]
  %v100 = vld [vmem:[%s1 + $0x178] sm:$0xff]
  %v101 = vld [vmem:[%s1 + $0x180] sm:$0xff]
  %v102 = vld [vmem:[%s1 + $0x188] sm:$0xff]
  %v103 = vld [vmem:[%s1 + $0x190] sm:$0xff]
  %v104 = vld [vmem:[%s1 + $0x198] sm:$0xff]
  %v105 = vld [vmem:[%s1 + $0x1a0] sm:$0xff]
  %v106 = vld [vmem:[%s1 + $0x1a8] sm:$0xff]
  %v107 = vld [vmem:[%s1 + $0x1b0] sm:$0xff]
  %v108 = vld [vmem:[%s1 + $0x1b8] sm:$0xff]
  %v109 = vld [vmem:[%s1 + $0x1c0] sm:$0xff]
  %v110 = vld [vmem:[%s1 + $0x1c8] sm:$0xff]
  %v111 = vld [vmem:[%s1 + $0x1d0] sm:$0xff]
  %v112 = vld [vmem:[%s1 + $0x1d8] sm:$0xff]
  %v113 = vld [vmem:[%s1 + $0x1e0] sm:$0xff]
  %v114 = vld [vmem:[%s1 + $0x1e8] sm:$0xff]
  %v115 = vld [vmem:[%s1 + $0x1f0] sm:$0xff]
  %v116 = vld [vmem:[%s1 + $0x1f8] sm:$0xff]
  %v117 = vld [vmem:[%s1 + $0x200] sm:$0xff]
  %v118 = vld [vmem:[%s1 + $0x208] sm:$0xff]
  %v119 = vld [vmem:[%s1 + $0x210] sm:$0xff]
  %v120 = vld [vmem:[%s1 + $0x218] sm:$0xff]
  %v121 = vld [vmem:[%s1 + $0x220] sm:$0xff]
  %v122 = vld [vmem:[%s1 + $0x228] sm:$0xff]
  %v123 = vld [vmem:[%s1 + $0x230] sm:$0xff]
  %v124 = vld [vmem:[%s1 + $0x238] sm:$0xff]
  %v125 = vld [vmem:[%s1 + $0x240] sm:$0xff]
  %v126 = vld [vmem:[%s1 + $0x248] sm:$0xff]
  %v127 = vld [vmem:[%s1 + $0x250] sm:$0xff]
  %v128 = vld [vmem:[%s1 + $0x258] sm:$0xff]
  %v129 = vld [vmem:[%s1 + $0x260] sm:$0xff]
  %v130 = vld [vmem:[%s1 + $0x268] sm:$0xff]
  %v131 = vld [vmem:[%s1 + $0x270] sm:$0xff]
  %v132 = vld [vmem:[%s1 + $0x278] sm:$0xff]
  %v133 = vld [vmem:[%s1 + $0x280] sm:$0xff]
  %v134 = vld [vmem:[%s1 + $0x288] sm:$0xff]
  %v135 = vld [vmem:[%s1 + $0x290] sm:$0xff]
  %v136 = vld [vmem:[%s1 + $0x298] sm:$0xff]
  %v137 = vld [vmem:[%s1 + $0x2a0] sm:$0xff]
  %v138 = vld [vmem:[%s1 + $0x2a8] sm:$0xff]
  %v139 = vld [vmem:[%s1 + $0x2b0] sm:$0xff]
  %v140 = vld [vmem:[%s1 + $0x2b8] sm:$0xff]
  %v141 = vld [vmem:[%s1 + $0x2c0] sm:$0xff]
  %v142 = vld [vmem:[%s1 + $0x2c8] sm:$0xff]
  %v143 = vld [vmem:[%s1 + $0x2d0] sm:$0xff]
  %v144 = vld [vmem:[%s1 + $0x2d8] sm:$0xff]
  %v145 = vld [vmem:[%s1 + $0x2e0] sm:$0xff]
  %v146 = vld [vmem:[%s1 + $0x2e8] sm:$0xff]
  %v147 = vld [vmem:[%s1 + $0x2f0] sm:$0xff]
  %v148 = vld [vmem:[%s1 + $0x2f8] sm:$0xff]
  %v149 = vld [vmem:[%s2] sm:$0xff]
  %v150 = vld [vmem:[%s2 + $0x8] sm:$0xff]
  %v151 = vld [vmem:[%s2 + $0x10] sm:$0xff]
  %v152 = vld [vmem:[%s2 + $0x18] sm:$0xff]
  %v153 = vld [vmem:[%s2 + $0x20] sm:$0xff]
  %v154 = vld [vmem:[%s2 + $0x28] sm:$0xff]
  %v155 = vld [vmem:[%s2 + $0x30] sm:$0xff]
  %v156 = vld [vmem:[%s2 + $0x38] sm:$0xff]
  %v157 = vld [vmem:[%s2 + $0x40] sm:$0xff]
  %v158 = vld [vmem:[%s2 + $0x48] sm:$0xff]
  %v159 = vld [vmem:[%s2 + $0x50] sm:$0xff]
  %v160 = vld [vmem:[%s2 + $0x58] sm:$0xff]
  %v161 = vld [vmem:[%s2 + $0x60] sm:$0xff]
  %v162 = vld [vmem:[%s2 + $0x68] sm:$0xff]
  %v163 = vld [vmem:[%s2 + $0x70] sm:$0xff]
  %v164 = vld [vmem:[%s2 + $0x78] sm:$0xff]
  %v165 = vld [vmem:[%s2 + $0x80] sm:$0xff]
  %v166 = vld [vmem:[%s2 + $0x88] sm:$0xff]
  %v167 = vld [vmem:[%s2 + $0x90] sm:$0xff]
  %v168 = vld [vmem:[%s2 + $0x98] sm:$0xff]
  %v169 = vld [vmem:[%s2 + $0xa0] sm:$0xff]
  %v170 = vld [vmem:[%s2 + $0xa8] sm:$0xff]
  %v171 = vld [vmem:[%s2 + $0xb0] sm:$0xff]
  %v172 = vld [vmem:[%s2 + $0xb8] sm:$0xff]
  %v173 = vld [vmem:[%s2 + $0xc0] sm:$0xff]
  %v174 = vld [vmem:[%s2 + $0xc8] sm:$0xff]
  %v175 = vld [vmem:[%s2 + $0xd0] sm:$0xff]
  %v176 = vld [vmem:[%s2 + $0xd8] sm:$0xff]
  %v177 = vld [vmem:[%s2 + $0xe0] sm:$0xff]
  %v178 = vld [vmem:[%s2 + $0xe8] sm:$0xff]
  %v179 = vld [vmem:[%s2 + $0xf0] sm:$0xff]
  %v180 = vld [vmem:[%s2 + $0xf8] sm:$0xff]
  %v181 = vld [vmem:[%s3] sm:$0xff]
  %v182 = vld [vmem:[%s3 + $0x8] sm:$0xff]
  %v183 = vld [vmem:[%s3 + $0x10] sm:$0xff]
  %v184 = vld [vmem:[%s3 + $0x18] sm:$0xff]
  %v185 = vld [vmem:[%s3 + $0x20] sm:$0xff]
  %v186 = vld [vmem:[%s3 + $0x28] sm:$0xff]
  %v187 = vld [vmem:[%s3 + $0x30] sm:$0xff]
  %v188 = vld [vmem:[%s3 + $0x38] sm:$0xff]
  %v189 = vld [vmem:[%s3 + $0x40] sm:$0xff]
  %v190 = vld [vmem:[%s3 + $0x48] sm:$0xff]
  %v191 = vld [vmem:[%s3 + $0x50] sm:$0xff]
  %v192 = vld [vmem:[%s3 + $0x58] sm:$0xff]
  %v193 = vld [vmem:[%s3 + $0x60] sm:$0xff]
  %v194 = vld [vmem:[%s3 + $0x68] sm:$0xff]
  %v195 = vld [vmem:[%s3 + $0x70] sm:$0xff]
  %v196 = vld [vmem:[%s3 + $0x78] sm:$0xff]
  %v197 = vld [vmem:[%s3 + $0x80] sm:$0xff]
  %v198 = vld [vmem:[%s3 + $0x88] sm:$0xff]
  %v199 = vld [vmem:[%s3 + $0x90] sm:$0xff]
  %v200 = vld [vmem:[%s3 + $0x98] sm:$0xff]
  %v201 = vld [vmem:[%s3 + $0xa0] sm:$0xff]
  %v202 = vld [vmem:[%s3 + $0xa8] sm:$0xff]
  %v203 = vld [vmem:[%s3 + $0xb0] sm:$0xff]
  %v204 = vld [vmem:[%s3 + $0xb8] sm:$0xff]
  %v205 = vld [vmem:[%s3 + $0xc0] sm:$0xff]
  %v206 = vld [vmem:[%s3 + $0xc8] sm:$0xff]
  %v207 = vld [vmem:[%s3 + $0xd0] sm:$0xff]
  %v208 = vld [vmem:[%s3 + $0xd8] sm:$0xff]
  %v209 = vld [vmem:[%s3 + $0xe0] sm:$0xff]
  %v210 = vld [vmem:[%s3 + $0xe8] sm:$0xff]
  %v211 = vld [vmem:[%s3 + $0xf0] sm:$0xff]
  %v212 = vld [vmem:[%s3 + $0xf8] sm:$0xff]
  %v309 = vunpack.c.l.b16 %v53
  %v310 = vunpack.c.h.b16 %v53
  %v311 = vunpack.c.l.b16 %v54
  %v312 = vunpack.c.h.b16 %v54
  %v313 = vunpack.c.l.b16 %v55
  %v314 = vunpack.c.h.b16 %v55
  %v315 = vunpack.c.l.b16 %v56
  %v316 = vunpack.c.h.b16 %v56
  %v317 = vunpack.c.l.b16 %v57
  %v318 = vunpack.c.h.b16 %v57
  %v319 = vunpack.c.l.b16 %v58
  %v320 = vunpack.c.h.b16 %v58
  %v321 = vunpack.c.l.b16 %v59
  %v322 = vunpack.c.h.b16 %v59
  %v323 = vunpack.c.l.b16 %v60
  %v324 = vunpack.c.h.b16 %v60
  %v325 = vunpack.c.l.b16 %v61
  %v326 = vunpack.c.h.b16 %v61
  %v327 = vunpack.c.l.b16 %v62
  %v328 = vunpack.c.h.b16 %v62
  %v329 = vunpack.c.l.b16 %v63
  %v330 = vunpack.c.h.b16 %v63
  %v331 = vunpack.c.l.b16 %v64
  %v332 = vunpack.c.h.b16 %v64
  %v333 = vunpack.c.l.b16 %v65
  %v334 = vunpack.c.h.b16 %v65
  %v335 = vunpack.c.l.b16 %v66
  %v336 = vunpack.c.h.b16 %v66
  %v337 = vunpack.c.l.b16 %v67
  %v338 = vunpack.c.h.b16 %v67
  %v339 = vunpack.c.l.b16 %v68
  %v340 = vunpack.c.h.b16 %v68
  %v341 = vunpack.c.l.b16 %v69
  %v342 = vunpack.c.h.b16 %v69
  %v343 = vunpack.c.l.b16 %v70
  %v344 = vunpack.c.h.b16 %v70
  %v345 = vunpack.c.l.b16 %v71
  %v346 = vunpack.c.h.b16 %v71
  %v347 = vunpack.c.l.b16 %v72
  %v348 = vunpack.c.h.b16 %v72
  %v349 = vunpack.c.l.b16 %v73
  %v350 = vunpack.c.h.b16 %v73
  %v351 = vunpack.c.l.b16 %v74
  %v352 = vunpack.c.h.b16 %v74
  %v353 = vunpack.c.l.b16 %v75
  %v354 = vunpack.c.h.b16 %v75
  %v355 = vunpack.c.l.b16 %v76
  %v356 = vunpack.c.h.b16 %v76
  %v357 = vunpack.c.l.b16 %v77
  %v358 = vunpack.c.h.b16 %v77
  %v359 = vunpack.c.l.b16 %v78
  %v360 = vunpack.c.h.b16 %v78
  %v361 = vunpack.c.l.b16 %v79
  %v362 = vunpack.c.h.b16 %v79
  %v363 = vunpack.c.l.b16 %v80
  %v364 = vunpack.c.h.b16 %v80
  %v365 = vunpack.c.l.b16 %v81
  %v366 = vunpack.c.h.b16 %v81
  %v367 = vunpack.c.l.b16 %v82
  %v368 = vunpack.c.h.b16 %v82
  %v369 = vunpack.c.l.b16 %v83
  %v370 = vunpack.c.h.b16 %v83
  %v371 = vunpack.c.l.b16 %v84
  %v372 = vunpack.c.h.b16 %v84
  %v373 = vunpack.c.l.b16 %v85
  %v374 = vunpack.c.h.b16 %v85
  %v375 = vunpack.c.l.b16 %v86
  %v376 = vunpack.c.h.b16 %v86
  %v377 = vunpack.c.l.b16 %v87
  %v378 = vunpack.c.h.b16 %v87
  %v379 = vunpack.c.l.b16 %v88
  %v380 = vunpack.c.h.b16 %v88
  %v381 = vunpack.c.l.b16 %v89
  %v382 = vunpack.c.h.b16 %v89
  %v383 = vunpack.c.l.b16 %v90
  %v384 = vunpack.c.h.b16 %v90
  %v385 = vunpack.c.l.b16 %v91
  %v386 = vunpack.c.h.b16 %v91
  %v387 = vunpack.c.l.b16 %v92
  %v388 = vunpack.c.h.b16 %v92
  %v389 = vunpack.c.l.b16 %v93
  %v390 = vunpack.c.h.b16 %v93
  %v391 = vunpack.c.l.b16 %v94
  %v392 = vunpack.c.h.b16 %v94
  %v393 = vunpack.c.l.b16 %v95
  %v394 = vunpack.c.h.b16 %v95
  %v395 = vunpack.c.l.b16 %v96
  %v396 = vunpack.c.h.b16 %v96
  %v397 = vunpack.c.l.b16 %v97
  %v398 = vunpack.c.h.b16 %v97
  %v399 = vunpack.c.l.b16 %v98
  %v400 = vunpack.c.h.b16 %v98
  %v401 = vunpack.c.l.b16 %v99
  %v402 = vunpack.c.h.b16 %v99
  %v403 = vunpack.c.l.b16 %v100
  %v404 = vunpack.c.h.b16 %v100
  %v405 = vunpack.c.l.b16 %v101
  %v406 = vunpack.c.h.b16 %v101
  %v407 = vunpack.c.l.b16 %v102
  %v408 = vunpack.c.h.b16 %v102
  %v409 = vunpack.c.l.b16 %v103
  %v410 = vunpack.c.h.b16 %v103
  %v411 = vunpack.c.l.b16 %v104
  %v412 = vunpack.c.h.b16 %v104
  %v413 = vunpack.c.l.b16 %v105
  %v414 = vunpack.c.h.b16 %v105
  %v415 = vunpack.c.l.b16 %v106
  %v416 = vunpack.c.h.b16 %v106
  %v417 = vunpack.c.l.b16 %v107
  %v418 = vunpack.c.h.b16 %v107
  %v419 = vunpack.c.l.b16 %v108
  %v420 = vunpack.c.h.b16 %v108
  %v421 = vunpack.c.l.b16 %v109
  %v422 = vunpack.c.h.b16 %v109
  %v423 = vunpack.c.l.b16 %v110
  %v424 = vunpack.c.h.b16 %v110
  %v425 = vunpack.c.l.b16 %v111
  %v426 = vunpack.c.h.b16 %v111
  %v427 = vunpack.c.l.b16 %v112
  %v428 = vunpack.c.h.b16 %v112
  %v429 = vunpack.c.l.b16 %v113
  %v430 = vunpack.c.h.b16 %v113
  %v431 = vunpack.c.l.b16 %v114
  %v432 = vunpack.c.h.b16 %v114
  %v433 = vunpack.c.l.b16 %v115
  %v434 = vunpack.c.h.b16 %v115
  %v435 = vunpack.c.l.b16 %v116
  %v436 = vunpack.c.h.b16 %v116
  %v437 = vunpack.c.l.b16 %v117
  %v438 = vunpack.c.h.b16 %v117
  %v439 = vunpack.c.l.b16 %v118
  %v440 = vunpack.c.h.b16 %v118
  %v441 = vunpack.c.l.b16 %v119
  %v442 = vunpack.c.h.b16 %v119
  %v443 = vunpack.c.l.b16 %v120
  %v444 = vunpack.c.h.b16 %v120
  %v445 = vunpack.c.l.b16 %v121
  %v446 = vunpack.c.h.b16 %v121
  %v447 = vunpack.c.l.b16 %v122
  %v448 = vunpack.c.h.b16 %v122
  %v449 = vunpack.c.l.b16 %v123
  %v450 = vunpack.c.h.b16 %v123
  %v451 = vunpack.c.l.b16 %v124
  %v452 = vunpack.c.h.b16 %v124
  %v453 = vunpack.c.l.b16 %v125
  %v454 = vunpack.c.h.b16 %v125
  %v455 = vunpack.c.l.b16 %v126
  %v456 = vunpack.c.h.b16 %v126
  %v457 = vunpack.c.l.b16 %v127
  %v458 = vunpack.c.h.b16 %v127
  %v459 = vunpack.c.l.b16 %v128
  %v460 = vunpack.c.h.b16 %v128
  %v461 = vunpack.c.l.b16 %v129
  %v462 = vunpack.c.h.b16 %v129
  %v463 = vunpack.c.l.b16 %v130
  %v464 = vunpack.c.h.b16 %v130
  %v465 = vunpack.c.l.b16 %v131
  %v466 = vunpack.c.h.b16 %v131
  %v467 = vunpack.c.l.b16 %v132
  %v468 = vunpack.c.h.b16 %v132
  %v469 = vunpack.c.l.b16 %v133
  %v470 = vunpack.c.h.b16 %v133
  %v471 = vunpack.c.l.b16 %v134
  %v472 = vunpack.c.h.b16 %v134
  %v473 = vunpack.c.l.b16 %v135
  %v474 = vunpack.c.h.b16 %v135
  %v475 = vunpack.c.l.b16 %v136
  %v476 = vunpack.c.h.b16 %v136
  %v477 = vunpack.c.l.b16 %v137
  %v478 = vunpack.c.h.b16 %v137
  %v479 = vunpack.c.l.b16 %v138
  %v480 = vunpack.c.h.b16 %v138
  %v481 = vunpack.c.l.b16 %v139
  %v482 = vunpack.c.h.b16 %v139
  %v483 = vunpack.c.l.b16 %v140
  %v484 = vunpack.c.h.b16 %v140
  %v485 = vunpack.c.l.b16 %v141
  %v486 = vunpack.c.h.b16 %v141
  %v487 = vunpack.c.l.b16 %v142
  %v488 = vunpack.c.h.b16 %v142
  %v489 = vunpack.c.l.b16 %v143
  %v490 = vunpack.c.h.b16 %v143
  %v491 = vunpack.c.l.b16 %v144
  %v492 = vunpack.c.h.b16 %v144
  %v493 = vunpack.c.l.b16 %v145
  %v494 = vunpack.c.h.b16 %v145
  %v495 = vunpack.c.l.b16 %v146
  %v496 = vunpack.c.h.b16 %v146
  %v497 = vunpack.c.l.b16 %v147
  %v498 = vunpack.c.h.b16 %v147
  %v499 = vunpack.c.l.b16 %v148
  %v500 = vunpack.c.h.b16 %v148
  %v501 = vpack.c.b16 %v311, %v309
  %v502 = vpack.c.b16 %v312, %v310
  %v503 = vpack.c.b16 %v315, %v313
  %v504 = vpack.c.b16 %v316, %v314
  %v505 = vpack.c.b16 %v319, %v317
  %v506 = vpack.c.b16 %v320, %v318
  %v507 = vpack.c.b16 %v323, %v321
  %v508 = vpack.c.b16 %v324, %v322
  %v509 = vpack.c.b16 %v327, %v325
  %v510 = vpack.c.b16 %v328, %v326
  %v511 = vpack.c.b16 %v331, %v329
  %v512 = vpack.c.b16 %v332, %v330
  %v513 = vpack.c.b16 %v335, %v333
  %v514 = vpack.c.b16 %v336, %v334
  %v515 = vpack.c.b16 %v339, %v337
  %v516 = vpack.c.b16 %v340, %v338
  %v517 = vpack.c.b16 %v343, %v341
  %v518 = vpack.c.b16 %v344, %v342
  %v519 = vpack.c.b16 %v347, %v345
  %v520 = vpack.c.b16 %v348, %v346
  %v521 = vpack.c.b16 %v351, %v349
  %v522 = vpack.c.b16 %v352, %v350
  %v523 = vpack.c.b16 %v355, %v353
  %v524 = vpack.c.b16 %v356, %v354
  %v525 = vpack.c.b16 %v359, %v357
  %v526 = vpack.c.b16 %v360, %v358
  %v527 = vpack.c.b16 %v363, %v361
  %v528 = vpack.c.b16 %v364, %v362
  %v529 = vpack.c.b16 %v367, %v365
  %v530 = vpack.c.b16 %v368, %v366
  %v531 = vpack.c.b16 %v371, %v369
  %v532 = vpack.c.b16 %v372, %v370
  %v533 = vpack.c.b16 %v375, %v373
  %v534 = vpack.c.b16 %v376, %v374
  %v535 = vpack.c.b16 %v379, %v377
  %v536 = vpack.c.b16 %v380, %v378
  %v537 = vpack.c.b16 %v383, %v381
  %v538 = vpack.c.b16 %v384, %v382
  %v539 = vpack.c.b16 %v387, %v385
  %v540 = vpack.c.b16 %v388, %v386
  %v541 = vpack.c.b16 %v391, %v389
  %v542 = vpack.c.b16 %v392, %v390
  %v543 = vpack.c.b16 %v395, %v393
  %v544 = vpack.c.b16 %v396, %v394
  %v545 = vpack.c.b16 %v399, %v397
  %v546 = vpack.c.b16 %v400, %v398
  %v547 = vpack.c.b16 %v403, %v401
  %v548 = vpack.c.b16 %v404, %v402
  %v549 = vpack.c.b16 %v407, %v405
  %v550 = vpack.c.b16 %v408, %v406
  %v551 = vpack.c.b16 %v411, %v409
  %v552 = vpack.c.b16 %v412, %v410
  %v553 = vpack.c.b16 %v415, %v413
  %v554 = vpack.c.b16 %v416, %v414
  %v555 = vpack.c.b16 %v419, %v417
  %v556 = vpack.c.b16 %v420, %v418
  %v557 = vpack.c.b16 %v423, %v421
  %v558 = vpack.c.b16 %v424, %v422
  %v559 = vpack.c.b16 %v427, %v425
  %v560 = vpack.c.b16 %v428, %v426
  %v561 = vpack.c.b16 %v431, %v429
  %v562 = vpack.c.b16 %v432, %v430
  %v563 = vpack.c.b16 %v435, %v433
  %v564 = vpack.c.b16 %v436, %v434
  %v565 = vpack.c.b16 %v439, %v437
  %v566 = vpack.c.b16 %v440, %v438
  %v567 = vpack.c.b16 %v443, %v441
  %v568 = vpack.c.b16 %v444, %v442
  %v569 = vpack.c.b16 %v447, %v445
  %v570 = vpack.c.b16 %v448, %v446
  %v571 = vpack.c.b16 %v451, %v449
  %v572 = vpack.c.b16 %v452, %v450
  %v573 = vpack.c.b16 %v455, %v453
  %v574 = vpack.c.b16 %v456, %v454
  %v575 = vpack.c.b16 %v459, %v457
  %v576 = vpack.c.b16 %v460, %v458
  %v577 = vpack.c.b16 %v463, %v461
  %v578 = vpack.c.b16 %v464, %v462
  %v579 = vpack.c.b16 %v467, %v465
  %v580 = vpack.c.b16 %v468, %v466
  %v581 = vpack.c.b16 %v471, %v469
  %v582 = vpack.c.b16 %v472, %v470
  %v583 = vpack.c.b16 %v475, %v473
  %v584 = vpack.c.b16 %v476, %v474
  %v585 = vpack.c.b16 %v479, %v477
  %v586 = vpack.c.b16 %v480, %v478
  %v587 = vpack.c.b16 %v483, %v481
  %v588 = vpack.c.b16 %v484, %v482
  %v589 = vpack.c.b16 %v487, %v485
  %v590 = vpack.c.b16 %v488, %v486
  %v591 = vpack.c.b16 %v491, %v489
  %v592 = vpack.c.b16 %v492, %v490
  %v593 = vpack.c.b16 %v495, %v493
  %v594 = vpack.c.b16 %v496, %v494
  %v595 = vpack.c.b16 %v499, %v497
  %v596 = vpack.c.b16 %v500, %v498
  %v725 = vunpack.c.l.b16 %v21
  %v726 = vunpack.c.l.b16 %v22
  %v727 = vunpack.c.l.b16 %v23
  %v728 = vunpack.c.l.b16 %v24
  %v729 = vunpack.c.l.b16 %v25
  %v730 = vunpack.c.l.b16 %v26
  %v731 = vunpack.c.l.b16 %v27
  %v732 = vunpack.c.l.b16 %v28
  %v733 = vunpack.c.l.b16 %v29
  %v734 = vunpack.c.l.b16 %v30
  %v735 = vunpack.c.l.b16 %v31
  %v736 = vunpack.c.l.b16 %v32
  %v737 = vunpack.c.l.b16 %v33
  %v738 = vunpack.c.l.b16 %v34
  %v739 = vunpack.c.l.b16 %v35
  %v740 = vunpack.c.l.b16 %v36
  %v741 = vunpack.c.l.b16 %v37
  %v742 = vunpack.c.l.b16 %v38
  %v743 = vunpack.c.l.b16 %v39
  %v744 = vunpack.c.l.b16 %v40
  %v745 = vunpack.c.l.b16 %v41
  %v746 = vunpack.c.l.b16 %v42
  %v747 = vunpack.c.l.b16 %v43
  %v748 = vunpack.c.l.b16 %v44
  %v749 = vunpack.c.l.b16 %v45
  %v750 = vunpack.c.l.b16 %v46
  %v751 = vunpack.c.l.b16 %v47
  %v752 = vunpack.c.l.b16 %v48
  %v753 = vunpack.c.l.b16 %v49
  %v754 = vunpack.c.l.b16 %v50
  %v755 = vunpack.c.l.b16 %v51
  %v756 = vunpack.c.l.b16 %v52
  %v757 = vpack.c.b16 %v726, %v725
  %v758 = vpack.c.b16 %v728, %v727
  %v759 = vpack.c.b16 %v730, %v729
  %v760 = vpack.c.b16 %v732, %v731
  %v761 = vpack.c.b16 %v734, %v733
  %v762 = vpack.c.b16 %v736, %v735
  %v763 = vpack.c.b16 %v738, %v737
  %v764 = vpack.c.b16 %v740, %v739
  %v765 = vpack.c.b16 %v742, %v741
  %v766 = vpack.c.b16 %v744, %v743
  %v767 = vpack.c.b16 %v746, %v745
  %v768 = vpack.c.b16 %v748, %v747
  %v769 = vpack.c.b16 %v750, %v749
  %v770 = vpack.c.b16 %v752, %v751
  %v771 = vpack.c.b16 %v754, %v753
  %v772 = vpack.c.b16 %v756, %v755
  %789 = vmatprep.subr.bf16.mxu0 0
  %790 = vmatpush1.bf16.msra.mxu0 %v757
  %791 = vmatprep.subr.bf16.mxu0 0
  %792 = vmatpush1.bf16.msra.mxu0 %v758
  %793 = vmatprep.subr.bf16.mxu0 0
  %794 = vmatpush1.bf16.msra.mxu0 %v759
  %795 = vmatprep.subr.bf16.mxu0 0
  %796 = vmatpush1.bf16.msra.mxu0 %v760
  %797 = vmatprep.subr.bf16.mxu0 0
  %798 = vmatpush1.bf16.msra.mxu0 %v761
  %799 = vmatprep.subr.bf16.mxu0 0
  %800 = vmatpush1.bf16.msra.mxu0 %v762
  %801 = vmatprep.subr.bf16.mxu0 0
  %802 = vmatpush1.bf16.msra.mxu0 %v763
  %803 = vmatprep.subr.bf16.mxu0 0
  %804 = vmatpush1.bf16.msra.mxu0 %v764
  %805 = vmatprep.subr.bf16.mxu0 0
  %806 = vmatpush1.bf16.msra.mxu0 %v765
  %807 = vmatprep.subr.bf16.mxu0 0
  %808 = vmatpush1.bf16.msra.mxu0 %v766
  %809 = vmatprep.subr.bf16.mxu0 0
  %810 = vmatpush1.bf16.msra.mxu0 %v767
  %811 = vmatprep.subr.bf16.mxu0 0
  %812 = vmatpush1.bf16.msra.mxu0 %v768
  %813 = vmatprep.subr.bf16.mxu0 0
  %814 = vmatpush1.bf16.msra.mxu0 %v769
  %815 = vmatprep.subr.bf16.mxu0 0
  %816 = vmatpush1.bf16.msra.mxu0 %v770
  %817 = vmatprep.subr.bf16.mxu0 0
  %818 = vmatpush1.bf16.msra.mxu0 %v771
  %819 = vmatprep.subr.bf16.mxu0 0
  %820 = vmatpush1.bf16.msra.mxu0 %v772
  %821 = vmatprep.mubr.bf16.mxu0 %v502
  %822 = vmatmul.mubr.bf16.gmra.mrb[0].mxu0 %v501
  %v823 = vpop.f32.mrb[0].mxu0
  %v824 = vadd.f32 0.0, %v823
  %v825 = vpop.f32.mrb[0].mxu0
  %v826 = vpop.f32.mrb[0].mxu0
  %v827 = vadd.f32 0.0, %v826
  %v828 = vpop.f32.mrb[0].mxu0
  %829 = vmatprep.mubr.bf16.mxu0 %v504
  %830 = vmatmul.mubr.bf16.gmra.mrb[0].mxu0 %v503
  %v831 = vpop.f32.mrb[0].mxu0
  %v832 = vadd.f32 0.0, %v831
  %v833 = vpop.f32.mrb[0].mxu0
  %v834 = vpop.f32.mrb[0].mxu0
  %v835 = vadd.f32 0.0, %v834
  %v836 = vpop.f32.mrb[0].mxu0
  %837 = vmatprep.mubr.bf16.mxu0 %v506
  %838 = vmatmul.mubr.bf16.gmra.mrb[0].mxu0 %v505
  %v839 = vpop.f32.mrb[0].mxu0
  %v840 = vadd.f32 0.0, %v839
  %v841 = vpop.f32.mrb[0].mxu0
  %v842 = vpop.f32.mrb[0].mxu0
  %v843 = vadd.f32 0.0, %v842
  %v844 = vpop.f32.mrb[0].mxu0
  %845 = vmatprep.mubr.bf16.mxu0 %v508
  %846 = vmatmul.mubr.bf16.gmra.mrb[0].mxu0 %v507
  %v847 = vpop.f32.mrb[0].mxu0
  %v848 = vadd.f32 0.0, %v847
  %v849 = vpop.f32.mrb[0].mxu0
  %v850 = vpop.f32.mrb[0].mxu0
  %v851 = vadd.f32 0.0, %v850
  %v852 = vpop.f32.mrb[0].mxu0
  %853 = vmatprep.mubr.bf16.mxu0 %v510
  %854 = vmatmul.mubr.bf16.gmra.mrb[0].mxu0 %v509
  %v855 = vpop.f32.mrb[0].mxu0
  %v856 = vadd.f32 0.0, %v855
  %v857 = vpop.f32.mrb[0].mxu0
  %v858 = vpop.f32.mrb[0].mxu0
  %v859 = vadd.f32 0.0, %v858
  %v860 = vpop.f32.mrb[0].mxu0
  %861 = vmatprep.mubr.bf16.mxu0 %v512
  %862 = vmatmul.mubr.bf16.gmra.mrb[0].mxu0 %v511
  %v863 = vpop.f32.mrb[0].mxu0
  %v864 = vadd.f32 0.0, %v863
  %v865 = vpop.f32.mrb[0].mxu0
  %v866 = vpop.f32.mrb[0].mxu0
  %v867 = vadd.f32 0.0, %v866
  %v868 = vpop.f32.mrb[0].mxu0
  %869 = vmatprep.mubr.bf16.mxu0 %v514
  %870 = vmatmul.mubr.bf16.gmra.mrb[0].mxu0 %v513
  %v871 = vpop.f32.mrb[0].mxu0
  %v872 = vadd.f32 0.0, %v871
  %v873 = vpop.f32.mrb[0].mxu0
  %v874 = vpop.f32.mrb[0].mxu0
  %v875 = vadd.f32 0.0, %v874
  %v876 = vpop.f32.mrb[0].mxu0
  %877 = vmatprep.mubr.bf16.mxu0 %v516
  %878 = vmatmul.mubr.bf16.gmra.mrb[0].mxu0 %v515
  %v879 = vpop.f32.mrb[0].mxu0
  %v880 = vadd.f32 0.0, %v879
  %v881 = vpop.f32.mrb[0].mxu0
  %v882 = vpop.f32.mrb[0].mxu0
  %v883 = vadd.f32 0.0, %v882
  %v884 = vpop.f32.mrb[0].mxu0
  %885 = vmatprep.mubr.bf16.mxu0 %v518
  %886 = vmatmul.mubr.bf16.gmra.mrb[0].mxu0 %v517
  %v887 = vpop.f32.mrb[0].mxu0
  %v888 = vadd.f32 0.0, %v887
  %v889 = vpop.f32.mrb[0].mxu0
  %v890 = vpop.f32.mrb[0].mxu0
  %v891 = vadd.f32 0.0, %v890
  %v892 = vpop.f32.mrb[0].mxu0
  %893 = vmatprep.mubr.bf16.mxu0 %v520
  %894 = vmatmul.mubr.bf16.gmra.mrb[0].mxu0 %v519
  %v895 = vpop.f32.mrb[0].mxu0
  %v896 = vadd.f32 0.0, %v895
  %v897 = vpop.f32.mrb[0].mxu0
  %v898 = vpop.f32.mrb[0].mxu0
  %v899 = vadd.f32 0.0, %v898
  %v900 = vpop.f32.mrb[0].mxu0
  %901 = vmatprep.mubr.bf16.mxu0 %v522
  %902 = vmatmul.mubr.bf16.gmra.mrb[0].mxu0 %v521
  %v903 = vpop.f32.mrb[0].mxu0
  %v904 = vadd.f32 0.0, %v903
  %v905 = vpop.f32.mrb[0].mxu0
  %v906 = vpop.f32.mrb[0].mxu0
  %v907 = vadd.f32 0.0, %v906
  %v908 = vpop.f32.mrb[0].mxu0
  %909 = vmatprep.mubr.bf16.mxu0 %v524
  %910 = vmatmul.mubr.bf16.gmra.mrb[0].mxu0 %v523
  %v911 = vpop.f32.mrb[0].mxu0
  %v912 = vadd.f32 0.0, %v911
  %v913 = vpop.f32.mrb[0].mxu0
  %v914 = vpop.f32.mrb[0].mxu0
  %v915 = vadd.f32 0.0, %v914
  %v916 = vpop.f32.mrb[0].mxu0
  %917 = vmatprep.mubr.bf16.mxu0 %v526
  %918 = vmatmul.mubr.bf16.gmra.mrb[0].mxu0 %v525
  %v919 = vpop.f32.mrb[0].mxu0
  %v920 = vadd.f32 0.0, %v919
  %v921 = vpop.f32.mrb[0].mxu0
  %v922 = vpop.f32.mrb[0].mxu0
  %v923 = vadd.f32 0.0, %v922
  %v924 = vpop.f32.mrb[0].mxu0
  %925 = vmatprep.mubr.bf16.mxu0 %v528
  %926 = vmatmul.mubr.bf16.gmra.mrb[0].mxu0 %v527
  %v927 = vpop.f32.mrb[0].mxu0
  %v928 = vadd.f32 0.0, %v927
  %v929 = vpop.f32.mrb[0].mxu0
  %v930 = vpop.f32.mrb[0].mxu0
  %v931 = vadd.f32 0.0, %v930
  %v932 = vpop.f32.mrb[0].mxu0
  %933 = vmatprep.mubr.bf16.mxu0 %v530
  %934 = vmatmul.mubr.bf16.gmra.mrb[0].mxu0 %v529
  %v935 = vpop.f32.mrb[0].mxu0
  %v936 = vadd.f32 0.0, %v935
  %v937 = vpop.f32.mrb[0].mxu0
  %v938 = vpop.f32.mrb[0].mxu0
  %v939 = vadd.f32 0.0, %v938
  %v940 = vpop.f32.mrb[0].mxu0
  %941 = vmatprep.mubr.bf16.mxu0 %v532
  %942 = vmatmul.mubr.bf16.gmra.mrb[0].mxu0 %v531
  %v943 = vpop.f32.mrb[0].mxu0
  %v944 = vadd.f32 0.0, %v943
  %v945 = vpop.f32.mrb[0].mxu0
  %v946 = vpop.f32.mrb[0].mxu0
  %v947 = vadd.f32 0.0, %v946
  %v948 = vpop.f32.mrb[0].mxu0
  %949 = vmatprep.mubr.bf16.mxu0 %v534
  %950 = vmatmul.mubr.bf16.gmra.mrb[0].mxu0 %v533
  %v951 = vpop.f32.mrb[0].mxu0
  %v952 = vadd.f32 0.0, %v951
  %v953 = vpop.f32.mrb[0].mxu0
  %v954 = vpop.f32.mrb[0].mxu0
  %v955 = vadd.f32 0.0, %v954
  %v956 = vpop.f32.mrb[0].mxu0
  %957 = vmatprep.mubr.bf16.mxu0 %v536
  %958 = vmatmul.mubr.bf16.gmra.mrb[0].mxu0 %v535
  %v959 = vpop.f32.mrb[0].mxu0
  %v960 = vadd.f32 0.0, %v959
  %v961 = vpop.f32.mrb[0].mxu0
  %v962 = vpop.f32.mrb[0].mxu0
  %v963 = vadd.f32 0.0, %v962
  %v964 = vpop.f32.mrb[0].mxu0
  %965 = vmatprep.mubr.bf16.mxu0 %v538
  %966 = vmatmul.mubr.bf16.gmra.mrb[0].mxu0 %v537
  %v967 = vpop.f32.mrb[0].mxu0
  %v968 = vadd.f32 0.0, %v967
  %v969 = vpop.f32.mrb[0].mxu0
  %v970 = vpop.f32.mrb[0].mxu0
  %v971 = vadd.f32 0.0, %v970
  %v972 = vpop.f32.mrb[0].mxu0
  %973 = vmatprep.mubr.bf16.mxu0 %v540
  %974 = vmatmul.mubr.bf16.gmra.mrb[0].mxu0 %v539
  %v975 = vpop.f32.mrb[0].mxu0
  %v976 = vadd.f32 0.0, %v975
  %v977 = vpop.f32.mrb[0].mxu0
  %v978 = vpop.f32.mrb[0].mxu0
  %v979 = vadd.f32 0.0, %v978
  %v980 = vpop.f32.mrb[0].mxu0
  %981 = vmatprep.mubr.bf16.mxu0 %v542
  %982 = vmatmul.mubr.bf16.gmra.mrb[0].mxu0 %v541
  %v983 = vpop.f32.mrb[0].mxu0
  %v984 = vadd.f32 0.0, %v983
  %v985 = vpop.f32.mrb[0].mxu0
  %v986 = vpop.f32.mrb[0].mxu0
  %v987 = vadd.f32 0.0, %v986
  %v988 = vpop.f32.mrb[0].mxu0
  %989 = vmatprep.mubr.bf16.mxu0 %v544
  %990 = vmatmul.mubr.bf16.gmra.mrb[0].mxu0 %v543
  %v991 = vpop.f32.mrb[0].mxu0
  %v992 = vadd.f32 0.0, %v991
  %v993 = vpop.f32.mrb[0].mxu0
  %v994 = vpop.f32.mrb[0].mxu0
  %v995 = vadd.f32 0.0, %v994
  %v996 = vpop.f32.mrb[0].mxu0
  %997 = vmatprep.mubr.bf16.mxu0 %v546
  %998 = vmatmul.mubr.bf16.gmra.mrb[0].mxu0 %v545
  %v999 = vpop.f32.mrb[0].mxu0
  %v1000 = vadd.f32 0.0, %v999
  %v1001 = vpop.f32.mrb[0].mxu0
  %v1002 = vpop.f32.mrb[0].mxu0
  %v1003 = vadd.f32 0.0, %v1002
  %v1004 = vpop.f32.mrb[0].mxu0
  %1005 = vmatprep.mubr.bf16.mxu0 %v548
  %1006 = vmatmul.mubr.bf16.gmra.mrb[0].mxu0 %v547
  %v1007 = vpop.f32.mrb[0].mxu0
  %v1008 = vadd.f32 0.0, %v1007
  %v1009 = vpop.f32.mrb[0].mxu0
  %v1010 = vpop.f32.mrb[0].mxu0
  %v1011 = vadd.f32 0.0, %v1010
  %v1012 = vpop.f32.mrb[0].mxu0
  %1013 = vmatprep.mubr.bf16.mxu0 %v550
  %1014 = vmatmul.mubr.bf16.gmra.mrb[0].mxu0 %v549
  %v1015 = vpop.f32.mrb[0].mxu0
  %v1016 = vadd.f32 0.0, %v1015
  %v1017 = vpop.f32.mrb[0].mxu0
  %v1018 = vpop.f32.mrb[0].mxu0
  %v1019 = vadd.f32 0.0, %v1018
  %v1020 = vpop.f32.mrb[0].mxu0
  %1021 = vmatprep.mubr.bf16.mxu0 %v552
  %1022 = vmatmul.mubr.bf16.gmra.mrb[0].mxu0 %v551
  %v1023 = vpop.f32.mrb[0].mxu0
  %v1024 = vadd.f32 0.0, %v1023
  %v1025 = vpop.f32.mrb[0].mxu0
  %v1026 = vpop.f32.mrb[0].mxu0
  %v1027 = vadd.f32 0.0, %v1026
  %v1028 = vpop.f32.mrb[0].mxu0
  %1029 = vmatprep.mubr.bf16.mxu0 %v554
  %1030 = vmatmul.mubr.bf16.gmra.mrb[0].mxu0 %v553
  %v1031 = vpop.f32.mrb[0].mxu0
  %v1032 = vadd.f32 0.0, %v1031
  %v1033 = vpop.f32.mrb[0].mxu0
  %v1034 = vpop.f32.mrb[0].mxu0
  %v1035 = vadd.f32 0.0, %v1034
  %v1036 = vpop.f32.mrb[0].mxu0
  %1037 = vmatprep.mubr.bf16.mxu0 %v556
  %1038 = vmatmul.mubr.bf16.gmra.mrb[0].mxu0 %v555
  %v1039 = vpop.f32.mrb[0].mxu0
  %v1040 = vadd.f32 0.0, %v1039
  %v1041 = vpop.f32.mrb[0].mxu0
  %v1042 = vpop.f32.mrb[0].mxu0
  %v1043 = vadd.f32 0.0, %v1042
  %v1044 = vpop.f32.mrb[0].mxu0
  %1045 = vmatprep.mubr.bf16.mxu0 %v558
  %1046 = vmatmul.mubr.bf16.gmra.mrb[0].mxu0 %v557
  %v1047 = vpop.f32.mrb[0].mxu0
  %v1048 = vadd.f32 0.0, %v1047
  %v1049 = vpop.f32.mrb[0].mxu0
  %v1050 = vpop.f32.mrb[0].mxu0
  %v1051 = vadd.f32 0.0, %v1050
  %v1052 = vpop.f32.mrb[0].mxu0
  %1053 = vmatprep.mubr.bf16.mxu0 %v560
  %1054 = vmatmul.mubr.bf16.gmra.mrb[0].mxu0 %v559
  %v1055 = vpop.f32.mrb[0].mxu0
  %v1056 = vadd.f32 0.0, %v1055
  %v1057 = vpop.f32.mrb[0].mxu0
  %v1058 = vpop.f32.mrb[0].mxu0
  %v1059 = vadd.f32 0.0, %v1058
  %v1060 = vpop.f32.mrb[0].mxu0
  %1061 = vmatprep.mubr.bf16.mxu0 %v562
  %1062 = vmatmul.mubr.bf16.gmra.mrb[0].mxu0 %v561
  %v1063 = vpop.f32.mrb[0].mxu0
  %v1064 = vadd.f32 0.0, %v1063
  %v1065 = vpop.f32.mrb[0].mxu0
  %v1066 = vpop.f32.mrb[0].mxu0
  %v1067 = vadd.f32 0.0, %v1066
  %v1068 = vpop.f32.mrb[0].mxu0
  %1069 = vmatprep.mubr.bf16.mxu0 %v564
  %1070 = vmatmul.mubr.bf16.gmra.mrb[0].mxu0 %v563
  %v1071 = vpop.f32.mrb[0].mxu0
  %v1072 = vadd.f32 0.0, %v1071
  %v1073 = vpop.f32.mrb[0].mxu0
  %v1074 = vpop.f32.mrb[0].mxu0
  %v1075 = vadd.f32 0.0, %v1074
  %v1076 = vpop.f32.mrb[0].mxu0
  %1077 = vmatprep.mubr.bf16.mxu0 %v566
  %1078 = vmatmul.mubr.bf16.gmra.mrb[0].mxu0 %v565
  %v1079 = vpop.f32.mrb[0].mxu0
  %v1080 = vadd.f32 0.0, %v1079
  %v1081 = vpop.f32.mrb[0].mxu0
  %v1082 = vpop.f32.mrb[0].mxu0
  %v1083 = vadd.f32 0.0, %v1082
  %v1084 = vpop.f32.mrb[0].mxu0
  %1085 = vmatprep.mubr.bf16.mxu0 %v568
  %1086 = vmatmul.mubr.bf16.gmra.mrb[0].mxu0 %v567
  %v1087 = vpop.f32.mrb[0].mxu0
  %v1088 = vadd.f32 0.0, %v1087
  %v1089 = vpop.f32.mrb[0].mxu0
  %v1090 = vpop.f32.mrb[0].mxu0
  %v1091 = vadd.f32 0.0, %v1090
  %v1092 = vpop.f32.mrb[0].mxu0
  %1093 = vmatprep.mubr.bf16.mxu0 %v570
  %1094 = vmatmul.mubr.bf16.gmra.mrb[0].mxu0 %v569
  %v1095 = vpop.f32.mrb[0].mxu0
  %v1096 = vadd.f32 0.0, %v1095
  %v1097 = vpop.f32.mrb[0].mxu0
  %v1098 = vpop.f32.mrb[0].mxu0
  %v1099 = vadd.f32 0.0, %v1098
  %v1100 = vpop.f32.mrb[0].mxu0
  %1101 = vmatprep.mubr.bf16.mxu0 %v572
  %1102 = vmatmul.mubr.bf16.gmra.mrb[0].mxu0 %v571
  %v1103 = vpop.f32.mrb[0].mxu0
  %v1104 = vadd.f32 0.0, %v1103
  %v1105 = vpop.f32.mrb[0].mxu0
  %v1106 = vpop.f32.mrb[0].mxu0
  %v1107 = vadd.f32 0.0, %v1106
  %v1108 = vpop.f32.mrb[0].mxu0
  %1109 = vmatprep.mubr.bf16.mxu0 %v574
  %1110 = vmatmul.mubr.bf16.gmra.mrb[0].mxu0 %v573
  %v1111 = vpop.f32.mrb[0].mxu0
  %v1112 = vadd.f32 0.0, %v1111
  %v1113 = vpop.f32.mrb[0].mxu0
  %v1114 = vpop.f32.mrb[0].mxu0
  %v1115 = vadd.f32 0.0, %v1114
  %v1116 = vpop.f32.mrb[0].mxu0
  %1117 = vmatprep.mubr.bf16.mxu0 %v576
  %1118 = vmatmul.mubr.bf16.gmra.mrb[0].mxu0 %v575
  %v1119 = vpop.f32.mrb[0].mxu0
  %v1120 = vadd.f32 0.0, %v1119
  %v1121 = vpop.f32.mrb[0].mxu0
  %v1122 = vpop.f32.mrb[0].mxu0
  %v1123 = vadd.f32 0.0, %v1122
  %v1124 = vpop.f32.mrb[0].mxu0
  %1125 = vmatprep.mubr.bf16.mxu0 %v578
  %1126 = vmatmul.mubr.bf16.gmra.mrb[0].mxu0 %v577
  %v1127 = vpop.f32.mrb[0].mxu0
  %v1128 = vadd.f32 0.0, %v1127
  %v1129 = vpop.f32.mrb[0].mxu0
  %v1130 = vpop.f32.mrb[0].mxu0
  %v1131 = vadd.f32 0.0, %v1130
  %v1132 = vpop.f32.mrb[0].mxu0
  %1133 = vmatprep.mubr.bf16.mxu0 %v580
  %1134 = vmatmul.mubr.bf16.gmra.mrb[0].mxu0 %v579
  %v1135 = vpop.f32.mrb[0].mxu0
  %v1136 = vadd.f32 0.0, %v1135
  %v1137 = vpop.f32.mrb[0].mxu0
  %v1138 = vpop.f32.mrb[0].mxu0
  %v1139 = vadd.f32 0.0, %v1138
  %v1140 = vpop.f32.mrb[0].mxu0
  %1141 = vmatprep.mubr.bf16.mxu0 %v582
  %1142 = vmatmul.mubr.bf16.gmra.mrb[0].mxu0 %v581
  %v1143 = vpop.f32.mrb[0].mxu0
  %v1144 = vadd.f32 0.0, %v1143
  %v1145 = vpop.f32.mrb[0].mxu0
  %v1146 = vpop.f32.mrb[0].mxu0
  %v1147 = vadd.f32 0.0, %v1146
  %v1148 = vpop.f32.mrb[0].mxu0
  %1149 = vmatprep.mubr.bf16.mxu0 %v584
  %1150 = vmatmul.mubr.bf16.gmra.mrb[0].mxu0 %v583
  %v1151 = vpop.f32.mrb[0].mxu0
  %v1152 = vadd.f32 0.0, %v1151
  %v1153 = vpop.f32.mrb[0].mxu0
  %v1154 = vpop.f32.mrb[0].mxu0
  %v1155 = vadd.f32 0.0, %v1154
  %v1156 = vpop.f32.mrb[0].mxu0
  %1157 = vmatprep.mubr.bf16.mxu0 %v586
  %1158 = vmatmul.mubr.bf16.gmra.mrb[0].mxu0 %v585
  %v1159 = vpop.f32.mrb[0].mxu0
  %v1160 = vadd.f32 0.0, %v1159
  %v1161 = vpop.f32.mrb[0].mxu0
  %v1162 = vpop.f32.mrb[0].mxu0
  %v1163 = vadd.f32 0.0, %v1162
  %v1164 = vpop.f32.mrb[0].mxu0
  %1165 = vmatprep.mubr.bf16.mxu0 %v588
  %1166 = vmatmul.mubr.bf16.gmra.mrb[0].mxu0 %v587
  %v1167 = vpop.f32.mrb[0].mxu0
  %v1168 = vadd.f32 0.0, %v1167
  %v1169 = vpop.f32.mrb[0].mxu0
  %v1170 = vpop.f32.mrb[0].mxu0
  %v1171 = vadd.f32 0.0, %v1170
  %v1172 = vpop.f32.mrb[0].mxu0
  %1173 = vmatprep.mubr.bf16.mxu0 %v590
  %1174 = vmatmul.mubr.bf16.gmra.mrb[0].mxu0 %v589
  %v1175 = vpop.f32.mrb[0].mxu0
  %v1176 = vadd.f32 0.0, %v1175
  %v1177 = vpop.f32.mrb[0].mxu0
  %v1178 = vpop.f32.mrb[0].mxu0
  %v1179 = vadd.f32 0.0, %v1178
  %v1180 = vpop.f32.mrb[0].mxu0
  %1181 = vmatprep.mubr.bf16.mxu0 %v592
  %1182 = vmatmul.mubr.bf16.gmra.mrb[0].mxu0 %v591
  %v1183 = vpop.f32.mrb[0].mxu0
  %v1184 = vadd.f32 0.0, %v1183
  %v1185 = vpop.f32.mrb[0].mxu0
  %v1186 = vpop.f32.mrb[0].mxu0
  %v1187 = vadd.f32 0.0, %v1186
  %v1188 = vpop.f32.mrb[0].mxu0
  %1189 = vmatprep.mubr.bf16.mxu0 %v594
  %1190 = vmatmul.mubr.bf16.gmra.mrb[0].mxu0 %v593
  %v1191 = vpop.f32.mrb[0].mxu0
  %v1192 = vadd.f32 0.0, %v1191
  %v1193 = vpop.f32.mrb[0].mxu0
  %v1194 = vpop.f32.mrb[0].mxu0
  %v1195 = vadd.f32 0.0, %v1194
  %v1196 = vpop.f32.mrb[0].mxu0
  %1197 = vmatprep.mubr.bf16.mxu0 %v596
  %1198 = vmatmul.mubr.bf16.gmra.mrb[0].mxu0 %v595
  %v1199 = vpop.f32.mrb[0].mxu0
  %v1200 = vadd.f32 0.0, %v1199
  %v1201 = vpop.f32.mrb[0].mxu0
  %v1202 = vpop.f32.mrb[0].mxu0
  %v1203 = vadd.f32 0.0, %v1202
  %v1204 = vpop.f32.mrb[0].mxu0
  %1205 = vdwg.mxu0
  %v1206 = vld [vmem:[%s4] sm:$0xff]
  %v1207 = vld [vmem:[%s4 + $0x8] sm:$0xff]
  %v1208 = vld [vmem:[%s4 + $0x10] sm:$0xff]
  %v1209 = vld [vmem:[%s4 + $0x18] sm:$0xff]
  %v1210 = vld [vmem:[%s4 + $0x20] sm:$0xff]
  %v1211 = vld [vmem:[%s4 + $0x28] sm:$0xff]
  %v1212 = vld [vmem:[%s4 + $0x30] sm:$0xff]
  %v1213 = vld [vmem:[%s4 + $0x38] sm:$0xff]
  %v1214 = vld [vmem:[%s4 + $0x40] sm:$0xff]
  %v1215 = vld [vmem:[%s4 + $0x48] sm:$0xff]
  %v1216 = vld [vmem:[%s4 + $0x50] sm:$0xff]
  %v1217 = vld [vmem:[%s4 + $0x58] sm:$0xff]
  %v1218 = vld [vmem:[%s4 + $0x60] sm:$0xff]
  %v1219 = vld [vmem:[%s4 + $0x68] sm:$0xff]
  %v1220 = vld [vmem:[%s4 + $0x70] sm:$0xff]
  %v1221 = vld [vmem:[%s4 + $0x78] sm:$0xff]
  %v1222 = vmul.f32 %v824, 0.17677669
  %v1223 = vmul.f32 %v827, 0.17677669
  %v1224 = vmul.f32 %v832, 0.17677669
  %v1225 = vmul.f32 %v835, 0.17677669
  %v1226 = vmul.f32 %v840, 0.17677669
  %v1227 = vmul.f32 %v843, 0.17677669
  %v1228 = vmul.f32 %v848, 0.17677669
  %v1229 = vmul.f32 %v851, 0.17677669
  %v1230 = vpack.c.bf16 %v1223, %v1222
  %v1231 = vpack.c.bf16 %v1225, %v1224
  %v1232 = vpack.c.bf16 %v1227, %v1226
  %v1233 = vpack.c.bf16 %v1229, %v1228
  %v1234 = vpack.c.bf16 %v955, %v952
  %v1235 = vpack.c.bf16 %v963, %v960
  %v1236 = vpack.c.bf16 %v971, %v968
  %v1237 = vpack.c.bf16 %v979, %v976
  %v1238 = vpack.c.bf16 %v1083, %v1080
  %v1239 = vpack.c.bf16 %v1091, %v1088
  %v1240 = vpack.c.bf16 %v1099, %v1096
  %v1241 = vpack.c.bf16 %v1107, %v1104
  %1242 = vxpose.xlu0.c.b16.start [1/8] %v1230, 128
  %1243 = vxpose.xlu0.c.b16.cont [2/8] 0, 128
  %1244 = vxpose.xlu0.c.b16.cont [3/8] 0, 128
  %1245 = vxpose.xlu0.c.b16.cont [4/8] 0, 128
  %1246 = vxpose.xlu0.c.b16.cont [5/8] 0, 128
  %1247 = vxpose.xlu0.c.b16.cont [6/8] 0, 128
  %1248 = vxpose.xlu0.c.b16.cont [7/8] 0, 128
  %1249 = vxpose.xlu0.c.b16.end [8/8] 0, 128
  %v1250 = vpop.trf.xlu0
  %v1251 = vpop.trf.xlu0
  %v1252 = vpop.trf.xlu0
  %v1253 = vpop.trf.xlu0
  %v1254 = vpop.trf.xlu0
  %v1255 = vpop.trf.xlu0
  %v1256 = vpop.trf.xlu0
  %v1257 = vpop.trf.xlu0
  %vm1258 = vcmask 130048
  %v1260 = vsel %vm1258, %v1250, 0
  %v1263 = vsel %vm1258, %v1251, 0
  %v1266 = vsel %vm1258, %v1252, 0
  %v1269 = vsel %vm1258, %v1253, 0
  %v1272 = vsel %vm1258, %v1254, 0
  %v1275 = vsel %vm1258, %v1255, 0
  %v1278 = vsel %vm1258, %v1256, 0
  %v1281 = vsel %vm1258, %v1257, 0
  %1283 = vmatprep.subr.bf16.mxu0 0
  %1284 = vmatpush1.bf16.msra.mxu0 %v1234
  %1285 = vmatprep.subr.bf16.mxu0 0
  %1286 = vmatpush1.bf16.msra.mxu0 0
  %1287 = vmatprep.subr.bf16.mxu0 0
  %1288 = vmatpush1.bf16.msra.mxu0 0
  %1289 = vmatprep.subr.bf16.mxu0 0
  %1290 = vmatpush1.bf16.msra.mxu0 0
  %1291 = vmatprep.subr.bf16.mxu0 0
  %1292 = vmatpush1.bf16.msra.mxu0 0
  %1293 = vmatprep.subr.bf16.mxu0 0
  %1294 = vmatpush1.bf16.msra.mxu0 0
  %1295 = vmatprep.subr.bf16.mxu0 0
  %1296 = vmatpush1.bf16.msra.mxu0 0
  %1297 = vmatprep.subr.bf16.mxu0 0
  %1298 = vmatpush1.bf16.msra.mxu0 0
  %1299 = vmatprep.subr.bf16.mxu0 0
  %1300 = vmatpush1.bf16.msra.mxu0 0
  %1301 = vmatprep.subr.bf16.mxu0 0
  %1302 = vmatpush1.bf16.msra.mxu0 0
  %1303 = vmatprep.subr.bf16.mxu0 0
  %1304 = vmatpush1.bf16.msra.mxu0 0
  %1305 = vmatprep.subr.bf16.mxu0 0
  %1306 = vmatpush1.bf16.msra.mxu0 0
  %1307 = vmatprep.subr.bf16.mxu0 0
  %1308 = vmatpush1.bf16.msra.mxu0 0
  %1309 = vmatprep.subr.bf16.mxu0 0
  %1310 = vmatpush1.bf16.msra.mxu0 0
  %1311 = vmatprep.subr.bf16.mxu0 0
  %1312 = vmatpush1.bf16.msra.mxu0 0
  %1313 = vmatprep.subr.bf16.mxu0 0
  %1314 = vmatpush1.bf16.msra.mxu0 0
  %1315 = vmatprep.mubr.bf16.mxu0 0
  %1316 = vmatmul.mubr.bf16.gmra.mrb[0].mxu0 %v1260
  %v1317 = vpop.f32.mrb[0].mxu0
  %v1318 = vadd.f32 %v1206, %v1317
  %v1319 = vpop.f32.mrb[0].mxu0
  %v1320 = vpop.f32.mrb[0].mxu0
  %v1321 = vadd.f32 %v1207, %v1320
  %v1322 = vpop.f32.mrb[0].mxu0
  %1323 = vmatprep.mubr.bf16.mxu0 0
  %1324 = vmatmul.mubr.bf16.gmra.mrb[0].mxu0 %v1263
  %v1325 = vpop.f32.mrb[0].mxu0
  %v1326 = vadd.f32 %v1208, %v1325
  %v1327 = vpop.f32.mrb[0].mxu0
  %v1328 = vpop.f32.mrb[0].mxu0
  %v1329 = vadd.f32 %v1209, %v1328
  %v1330 = vpop.f32.mrb[0].mxu0
  %1331 = vmatprep.mubr.bf16.mxu0 0
  %1332 = vmatmul.mubr.bf16.gmra.mrb[0].mxu0 %v1266
  %v1333 = vpop.f32.mrb[0].mxu0
  %v1334 = vadd.f32 %v1210, %v1333
  %v1335 = vpop.f32.mrb[0].mxu0
  %v1336 = vpop.f32.mrb[0].mxu0
  %v1337 = vadd.f32 %v1211, %v1336
  %v1338 = vpop.f32.mrb[0].mxu0
  %1339 = vmatprep.mubr.bf16.mxu0 0
  %1340 = vmatmul.mubr.bf16.gmra.mrb[0].mxu0 %v1269
  %v1341 = vpop.f32.mrb[0].mxu0
  %v1342 = vadd.f32 %v1212, %v1341
  %v1343 = vpop.f32.mrb[0].mxu0
  %v1344 = vpop.f32.mrb[0].mxu0
  %v1345 = vadd.f32 %v1213, %v1344
  %v1346 = vpop.f32.mrb[0].mxu0
  %1347 = vmatprep.mubr.bf16.mxu0 0
  %1348 = vmatmul.mubr.bf16.gmra.mrb[0].mxu0 %v1272
  %v1349 = vpop.f32.mrb[0].mxu0
  %v1350 = vadd.f32 %v1214, %v1349
  %v1351 = vpop.f32.mrb[0].mxu0
  %v1352 = vpop.f32.mrb[0].mxu0
  %v1353 = vadd.f32 %v1215, %v1352
  %v1354 = vpop.f32.mrb[0].mxu0
  %1355 = vmatprep.mubr.bf16.mxu0 0
  %1356 = vmatmul.mubr.bf16.gmra.mrb[0].mxu0 %v1275
  %v1357 = vpop.f32.mrb[0].mxu0
  %v1358 = vadd.f32 %v1216, %v1357
  %v1359 = vpop.f32.mrb[0].mxu0
  %v1360 = vpop.f32.mrb[0].mxu0
  %v1361 = vadd.f32 %v1217, %v1360
  %v1362 = vpop.f32.mrb[0].mxu0
  %1363 = vmatprep.mubr.bf16.mxu0 0
  %1364 = vmatmul.mubr.bf16.gmra.mrb[0].mxu0 %v1278
  %v1365 = vpop.f32.mrb[0].mxu0
  %v1366 = vadd.f32 %v1218, %v1365
  %v1367 = vpop.f32.mrb[0].mxu0
  %v1368 = vpop.f32.mrb[0].mxu0
  %v1369 = vadd.f32 %v1219, %v1368
  %v1370 = vpop.f32.mrb[0].mxu0
  %1371 = vmatprep.mubr.bf16.mxu0 0
  %1372 = vmatmul.mubr.bf16.gmra.mrb[0].mxu0 %v1281
  %v1373 = vpop.f32.mrb[0].mxu0
  %v1374 = vadd.f32 %v1220, %v1373
  %v1375 = vpop.f32.mrb[0].mxu0
  %v1376 = vpop.f32.mrb[0].mxu0
  %v1377 = vadd.f32 %v1221, %v1376
  %v1378 = vpop.f32.mrb[0].mxu0
  %1379 = vdwg.mxu0
  %1380 = vxpose.xlu0.c.b16.start [1/8] %v1231, 128
  %1381 = vxpose.xlu0.c.b16.cont [2/8] 0, 128
  %1382 = vxpose.xlu0.c.b16.cont [3/8] 0, 128
  %1383 = vxpose.xlu0.c.b16.cont [4/8] 0, 128
  %1384 = vxpose.xlu0.c.b16.cont [5/8] 0, 128
  %1385 = vxpose.xlu0.c.b16.cont [6/8] 0, 128
  %1386 = vxpose.xlu0.c.b16.cont [7/8] 0, 128
  %1387 = vxpose.xlu0.c.b16.end [8/8] 0, 128
  %v1388 = vpop.trf.xlu0
  %v1389 = vpop.trf.xlu0
  %v1390 = vpop.trf.xlu0
  %v1391 = vpop.trf.xlu0
  %v1392 = vpop.trf.xlu0
  %v1393 = vpop.trf.xlu0
  %v1394 = vpop.trf.xlu0
  %v1395 = vpop.trf.xlu0
  %v1397 = vsel %vm1258, %v1388, 0
  %v1400 = vsel %vm1258, %v1389, 0
  %v1403 = vsel %vm1258, %v1390, 0
  %v1406 = vsel %vm1258, %v1391, 0
  %v1409 = vsel %vm1258, %v1392, 0
  %v1412 = vsel %vm1258, %v1393, 0
  %v1415 = vsel %vm1258, %v1394, 0
  %v1418 = vsel %vm1258, %v1395, 0
  %1420 = vmatprep.subr.bf16.mxu0 0
  %1421 = vmatpush1.bf16.msra.mxu0 %v1235
  %1422 = vmatprep.subr.bf16.mxu0 0
  %1423 = vmatpush1.bf16.msra.mxu0 0
  %1424 = vmatprep.subr.bf16.mxu0 0
  %1425 = vmatpush1.bf16.msra.mxu0 0
  %1426 = vmatprep.subr.bf16.mxu0 0
  %1427 = vmatpush1.bf16.msra.mxu0 0
  %1428 = vmatprep.subr.bf16.mxu0 0
  %1429 = vmatpush1.bf16.msra.mxu0 0
  %1430 = vmatprep.subr.bf16.mxu0 0
  %1431 = vmatpush1.bf16.msra.mxu0 0
  %1432 = vmatprep.subr.bf16.mxu0 0
  %1433 = vmatpush1.bf16.msra.mxu0 0
  %1434 = vmatprep.subr.bf16.mxu0 0
  %1435 = vmatpush1.bf16.msra.mxu0 0
  %1436 = vmatprep.subr.bf16.mxu0 0
  %1437 = vmatpush1.bf16.msra.mxu0 0
  %1438 = vmatprep.subr.bf16.mxu0 0
  %1439 = vmatpush1.bf16.msra.mxu0 0
  %1440 = vmatprep.subr.bf16.mxu0 0
  %1441 = vmatpush1.bf16.msra.mxu0 0
  %1442 = vmatprep.subr.bf16.mxu0 0
  %1443 = vmatpush1.bf16.msra.mxu0 0
  %1444 = vmatprep.subr.bf16.mxu0 0
  %1445 = vmatpush1.bf16.msra.mxu0 0
  %1446 = vmatprep.subr.bf16.mxu0 0
  %1447 = vmatpush1.bf16.msra.mxu0 0
  %1448 = vmatprep.subr.bf16.mxu0 0
  %1449 = vmatpush1.bf16.msra.mxu0 0
  %1450 = vmatprep.subr.bf16.mxu0 0
  %1451 = vmatpush1.bf16.msra.mxu0 0
  %1452 = vmatprep.mubr.bf16.mxu0 0
  %1453 = vmatmul.mubr.bf16.gmra.mrb[0].mxu0 %v1397
  %v1454 = vpop.f32.mrb[0].mxu0
  %v1455 = vadd.f32 %v1206, %v1454
  %v1456 = vpop.f32.mrb[0].mxu0
  %v1457 = vpop.f32.mrb[0].mxu0
  %v1458 = vadd.f32 %v1207, %v1457
  %v1459 = vpop.f32.mrb[0].mxu0
  %1460 = vmatprep.mubr.bf16.mxu0 0
  %1461 = vmatmul.mubr.bf16.gmra.mrb[0].mxu0 %v1400
  %v1462 = vpop.f32.mrb[0].mxu0
  %v1463 = vadd.f32 %v1208, %v1462
  %v1464 = vpop.f32.mrb[0].mxu0
  %v1465 = vpop.f32.mrb[0].mxu0
  %v1466 = vadd.f32 %v1209, %v1465
  %v1467 = vpop.f32.mrb[0].mxu0
  %1468 = vmatprep.mubr.bf16.mxu0 0
  %1469 = vmatmul.mubr.bf16.gmra.mrb[0].mxu0 %v1403
  %v1470 = vpop.f32.mrb[0].mxu0
  %v1471 = vadd.f32 %v1210, %v1470
  %v1472 = vpop.f32.mrb[0].mxu0
  %v1473 = vpop.f32.mrb[0].mxu0
  %v1474 = vadd.f32 %v1211, %v1473
  %v1475 = vpop.f32.mrb[0].mxu0
  %1476 = vmatprep.mubr.bf16.mxu0 0
  %1477 = vmatmul.mubr.bf16.gmra.mrb[0].mxu0 %v1406
  %v1478 = vpop.f32.mrb[0].mxu0
  %v1479 = vadd.f32 %v1212, %v1478
  %v1480 = vpop.f32.mrb[0].mxu0
  %v1481 = vpop.f32.mrb[0].mxu0
  %v1482 = vadd.f32 %v1213, %v1481
  %v1483 = vpop.f32.mrb[0].mxu0
  %1484 = vmatprep.mubr.bf16.mxu0 0
  %1485 = vmatmul.mubr.bf16.gmra.mrb[0].mxu0 %v1409
  %v1486 = vpop.f32.mrb[0].mxu0
  %v1487 = vadd.f32 %v1214, %v1486
  %v1488 = vpop.f32.mrb[0].mxu0
  %v1489 = vpop.f32.mrb[0].mxu0
  %v1490 = vadd.f32 %v1215, %v1489
  %v1491 = vpop.f32.mrb[0].mxu0
  %1492 = vmatprep.mubr.bf16.mxu0 0
  %1493 = vmatmul.mubr.bf16.gmra.mrb[0].mxu0 %v1412
  %v1494 = vpop.f32.mrb[0].mxu0
  %v1495 = vadd.f32 %v1216, %v1494
  %v1496 = vpop.f32.mrb[0].mxu0
  %v1497 = vpop.f32.mrb[0].mxu0
  %v1498 = vadd.f32 %v1217, %v1497
  %v1499 = vpop.f32.mrb[0].mxu0
  %1500 = vmatprep.mubr.bf16.mxu0 0
  %1501 = vmatmul.mubr.bf16.gmra.mrb[0].mxu0 %v1415
  %v1502 = vpop.f32.mrb[0].mxu0
  %v1503 = vadd.f32 %v1218, %v1502
  %v1504 = vpop.f32.mrb[0].mxu0
  %v1505 = vpop.f32.mrb[0].mxu0
  %v1506 = vadd.f32 %v1219, %v1505
  %v1507 = vpop.f32.mrb[0].mxu0
  %1508 = vmatprep.mubr.bf16.mxu0 0
  %1509 = vmatmul.mubr.bf16.gmra.mrb[0].mxu0 %v1418
  %v1510 = vpop.f32.mrb[0].mxu0
  %v1511 = vadd.f32 %v1220, %v1510
  %v1512 = vpop.f32.mrb[0].mxu0
  %v1513 = vpop.f32.mrb[0].mxu0
  %v1514 = vadd.f32 %v1221, %v1513
  %v1515 = vpop.f32.mrb[0].mxu0
  %1516 = vdwg.mxu0
  %1517 = vxpose.xlu0.c.b16.start [1/8] %v1232, 128
  %1518 = vxpose.xlu0.c.b16.cont [2/8] 0, 128
  %1519 = vxpose.xlu0.c.b16.cont [3/8] 0, 128
  %1520 = vxpose.xlu0.c.b16.cont [4/8] 0, 128
  %1521 = vxpose.xlu0.c.b16.cont [5/8] 0, 128
  %1522 = vxpose.xlu0.c.b16.cont [6/8] 0, 128
  %1523 = vxpose.xlu0.c.b16.cont [7/8] 0, 128
  %1524 = vxpose.xlu0.c.b16.end [8/8] 0, 128
  %v1525 = vpop.trf.xlu0
  %v1526 = vpop.trf.xlu0
  %v1527 = vpop.trf.xlu0
  %v1528 = vpop.trf.xlu0
  %v1529 = vpop.trf.xlu0
  %v1530 = vpop.trf.xlu0
  %v1531 = vpop.trf.xlu0
  %v1532 = vpop.trf.xlu0
  %v1534 = vsel %vm1258, %v1525, 0
  %v1537 = vsel %vm1258, %v1526, 0
  %v1540 = vsel %vm1258, %v1527, 0
  %v1543 = vsel %vm1258, %v1528, 0
  %v1546 = vsel %vm1258, %v1529, 0
  %v1549 = vsel %vm1258, %v1530, 0
  %v1552 = vsel %vm1258, %v1531, 0
  %v1555 = vsel %vm1258, %v1532, 0
  %1557 = vmatprep.subr.bf16.mxu0 0
  %1558 = vmatpush1.bf16.msra.mxu0 %v1236
  %1559 = vmatprep.subr.bf16.mxu0 0
  %1560 = vmatpush1.bf16.msra.mxu0 0
  %1561 = vmatprep.subr.bf16.mxu0 0
  %1562 = vmatpush1.bf16.msra.mxu0 0
  %1563 = vmatprep.subr.bf16.mxu0 0
  %1564 = vmatpush1.bf16.msra.mxu0 0
  %1565 = vmatprep.subr.bf16.mxu0 0
  %1566 = vmatpush1.bf16.msra.mxu0 0
  %1567 = vmatprep.subr.bf16.mxu0 0
  %1568 = vmatpush1.bf16.msra.mxu0 0
  %1569 = vmatprep.subr.bf16.mxu0 0
  %1570 = vmatpush1.bf16.msra.mxu0 0
  %1571 = vmatprep.subr.bf16.mxu0 0
  %1572 = vmatpush1.bf16.msra.mxu0 0
  %1573 = vmatprep.subr.bf16.mxu0 0
  %1574 = vmatpush1.bf16.msra.mxu0 0
  %1575 = vmatprep.subr.bf16.mxu0 0
  %1576 = vmatpush1.bf16.msra.mxu0 0
  %1577 = vmatprep.subr.bf16.mxu0 0
  %1578 = vmatpush1.bf16.msra.mxu0 0
  %1579 = vmatprep.subr.bf16.mxu0 0
  %1580 = vmatpush1.bf16.msra.mxu0 0
  %1581 = vmatprep.subr.bf16.mxu0 0
  %1582 = vmatpush1.bf16.msra.mxu0 0
  %1583 = vmatprep.subr.bf16.mxu0 0
  %1584 = vmatpush1.bf16.msra.mxu0 0
  %1585 = vmatprep.subr.bf16.mxu0 0
  %1586 = vmatpush1.bf16.msra.mxu0 0
  %1587 = vmatprep.subr.bf16.mxu0 0
  %1588 = vmatpush1.bf16.msra.mxu0 0
  %1589 = vmatprep.mubr.bf16.mxu0 0
  %1590 = vmatmul.mubr.bf16.gmra.mrb[0].mxu0 %v1534
  %v1591 = vpop.f32.mrb[0].mxu0
  %v1592 = vadd.f32 %v1206, %v1591
  %v1593 = vpop.f32.mrb[0].mxu0
  %v1594 = vpop.f32.mrb[0].mxu0
  %v1595 = vadd.f32 %v1207, %v1594
  %v1596 = vpop.f32.mrb[0].mxu0
  %1597 = vmatprep.mubr.bf16.mxu0 0
  %1598 = vmatmul.mubr.bf16.gmra.mrb[0].mxu0 %v1537
  %v1599 = vpop.f32.mrb[0].mxu0
  %v1600 = vadd.f32 %v1208, %v1599
  %v1601 = vpop.f32.mrb[0].mxu0
  %v1602 = vpop.f32.mrb[0].mxu0
  %v1603 = vadd.f32 %v1209, %v1602
  %v1604 = vpop.f32.mrb[0].mxu0
  %1605 = vmatprep.mubr.bf16.mxu0 0
  %1606 = vmatmul.mubr.bf16.gmra.mrb[0].mxu0 %v1540
  %v1607 = vpop.f32.mrb[0].mxu0
  %v1608 = vadd.f32 %v1210, %v1607
  %v1609 = vpop.f32.mrb[0].mxu0
  %v1610 = vpop.f32.mrb[0].mxu0
  %v1611 = vadd.f32 %v1211, %v1610
  %v1612 = vpop.f32.mrb[0].mxu0
  %1613 = vmatprep.mubr.bf16.mxu0 0
  %1614 = vmatmul.mubr.bf16.gmra.mrb[0].mxu0 %v1543
  %v1615 = vpop.f32.mrb[0].mxu0
  %v1616 = vadd.f32 %v1212, %v1615
  %v1617 = vpop.f32.mrb[0].mxu0
  %v1618 = vpop.f32.mrb[0].mxu0
  %v1619 = vadd.f32 %v1213, %v1618
  %v1620 = vpop.f32.mrb[0].mxu0
  %1621 = vmatprep.mubr.bf16.mxu0 0
  %1622 = vmatmul.mubr.bf16.gmra.mrb[0].mxu0 %v1546
  %v1623 = vpop.f32.mrb[0].mxu0
  %v1624 = vadd.f32 %v1214, %v1623
  %v1625 = vpop.f32.mrb[0].mxu0
  %v1626 = vpop.f32.mrb[0].mxu0
  %v1627 = vadd.f32 %v1215, %v1626
  %v1628 = vpop.f32.mrb[0].mxu0
  %1629 = vmatprep.mubr.bf16.mxu0 0
  %1630 = vmatmul.mubr.bf16.gmra.mrb[0].mxu0 %v1549
  %v1631 = vpop.f32.mrb[0].mxu0
  %v1632 = vadd.f32 %v1216, %v1631
  %v1633 = vpop.f32.mrb[0].mxu0
  %v1634 = vpop.f32.mrb[0].mxu0
  %v1635 = vadd.f32 %v1217, %v1634
  %v1636 = vpop.f32.mrb[0].mxu0
  %1637 = vmatprep.mubr.bf16.mxu0 0
  %1638 = vmatmul.mubr.bf16.gmra.mrb[0].mxu0 %v1552
  %v1639 = vpop.f32.mrb[0].mxu0
  %v1640 = vadd.f32 %v1218, %v1639
  %v1641 = vpop.f32.mrb[0].mxu0
  %v1642 = vpop.f32.mrb[0].mxu0
  %v1643 = vadd.f32 %v1219, %v1642
  %v1644 = vpop.f32.mrb[0].mxu0
  %1645 = vmatprep.mubr.bf16.mxu0 0
  %1646 = vmatmul.mubr.bf16.gmra.mrb[0].mxu0 %v1555
  %v1647 = vpop.f32.mrb[0].mxu0
  %v1648 = vadd.f32 %v1220, %v1647
  %v1649 = vpop.f32.mrb[0].mxu0
  %v1650 = vpop.f32.mrb[0].mxu0
  %v1651 = vadd.f32 %v1221, %v1650
  %v1652 = vpop.f32.mrb[0].mxu0
  %1653 = vdwg.mxu0
  %1654 = vxpose.xlu0.c.b16.start [1/8] %v1233, 128
  %1655 = vxpose.xlu0.c.b16.cont [2/8] 0, 128
  %1656 = vxpose.xlu0.c.b16.cont [3/8] 0, 128
  %1657 = vxpose.xlu0.c.b16.cont [4/8] 0, 128
  %1658 = vxpose.xlu0.c.b16.cont [5/8] 0, 128
  %1659 = vxpose.xlu0.c.b16.cont [6/8] 0, 128
  %1660 = vxpose.xlu0.c.b16.cont [7/8] 0, 128
  %1661 = vxpose.xlu0.c.b16.end [8/8] 0, 128
  %v1662 = vpop.trf.xlu0
  %v1663 = vpop.trf.xlu0
  %v1664 = vpop.trf.xlu0
  %v1665 = vpop.trf.xlu0
  %v1666 = vpop.trf.xlu0
  %v1667 = vpop.trf.xlu0
  %v1668 = vpop.trf.xlu0
  %v1669 = vpop.trf.xlu0
  %v1671 = vsel %vm1258, %v1662, 0
  %v1674 = vsel %vm1258, %v1663, 0
  %v1677 = vsel %vm1258, %v1664, 0
  %v1680 = vsel %vm1258, %v1665, 0
  %v1683 = vsel %vm1258, %v1666, 0
  %v1686 = vsel %vm1258, %v1667, 0
  %v1689 = vsel %vm1258, %v1668, 0
  %v1692 = vsel %vm1258, %v1669, 0
  %1694 = vmatprep.subr.bf16.mxu0 0
  %1695 = vmatpush1.bf16.msra.mxu0 %v1237
  %1696 = vmatprep.subr.bf16.mxu0 0
  %1697 = vmatpush1.bf16.msra.mxu0 0
  %1698 = vmatprep.subr.bf16.mxu0 0
  %1699 = vmatpush1.bf16.msra.mxu0 0
  %1700 = vmatprep.subr.bf16.mxu0 0
  %1701 = vmatpush1.bf16.msra.mxu0 0
  %1702 = vmatprep.subr.bf16.mxu0 0
  %1703 = vmatpush1.bf16.msra.mxu0 0
  %1704 = vmatprep.subr.bf16.mxu0 0
  %1705 = vmatpush1.bf16.msra.mxu0 0
  %1706 = vmatprep.subr.bf16.mxu0 0
  %1707 = vmatpush1.bf16.msra.mxu0 0
  %1708 = vmatprep.subr.bf16.mxu0 0
  %1709 = vmatpush1.bf16.msra.mxu0 0
  %1710 = vmatprep.subr.bf16.mxu0 0
  %1711 = vmatpush1.bf16.msra.mxu0 0
  %1712 = vmatprep.subr.bf16.mxu0 0
  %1713 = vmatpush1.bf16.msra.mxu0 0
  %1714 = vmatprep.subr.bf16.mxu0 0
  %1715 = vmatpush1.bf16.msra.mxu0 0
  %1716 = vmatprep.subr.bf16.mxu0 0
  %1717 = vmatpush1.bf16.msra.mxu0 0
  %1718 = vmatprep.subr.bf16.mxu0 0
  %1719 = vmatpush1.bf16.msra.mxu0 0
  %1720 = vmatprep.subr.bf16.mxu0 0
  %1721 = vmatpush1.bf16.msra.mxu0 0
  %1722 = vmatprep.subr.bf16.mxu0 0
  %1723 = vmatpush1.bf16.msra.mxu0 0
  %1724 = vmatprep.subr.bf16.mxu0 0
  %1725 = vmatpush1.bf16.msra.mxu0 0
  %1726 = vmatprep.mubr.bf16.mxu0 0
  %1727 = vmatmul.mubr.bf16.gmra.mrb[0].mxu0 %v1671
  %v1728 = vpop.f32.mrb[0].mxu0
  %v1729 = vadd.f32 %v1206, %v1728
  %v1730 = vpop.f32.mrb[0].mxu0
  %v1731 = vpop.f32.mrb[0].mxu0
  %v1732 = vadd.f32 %v1207, %v1731
  %v1733 = vpop.f32.mrb[0].mxu0
  %1734 = vmatprep.mubr.bf16.mxu0 0
  %1735 = vmatmul.mubr.bf16.gmra.mrb[0].mxu0 %v1674
  %v1736 = vpop.f32.mrb[0].mxu0
  %v1737 = vadd.f32 %v1208, %v1736
  %v1738 = vpop.f32.mrb[0].mxu0
  %v1739 = vpop.f32.mrb[0].mxu0
  %v1740 = vadd.f32 %v1209, %v1739
  %v1741 = vpop.f32.mrb[0].mxu0
  %1742 = vmatprep.mubr.bf16.mxu0 0
  %1743 = vmatmul.mubr.bf16.gmra.mrb[0].mxu0 %v1677
  %v1744 = vpop.f32.mrb[0].mxu0
  %v1745 = vadd.f32 %v1210, %v1744
  %v1746 = vpop.f32.mrb[0].mxu0
  %v1747 = vpop.f32.mrb[0].mxu0
  %v1748 = vadd.f32 %v1211, %v1747
  %v1749 = vpop.f32.mrb[0].mxu0
  %1750 = vmatprep.mubr.bf16.mxu0 0
  %1751 = vmatmul.mubr.bf16.gmra.mrb[0].mxu0 %v1680
  %v1752 = vpop.f32.mrb[0].mxu0
  %v1753 = vadd.f32 %v1212, %v1752
  %v1754 = vpop.f32.mrb[0].mxu0
  %v1755 = vpop.f32.mrb[0].mxu0
  %v1756 = vadd.f32 %v1213, %v1755
  %v1757 = vpop.f32.mrb[0].mxu0
  %1758 = vmatprep.mubr.bf16.mxu0 0
  %1759 = vmatmul.mubr.bf16.gmra.mrb[0].mxu0 %v1683
  %v1760 = vpop.f32.mrb[0].mxu0
  %v1761 = vadd.f32 %v1214, %v1760
  %v1762 = vpop.f32.mrb[0].mxu0
  %v1763 = vpop.f32.mrb[0].mxu0
  %v1764 = vadd.f32 %v1215, %v1763
  %v1765 = vpop.f32.mrb[0].mxu0
  %1766 = vmatprep.mubr.bf16.mxu0 0
  %1767 = vmatmul.mubr.bf16.gmra.mrb[0].mxu0 %v1686
  %v1768 = vpop.f32.mrb[0].mxu0
  %v1769 = vadd.f32 %v1216, %v1768
  %v1770 = vpop.f32.mrb[0].mxu0
  %v1771 = vpop.f32.mrb[0].mxu0
  %v1772 = vadd.f32 %v1217, %v1771
  %v1773 = vpop.f32.mrb[0].mxu0
  %1774 = vmatprep.mubr.bf16.mxu0 0
  %1775 = vmatmul.mubr.bf16.gmra.mrb[0].mxu0 %v1689
  %v1776 = vpop.f32.mrb[0].mxu0
  %v1777 = vadd.f32 %v1218, %v1776
  %v1778 = vpop.f32.mrb[0].mxu0
  %v1779 = vpop.f32.mrb[0].mxu0
  %v1780 = vadd.f32 %v1219, %v1779
  %v1781 = vpop.f32.mrb[0].mxu0
  %1782 = vmatprep.mubr.bf16.mxu0 0
  %1783 = vmatmul.mubr.bf16.gmra.mrb[0].mxu0 %v1692
  %v1784 = vpop.f32.mrb[0].mxu0
  %v1785 = vadd.f32 %v1220, %v1784
  %v1786 = vpop.f32.mrb[0].mxu0
  %v1787 = vpop.f32.mrb[0].mxu0
  %v1788 = vadd.f32 %v1221, %v1787
  %v1789 = vpop.f32.mrb[0].mxu0
  %1790 = vdwg.mxu0
  %1791 = vmax.xlane.f32.xlu0 %v1318
  %v1792 = vpop.xlane.xlu0 %1791
  %1793 = vmax.xlane.f32.xlu0 %v1321
  %v1794 = vpop.xlane.xlu0 %1793
  %1795 = vmax.xlane.f32.xlu0 %v1326
  %v1796 = vpop.xlane.xlu0 %1795
  %1797 = vmax.xlane.f32.xlu0 %v1329
  %v1798 = vpop.xlane.xlu0 %1797
  %1799 = vmax.xlane.f32.xlu0 %v1334
  %v1800 = vpop.xlane.xlu0 %1799
  %1801 = vmax.xlane.f32.xlu0 %v1337
  %v1802 = vpop.xlane.xlu0 %1801
  %1803 = vmax.xlane.f32.xlu0 %v1342
  %v1804 = vpop.xlane.xlu0 %1803
  %1805 = vmax.xlane.f32.xlu0 %v1345
  %v1806 = vpop.xlane.xlu0 %1805
  %1807 = vmax.xlane.f32.xlu0 %v1350
  %v1808 = vpop.xlane.xlu0 %1807
  %1809 = vmax.xlane.f32.xlu0 %v1353
  %v1810 = vpop.xlane.xlu0 %1809
  %1811 = vmax.xlane.f32.xlu0 %v1358
  %v1812 = vpop.xlane.xlu0 %1811
  %1813 = vmax.xlane.f32.xlu0 %v1361
  %v1814 = vpop.xlane.xlu0 %1813
  %1815 = vmax.xlane.f32.xlu0 %v1366
  %v1816 = vpop.xlane.xlu0 %1815
  %1817 = vmax.xlane.f32.xlu0 %v1369
  %v1818 = vpop.xlane.xlu0 %1817
  %1819 = vmax.xlane.f32.xlu0 %v1374
  %v1820 = vpop.xlane.xlu0 %1819
  %1821 = vmax.xlane.f32.xlu0 %v1377
  %v1822 = vpop.xlane.xlu0 %1821
  %1823 = vmax.xlane.f32.xlu0 %v1455
  %v1824 = vpop.xlane.xlu0 %1823
  %1825 = vmax.xlane.f32.xlu0 %v1458
  %v1826 = vpop.xlane.xlu0 %1825
  %1827 = vmax.xlane.f32.xlu0 %v1463
  %v1828 = vpop.xlane.xlu0 %1827
  %1829 = vmax.xlane.f32.xlu0 %v1466
  %v1830 = vpop.xlane.xlu0 %1829
  %1831 = vmax.xlane.f32.xlu0 %v1471
  %v1832 = vpop.xlane.xlu0 %1831
  %1833 = vmax.xlane.f32.xlu0 %v1474
  %v1834 = vpop.xlane.xlu0 %1833
  %1835 = vmax.xlane.f32.xlu0 %v1479
  %v1836 = vpop.xlane.xlu0 %1835
  %1837 = vmax.xlane.f32.xlu0 %v1482
  %v1838 = vpop.xlane.xlu0 %1837
  %1839 = vmax.xlane.f32.xlu0 %v1487
  %v1840 = vpop.xlane.xlu0 %1839
  %1841 = vmax.xlane.f32.xlu0 %v1490
  %v1842 = vpop.xlane.xlu0 %1841
  %1843 = vmax.xlane.f32.xlu0 %v1495
  %v1844 = vpop.xlane.xlu0 %1843
  %1845 = vmax.xlane.f32.xlu0 %v1498
  %v1846 = vpop.xlane.xlu0 %1845
  %1847 = vmax.xlane.f32.xlu0 %v1503
  %v1848 = vpop.xlane.xlu0 %1847
  %1849 = vmax.xlane.f32.xlu0 %v1506
  %v1850 = vpop.xlane.xlu0 %1849
  %1851 = vmax.xlane.f32.xlu0 %v1511
  %v1852 = vpop.xlane.xlu0 %1851
  %1853 = vmax.xlane.f32.xlu0 %v1514
  %v1854 = vpop.xlane.xlu0 %1853
  %1855 = vmax.xlane.f32.xlu0 %v1592
  %v1856 = vpop.xlane.xlu0 %1855
  %1857 = vmax.xlane.f32.xlu0 %v1595
  %v1858 = vpop.xlane.xlu0 %1857
  %1859 = vmax.xlane.f32.xlu0 %v1600
  %v1860 = vpop.xlane.xlu0 %1859
  %1861 = vmax.xlane.f32.xlu0 %v1603
  %v1862 = vpop.xlane.xlu0 %1861
  %1863 = vmax.xlane.f32.xlu0 %v1608
  %v1864 = vpop.xlane.xlu0 %1863
  %1865 = vmax.xlane.f32.xlu0 %v1611
  %v1866 = vpop.xlane.xlu0 %1865
  %1867 = vmax.xlane.f32.xlu0 %v1616
  %v1868 = vpop.xlane.xlu0 %1867
  %1869 = vmax.xlane.f32.xlu0 %v1619
  %v1870 = vpop.xlane.xlu0 %1869
  %1871 = vmax.xlane.f32.xlu0 %v1624
  %v1872 = vpop.xlane.xlu0 %1871
  %1873 = vmax.xlane.f32.xlu0 %v1627
  %v1874 = vpop.xlane.xlu0 %1873
  %1875 = vmax.xlane.f32.xlu0 %v1632
  %v1876 = vpop.xlane.xlu0 %1875
  %1877 = vmax.xlane.f32.xlu0 %v1635
  %v1878 = vpop.xlane.xlu0 %1877
  %1879 = vmax.xlane.f32.xlu0 %v1640
  %v1880 = vpop.xlane.xlu0 %1879
  %1881 = vmax.xlane.f32.xlu0 %v1643
  %v1882 = vpop.xlane.xlu0 %1881
  %1883 = vmax.xlane.f32.xlu0 %v1648
  %v1884 = vpop.xlane.xlu0 %1883
  %1885 = vmax.xlane.f32.xlu0 %v1651
  %v1886 = vpop.xlane.xlu0 %1885
  %1887 = vmax.xlane.f32.xlu0 %v1729
  %v1888 = vpop.xlane.xlu0 %1887
  %1889 = vmax.xlane.f32.xlu0 %v1732
  %v1890 = vpop.xlane.xlu0 %1889
  %1891 = vmax.xlane.f32.xlu0 %v1737
  %v1892 = vpop.xlane.xlu0 %1891
  %1893 = vmax.xlane.f32.xlu0 %v1740
  %v1894 = vpop.xlane.xlu0 %1893
  %1895 = vmax.xlane.f32.xlu0 %v1745
  %v1896 = vpop.xlane.xlu0 %1895
  %1897 = vmax.xlane.f32.xlu0 %v1748
  %v1898 = vpop.xlane.xlu0 %1897
  %1899 = vmax.xlane.f32.xlu0 %v1753
  %v1900 = vpop.xlane.xlu0 %1899
  %1901 = vmax.xlane.f32.xlu0 %v1756
  %v1902 = vpop.xlane.xlu0 %1901
  %1903 = vmax.xlane.f32.xlu0 %v1761
  %v1904 = vpop.xlane.xlu0 %1903
  %1905 = vmax.xlane.f32.xlu0 %v1764
  %v1906 = vpop.xlane.xlu0 %1905
  %1907 = vmax.xlane.f32.xlu0 %v1769
  %v1908 = vpop.xlane.xlu0 %1907
  %1909 = vmax.xlane.f32.xlu0 %v1772
  %v1910 = vpop.xlane.xlu0 %1909
  %1911 = vmax.xlane.f32.xlu0 %v1777
  %v1912 = vpop.xlane.xlu0 %1911
  %1913 = vmax.xlane.f32.xlu0 %v1780
  %v1914 = vpop.xlane.xlu0 %1913
  %1915 = vmax.xlane.f32.xlu0 %v1785
  %v1916 = vpop.xlane.xlu0 %1915
  %1917 = vmax.xlane.f32.xlu0 %v1788
  %v1918 = vpop.xlane.xlu0 %1917
  %v1919 = vsub.f32 %v1318, %v1792
  %v1920 = vsub.f32 %v1321, %v1794
  %v1921 = vsub.f32 %v1326, %v1796
  %v1922 = vsub.f32 %v1329, %v1798
  %v1923 = vsub.f32 %v1334, %v1800
  %v1924 = vsub.f32 %v1337, %v1802
  %v1925 = vsub.f32 %v1342, %v1804
  %v1926 = vsub.f32 %v1345, %v1806
  %v1927 = vsub.f32 %v1350, %v1808
  %v1928 = vsub.f32 %v1353, %v1810
  %v1929 = vsub.f32 %v1358, %v1812
  %v1930 = vsub.f32 %v1361, %v1814
  %v1931 = vsub.f32 %v1366, %v1816
  %v1932 = vsub.f32 %v1369, %v1818
  %v1933 = vsub.f32 %v1374, %v1820
  %v1934 = vsub.f32 %v1377, %v1822
  %v1935 = vsub.f32 %v1455, %v1824
  %v1936 = vsub.f32 %v1458, %v1826
  %v1937 = vsub.f32 %v1463, %v1828
  %v1938 = vsub.f32 %v1466, %v1830
  %v1939 = vsub.f32 %v1471, %v1832
  %v1940 = vsub.f32 %v1474, %v1834
  %v1941 = vsub.f32 %v1479, %v1836
  %v1942 = vsub.f32 %v1482, %v1838
  %v1943 = vsub.f32 %v1487, %v1840
  %v1944 = vsub.f32 %v1490, %v1842
  %v1945 = vsub.f32 %v1495, %v1844
  %v1946 = vsub.f32 %v1498, %v1846
  %v1947 = vsub.f32 %v1503, %v1848
  %v1948 = vsub.f32 %v1506, %v1850
  %v1949 = vsub.f32 %v1511, %v1852
  %v1950 = vsub.f32 %v1514, %v1854
  %v1951 = vsub.f32 %v1592, %v1856
  %v1952 = vsub.f32 %v1595, %v1858
  %v1953 = vsub.f32 %v1600, %v1860
  %v1954 = vsub.f32 %v1603, %v1862
  %v1955 = vsub.f32 %v1608, %v1864
  %v1956 = vsub.f32 %v1611, %v1866
  %v1957 = vsub.f32 %v1616, %v1868
  %v1958 = vsub.f32 %v1619, %v1870
  %v1959 = vsub.f32 %v1624, %v1872
  %v1960 = vsub.f32 %v1627, %v1874
  %v1961 = vsub.f32 %v1632, %v1876
  %v1962 = vsub.f32 %v1635, %v1878
  %v1963 = vsub.f32 %v1640, %v1880
  %v1964 = vsub.f32 %v1643, %v1882
  %v1965 = vsub.f32 %v1648, %v1884
  %v1966 = vsub.f32 %v1651, %v1886
  %v1967 = vsub.f32 %v1729, %v1888
  %v1968 = vsub.f32 %v1732, %v1890
  %v1969 = vsub.f32 %v1737, %v1892
  %v1970 = vsub.f32 %v1740, %v1894
  %v1971 = vsub.f32 %v1745, %v1896
  %v1972 = vsub.f32 %v1748, %v1898
  %v1973 = vsub.f32 %v1753, %v1900
  %v1974 = vsub.f32 %v1756, %v1902
  %v1975 = vsub.f32 %v1761, %v1904
  %v1976 = vsub.f32 %v1764, %v1906
  %v1977 = vsub.f32 %v1769, %v1908
  %v1978 = vsub.f32 %v1772, %v1910
  %v1979 = vsub.f32 %v1777, %v1912
  %v1980 = vsub.f32 %v1780, %v1914
  %v1981 = vsub.f32 %v1785, %v1916
  %v1982 = vsub.f32 %v1788, %v1918
  %v1983 = vmul.f32 %v1919, 1.442695
  %v1984 = vpow.pop %v1983
  %v1985 = vmul.f32 %v1920, 1.442695
  %v1986 = vpow.pop %v1985
  %v1987 = vmul.f32 %v1921, 1.442695
  %v1988 = vpow.pop %v1987
  %v1989 = vmul.f32 %v1922, 1.442695
  %v1990 = vpow.pop %v1989
  %v1991 = vmul.f32 %v1923, 1.442695
  %v1992 = vpow.pop %v1991
  %v1993 = vmul.f32 %v1924, 1.442695
  %v1994 = vpow.pop %v1993
  %v1995 = vmul.f32 %v1925, 1.442695
  %v1996 = vpow.pop %v1995
  %v1997 = vmul.f32 %v1926, 1.442695
  %v1998 = vpow.pop %v1997
  %v1999 = vmul.f32 %v1927, 1.442695
  %v2000 = vpow.pop %v1999
  %v2001 = vmul.f32 %v1928, 1.442695
  %v2002 = vpow.pop %v2001
  %v2003 = vmul.f32 %v1929, 1.442695
  %v2004 = vpow.pop %v2003
  %v2005 = vmul.f32 %v1930, 1.442695
  %v2006 = vpow.pop %v2005
  %v2007 = vmul.f32 %v1931, 1.442695
  %v2008 = vpow.pop %v2007
  %v2009 = vmul.f32 %v1932, 1.442695
  %v2010 = vpow.pop %v2009
  %v2011 = vmul.f32 %v1933, 1.442695
  %v2012 = vpow.pop %v2011
  %v2013 = vmul.f32 %v1934, 1.442695
  %v2014 = vpow.pop %v2013
  %v2015 = vmul.f32 %v1935, 1.442695
  %v2016 = vpow.pop %v2015
  %v2017 = vmul.f32 %v1936, 1.442695
  %v2018 = vpow.pop %v2017
  %v2019 = vmul.f32 %v1937, 1.442695
  %v2020 = vpow.pop %v2019
  %v2021 = vmul.f32 %v1938, 1.442695
  %v2022 = vpow.pop %v2021
  %v2023 = vmul.f32 %v1939, 1.442695
  %v2024 = vpow.pop %v2023
  %v2025 = vmul.f32 %v1940, 1.442695
  %v2026 = vpow.pop %v2025
  %v2027 = vmul.f32 %v1941, 1.442695
  %v2028 = vpow.pop %v2027
  %v2029 = vmul.f32 %v1942, 1.442695
  %v2030 = vpow.pop %v2029
  %v2031 = vmul.f32 %v1943, 1.442695
  %v2032 = vpow.pop %v2031
  %v2033 = vmul.f32 %v1944, 1.442695
  %v2034 = vpow.pop %v2033
  %v2035 = vmul.f32 %v1945, 1.442695
  %v2036 = vpow.pop %v2035
  %v2037 = vmul.f32 %v1946, 1.442695
  %v2038 = vpow.pop %v2037
  %v2039 = vmul.f32 %v1947, 1.442695
  %v2040 = vpow.pop %v2039
  %v2041 = vmul.f32 %v1948, 1.442695
  %v2042 = vpow.pop %v2041
  %v2043 = vmul.f32 %v1949, 1.442695
  %v2044 = vpow.pop %v2043
  %v2045 = vmul.f32 %v1950, 1.442695
  %v2046 = vpow.pop %v2045
  %v2047 = vmul.f32 %v1951, 1.442695
  %v2048 = vpow.pop %v2047
  %v2049 = vmul.f32 %v1952, 1.442695
  %v2050 = vpow.pop %v2049
  %v2051 = vmul.f32 %v1953, 1.442695
  %v2052 = vpow.pop %v2051
  %v2053 = vmul.f32 %v1954, 1.442695
  %v2054 = vpow.pop %v2053
  %v2055 = vmul.f32 %v1955, 1.442695
  %v2056 = vpow.pop %v2055
  %v2057 = vmul.f32 %v1956, 1.442695
  %v2058 = vpow.pop %v2057
  %v2059 = vmul.f32 %v1957, 1.442695
  %v2060 = vpow.pop %v2059
  %v2061 = vmul.f32 %v1958, 1.442695
  %v2062 = vpow.pop %v2061
  %v2063 = vmul.f32 %v1959, 1.442695
  %v2064 = vpow.pop %v2063
  %v2065 = vmul.f32 %v1960, 1.442695
  %v2066 = vpow.pop %v2065
  %v2067 = vmul.f32 %v1961, 1.442695
  %v2068 = vpow.pop %v2067
  %v2069 = vmul.f32 %v1962, 1.442695
  %v2070 = vpow.pop %v2069
  %v2071 = vmul.f32 %v1963, 1.442695
  %v2072 = vpow.pop %v2071
  %v2073 = vmul.f32 %v1964, 1.442695
  %v2074 = vpow.pop %v2073
  %v2075 = vmul.f32 %v1965, 1.442695
  %v2076 = vpow.pop %v2075
  %v2077 = vmul.f32 %v1966, 1.442695
  %v2078 = vpow.pop %v2077
  %v2079 = vmul.f32 %v1967, 1.442695
  %v2080 = vpow.pop %v2079
  %v2081 = vmul.f32 %v1968, 1.442695
  %v2082 = vpow.pop %v2081
  %v2083 = vmul.f32 %v1969, 1.442695
  %v2084 = vpow.pop %v2083
  %v2085 = vmul.f32 %v1970, 1.442695
  %v2086 = vpow.pop %v2085
  %v2087 = vmul.f32 %v1971, 1.442695
  %v2088 = vpow.pop %v2087
  %v2089 = vmul.f32 %v1972, 1.442695
  %v2090 = vpow.pop %v2089
  %v2091 = vmul.f32 %v1973, 1.442695
  %v2092 = vpow.pop %v2091
  %v2093 = vmul.f32 %v1974, 1.442695
  %v2094 = vpow.pop %v2093
  %v2095 = vmul.f32 %v1975, 1.442695
  %v2096 = vpow.pop %v2095
  %v2097 = vmul.f32 %v1976, 1.442695
  %v2098 = vpow.pop %v2097
  %v2099 = vmul.f32 %v1977, 1.442695
  %v2100 = vpow.pop %v2099
  %v2101 = vmul.f32 %v1978, 1.442695
  %v2102 = vpow.pop %v2101
  %v2103 = vmul.f32 %v1979, 1.442695
  %v2104 = vpow.pop %v2103
  %v2105 = vmul.f32 %v1980, 1.442695
  %v2106 = vpow.pop %v2105
  %v2107 = vmul.f32 %v1981, 1.442695
  %v2108 = vpow.pop %v2107
  %v2109 = vmul.f32 %v1982, 1.442695
  %v2110 = vpow.pop %v2109
  %2111 = vadd.xlane.f32.xlu0 %v1984
  %v2112 = vpop.xlane.xlu0 %2111
  %2113 = vadd.xlane.f32.xlu0 %v1986
  %v2114 = vpop.xlane.xlu0 %2113
  %2115 = vadd.xlane.f32.xlu0 %v1988
  %v2116 = vpop.xlane.xlu0 %2115
  %2117 = vadd.xlane.f32.xlu0 %v1990
  %v2118 = vpop.xlane.xlu0 %2117
  %2119 = vadd.xlane.f32.xlu0 %v1992
  %v2120 = vpop.xlane.xlu0 %2119
  %2121 = vadd.xlane.f32.xlu0 %v1994
  %v2122 = vpop.xlane.xlu0 %2121
  %2123 = vadd.xlane.f32.xlu0 %v1996
  %v2124 = vpop.xlane.xlu0 %2123
  %2125 = vadd.xlane.f32.xlu0 %v1998
  %v2126 = vpop.xlane.xlu0 %2125
  %2127 = vadd.xlane.f32.xlu0 %v2000
  %v2128 = vpop.xlane.xlu0 %2127
  %2129 = vadd.xlane.f32.xlu0 %v2002
  %v2130 = vpop.xlane.xlu0 %2129
  %2131 = vadd.xlane.f32.xlu0 %v2004
  %v2132 = vpop.xlane.xlu0 %2131
  %2133 = vadd.xlane.f32.xlu0 %v2006
  %v2134 = vpop.xlane.xlu0 %2133
  %2135 = vadd.xlane.f32.xlu0 %v2008
  %v2136 = vpop.xlane.xlu0 %2135
  %2137 = vadd.xlane.f32.xlu0 %v2010
  %v2138 = vpop.xlane.xlu0 %2137
  %2139 = vadd.xlane.f32.xlu0 %v2012
  %v2140 = vpop.xlane.xlu0 %2139
  %2141 = vadd.xlane.f32.xlu0 %v2014
  %v2142 = vpop.xlane.xlu0 %2141
  %2143 = vadd.xlane.f32.xlu0 %v2016
  %v2144 = vpop.xlane.xlu0 %2143
  %2145 = vadd.xlane.f32.xlu0 %v2018
  %v2146 = vpop.xlane.xlu0 %2145
  %2147 = vadd.xlane.f32.xlu0 %v2020
  %v2148 = vpop.xlane.xlu0 %2147
  %2149 = vadd.xlane.f32.xlu0 %v2022
  %v2150 = vpop.xlane.xlu0 %2149
  %2151 = vadd.xlane.f32.xlu0 %v2024
  %v2152 = vpop.xlane.xlu0 %2151
  %2153 = vadd.xlane.f32.xlu0 %v2026
  %v2154 = vpop.xlane.xlu0 %2153
  %2155 = vadd.xlane.f32.xlu0 %v2028
  %v2156 = vpop.xlane.xlu0 %2155
  %2157 = vadd.xlane.f32.xlu0 %v2030
  %v2158 = vpop.xlane.xlu0 %2157
  %2159 = vadd.xlane.f32.xlu0 %v2032
  %v2160 = vpop.xlane.xlu0 %2159
  %2161 = vadd.xlane.f32.xlu0 %v2034
  %v2162 = vpop.xlane.xlu0 %2161
  %2163 = vadd.xlane.f32.xlu0 %v2036
  %v2164 = vpop.xlane.xlu0 %2163
  %2165 = vadd.xlane.f32.xlu0 %v2038
  %v2166 = vpop.xlane.xlu0 %2165
  %2167 = vadd.xlane.f32.xlu0 %v2040
  %v2168 = vpop.xlane.xlu0 %2167
  %2169 = vadd.xlane.f32.xlu0 %v2042
  %v2170 = vpop.xlane.xlu0 %2169
  %2171 = vadd.xlane.f32.xlu0 %v2044
  %v2172 = vpop.xlane.xlu0 %2171
  %2173 = vadd.xlane.f32.xlu0 %v2046
  %v2174 = vpop.xlane.xlu0 %2173
  %2175 = vadd.xlane.f32.xlu0 %v2048
  %v2176 = vpop.xlane.xlu0 %2175
  %2177 = vadd.xlane.f32.xlu0 %v2050
  %v2178 = vpop.xlane.xlu0 %2177
  %2179 = vadd.xlane.f32.xlu0 %v2052
  %v2180 = vpop.xlane.xlu0 %2179
  %2181 = vadd.xlane.f32.xlu0 %v2054
  %v2182 = vpop.xlane.xlu0 %2181
  %2183 = vadd.xlane.f32.xlu0 %v2056
  %v2184 = vpop.xlane.xlu0 %2183
  %2185 = vadd.xlane.f32.xlu0 %v2058
  %v2186 = vpop.xlane.xlu0 %2185
  %2187 = vadd.xlane.f32.xlu0 %v2060
  %v2188 = vpop.xlane.xlu0 %2187
  %2189 = vadd.xlane.f32.xlu0 %v2062
  %v2190 = vpop.xlane.xlu0 %2189
  %2191 = vadd.xlane.f32.xlu0 %v2064
  %v2192 = vpop.xlane.xlu0 %2191
  %2193 = vadd.xlane.f32.xlu0 %v2066
  %v2194 = vpop.xlane.xlu0 %2193
  %2195 = vadd.xlane.f32.xlu0 %v2068
  %v2196 = vpop.xlane.xlu0 %2195
  %2197 = vadd.xlane.f32.xlu0 %v2070
  %v2198 = vpop.xlane.xlu0 %2197
  %2199 = vadd.xlane.f32.xlu0 %v2072
  %v2200 = vpop.xlane.xlu0 %2199
  %2201 = vadd.xlane.f32.xlu0 %v2074
  %v2202 = vpop.xlane.xlu0 %2201
  %2203 = vadd.xlane.f32.xlu0 %v2076
  %v2204 = vpop.xlane.xlu0 %2203
  %2205 = vadd.xlane.f32.xlu0 %v2078
  %v2206 = vpop.xlane.xlu0 %2205
  %2207 = vadd.xlane.f32.xlu0 %v2080
  %v2208 = vpop.xlane.xlu0 %2207
  %2209 = vadd.xlane.f32.xlu0 %v2082
  %v2210 = vpop.xlane.xlu0 %2209
  %2211 = vadd.xlane.f32.xlu0 %v2084
  %v2212 = vpop.xlane.xlu0 %2211
  %2213 = vadd.xlane.f32.xlu0 %v2086
  %v2214 = vpop.xlane.xlu0 %2213
  %2215 = vadd.xlane.f32.xlu0 %v2088
  %v2216 = vpop.xlane.xlu0 %2215
  %2217 = vadd.xlane.f32.xlu0 %v2090
  %v2218 = vpop.xlane.xlu0 %2217
  %2219 = vadd.xlane.f32.xlu0 %v2092
  %v2220 = vpop.xlane.xlu0 %2219
  %2221 = vadd.xlane.f32.xlu0 %v2094
  %v2222 = vpop.xlane.xlu0 %2221
  %2223 = vadd.xlane.f32.xlu0 %v2096
  %v2224 = vpop.xlane.xlu0 %2223
  %2225 = vadd.xlane.f32.xlu0 %v2098
  %v2226 = vpop.xlane.xlu0 %2225
  %2227 = vadd.xlane.f32.xlu0 %v2100
  %v2228 = vpop.xlane.xlu0 %2227
  %2229 = vadd.xlane.f32.xlu0 %v2102
  %v2230 = vpop.xlane.xlu0 %2229
  %2231 = vadd.xlane.f32.xlu0 %v2104
  %v2232 = vpop.xlane.xlu0 %2231
  %2233 = vadd.xlane.f32.xlu0 %v2106
  %v2234 = vpop.xlane.xlu0 %2233
  %2235 = vadd.xlane.f32.xlu0 %v2108
  %v2236 = vpop.xlane.xlu0 %2235
  %2237 = vadd.xlane.f32.xlu0 %v2110
  %v2238 = vpop.xlane.xlu0 %2237
  %v2239 = vrcp.pop %v2112
  %v2240 = vrcp.pop %v2114
  %v2241 = vrcp.pop %v2116
  %v2242 = vrcp.pop %v2118
  %v2243 = vrcp.pop %v2120
  %v2244 = vrcp.pop %v2122
  %v2245 = vrcp.pop %v2124
  %v2246 = vrcp.pop %v2126
  %v2247 = vrcp.pop %v2128
  %v2248 = vrcp.pop %v2130
  %v2249 = vrcp.pop %v2132
  %v2250 = vrcp.pop %v2134
  %v2251 = vrcp.pop %v2136
  %v2252 = vrcp.pop %v2138
  %v2253 = vrcp.pop %v2140
  %v2254 = vrcp.pop %v2142
  %v2255 = vrcp.pop %v2144
  %v2256 = vrcp.pop %v2146
  %v2257 = vrcp.pop %v2148
  %v2258 = vrcp.pop %v2150
  %v2259 = vrcp.pop %v2152
  %v2260 = vrcp.pop %v2154
  %v2261 = vrcp.pop %v2156
  %v2262 = vrcp.pop %v2158
  %v2263 = vrcp.pop %v2160
  %v2264 = vrcp.pop %v2162
  %v2265 = vrcp.pop %v2164
  %v2266 = vrcp.pop %v2166
  %v2267 = vrcp.pop %v2168
  %v2268 = vrcp.pop %v2170
  %v2269 = vrcp.pop %v2172
  %v2270 = vrcp.pop %v2174
  %v2271 = vrcp.pop %v2176
  %v2272 = vrcp.pop %v2178
  %v2273 = vrcp.pop %v2180
  %v2274 = vrcp.pop %v2182
  %v2275 = vrcp.pop %v2184
  %v2276 = vrcp.pop %v2186
  %v2277 = vrcp.pop %v2188
  %v2278 = vrcp.pop %v2190
  %v2279 = vrcp.pop %v2192
  %v2280 = vrcp.pop %v2194
  %v2281 = vrcp.pop %v2196
  %v2282 = vrcp.pop %v2198
  %v2283 = vrcp.pop %v2200
  %v2284 = vrcp.pop %v2202
  %v2285 = vrcp.pop %v2204
  %v2286 = vrcp.pop %v2206
  %v2287 = vrcp.pop %v2208
  %v2288 = vrcp.pop %v2210
  %v2289 = vrcp.pop %v2212
  %v2290 = vrcp.pop %v2214
  %v2291 = vrcp.pop %v2216
  %v2292 = vrcp.pop %v2218
  %v2293 = vrcp.pop %v2220
  %v2294 = vrcp.pop %v2222
  %v2295 = vrcp.pop %v2224
  %v2296 = vrcp.pop %v2226
  %v2297 = vrcp.pop %v2228
  %v2298 = vrcp.pop %v2230
  %v2299 = vrcp.pop %v2232
  %v2300 = vrcp.pop %v2234
  %v2301 = vrcp.pop %v2236
  %v2302 = vrcp.pop %v2238
  %v2303 = vmul.f32 %v1984, %v2239
  %v2304 = vmul.f32 %v1986, %v2240
  %v2305 = vmul.f32 %v1988, %v2241
  %v2306 = vmul.f32 %v1990, %v2242
  %v2307 = vmul.f32 %v1992, %v2243
  %v2308 = vmul.f32 %v1994, %v2244
  %v2309 = vmul.f32 %v1996, %v2245
  %v2310 = vmul.f32 %v1998, %v2246
  %v2311 = vmul.f32 %v2000, %v2247
  %v2312 = vmul.f32 %v2002, %v2248
  %v2313 = vmul.f32 %v2004, %v2249
  %v2314 = vmul.f32 %v2006, %v2250
  %v2315 = vmul.f32 %v2008, %v2251
  %v2316 = vmul.f32 %v2010, %v2252
  %v2317 = vmul.f32 %v2012, %v2253
  %v2318 = vmul.f32 %v2014, %v2254
  %v2319 = vmul.f32 %v2016, %v2255
  %v2320 = vmul.f32 %v2018, %v2256
  %v2321 = vmul.f32 %v2020, %v2257
  %v2322 = vmul.f32 %v2022, %v2258
  %v2323 = vmul.f32 %v2024, %v2259
  %v2324 = vmul.f32 %v2026, %v2260
  %v2325 = vmul.f32 %v2028, %v2261
  %v2326 = vmul.f32 %v2030, %v2262
  %v2327 = vmul.f32 %v2032, %v2263
  %v2328 = vmul.f32 %v2034, %v2264
  %v2329 = vmul.f32 %v2036, %v2265
  %v2330 = vmul.f32 %v2038, %v2266
  %v2331 = vmul.f32 %v2040, %v2267
  %v2332 = vmul.f32 %v2042, %v2268
  %v2333 = vmul.f32 %v2044, %v2269
  %v2334 = vmul.f32 %v2046, %v2270
  %v2335 = vmul.f32 %v2048, %v2271
  %v2336 = vmul.f32 %v2050, %v2272
  %v2337 = vmul.f32 %v2052, %v2273
  %v2338 = vmul.f32 %v2054, %v2274
  %v2339 = vmul.f32 %v2056, %v2275
  %v2340 = vmul.f32 %v2058, %v2276
  %v2341 = vmul.f32 %v2060, %v2277
  %v2342 = vmul.f32 %v2062, %v2278
  %v2343 = vmul.f32 %v2064, %v2279
  %v2344 = vmul.f32 %v2066, %v2280
  %v2345 = vmul.f32 %v2068, %v2281
  %v2346 = vmul.f32 %v2070, %v2282
  %v2347 = vmul.f32 %v2072, %v2283
  %v2348 = vmul.f32 %v2074, %v2284
  %v2349 = vmul.f32 %v2076, %v2285
  %v2350 = vmul.f32 %v2078, %v2286
  %v2351 = vmul.f32 %v2080, %v2287
  %v2352 = vmul.f32 %v2082, %v2288
  %v2353 = vmul.f32 %v2084, %v2289
  %v2354 = vmul.f32 %v2086, %v2290
  %v2355 = vmul.f32 %v2088, %v2291
  %v2356 = vmul.f32 %v2090, %v2292
  %v2357 = vmul.f32 %v2092, %v2293
  %v2358 = vmul.f32 %v2094, %v2294
  %v2359 = vmul.f32 %v2096, %v2295
  %v2360 = vmul.f32 %v2098, %v2296
  %v2361 = vmul.f32 %v2100, %v2297
  %v2362 = vmul.f32 %v2102, %v2298
  %v2363 = vmul.f32 %v2104, %v2299
  %v2364 = vmul.f32 %v2106, %v2300
  %v2365 = vmul.f32 %v2108, %v2301
  %v2366 = vmul.f32 %v2110, %v2302
  %v2367 = vpack.c.bf16 %v2304, %v2303
  %v2368 = vpack.c.bf16 %v2306, %v2305
  %v2369 = vpack.c.bf16 %v2308, %v2307
  %v2370 = vpack.c.bf16 %v2310, %v2309
  %v2371 = vpack.c.bf16 %v2312, %v2311
  %v2372 = vpack.c.bf16 %v2314, %v2313
  %v2373 = vpack.c.bf16 %v2316, %v2315
  %v2374 = vpack.c.bf16 %v2318, %v2317
  %v2375 = vpack.c.bf16 %v2320, %v2319
  %v2376 = vpack.c.bf16 %v2322, %v2321
  %v2377 = vpack.c.bf16 %v2324, %v2323
  %v2378 = vpack.c.bf16 %v2326, %v2325
  %v2379 = vpack.c.bf16 %v2328, %v2327
  %v2380 = vpack.c.bf16 %v2330, %v2329
  %v2381 = vpack.c.bf16 %v2332, %v2331
  %v2382 = vpack.c.bf16 %v2334, %v2333
  %v2383 = vpack.c.bf16 %v2336, %v2335
  %v2384 = vpack.c.bf16 %v2338, %v2337
  %v2385 = vpack.c.bf16 %v2340, %v2339
  %v2386 = vpack.c.bf16 %v2342, %v2341
  %v2387 = vpack.c.bf16 %v2344, %v2343
  %v2388 = vpack.c.bf16 %v2346, %v2345
  %v2389 = vpack.c.bf16 %v2348, %v2347
  %v2390 = vpack.c.bf16 %v2350, %v2349
  %v2391 = vpack.c.bf16 %v2352, %v2351
  %v2392 = vpack.c.bf16 %v2354, %v2353
  %v2393 = vpack.c.bf16 %v2356, %v2355
  %v2394 = vpack.c.bf16 %v2358, %v2357
  %v2395 = vpack.c.bf16 %v2360, %v2359
  %v2396 = vpack.c.bf16 %v2362, %v2361
  %v2397 = vpack.c.bf16 %v2364, %v2363
  %v2398 = vpack.c.bf16 %v2366, %v2365
  %2399 = vmatprep.subr.bf16.mxu0 0
  %2400 = vmatpush1.bf16.xpose.msra.mxu0 %v2367
  %2401 = vmatprep.subr.bf16.mxu0 0
  %2402 = vmatpush1.bf16.xpose.msra.mxu0 %v2368
  %2403 = vmatprep.subr.bf16.mxu0 0
  %2404 = vmatpush1.bf16.xpose.msra.mxu0 %v2369
  %2405 = vmatprep.subr.bf16.mxu0 0
  %2406 = vmatpush1.bf16.xpose.msra.mxu0 %v2370
  %2407 = vmatprep.subr.bf16.mxu0 0
  %2408 = vmatpush1.bf16.xpose.msra.mxu0 %v2371
  %2409 = vmatprep.subr.bf16.mxu0 0
  %2410 = vmatpush1.bf16.xpose.msra.mxu0 %v2372
  %2411 = vmatprep.subr.bf16.mxu0 0
  %2412 = vmatpush1.bf16.xpose.msra.mxu0 %v2373
  %2413 = vmatprep.subr.bf16.mxu0 0
  %2414 = vmatpush1.bf16.xpose.msra.mxu0 %v2374
  %2415 = vmatprep.subr.bf16.mxu0 0
  %2416 = vmatpush1.bf16.xpose.msra.mxu0 0
  %2417 = vmatprep.subr.bf16.mxu0 0
  %2418 = vmatpush1.bf16.xpose.msra.mxu0 0
  %2419 = vmatprep.subr.bf16.mxu0 0
  %2420 = vmatpush1.bf16.xpose.msra.mxu0 0
  %2421 = vmatprep.subr.bf16.mxu0 0
  %2422 = vmatpush1.bf16.xpose.msra.mxu0 0
  %2423 = vmatprep.subr.bf16.mxu0 0
  %2424 = vmatpush1.bf16.xpose.msra.mxu0 0
  %2425 = vmatprep.subr.bf16.mxu0 0
  %2426 = vmatpush1.bf16.xpose.msra.mxu0 0
  %2427 = vmatprep.subr.bf16.mxu0 0
  %2428 = vmatpush1.bf16.xpose.msra.mxu0 0
  %2429 = vmatprep.subr.bf16.mxu0 0
  %2430 = vmatpush1.bf16.xpose.msra.mxu0 0
  %2431 = vmatprep.mubr.bf16.mxu0 0
  %2432 = vmatmul.mubr.bf16.gmra.mrb[0].mxu0 %v1238
  %v2433 = vpop.f32.mrb[0].mxu0
  %v2434 = vadd.f32 0.0, %v2433
  %v2435 = vpop.f32.mrb[0].mxu0
  %v2436 = vpop.f32.mrb[0].mxu0
  %v2437 = vadd.f32 0.0, %v2436
  %v2438 = vpop.f32.mrb[0].mxu0
  %2439 = vdwg.mxu0
  %2440 = vmatprep.subr.bf16.mxu0 0
  %2441 = vmatpush1.bf16.xpose.msra.mxu0 %v2375
  %2442 = vmatprep.subr.bf16.mxu0 0
  %2443 = vmatpush1.bf16.xpose.msra.mxu0 %v2376
  %2444 = vmatprep.subr.bf16.mxu0 0
  %2445 = vmatpush1.bf16.xpose.msra.mxu0 %v2377
  %2446 = vmatprep.subr.bf16.mxu0 0
  %2447 = vmatpush1.bf16.xpose.msra.mxu0 %v2378
  %2448 = vmatprep.subr.bf16.mxu0 0
  %2449 = vmatpush1.bf16.xpose.msra.mxu0 %v2379
  %2450 = vmatprep.subr.bf16.mxu0 0
  %2451 = vmatpush1.bf16.xpose.msra.mxu0 %v2380
  %2452 = vmatprep.subr.bf16.mxu0 0
  %2453 = vmatpush1.bf16.xpose.msra.mxu0 %v2381
  %2454 = vmatprep.subr.bf16.mxu0 0
  %2455 = vmatpush1.bf16.xpose.msra.mxu0 %v2382
  %2456 = vmatprep.subr.bf16.mxu0 0
  %2457 = vmatpush1.bf16.xpose.msra.mxu0 0
  %2458 = vmatprep.subr.bf16.mxu0 0
  %2459 = vmatpush1.bf16.xpose.msra.mxu0 0
  %2460 = vmatprep.subr.bf16.mxu0 0
  %2461 = vmatpush1.bf16.xpose.msra.mxu0 0
  %2462 = vmatprep.subr.bf16.mxu0 0
  %2463 = vmatpush1.bf16.xpose.msra.mxu0 0
  %2464 = vmatprep.subr.bf16.mxu0 0
  %2465 = vmatpush1.bf16.xpose.msra.mxu0 0
  %2466 = vmatprep.subr.bf16.mxu0 0
  %2467 = vmatpush1.bf16.xpose.msra.mxu0 0
  %2468 = vmatprep.subr.bf16.mxu0 0
  %2469 = vmatpush1.bf16.xpose.msra.mxu0 0
  %2470 = vmatprep.subr.bf16.mxu0 0
  %2471 = vmatpush1.bf16.xpose.msra.mxu0 0
  %2472 = vmatprep.mubr.bf16.mxu0 0
  %2473 = vmatmul.mubr.bf16.gmra.mrb[0].mxu0 %v1239
  %v2474 = vpop.f32.mrb[0].mxu0
  %v2475 = vadd.f32 0.0, %v2474
  %v2476 = vpop.f32.mrb[0].mxu0
  %v2477 = vpop.f32.mrb[0].mxu0
  %v2478 = vadd.f32 0.0, %v2477
  %v2479 = vpop.f32.mrb[0].mxu0
  %2480 = vdwg.mxu0
  %2481 = vmatprep.subr.bf16.mxu0 0
  %2482 = vmatpush1.bf16.xpose.msra.mxu0 %v2383
  %2483 = vmatprep.subr.bf16.mxu0 0
  %2484 = vmatpush1.bf16.xpose.msra.mxu0 %v2384
  %2485 = vmatprep.subr.bf16.mxu0 0
  %2486 = vmatpush1.bf16.xpose.msra.mxu0 %v2385
  %2487 = vmatprep.subr.bf16.mxu0 0
  %2488 = vmatpush1.bf16.xpose.msra.mxu0 %v2386
  %2489 = vmatprep.subr.bf16.mxu0 0
  %2490 = vmatpush1.bf16.xpose.msra.mxu0 %v2387
  %2491 = vmatprep.subr.bf16.mxu0 0
  %2492 = vmatpush1.bf16.xpose.msra.mxu0 %v2388
  %2493 = vmatprep.subr.bf16.mxu0 0
  %2494 = vmatpush1.bf16.xpose.msra.mxu0 %v2389
  %2495 = vmatprep.subr.bf16.mxu0 0
  %2496 = vmatpush1.bf16.xpose.msra.mxu0 %v2390
  %2497 = vmatprep.subr.bf16.mxu0 0
  %2498 = vmatpush1.bf16.xpose.msra.mxu0 0
  %2499 = vmatprep.subr.bf16.mxu0 0
  %2500 = vmatpush1.bf16.xpose.msra.mxu0 0
  %2501 = vmatprep.subr.bf16.mxu0 0
  %2502 = vmatpush1.bf16.xpose.msra.mxu0 0
  %2503 = vmatprep.subr.bf16.mxu0 0
  %2504 = vmatpush1.bf16.xpose.msra.mxu0 0
  %2505 = vmatprep.subr.bf16.mxu0 0
  %2506 = vmatpush1.bf16.xpose.msra.mxu0 0
  %2507 = vmatprep.subr.bf16.mxu0 0
  %2508 = vmatpush1.bf16.xpose.msra.mxu0 0
  %2509 = vmatprep.subr.bf16.mxu0 0
  %2510 = vmatpush1.bf16.xpose.msra.mxu0 0
  %2511 = vmatprep.subr.bf16.mxu0 0
  %2512 = vmatpush1.bf16.xpose.msra.mxu0 0
  %2513 = vmatprep.mubr.bf16.mxu0 0
  %2514 = vmatmul.mubr.bf16.gmra.mrb[0].mxu0 %v1240
  %v2515 = vpop.f32.mrb[0].mxu0
  %v2516 = vadd.f32 0.0, %v2515
  %v2517 = vpop.f32.mrb[0].mxu0
  %v2518 = vpop.f32.mrb[0].mxu0
  %v2519 = vadd.f32 0.0, %v2518
  %v2520 = vpop.f32.mrb[0].mxu0
  %2521 = vdwg.mxu0
  %2522 = vmatprep.subr.bf16.mxu0 0
  %2523 = vmatpush1.bf16.xpose.msra.mxu0 %v2391
  %2524 = vmatprep.subr.bf16.mxu0 0
  %2525 = vmatpush1.bf16.xpose.msra.mxu0 %v2392
  %2526 = vmatprep.subr.bf16.mxu0 0
  %2527 = vmatpush1.bf16.xpose.msra.mxu0 %v2393
  %2528 = vmatprep.subr.bf16.mxu0 0
  %2529 = vmatpush1.bf16.xpose.msra.mxu0 %v2394
  %2530 = vmatprep.subr.bf16.mxu0 0
  %2531 = vmatpush1.bf16.xpose.msra.mxu0 %v2395
  %2532 = vmatprep.subr.bf16.mxu0 0
  %2533 = vmatpush1.bf16.xpose.msra.mxu0 %v2396
  %2534 = vmatprep.subr.bf16.mxu0 0
  %2535 = vmatpush1.bf16.xpose.msra.mxu0 %v2397
  %2536 = vmatprep.subr.bf16.mxu0 0
  %2537 = vmatpush1.bf16.xpose.msra.mxu0 %v2398
  %2538 = vmatprep.subr.bf16.mxu0 0
  %2539 = vmatpush1.bf16.xpose.msra.mxu0 0
  %2540 = vmatprep.subr.bf16.mxu0 0
  %2541 = vmatpush1.bf16.xpose.msra.mxu0 0
  %2542 = vmatprep.subr.bf16.mxu0 0
  %2543 = vmatpush1.bf16.xpose.msra.mxu0 0
  %2544 = vmatprep.subr.bf16.mxu0 0
  %2545 = vmatpush1.bf16.xpose.msra.mxu0 0
  %2546 = vmatprep.subr.bf16.mxu0 0
  %2547 = vmatpush1.bf16.xpose.msra.mxu0 0
  %2548 = vmatprep.subr.bf16.mxu0 0
  %2549 = vmatpush1.bf16.xpose.msra.mxu0 0
  %2550 = vmatprep.subr.bf16.mxu0 0
  %2551 = vmatpush1.bf16.xpose.msra.mxu0 0
  %2552 = vmatprep.subr.bf16.mxu0 0
  %2553 = vmatpush1.bf16.xpose.msra.mxu0 0
  %2554 = vmatprep.mubr.bf16.mxu0 0
  %2555 = vmatmul.mubr.bf16.gmra.mrb[0].mxu0 %v1241
  %v2556 = vpop.f32.mrb[0].mxu0
  %v2557 = vadd.f32 0.0, %v2556
  %v2558 = vpop.f32.mrb[0].mxu0
  %v2559 = vpop.f32.mrb[0].mxu0
  %v2560 = vadd.f32 0.0, %v2559
  %v2561 = vpop.f32.mrb[0].mxu0
  %2562 = vdwg.mxu0
  %v2563 = vpack.c.bf16 %v2437, %v2434
  %v2564 = vpack.c.bf16 %v2478, %v2475
  %v2565 = vpack.c.bf16 %v2519, %v2516
  %v2566 = vpack.c.bf16 %v2560, %v2557
  %v2567 = vmul.f32 %v856, 0.17677669
  %v2568 = vmul.f32 %v859, 0.17677669
  %v2569 = vmul.f32 %v864, 0.17677669
  %v2570 = vmul.f32 %v867, 0.17677669
  %v2571 = vmul.f32 %v872, 0.17677669
  %v2572 = vmul.f32 %v875, 0.17677669
  %v2573 = vmul.f32 %v880, 0.17677669
  %v2574 = vmul.f32 %v883, 0.17677669
  %v2575 = vpack.c.bf16 %v2568, %v2567
  %v2576 = vpack.c.bf16 %v2570, %v2569
  %v2577 = vpack.c.bf16 %v2572, %v2571
  %v2578 = vpack.c.bf16 %v2574, %v2573
  %v2579 = vpack.c.bf16 %v987, %v984
  %v2580 = vpack.c.bf16 %v995, %v992
  %v2581 = vpack.c.bf16 %v1003, %v1000
  %v2582 = vpack.c.bf16 %v1011, %v1008
  %v2583 = vpack.c.bf16 %v1115, %v1112
  %v2584 = vpack.c.bf16 %v1123, %v1120
  %v2585 = vpack.c.bf16 %v1131, %v1128
  %v2586 = vpack.c.bf16 %v1139, %v1136
  %2587 = vxpose.xlu0.c.b16.start [1/8] %v2575, 128
  %2588 = vxpose.xlu0.c.b16.cont [2/8] 0, 128
  %2589 = vxpose.xlu0.c.b16.cont [3/8] 0, 128
  %2590 = vxpose.xlu0.c.b16.cont [4/8] 0, 128
  %2591 = vxpose.xlu0.c.b16.cont [5/8] 0, 128
  %2592 = vxpose.xlu0.c.b16.cont [6/8] 0, 128
  %2593 = vxpose.xlu0.c.b16.cont [7/8] 0, 128
  %2594 = vxpose.xlu0.c.b16.end [8/8] 0, 128
  %v2595 = vpop.trf.xlu0
  %v2596 = vpop.trf.xlu0
  %v2597 = vpop.trf.xlu0
  %v2598 = vpop.trf.xlu0
  %v2599 = vpop.trf.xlu0
  %v2600 = vpop.trf.xlu0
  %v2601 = vpop.trf.xlu0
  %v2602 = vpop.trf.xlu0
  %v2604 = vsel %vm1258, %v2595, 0
  %v2607 = vsel %vm1258, %v2596, 0
  %v2610 = vsel %vm1258, %v2597, 0
  %v2613 = vsel %vm1258, %v2598, 0
  %v2616 = vsel %vm1258, %v2599, 0
  %v2619 = vsel %vm1258, %v2600, 0
  %v2622 = vsel %vm1258, %v2601, 0
  %v2625 = vsel %vm1258, %v2602, 0
  %2627 = vmatprep.subr.bf16.mxu0 0
  %2628 = vmatpush1.bf16.msra.mxu0 %v2579
  %2629 = vmatprep.subr.bf16.mxu0 0
  %2630 = vmatpush1.bf16.msra.mxu0 0
  %2631 = vmatprep.subr.bf16.mxu0 0
  %2632 = vmatpush1.bf16.msra.mxu0 0
  %2633 = vmatprep.subr.bf16.mxu0 0
  %2634 = vmatpush1.bf16.msra.mxu0 0
  %2635 = vmatprep.subr.bf16.mxu0 0
  %2636 = vmatpush1.bf16.msra.mxu0 0
  %2637 = vmatprep.subr.bf16.mxu0 0
  %2638 = vmatpush1.bf16.msra.mxu0 0
  %2639 = vmatprep.subr.bf16.mxu0 0
  %2640 = vmatpush1.bf16.msra.mxu0 0
  %2641 = vmatprep.subr.bf16.mxu0 0
  %2642 = vmatpush1.bf16.msra.mxu0 0
  %2643 = vmatprep.subr.bf16.mxu0 0
  %2644 = vmatpush1.bf16.msra.mxu0 0
  %2645 = vmatprep.subr.bf16.mxu0 0
  %2646 = vmatpush1.bf16.msra.mxu0 0
  %2647 = vmatprep.subr.bf16.mxu0 0
  %2648 = vmatpush1.bf16.msra.mxu0 0
  %2649 = vmatprep.subr.bf16.mxu0 0
  %2650 = vmatpush1.bf16.msra.mxu0 0
  %2651 = vmatprep.subr.bf16.mxu0 0
  %2652 = vmatpush1.bf16.msra.mxu0 0
  %2653 = vmatprep.subr.bf16.mxu0 0
  %2654 = vmatpush1.bf16.msra.mxu0 0
  %2655 = vmatprep.subr.bf16.mxu0 0
  %2656 = vmatpush1.bf16.msra.mxu0 0
  %2657 = vmatprep.subr.bf16.mxu0 0
  %2658 = vmatpush1.bf16.msra.mxu0 0
  %2659 = vmatprep.mubr.bf16.mxu0 0
  %2660 = vmatmul.mubr.bf16.gmra.mrb[0].mxu0 %v2604
  %v2661 = vpop.f32.mrb[0].mxu0
  %v2662 = vadd.f32 %v1206, %v2661
  %v2663 = vpop.f32.mrb[0].mxu0
  %v2664 = vpop.f32.mrb[0].mxu0
  %v2665 = vadd.f32 %v1207, %v2664
  %v2666 = vpop.f32.mrb[0].mxu0
  %2667 = vmatprep.mubr.bf16.mxu0 0
  %2668 = vmatmul.mubr.bf16.gmra.mrb[0].mxu0 %v2607
  %v2669 = vpop.f32.mrb[0].mxu0
  %v2670 = vadd.f32 %v1208, %v2669
  %v2671 = vpop.f32.mrb[0].mxu0
  %v2672 = vpop.f32.mrb[0].mxu0
  %v2673 = vadd.f32 %v1209, %v2672
  %v2674 = vpop.f32.mrb[0].mxu0
  %2675 = vmatprep.mubr.bf16.mxu0 0
  %2676 = vmatmul.mubr.bf16.gmra.mrb[0].mxu0 %v2610
  %v2677 = vpop.f32.mrb[0].mxu0
  %v2678 = vadd.f32 %v1210, %v2677
  %v2679 = vpop.f32.mrb[0].mxu0
  %v2680 = vpop.f32.mrb[0].mxu0
  %v2681 = vadd.f32 %v1211, %v2680
  %v2682 = vpop.f32.mrb[0].mxu0
  %2683 = vmatprep.mubr.bf16.mxu0 0
  %2684 = vmatmul.mubr.bf16.gmra.mrb[0].mxu0 %v2613
  %v2685 = vpop.f32.mrb[0].mxu0
  %v2686 = vadd.f32 %v1212, %v2685
  %v2687 = vpop.f32.mrb[0].mxu0
  %v2688 = vpop.f32.mrb[0].mxu0
  %v2689 = vadd.f32 %v1213, %v2688
  %v2690 = vpop.f32.mrb[0].mxu0
  %2691 = vmatprep.mubr.bf16.mxu0 0
  %2692 = vmatmul.mubr.bf16.gmra.mrb[0].mxu0 %v2616
  %v2693 = vpop.f32.mrb[0].mxu0
  %v2694 = vadd.f32 %v1214, %v2693
  %v2695 = vpop.f32.mrb[0].mxu0
  %v2696 = vpop.f32.mrb[0].mxu0
  %v2697 = vadd.f32 %v1215, %v2696
  %v2698 = vpop.f32.mrb[0].mxu0
  %2699 = vmatprep.mubr.bf16.mxu0 0
  %2700 = vmatmul.mubr.bf16.gmra.mrb[0].mxu0 %v2619
  %v2701 = vpop.f32.mrb[0].mxu0
  %v2702 = vadd.f32 %v1216, %v2701
  %v2703 = vpop.f32.mrb[0].mxu0
  %v2704 = vpop.f32.mrb[0].mxu0
  %v2705 = vadd.f32 %v1217, %v2704
  %v2706 = vpop.f32.mrb[0].mxu0
  %2707 = vmatprep.mubr.bf16.mxu0 0
  %2708 = vmatmul.mubr.bf16.gmra.mrb[0].mxu0 %v2622
  %v2709 = vpop.f32.mrb[0].mxu0
  %v2710 = vadd.f32 %v1218, %v2709
  %v2711 = vpop.f32.mrb[0].mxu0
  %v2712 = vpop.f32.mrb[0].mxu0
  %v2713 = vadd.f32 %v1219, %v2712
  %v2714 = vpop.f32.mrb[0].mxu0
  %2715 = vmatprep.mubr.bf16.mxu0 0
  %2716 = vmatmul.mubr.bf16.gmra.mrb[0].mxu0 %v2625
  %v2717 = vpop.f32.mrb[0].mxu0
  %v2718 = vadd.f32 %v1220, %v2717
  %v2719 = vpop.f32.mrb[0].mxu0
  %v2720 = vpop.f32.mrb[0].mxu0
  %v2721 = vadd.f32 %v1221, %v2720
  %v2722 = vpop.f32.mrb[0].mxu0
  %2723 = vdwg.mxu0
  %2724 = vxpose.xlu0.c.b16.start [1/8] %v2576, 128
  %2725 = vxpose.xlu0.c.b16.cont [2/8] 0, 128
  %2726 = vxpose.xlu0.c.b16.cont [3/8] 0, 128
  %2727 = vxpose.xlu0.c.b16.cont [4/8] 0, 128
  %2728 = vxpose.xlu0.c.b16.cont [5/8] 0, 128
  %2729 = vxpose.xlu0.c.b16.cont [6/8] 0, 128
  %2730 = vxpose.xlu0.c.b16.cont [7/8] 0, 128
  %2731 = vxpose.xlu0.c.b16.end [8/8] 0, 128
  %v2732 = vpop.trf.xlu0
  %v2733 = vpop.trf.xlu0
  %v2734 = vpop.trf.xlu0
  %v2735 = vpop.trf.xlu0
  %v2736 = vpop.trf.xlu0
  %v2737 = vpop.trf.xlu0
  %v2738 = vpop.trf.xlu0
  %v2739 = vpop.trf.xlu0
  %v2741 = vsel %vm1258, %v2732, 0
  %v2744 = vsel %vm1258, %v2733, 0
  %v2747 = vsel %vm1258, %v2734, 0
  %v2750 = vsel %vm1258, %v2735, 0
  %v2753 = vsel %vm1258, %v2736, 0
  %v2756 = vsel %vm1258, %v2737, 0
  %v2759 = vsel %vm1258, %v2738, 0
  %v2762 = vsel %vm1258, %v2739, 0
  %2764 = vmatprep.subr.bf16.mxu0 0
  %2765 = vmatpush1.bf16.msra.mxu0 %v2580
  %2766 = vmatprep.subr.bf16.mxu0 0
  %2767 = vmatpush1.bf16.msra.mxu0 0
  %2768 = vmatprep.subr.bf16.mxu0 0
  %2769 = vmatpush1.bf16.msra.mxu0 0
  %2770 = vmatprep.subr.bf16.mxu0 0
  %2771 = vmatpush1.bf16.msra.mxu0 0
  %2772 = vmatprep.subr.bf16.mxu0 0
  %2773 = vmatpush1.bf16.msra.mxu0 0
  %2774 = vmatprep.subr.bf16.mxu0 0
  %2775 = vmatpush1.bf16.msra.mxu0 0
  %2776 = vmatprep.subr.bf16.mxu0 0
  %2777 = vmatpush1.bf16.msra.mxu0 0
  %2778 = vmatprep.subr.bf16.mxu0 0
  %2779 = vmatpush1.bf16.msra.mxu0 0
  %2780 = vmatprep.subr.bf16.mxu0 0
  %2781 = vmatpush1.bf16.msra.mxu0 0
  %2782 = vmatprep.subr.bf16.mxu0 0
  %2783 = vmatpush1.bf16.msra.mxu0 0
  %2784 = vmatprep.subr.bf16.mxu0 0
  %2785 = vmatpush1.bf16.msra.mxu0 0
  %2786 = vmatprep.subr.bf16.mxu0 0
  %2787 = vmatpush1.bf16.msra.mxu0 0
  %2788 = vmatprep.subr.bf16.mxu0 0
  %2789 = vmatpush1.bf16.msra.mxu0 0
  %2790 = vmatprep.subr.bf16.mxu0 0
  %2791 = vmatpush1.bf16.msra.mxu0 0
  %2792 = vmatprep.subr.bf16.mxu0 0
  %2793 = vmatpush1.bf16.msra.mxu0 0
  %2794 = vmatprep.subr.bf16.mxu0 0
  %2795 = vmatpush1.bf16.msra.mxu0 0
  %2796 = vmatprep.mubr.bf16.mxu0 0
  %2797 = vmatmul.mubr.bf16.gmra.mrb[0].mxu0 %v2741
  %v2798 = vpop.f32.mrb[0].mxu0
  %v2799 = vadd.f32 %v1206, %v2798
  %v2800 = vpop.f32.mrb[0].mxu0
  %v2801 = vpop.f32.mrb[0].mxu0
  %v2802 = vadd.f32 %v1207, %v2801
  %v2803 = vpop.f32.mrb[0].mxu0
  %2804 = vmatprep.mubr.bf16.mxu0 0
  %2805 = vmatmul.mubr.bf16.gmra.mrb[0].mxu0 %v2744
  %v2806 = vpop.f32.mrb[0].mxu0
  %v2807 = vadd.f32 %v1208, %v2806
  %v2808 = vpop.f32.mrb[0].mxu0
  %v2809 = vpop.f32.mrb[0].mxu0
  %v2810 = vadd.f32 %v1209, %v2809
  %v2811 = vpop.f32.mrb[0].mxu0
  %2812 = vmatprep.mubr.bf16.mxu0 0
  %2813 = vmatmul.mubr.bf16.gmra.mrb[0].mxu0 %v2747
  %v2814 = vpop.f32.mrb[0].mxu0
  %v2815 = vadd.f32 %v1210, %v2814
  %v2816 = vpop.f32.mrb[0].mxu0
  %v2817 = vpop.f32.mrb[0].mxu0
  %v2818 = vadd.f32 %v1211, %v2817
  %v2819 = vpop.f32.mrb[0].mxu0
  %2820 = vmatprep.mubr.bf16.mxu0 0
  %2821 = vmatmul.mubr.bf16.gmra.mrb[0].mxu0 %v2750
  %v2822 = vpop.f32.mrb[0].mxu0
  %v2823 = vadd.f32 %v1212, %v2822
  %v2824 = vpop.f32.mrb[0].mxu0
  %v2825 = vpop.f32.mrb[0].mxu0
  %v2826 = vadd.f32 %v1213, %v2825
  %v2827 = vpop.f32.mrb[0].mxu0
  %2828 = vmatprep.mubr.bf16.mxu0 0
  %2829 = vmatmul.mubr.bf16.gmra.mrb[0].mxu0 %v2753
  %v2830 = vpop.f32.mrb[0].mxu0
  %v2831 = vadd.f32 %v1214, %v2830
  %v2832 = vpop.f32.mrb[0].mxu0
  %v2833 = vpop.f32.mrb[0].mxu0
  %v2834 = vadd.f32 %v1215, %v2833
  %v2835 = vpop.f32.mrb[0].mxu0
  %2836 = vmatprep.mubr.bf16.mxu0 0
  %2837 = vmatmul.mubr.bf16.gmra.mrb[0].mxu0 %v2756
  %v2838 = vpop.f32.mrb[0].mxu0
  %v2839 = vadd.f32 %v1216, %v2838
  %v2840 = vpop.f32.mrb[0].mxu0
  %v2841 = vpop.f32.mrb[0].mxu0
  %v2842 = vadd.f32 %v1217, %v2841
  %v2843 = vpop.f32.mrb[0].mxu0
  %2844 = vmatprep.mubr.bf16.mxu0 0
  %2845 = vmatmul.mubr.bf16.gmra.mrb[0].mxu0 %v2759
  %v2846 = vpop.f32.mrb[0].mxu0
  %v2847 = vadd.f32 %v1218, %v2846
  %v2848 = vpop.f32.mrb[0].mxu0
  %v2849 = vpop.f32.mrb[0].mxu0
  %v2850 = vadd.f32 %v1219, %v2849
  %v2851 = vpop.f32.mrb[0].mxu0
  %2852 = vmatprep.mubr.bf16.mxu0 0
  %2853 = vmatmul.mubr.bf16.gmra.mrb[0].mxu0 %v2762
  %v2854 = vpop.f32.mrb[0].mxu0
  %v2855 = vadd.f32 %v1220, %v2854
  %v2856 = vpop.f32.mrb[0].mxu0
  %v2857 = vpop.f32.mrb[0].mxu0
  %v2858 = vadd.f32 %v1221, %v2857
  %v2859 = vpop.f32.mrb[0].mxu0
  %2860 = vdwg.mxu0
  %2861 = vxpose.xlu0.c.b16.start [1/8] %v2577, 128
  %2862 = vxpose.xlu0.c.b16.cont [2/8] 0, 128
  %2863 = vxpose.xlu0.c.b16.cont [3/8] 0, 128
  %2864 = vxpose.xlu0.c.b16.cont [4/8] 0, 128
  %2865 = vxpose.xlu0.c.b16.cont [5/8] 0, 128
  %2866 = vxpose.xlu0.c.b16.cont [6/8] 0, 128
  %2867 = vxpose.xlu0.c.b16.cont [7/8] 0, 128
  %2868 = vxpose.xlu0.c.b16.end [8/8] 0, 128
  %v2869 = vpop.trf.xlu0
  %v2870 = vpop.trf.xlu0
  %v2871 = vpop.trf.xlu0
  %v2872 = vpop.trf.xlu0
  %v2873 = vpop.trf.xlu0
  %v2874 = vpop.trf.xlu0
  %v2875 = vpop.trf.xlu0
  %v2876 = vpop.trf.xlu0
  %v2878 = vsel %vm1258, %v2869, 0
  %v2881 = vsel %vm1258, %v2870, 0
  %v2884 = vsel %vm1258, %v2871, 0
  %v2887 = vsel %vm1258, %v2872, 0
  %v2890 = vsel %vm1258, %v2873, 0
  %v2893 = vsel %vm1258, %v2874, 0
  %v2896 = vsel %vm1258, %v2875, 0
  %v2899 = vsel %vm1258, %v2876, 0
  %2901 = vmatprep.subr.bf16.mxu0 0
  %2902 = vmatpush1.bf16.msra.mxu0 %v2581
  %2903 = vmatprep.subr.bf16.mxu0 0
  %2904 = vmatpush1.bf16.msra.mxu0 0
  %2905 = vmatprep.subr.bf16.mxu0 0
  %2906 = vmatpush1.bf16.msra.mxu0 0
  %2907 = vmatprep.subr.bf16.mxu0 0
  %2908 = vmatpush1.bf16.msra.mxu0 0
  %2909 = vmatprep.subr.bf16.mxu0 0
  %2910 = vmatpush1.bf16.msra.mxu0 0
  %2911 = vmatprep.subr.bf16.mxu0 0
  %2912 = vmatpush1.bf16.msra.mxu0 0
  %2913 = vmatprep.subr.bf16.mxu0 0
  %2914 = vmatpush1.bf16.msra.mxu0 0
  %2915 = vmatprep.subr.bf16.mxu0 0
  %2916 = vmatpush1.bf16.msra.mxu0 0
  %2917 = vmatprep.subr.bf16.mxu0 0
  %2918 = vmatpush1.bf16.msra.mxu0 0
  %2919 = vmatprep.subr.bf16.mxu0 0
  %2920 = vmatpush1.bf16.msra.mxu0 0
  %2921 = vmatprep.subr.bf16.mxu0 0
  %2922 = vmatpush1.bf16.msra.mxu0 0
  %2923 = vmatprep.subr.bf16.mxu0 0
  %2924 = vmatpush1.bf16.msra.mxu0 0
  %2925 = vmatprep.subr.bf16.mxu0 0
  %2926 = vmatpush1.bf16.msra.mxu0 0
  %2927 = vmatprep.subr.bf16.mxu0 0
  %2928 = vmatpush1.bf16.msra.mxu0 0
  %2929 = vmatprep.subr.bf16.mxu0 0
  %2930 = vmatpush1.bf16.msra.mxu0 0
  %2931 = vmatprep.subr.bf16.mxu0 0
  %2932 = vmatpush1.bf16.msra.mxu0 0
  %2933 = vmatprep.mubr.bf16.mxu0 0
  %2934 = vmatmul.mubr.bf16.gmra.mrb[0].mxu0 %v2878
  %v2935 = vpop.f32.mrb[0].mxu0
  %v2936 = vadd.f32 %v1206, %v2935
  %v2937 = vpop.f32.mrb[0].mxu0
  %v2938 = vpop.f32.mrb[0].mxu0
  %v2939 = vadd.f32 %v1207, %v2938
  %v2940 = vpop.f32.mrb[0].mxu0
  %2941 = vmatprep.mubr.bf16.mxu0 0
  %2942 = vmatmul.mubr.bf16.gmra.mrb[0].mxu0 %v2881
  %v2943 = vpop.f32.mrb[0].mxu0
  %v2944 = vadd.f32 %v1208, %v2943
  %v2945 = vpop.f32.mrb[0].mxu0
  %v2946 = vpop.f32.mrb[0].mxu0
  %v2947 = vadd.f32 %v1209, %v2946
  %v2948 = vpop.f32.mrb[0].mxu0
  %2949 = vmatprep.mubr.bf16.mxu0 0
  %2950 = vmatmul.mubr.bf16.gmra.mrb[0].mxu0 %v2884
  %v2951 = vpop.f32.mrb[0].mxu0
  %v2952 = vadd.f32 %v1210, %v2951
  %v2953 = vpop.f32.mrb[0].mxu0
  %v2954 = vpop.f32.mrb[0].mxu0
  %v2955 = vadd.f32 %v1211, %v2954
  %v2956 = vpop.f32.mrb[0].mxu0
  %2957 = vmatprep.mubr.bf16.mxu0 0
  %2958 = vmatmul.mubr.bf16.gmra.mrb[0].mxu0 %v2887
  %v2959 = vpop.f32.mrb[0].mxu0
  %v2960 = vadd.f32 %v1212, %v2959
  %v2961 = vpop.f32.mrb[0].mxu0
  %v2962 = vpop.f32.mrb[0].mxu0
  %v2963 = vadd.f32 %v1213, %v2962
  %v2964 = vpop.f32.mrb[0].mxu0
  %2965 = vmatprep.mubr.bf16.mxu0 0
  %2966 = vmatmul.mubr.bf16.gmra.mrb[0].mxu0 %v2890
  %v2967 = vpop.f32.mrb[0].mxu0
  %v2968 = vadd.f32 %v1214, %v2967
  %v2969 = vpop.f32.mrb[0].mxu0
  %v2970 = vpop.f32.mrb[0].mxu0
  %v2971 = vadd.f32 %v1215, %v2970
  %v2972 = vpop.f32.mrb[0].mxu0
  %2973 = vmatprep.mubr.bf16.mxu0 0
  %2974 = vmatmul.mubr.bf16.gmra.mrb[0].mxu0 %v2893
  %v2975 = vpop.f32.mrb[0].mxu0
  %v2976 = vadd.f32 %v1216, %v2975
  %v2977 = vpop.f32.mrb[0].mxu0
  %v2978 = vpop.f32.mrb[0].mxu0
  %v2979 = vadd.f32 %v1217, %v2978
  %v2980 = vpop.f32.mrb[0].mxu0
  %2981 = vmatprep.mubr.bf16.mxu0 0
  %2982 = vmatmul.mubr.bf16.gmra.mrb[0].mxu0 %v2896
  %v2983 = vpop.f32.mrb[0].mxu0
  %v2984 = vadd.f32 %v1218, %v2983
  %v2985 = vpop.f32.mrb[0].mxu0
  %v2986 = vpop.f32.mrb[0].mxu0
  %v2987 = vadd.f32 %v1219, %v2986
  %v2988 = vpop.f32.mrb[0].mxu0
  %2989 = vmatprep.mubr.bf16.mxu0 0
  %2990 = vmatmul.mubr.bf16.gmra.mrb[0].mxu0 %v2899
  %v2991 = vpop.f32.mrb[0].mxu0
  %v2992 = vadd.f32 %v1220, %v2991
  %v2993 = vpop.f32.mrb[0].mxu0
  %v2994 = vpop.f32.mrb[0].mxu0
  %v2995 = vadd.f32 %v1221, %v2994
  %v2996 = vpop.f32.mrb[0].mxu0
  %2997 = vdwg.mxu0
  %2998 = vxpose.xlu0.c.b16.start [1/8] %v2578, 128
  %2999 = vxpose.xlu0.c.b16.cont [2/8] 0, 128
  %3000 = vxpose.xlu0.c.b16.cont [3/8] 0, 128
  %3001 = vxpose.xlu0.c.b16.cont [4/8] 0, 128
  %3002 = vxpose.xlu0.c.b16.cont [5/8] 0, 128
  %3003 = vxpose.xlu0.c.b16.cont [6/8] 0, 128
  %3004 = vxpose.xlu0.c.b16.cont [7/8] 0, 128
  %3005 = vxpose.xlu0.c.b16.end [8/8] 0, 128
  %v3006 = vpop.trf.xlu0
  %v3007 = vpop.trf.xlu0
  %v3008 = vpop.trf.xlu0
  %v3009 = vpop.trf.xlu0
  %v3010 = vpop.trf.xlu0
  %v3011 = vpop.trf.xlu0
  %v3012 = vpop.trf.xlu0
  %v3013 = vpop.trf.xlu0
  %v3015 = vsel %vm1258, %v3006, 0
  %v3018 = vsel %vm1258, %v3007, 0
  %v3021 = vsel %vm1258, %v3008, 0
  %v3024 = vsel %vm1258, %v3009, 0
  %v3027 = vsel %vm1258, %v3010, 0
  %v3030 = vsel %vm1258, %v3011, 0
  %v3033 = vsel %vm1258, %v3012, 0
  %v3036 = vsel %vm1258, %v3013, 0
  %3038 = vmatprep.subr.bf16.mxu0 0
  %3039 = vmatpush1.bf16.msra.mxu0 %v2582
  %3040 = vmatprep.subr.bf16.mxu0 0
  %3041 = vmatpush1.bf16.msra.mxu0 0
  %3042 = vmatprep.subr.bf16.mxu0 0
  %3043 = vmatpush1.bf16.msra.mxu0 0
  %3044 = vmatprep.subr.bf16.mxu0 0
  %3045 = vmatpush1.bf16.msra.mxu0 0
  %3046 = vmatprep.subr.bf16.mxu0 0
  %3047 = vmatpush1.bf16.msra.mxu0 0
  %3048 = vmatprep.subr.bf16.mxu0 0
  %3049 = vmatpush1.bf16.msra.mxu0 0
  %3050 = vmatprep.subr.bf16.mxu0 0
  %3051 = vmatpush1.bf16.msra.mxu0 0
  %3052 = vmatprep.subr.bf16.mxu0 0
  %3053 = vmatpush1.bf16.msra.mxu0 0
  %3054 = vmatprep.subr.bf16.mxu0 0
  %3055 = vmatpush1.bf16.msra.mxu0 0
  %3056 = vmatprep.subr.bf16.mxu0 0
  %3057 = vmatpush1.bf16.msra.mxu0 0
  %3058 = vmatprep.subr.bf16.mxu0 0
  %3059 = vmatpush1.bf16.msra.mxu0 0
  %3060 = vmatprep.subr.bf16.mxu0 0
  %3061 = vmatpush1.bf16.msra.mxu0 0
  %3062 = vmatprep.subr.bf16.mxu0 0
  %3063 = vmatpush1.bf16.msra.mxu0 0
  %3064 = vmatprep.subr.bf16.mxu0 0
  %3065 = vmatpush1.bf16.msra.mxu0 0
  %3066 = vmatprep.subr.bf16.mxu0 0
  %3067 = vmatpush1.bf16.msra.mxu0 0
  %3068 = vmatprep.subr.bf16.mxu0 0
  %3069 = vmatpush1.bf16.msra.mxu0 0
  %3070 = vmatprep.mubr.bf16.mxu0 0
  %3071 = vmatmul.mubr.bf16.gmra.mrb[0].mxu0 %v3015
  %v3072 = vpop.f32.mrb[0].mxu0
  %v3073 = vadd.f32 %v1206, %v3072
  %v3074 = vpop.f32.mrb[0].mxu0
  %v3075 = vpop.f32.mrb[0].mxu0
  %v3076 = vadd.f32 %v1207, %v3075
  %v3077 = vpop.f32.mrb[0].mxu0
  %3078 = vmatprep.mubr.bf16.mxu0 0
  %3079 = vmatmul.mubr.bf16.gmra.mrb[0].mxu0 %v3018
  %v3080 = vpop.f32.mrb[0].mxu0
  %v3081 = vadd.f32 %v1208, %v3080
  %v3082 = vpop.f32.mrb[0].mxu0
  %v3083 = vpop.f32.mrb[0].mxu0
  %v3084 = vadd.f32 %v1209, %v3083
  %v3085 = vpop.f32.mrb[0].mxu0
  %3086 = vmatprep.mubr.bf16.mxu0 0
  %3087 = vmatmul.mubr.bf16.gmra.mrb[0].mxu0 %v3021
  %v3088 = vpop.f32.mrb[0].mxu0
  %v3089 = vadd.f32 %v1210, %v3088
  %v3090 = vpop.f32.mrb[0].mxu0
  %v3091 = vpop.f32.mrb[0].mxu0
  %v3092 = vadd.f32 %v1211, %v3091
  %v3093 = vpop.f32.mrb[0].mxu0
  %3094 = vmatprep.mubr.bf16.mxu0 0
  %3095 = vmatmul.mubr.bf16.gmra.mrb[0].mxu0 %v3024
  %v3096 = vpop.f32.mrb[0].mxu0
  %v3097 = vadd.f32 %v1212, %v3096
  %v3098 = vpop.f32.mrb[0].mxu0
  %v3099 = vpop.f32.mrb[0].mxu0
  %v3100 = vadd.f32 %v1213, %v3099
  %v3101 = vpop.f32.mrb[0].mxu0
  %3102 = vmatprep.mubr.bf16.mxu0 0
  %3103 = vmatmul.mubr.bf16.gmra.mrb[0].mxu0 %v3027
  %v3104 = vpop.f32.mrb[0].mxu0
  %v3105 = vadd.f32 %v1214, %v3104
  %v3106 = vpop.f32.mrb[0].mxu0
  %v3107 = vpop.f32.mrb[0].mxu0
  %v3108 = vadd.f32 %v1215, %v3107
  %v3109 = vpop.f32.mrb[0].mxu0
  %3110 = vmatprep.mubr.bf16.mxu0 0
  %3111 = vmatmul.mubr.bf16.gmra.mrb[0].mxu0 %v3030
  %v3112 = vpop.f32.mrb[0].mxu0
  %v3113 = vadd.f32 %v1216, %v3112
  %v3114 = vpop.f32.mrb[0].mxu0
  %v3115 = vpop.f32.mrb[0].mxu0
  %v3116 = vadd.f32 %v1217, %v3115
  %v3117 = vpop.f32.mrb[0].mxu0
  %3118 = vmatprep.mubr.bf16.mxu0 0
  %3119 = vmatmul.mubr.bf16.gmra.mrb[0].mxu0 %v3033
  %v3120 = vpop.f32.mrb[0].mxu0
  %v3121 = vadd.f32 %v1218, %v3120
  %v3122 = vpop.f32.mrb[0].mxu0
  %v3123 = vpop.f32.mrb[0].mxu0
  %v3124 = vadd.f32 %v1219, %v3123
  %v3125 = vpop.f32.mrb[0].mxu0
  %3126 = vmatprep.mubr.bf16.mxu0 0
  %3127 = vmatmul.mubr.bf16.gmra.mrb[0].mxu0 %v3036
  %v3128 = vpop.f32.mrb[0].mxu0
  %v3129 = vadd.f32 %v1220, %v3128
  %v3130 = vpop.f32.mrb[0].mxu0
  %v3131 = vpop.f32.mrb[0].mxu0
  %v3132 = vadd.f32 %v1221, %v3131
  %v3133 = vpop.f32.mrb[0].mxu0
  %3134 = vdwg.mxu0
  %3135 = vmax.xlane.f32.xlu0 %v2662
  %v3136 = vpop.xlane.xlu0 %3135
  %3137 = vmax.xlane.f32.xlu0 %v2665
  %v3138 = vpop.xlane.xlu0 %3137
  %3139 = vmax.xlane.f32.xlu0 %v2670
  %v3140 = vpop.xlane.xlu0 %3139
  %3141 = vmax.xlane.f32.xlu0 %v2673
  %v3142 = vpop.xlane.xlu0 %3141
  %3143 = vmax.xlane.f32.xlu0 %v2678
  %v3144 = vpop.xlane.xlu0 %3143
  %3145 = vmax.xlane.f32.xlu0 %v2681
  %v3146 = vpop.xlane.xlu0 %3145
  %3147 = vmax.xlane.f32.xlu0 %v2686
  %v3148 = vpop.xlane.xlu0 %3147
  %3149 = vmax.xlane.f32.xlu0 %v2689
  %v3150 = vpop.xlane.xlu0 %3149
  %3151 = vmax.xlane.f32.xlu0 %v2694
  %v3152 = vpop.xlane.xlu0 %3151
  %3153 = vmax.xlane.f32.xlu0 %v2697
  %v3154 = vpop.xlane.xlu0 %3153
  %3155 = vmax.xlane.f32.xlu0 %v2702
  %v3156 = vpop.xlane.xlu0 %3155
  %3157 = vmax.xlane.f32.xlu0 %v2705
  %v3158 = vpop.xlane.xlu0 %3157
  %3159 = vmax.xlane.f32.xlu0 %v2710
  %v3160 = vpop.xlane.xlu0 %3159
  %3161 = vmax.xlane.f32.xlu0 %v2713
  %v3162 = vpop.xlane.xlu0 %3161
  %3163 = vmax.xlane.f32.xlu0 %v2718
  %v3164 = vpop.xlane.xlu0 %3163
  %3165 = vmax.xlane.f32.xlu0 %v2721
  %v3166 = vpop.xlane.xlu0 %3165
  %3167 = vmax.xlane.f32.xlu0 %v2799
  %v3168 = vpop.xlane.xlu0 %3167
  %3169 = vmax.xlane.f32.xlu0 %v2802
  %v3170 = vpop.xlane.xlu0 %3169
  %3171 = vmax.xlane.f32.xlu0 %v2807
  %v3172 = vpop.xlane.xlu0 %3171
  %3173 = vmax.xlane.f32.xlu0 %v2810
  %v3174 = vpop.xlane.xlu0 %3173
  %3175 = vmax.xlane.f32.xlu0 %v2815
  %v3176 = vpop.xlane.xlu0 %3175
  %3177 = vmax.xlane.f32.xlu0 %v2818
  %v3178 = vpop.xlane.xlu0 %3177
  %3179 = vmax.xlane.f32.xlu0 %v2823
  %v3180 = vpop.xlane.xlu0 %3179
  %3181 = vmax.xlane.f32.xlu0 %v2826
  %v3182 = vpop.xlane.xlu0 %3181
  %3183 = vmax.xlane.f32.xlu0 %v2831
  %v3184 = vpop.xlane.xlu0 %3183
  %3185 = vmax.xlane.f32.xlu0 %v2834
  %v3186 = vpop.xlane.xlu0 %3185
  %3187 = vmax.xlane.f32.xlu0 %v2839
  %v3188 = vpop.xlane.xlu0 %3187
  %3189 = vmax.xlane.f32.xlu0 %v2842
  %v3190 = vpop.xlane.xlu0 %3189
  %3191 = vmax.xlane.f32.xlu0 %v2847
  %v3192 = vpop.xlane.xlu0 %3191
  %3193 = vmax.xlane.f32.xlu0 %v2850
  %v3194 = vpop.xlane.xlu0 %3193
  %3195 = vmax.xlane.f32.xlu0 %v2855
  %v3196 = vpop.xlane.xlu0 %3195
  %3197 = vmax.xlane.f32.xlu0 %v2858
  %v3198 = vpop.xlane.xlu0 %3197
  %3199 = vmax.xlane.f32.xlu0 %v2936
  %v3200 = vpop.xlane.xlu0 %3199
  %3201 = vmax.xlane.f32.xlu0 %v2939
  %v3202 = vpop.xlane.xlu0 %3201
  %3203 = vmax.xlane.f32.xlu0 %v2944
  %v3204 = vpop.xlane.xlu0 %3203
  %3205 = vmax.xlane.f32.xlu0 %v2947
  %v3206 = vpop.xlane.xlu0 %3205
  %3207 = vmax.xlane.f32.xlu0 %v2952
  %v3208 = vpop.xlane.xlu0 %3207
  %3209 = vmax.xlane.f32.xlu0 %v2955
  %v3210 = vpop.xlane.xlu0 %3209
  %3211 = vmax.xlane.f32.xlu0 %v2960
  %v3212 = vpop.xlane.xlu0 %3211
  %3213 = vmax.xlane.f32.xlu0 %v2963
  %v3214 = vpop.xlane.xlu0 %3213
  %3215 = vmax.xlane.f32.xlu0 %v2968
  %v3216 = vpop.xlane.xlu0 %3215
  %3217 = vmax.xlane.f32.xlu0 %v2971
  %v3218 = vpop.xlane.xlu0 %3217
  %3219 = vmax.xlane.f32.xlu0 %v2976
  %v3220 = vpop.xlane.xlu0 %3219
  %3221 = vmax.xlane.f32.xlu0 %v2979
  %v3222 = vpop.xlane.xlu0 %3221
  %3223 = vmax.xlane.f32.xlu0 %v2984
  %v3224 = vpop.xlane.xlu0 %3223
  %3225 = vmax.xlane.f32.xlu0 %v2987
  %v3226 = vpop.xlane.xlu0 %3225
  %3227 = vmax.xlane.f32.xlu0 %v2992
  %v3228 = vpop.xlane.xlu0 %3227
  %3229 = vmax.xlane.f32.xlu0 %v2995
  %v3230 = vpop.xlane.xlu0 %3229
  %3231 = vmax.xlane.f32.xlu0 %v3073
  %v3232 = vpop.xlane.xlu0 %3231
  %3233 = vmax.xlane.f32.xlu0 %v3076
  %v3234 = vpop.xlane.xlu0 %3233
  %3235 = vmax.xlane.f32.xlu0 %v3081
  %v3236 = vpop.xlane.xlu0 %3235
  %3237 = vmax.xlane.f32.xlu0 %v3084
  %v3238 = vpop.xlane.xlu0 %3237
  %3239 = vmax.xlane.f32.xlu0 %v3089
  %v3240 = vpop.xlane.xlu0 %3239
  %3241 = vmax.xlane.f32.xlu0 %v3092
  %v3242 = vpop.xlane.xlu0 %3241
  %3243 = vmax.xlane.f32.xlu0 %v3097
  %v3244 = vpop.xlane.xlu0 %3243
  %3245 = vmax.xlane.f32.xlu0 %v3100
  %v3246 = vpop.xlane.xlu0 %3245
  %3247 = vmax.xlane.f32.xlu0 %v3105
  %v3248 = vpop.xlane.xlu0 %3247
  %3249 = vmax.xlane.f32.xlu0 %v3108
  %v3250 = vpop.xlane.xlu0 %3249
  %3251 = vmax.xlane.f32.xlu0 %v3113
  %v3252 = vpop.xlane.xlu0 %3251
  %3253 = vmax.xlane.f32.xlu0 %v3116
  %v3254 = vpop.xlane.xlu0 %3253
  %3255 = vmax.xlane.f32.xlu0 %v3121
  %v3256 = vpop.xlane.xlu0 %3255
  %3257 = vmax.xlane.f32.xlu0 %v3124
  %v3258 = vpop.xlane.xlu0 %3257
  %3259 = vmax.xlane.f32.xlu0 %v3129
  %v3260 = vpop.xlane.xlu0 %3259
  %3261 = vmax.xlane.f32.xlu0 %v3132
  %v3262 = vpop.xlane.xlu0 %3261
  %v3263 = vsub.f32 %v2662, %v3136
  %v3264 = vsub.f32 %v2665, %v3138
  %v3265 = vsub.f32 %v2670, %v3140
  %v3266 = vsub.f32 %v2673, %v3142
  %v3267 = vsub.f32 %v2678, %v3144
  %v3268 = vsub.f32 %v2681, %v3146
  %v3269 = vsub.f32 %v2686, %v3148
  %v3270 = vsub.f32 %v2689, %v3150
  %v3271 = vsub.f32 %v2694, %v3152
  %v3272 = vsub.f32 %v2697, %v3154
  %v3273 = vsub.f32 %v2702, %v3156
  %v3274 = vsub.f32 %v2705, %v3158
  %v3275 = vsub.f32 %v2710, %v3160
  %v3276 = vsub.f32 %v2713, %v3162
  %v3277 = vsub.f32 %v2718, %v3164
  %v3278 = vsub.f32 %v2721, %v3166
  %v3279 = vsub.f32 %v2799, %v3168
  %v3280 = vsub.f32 %v2802, %v3170
  %v3281 = vsub.f32 %v2807, %v3172
  %v3282 = vsub.f32 %v2810, %v3174
  %v3283 = vsub.f32 %v2815, %v3176
  %v3284 = vsub.f32 %v2818, %v3178
  %v3285 = vsub.f32 %v2823, %v3180
  %v3286 = vsub.f32 %v2826, %v3182
  %v3287 = vsub.f32 %v2831, %v3184
  %v3288 = vsub.f32 %v2834, %v3186
  %v3289 = vsub.f32 %v2839, %v3188
  %v3290 = vsub.f32 %v2842, %v3190
  %v3291 = vsub.f32 %v2847, %v3192
  %v3292 = vsub.f32 %v2850, %v3194
  %v3293 = vsub.f32 %v2855, %v3196
  %v3294 = vsub.f32 %v2858, %v3198
  %v3295 = vsub.f32 %v2936, %v3200
  %v3296 = vsub.f32 %v2939, %v3202
  %v3297 = vsub.f32 %v2944, %v3204
  %v3298 = vsub.f32 %v2947, %v3206
  %v3299 = vsub.f32 %v2952, %v3208
  %v3300 = vsub.f32 %v2955, %v3210
  %v3301 = vsub.f32 %v2960, %v3212
  %v3302 = vsub.f32 %v2963, %v3214
  %v3303 = vsub.f32 %v2968, %v3216
  %v3304 = vsub.f32 %v2971, %v3218
  %v3305 = vsub.f32 %v2976, %v3220
  %v3306 = vsub.f32 %v2979, %v3222
  %v3307 = vsub.f32 %v2984, %v3224
  %v3308 = vsub.f32 %v2987, %v3226
  %v3309 = vsub.f32 %v2992, %v3228
  %v3310 = vsub.f32 %v2995, %v3230
  %v3311 = vsub.f32 %v3073, %v3232
  %v3312 = vsub.f32 %v3076, %v3234
  %v3313 = vsub.f32 %v3081, %v3236
  %v3314 = vsub.f32 %v3084, %v3238
  %v3315 = vsub.f32 %v3089, %v3240
  %v3316 = vsub.f32 %v3092, %v3242
  %v3317 = vsub.f32 %v3097, %v3244
  %v3318 = vsub.f32 %v3100, %v3246
  %v3319 = vsub.f32 %v3105, %v3248
  %v3320 = vsub.f32 %v3108, %v3250
  %v3321 = vsub.f32 %v3113, %v3252
  %v3322 = vsub.f32 %v3116, %v3254
  %v3323 = vsub.f32 %v3121, %v3256
  %v3324 = vsub.f32 %v3124, %v3258
  %v3325 = vsub.f32 %v3129, %v3260
  %v3326 = vsub.f32 %v3132, %v3262
  %v3327 = vmul.f32 %v3263, 1.442695
  %v3328 = vpow.pop %v3327
  %v3329 = vmul.f32 %v3264, 1.442695
  %v3330 = vpow.pop %v3329
  %v3331 = vmul.f32 %v3265, 1.442695
  %v3332 = vpow.pop %v3331
  %v3333 = vmul.f32 %v3266, 1.442695
  %v3334 = vpow.pop %v3333
  %v3335 = vmul.f32 %v3267, 1.442695
  %v3336 = vpow.pop %v3335
  %v3337 = vmul.f32 %v3268, 1.442695
  %v3338 = vpow.pop %v3337
  %v3339 = vmul.f32 %v3269, 1.442695
  %v3340 = vpow.pop %v3339
  %v3341 = vmul.f32 %v3270, 1.442695
  %v3342 = vpow.pop %v3341
  %v3343 = vmul.f32 %v3271, 1.442695
  %v3344 = vpow.pop %v3343
  %v3345 = vmul.f32 %v3272, 1.442695
  %v3346 = vpow.pop %v3345
  %v3347 = vmul.f32 %v3273, 1.442695
  %v3348 = vpow.pop %v3347
  %v3349 = vmul.f32 %v3274, 1.442695
  %v3350 = vpow.pop %v3349
  %v3351 = vmul.f32 %v3275, 1.442695
  %v3352 = vpow.pop %v3351
  %v3353 = vmul.f32 %v3276, 1.442695
  %v3354 = vpow.pop %v3353
  %v3355 = vmul.f32 %v3277, 1.442695
  %v3356 = vpow.pop %v3355
  %v3357 = vmul.f32 %v3278, 1.442695
  %v3358 = vpow.pop %v3357
  %v3359 = vmul.f32 %v3279, 1.442695
  %v3360 = vpow.pop %v3359
  %v3361 = vmul.f32 %v3280, 1.442695
  %v3362 = vpow.pop %v3361
  %v3363 = vmul.f32 %v3281, 1.442695
  %v3364 = vpow.pop %v3363
  %v3365 = vmul.f32 %v3282, 1.442695
  %v3366 = vpow.pop %v3365
  %v3367 = vmul.f32 %v3283, 1.442695
  %v3368 = vpow.pop %v3367
  %v3369 = vmul.f32 %v3284, 1.442695
  %v3370 = vpow.pop %v3369
  %v3371 = vmul.f32 %v3285, 1.442695
  %v3372 = vpow.pop %v3371
  %v3373 = vmul.f32 %v3286, 1.442695
  %v3374 = vpow.pop %v3373
  %v3375 = vmul.f32 %v3287, 1.442695
  %v3376 = vpow.pop %v3375
  %v3377 = vmul.f32 %v3288, 1.442695
  %v3378 = vpow.pop %v3377
  %v3379 = vmul.f32 %v3289, 1.442695
  %v3380 = vpow.pop %v3379
  %v3381 = vmul.f32 %v3290, 1.442695
  %v3382 = vpow.pop %v3381
  %v3383 = vmul.f32 %v3291, 1.442695
  %v3384 = vpow.pop %v3383
  %v3385 = vmul.f32 %v3292, 1.442695
  %v3386 = vpow.pop %v3385
  %v3387 = vmul.f32 %v3293, 1.442695
  %v3388 = vpow.pop %v3387
  %v3389 = vmul.f32 %v3294, 1.442695
  %v3390 = vpow.pop %v3389
  %v3391 = vmul.f32 %v3295, 1.442695
  %v3392 = vpow.pop %v3391
  %v3393 = vmul.f32 %v3296, 1.442695
  %v3394 = vpow.pop %v3393
  %v3395 = vmul.f32 %v3297, 1.442695
  %v3396 = vpow.pop %v3395
  %v3397 = vmul.f32 %v3298, 1.442695
  %v3398 = vpow.pop %v3397
  %v3399 = vmul.f32 %v3299, 1.442695
  %v3400 = vpow.pop %v3399
  %v3401 = vmul.f32 %v3300, 1.442695
  %v3402 = vpow.pop %v3401
  %v3403 = vmul.f32 %v3301, 1.442695
  %v3404 = vpow.pop %v3403
  %v3405 = vmul.f32 %v3302, 1.442695
  %v3406 = vpow.pop %v3405
  %v3407 = vmul.f32 %v3303, 1.442695
  %v3408 = vpow.pop %v3407
  %v3409 = vmul.f32 %v3304, 1.442695
  %v3410 = vpow.pop %v3409
  %v3411 = vmul.f32 %v3305, 1.442695
  %v3412 = vpow.pop %v3411
  %v3413 = vmul.f32 %v3306, 1.442695
  %v3414 = vpow.pop %v3413
  %v3415 = vmul.f32 %v3307, 1.442695
  %v3416 = vpow.pop %v3415
  %v3417 = vmul.f32 %v3308, 1.442695
  %v3418 = vpow.pop %v3417
  %v3419 = vmul.f32 %v3309, 1.442695
  %v3420 = vpow.pop %v3419
  %v3421 = vmul.f32 %v3310, 1.442695
  %v3422 = vpow.pop %v3421
  %v3423 = vmul.f32 %v3311, 1.442695
  %v3424 = vpow.pop %v3423
  %v3425 = vmul.f32 %v3312, 1.442695
  %v3426 = vpow.pop %v3425
  %v3427 = vmul.f32 %v3313, 1.442695
  %v3428 = vpow.pop %v3427
  %v3429 = vmul.f32 %v3314, 1.442695
  %v3430 = vpow.pop %v3429
  %v3431 = vmul.f32 %v3315, 1.442695
  %v3432 = vpow.pop %v3431
  %v3433 = vmul.f32 %v3316, 1.442695
  %v3434 = vpow.pop %v3433
  %v3435 = vmul.f32 %v3317, 1.442695
  %v3436 = vpow.pop %v3435
  %v3437 = vmul.f32 %v3318, 1.442695
  %v3438 = vpow.pop %v3437
  %v3439 = vmul.f32 %v3319, 1.442695
  %v3440 = vpow.pop %v3439
  %v3441 = vmul.f32 %v3320, 1.442695
  %v3442 = vpow.pop %v3441
  %v3443 = vmul.f32 %v3321, 1.442695
  %v3444 = vpow.pop %v3443
  %v3445 = vmul.f32 %v3322, 1.442695
  %v3446 = vpow.pop %v3445
  %v3447 = vmul.f32 %v3323, 1.442695
  %v3448 = vpow.pop %v3447
  %v3449 = vmul.f32 %v3324, 1.442695
  %v3450 = vpow.pop %v3449
  %v3451 = vmul.f32 %v3325, 1.442695
  %v3452 = vpow.pop %v3451
  %v3453 = vmul.f32 %v3326, 1.442695
  %v3454 = vpow.pop %v3453
  %3455 = vadd.xlane.f32.xlu0 %v3328
  %v3456 = vpop.xlane.xlu0 %3455
  %3457 = vadd.xlane.f32.xlu0 %v3330
  %v3458 = vpop.xlane.xlu0 %3457
  %3459 = vadd.xlane.f32.xlu0 %v3332
  %v3460 = vpop.xlane.xlu0 %3459
  %3461 = vadd.xlane.f32.xlu0 %v3334
  %v3462 = vpop.xlane.xlu0 %3461
  %3463 = vadd.xlane.f32.xlu0 %v3336
  %v3464 = vpop.xlane.xlu0 %3463
  %3465 = vadd.xlane.f32.xlu0 %v3338
  %v3466 = vpop.xlane.xlu0 %3465
  %3467 = vadd.xlane.f32.xlu0 %v3340
  %v3468 = vpop.xlane.xlu0 %3467
  %3469 = vadd.xlane.f32.xlu0 %v3342
  %v3470 = vpop.xlane.xlu0 %3469
  %3471 = vadd.xlane.f32.xlu0 %v3344
  %v3472 = vpop.xlane.xlu0 %3471
  %3473 = vadd.xlane.f32.xlu0 %v3346
  %v3474 = vpop.xlane.xlu0 %3473
  %3475 = vadd.xlane.f32.xlu0 %v3348
  %v3476 = vpop.xlane.xlu0 %3475
  %3477 = vadd.xlane.f32.xlu0 %v3350
  %v3478 = vpop.xlane.xlu0 %3477
  %3479 = vadd.xlane.f32.xlu0 %v3352
  %v3480 = vpop.xlane.xlu0 %3479
  %3481 = vadd.xlane.f32.xlu0 %v3354
  %v3482 = vpop.xlane.xlu0 %3481
  %3483 = vadd.xlane.f32.xlu0 %v3356
  %v3484 = vpop.xlane.xlu0 %3483
  %3485 = vadd.xlane.f32.xlu0 %v3358
  %v3486 = vpop.xlane.xlu0 %3485
  %3487 = vadd.xlane.f32.xlu0 %v3360
  %v3488 = vpop.xlane.xlu0 %3487
  %3489 = vadd.xlane.f32.xlu0 %v3362
  %v3490 = vpop.xlane.xlu0 %3489
  %3491 = vadd.xlane.f32.xlu0 %v3364
  %v3492 = vpop.xlane.xlu0 %3491
  %3493 = vadd.xlane.f32.xlu0 %v3366
  %v3494 = vpop.xlane.xlu0 %3493
  %3495 = vadd.xlane.f32.xlu0 %v3368
  %v3496 = vpop.xlane.xlu0 %3495
  %3497 = vadd.xlane.f32.xlu0 %v3370
  %v3498 = vpop.xlane.xlu0 %3497
  %3499 = vadd.xlane.f32.xlu0 %v3372
  %v3500 = vpop.xlane.xlu0 %3499
  %3501 = vadd.xlane.f32.xlu0 %v3374
  %v3502 = vpop.xlane.xlu0 %3501
  %3503 = vadd.xlane.f32.xlu0 %v3376
  %v3504 = vpop.xlane.xlu0 %3503
  %3505 = vadd.xlane.f32.xlu0 %v3378
  %v3506 = vpop.xlane.xlu0 %3505
  %3507 = vadd.xlane.f32.xlu0 %v3380
  %v3508 = vpop.xlane.xlu0 %3507
  %3509 = vadd.xlane.f32.xlu0 %v3382
  %v3510 = vpop.xlane.xlu0 %3509
  %3511 = vadd.xlane.f32.xlu0 %v3384
  %v3512 = vpop.xlane.xlu0 %3511
  %3513 = vadd.xlane.f32.xlu0 %v3386
  %v3514 = vpop.xlane.xlu0 %3513
  %3515 = vadd.xlane.f32.xlu0 %v3388
  %v3516 = vpop.xlane.xlu0 %3515
  %3517 = vadd.xlane.f32.xlu0 %v3390
  %v3518 = vpop.xlane.xlu0 %3517
  %3519 = vadd.xlane.f32.xlu0 %v3392
  %v3520 = vpop.xlane.xlu0 %3519
  %3521 = vadd.xlane.f32.xlu0 %v3394
  %v3522 = vpop.xlane.xlu0 %3521
  %3523 = vadd.xlane.f32.xlu0 %v3396
  %v3524 = vpop.xlane.xlu0 %3523
  %3525 = vadd.xlane.f32.xlu0 %v3398
  %v3526 = vpop.xlane.xlu0 %3525
  %3527 = vadd.xlane.f32.xlu0 %v3400
  %v3528 = vpop.xlane.xlu0 %3527
  %3529 = vadd.xlane.f32.xlu0 %v3402
  %v3530 = vpop.xlane.xlu0 %3529
  %3531 = vadd.xlane.f32.xlu0 %v3404
  %v3532 = vpop.xlane.xlu0 %3531
  %3533 = vadd.xlane.f32.xlu0 %v3406
  %v3534 = vpop.xlane.xlu0 %3533
  %3535 = vadd.xlane.f32.xlu0 %v3408
  %v3536 = vpop.xlane.xlu0 %3535
  %3537 = vadd.xlane.f32.xlu0 %v3410
  %v3538 = vpop.xlane.xlu0 %3537
  %3539 = vadd.xlane.f32.xlu0 %v3412
  %v3540 = vpop.xlane.xlu0 %3539
  %3541 = vadd.xlane.f32.xlu0 %v3414
  %v3542 = vpop.xlane.xlu0 %3541
  %3543 = vadd.xlane.f32.xlu0 %v3416
  %v3544 = vpop.xlane.xlu0 %3543
  %3545 = vadd.xlane.f32.xlu0 %v3418
  %v3546 = vpop.xlane.xlu0 %3545
  %3547 = vadd.xlane.f32.xlu0 %v3420
  %v3548 = vpop.xlane.xlu0 %3547
  %3549 = vadd.xlane.f32.xlu0 %v3422
  %v3550 = vpop.xlane.xlu0 %3549
  %3551 = vadd.xlane.f32.xlu0 %v3424
  %v3552 = vpop.xlane.xlu0 %3551
  %3553 = vadd.xlane.f32.xlu0 %v3426
  %v3554 = vpop.xlane.xlu0 %3553
  %3555 = vadd.xlane.f32.xlu0 %v3428
  %v3556 = vpop.xlane.xlu0 %3555
  %3557 = vadd.xlane.f32.xlu0 %v3430
  %v3558 = vpop.xlane.xlu0 %3557
  %3559 = vadd.xlane.f32.xlu0 %v3432
  %v3560 = vpop.xlane.xlu0 %3559
  %3561 = vadd.xlane.f32.xlu0 %v3434
  %v3562 = vpop.xlane.xlu0 %3561
  %3563 = vadd.xlane.f32.xlu0 %v3436
  %v3564 = vpop.xlane.xlu0 %3563
  %3565 = vadd.xlane.f32.xlu0 %v3438
  %v3566 = vpop.xlane.xlu0 %3565
  %3567 = vadd.xlane.f32.xlu0 %v3440
  %v3568 = vpop.xlane.xlu0 %3567
  %3569 = vadd.xlane.f32.xlu0 %v3442
  %v3570 = vpop.xlane.xlu0 %3569
  %3571 = vadd.xlane.f32.xlu0 %v3444
  %v3572 = vpop.xlane.xlu0 %3571
  %3573 = vadd.xlane.f32.xlu0 %v3446
  %v3574 = vpop.xlane.xlu0 %3573
  %3575 = vadd.xlane.f32.xlu0 %v3448
  %v3576 = vpop.xlane.xlu0 %3575
  %3577 = vadd.xlane.f32.xlu0 %v3450
  %v3578 = vpop.xlane.xlu0 %3577
  %3579 = vadd.xlane.f32.xlu0 %v3452
  %v3580 = vpop.xlane.xlu0 %3579
  %3581 = vadd.xlane.f32.xlu0 %v3454
  %v3582 = vpop.xlane.xlu0 %3581
  %v3583 = vrcp.pop %v3456
  %v3584 = vrcp.pop %v3458
  %v3585 = vrcp.pop %v3460
  %v3586 = vrcp.pop %v3462
  %v3587 = vrcp.pop %v3464
  %v3588 = vrcp.pop %v3466
  %v3589 = vrcp.pop %v3468
  %v3590 = vrcp.pop %v3470
  %v3591 = vrcp.pop %v3472
  %v3592 = vrcp.pop %v3474
  %v3593 = vrcp.pop %v3476
  %v3594 = vrcp.pop %v3478
  %v3595 = vrcp.pop %v3480
  %v3596 = vrcp.pop %v3482
  %v3597 = vrcp.pop %v3484
  %v3598 = vrcp.pop %v3486
  %v3599 = vrcp.pop %v3488
  %v3600 = vrcp.pop %v3490
  %v3601 = vrcp.pop %v3492
  %v3602 = vrcp.pop %v3494
  %v3603 = vrcp.pop %v3496
  %v3604 = vrcp.pop %v3498
  %v3605 = vrcp.pop %v3500
  %v3606 = vrcp.pop %v3502
  %v3607 = vrcp.pop %v3504
  %v3608 = vrcp.pop %v3506
  %v3609 = vrcp.pop %v3508
  %v3610 = vrcp.pop %v3510
  %v3611 = vrcp.pop %v3512
  %v3612 = vrcp.pop %v3514
  %v3613 = vrcp.pop %v3516
  %v3614 = vrcp.pop %v3518
  %v3615 = vrcp.pop %v3520
  %v3616 = vrcp.pop %v3522
  %v3617 = vrcp.pop %v3524
  %v3618 = vrcp.pop %v3526
  %v3619 = vrcp.pop %v3528
  %v3620 = vrcp.pop %v3530
  %v3621 = vrcp.pop %v3532
  %v3622 = vrcp.pop %v3534
  %v3623 = vrcp.pop %v3536
  %v3624 = vrcp.pop %v3538
  %v3625 = vrcp.pop %v3540
  %v3626 = vrcp.pop %v3542
  %v3627 = vrcp.pop %v3544
  %v3628 = vrcp.pop %v3546
  %v3629 = vrcp.pop %v3548
  %v3630 = vrcp.pop %v3550
  %v3631 = vrcp.pop %v3552
  %v3632 = vrcp.pop %v3554
  %v3633 = vrcp.pop %v3556
  %v3634 = vrcp.pop %v3558
  %v3635 = vrcp.pop %v3560
  %v3636 = vrcp.pop %v3562
  %v3637 = vrcp.pop %v3564
  %v3638 = vrcp.pop %v3566
  %v3639 = vrcp.pop %v3568
  %v3640 = vrcp.pop %v3570
  %v3641 = vrcp.pop %v3572
  %v3642 = vrcp.pop %v3574
  %v3643 = vrcp.pop %v3576
  %v3644 = vrcp.pop %v3578
  %v3645 = vrcp.pop %v3580
  %v3646 = vrcp.pop %v3582
  %v3647 = vmul.f32 %v3328, %v3583
  %v3648 = vmul.f32 %v3330, %v3584
  %v3649 = vmul.f32 %v3332, %v3585
  %v3650 = vmul.f32 %v3334, %v3586
  %v3651 = vmul.f32 %v3336, %v3587
  %v3652 = vmul.f32 %v3338, %v3588
  %v3653 = vmul.f32 %v3340, %v3589
  %v3654 = vmul.f32 %v3342, %v3590
  %v3655 = vmul.f32 %v3344, %v3591
  %v3656 = vmul.f32 %v3346, %v3592
  %v3657 = vmul.f32 %v3348, %v3593
  %v3658 = vmul.f32 %v3350, %v3594
  %v3659 = vmul.f32 %v3352, %v3595
  %v3660 = vmul.f32 %v3354, %v3596
  %v3661 = vmul.f32 %v3356, %v3597
  %v3662 = vmul.f32 %v3358, %v3598
  %v3663 = vmul.f32 %v3360, %v3599
  %v3664 = vmul.f32 %v3362, %v3600
  %v3665 = vmul.f32 %v3364, %v3601
  %v3666 = vmul.f32 %v3366, %v3602
  %v3667 = vmul.f32 %v3368, %v3603
  %v3668 = vmul.f32 %v3370, %v3604
  %v3669 = vmul.f32 %v3372, %v3605
  %v3670 = vmul.f32 %v3374, %v3606
  %v3671 = vmul.f32 %v3376, %v3607
  %v3672 = vmul.f32 %v3378, %v3608
  %v3673 = vmul.f32 %v3380, %v3609
  %v3674 = vmul.f32 %v3382, %v3610
  %v3675 = vmul.f32 %v3384, %v3611
  %v3676 = vmul.f32 %v3386, %v3612
  %v3677 = vmul.f32 %v3388, %v3613
  %v3678 = vmul.f32 %v3390, %v3614
  %v3679 = vmul.f32 %v3392, %v3615
  %v3680 = vmul.f32 %v3394, %v3616
  %v3681 = vmul.f32 %v3396, %v3617
  %v3682 = vmul.f32 %v3398, %v3618
  %v3683 = vmul.f32 %v3400, %v3619
  %v3684 = vmul.f32 %v3402, %v3620
  %v3685 = vmul.f32 %v3404, %v3621
  %v3686 = vmul.f32 %v3406, %v3622
  %v3687 = vmul.f32 %v3408, %v3623
  %v3688 = vmul.f32 %v3410, %v3624
  %v3689 = vmul.f32 %v3412, %v3625
  %v3690 = vmul.f32 %v3414, %v3626
  %v3691 = vmul.f32 %v3416, %v3627
  %v3692 = vmul.f32 %v3418, %v3628
  %v3693 = vmul.f32 %v3420, %v3629
  %v3694 = vmul.f32 %v3422, %v3630
  %v3695 = vmul.f32 %v3424, %v3631
  %v3696 = vmul.f32 %v3426, %v3632
  %v3697 = vmul.f32 %v3428, %v3633
  %v3698 = vmul.f32 %v3430, %v3634
  %v3699 = vmul.f32 %v3432, %v3635
  %v3700 = vmul.f32 %v3434, %v3636
  %v3701 = vmul.f32 %v3436, %v3637
  %v3702 = vmul.f32 %v3438, %v3638
  %v3703 = vmul.f32 %v3440, %v3639
  %v3704 = vmul.f32 %v3442, %v3640
  %v3705 = vmul.f32 %v3444, %v3641
  %v3706 = vmul.f32 %v3446, %v3642
  %v3707 = vmul.f32 %v3448, %v3643
  %v3708 = vmul.f32 %v3450, %v3644
  %v3709 = vmul.f32 %v3452, %v3645
  %v3710 = vmul.f32 %v3454, %v3646
  %v3711 = vpack.c.bf16 %v3648, %v3647
  %v3712 = vpack.c.bf16 %v3650, %v3649
  %v3713 = vpack.c.bf16 %v3652, %v3651
  %v3714 = vpack.c.bf16 %v3654, %v3653
  %v3715 = vpack.c.bf16 %v3656, %v3655
  %v3716 = vpack.c.bf16 %v3658, %v3657
  %v3717 = vpack.c.bf16 %v3660, %v3659
  %v3718 = vpack.c.bf16 %v3662, %v3661
  %v3719 = vpack.c.bf16 %v3664, %v3663
  %v3720 = vpack.c.bf16 %v3666, %v3665
  %v3721 = vpack.c.bf16 %v3668, %v3667
  %v3722 = vpack.c.bf16 %v3670, %v3669
  %v3723 = vpack.c.bf16 %v3672, %v3671
  %v3724 = vpack.c.bf16 %v3674, %v3673
  %v3725 = vpack.c.bf16 %v3676, %v3675
  %v3726 = vpack.c.bf16 %v3678, %v3677
  %v3727 = vpack.c.bf16 %v3680, %v3679
  %v3728 = vpack.c.bf16 %v3682, %v3681
  %v3729 = vpack.c.bf16 %v3684, %v3683
  %v3730 = vpack.c.bf16 %v3686, %v3685
  %v3731 = vpack.c.bf16 %v3688, %v3687
  %v3732 = vpack.c.bf16 %v3690, %v3689
  %v3733 = vpack.c.bf16 %v3692, %v3691
  %v3734 = vpack.c.bf16 %v3694, %v3693
  %v3735 = vpack.c.bf16 %v3696, %v3695
  %v3736 = vpack.c.bf16 %v3698, %v3697
  %v3737 = vpack.c.bf16 %v3700, %v3699
  %v3738 = vpack.c.bf16 %v3702, %v3701
  %v3739 = vpack.c.bf16 %v3704, %v3703
  %v3740 = vpack.c.bf16 %v3706, %v3705
  %v3741 = vpack.c.bf16 %v3708, %v3707
  %v3742 = vpack.c.bf16 %v3710, %v3709
  %3743 = vmatprep.subr.bf16.mxu0 0
  %3744 = vmatpush1.bf16.xpose.msra.mxu0 %v3711
  %3745 = vmatprep.subr.bf16.mxu0 0
  %3746 = vmatpush1.bf16.xpose.msra.mxu0 %v3712
  %3747 = vmatprep.subr.bf16.mxu0 0
  %3748 = vmatpush1.bf16.xpose.msra.mxu0 %v3713
  %3749 = vmatprep.subr.bf16.mxu0 0
  %3750 = vmatpush1.bf16.xpose.msra.mxu0 %v3714
  %3751 = vmatprep.subr.bf16.mxu0 0
  %3752 = vmatpush1.bf16.xpose.msra.mxu0 %v3715
  %3753 = vmatprep.subr.bf16.mxu0 0
  %3754 = vmatpush1.bf16.xpose.msra.mxu0 %v3716
  %3755 = vmatprep.subr.bf16.mxu0 0
  %3756 = vmatpush1.bf16.xpose.msra.mxu0 %v3717
  %3757 = vmatprep.subr.bf16.mxu0 0
  %3758 = vmatpush1.bf16.xpose.msra.mxu0 %v3718
  %3759 = vmatprep.subr.bf16.mxu0 0
  %3760 = vmatpush1.bf16.xpose.msra.mxu0 0
  %3761 = vmatprep.subr.bf16.mxu0 0
  %3762 = vmatpush1.bf16.xpose.msra.mxu0 0
  %3763 = vmatprep.subr.bf16.mxu0 0
  %3764 = vmatpush1.bf16.xpose.msra.mxu0 0
  %3765 = vmatprep.subr.bf16.mxu0 0
  %3766 = vmatpush1.bf16.xpose.msra.mxu0 0
  %3767 = vmatprep.subr.bf16.mxu0 0
  %3768 = vmatpush1.bf16.xpose.msra.mxu0 0
  %3769 = vmatprep.subr.bf16.mxu0 0
  %3770 = vmatpush1.bf16.xpose.msra.mxu0 0
  %3771 = vmatprep.subr.bf16.mxu0 0
  %3772 = vmatpush1.bf16.xpose.msra.mxu0 0
  %3773 = vmatprep.subr.bf16.mxu0 0
  %3774 = vmatpush1.bf16.xpose.msra.mxu0 0
  %3775 = vmatprep.mubr.bf16.mxu0 0
  %3776 = vmatmul.mubr.bf16.gmra.mrb[0].mxu0 %v2583
  %v3777 = vpop.f32.mrb[0].mxu0
  %v3778 = vadd.f32 0.0, %v3777
  %v3779 = vpop.f32.mrb[0].mxu0
  %v3780 = vpop.f32.mrb[0].mxu0
  %v3781 = vadd.f32 0.0, %v3780
  %v3782 = vpop.f32.mrb[0].mxu0
  %3783 = vdwg.mxu0
  %3784 = vmatprep.subr.bf16.mxu0 0
  %3785 = vmatpush1.bf16.xpose.msra.mxu0 %v3719
  %3786 = vmatprep.subr.bf16.mxu0 0
  %3787 = vmatpush1.bf16.xpose.msra.mxu0 %v3720
  %3788 = vmatprep.subr.bf16.mxu0 0
  %3789 = vmatpush1.bf16.xpose.msra.mxu0 %v3721
  %3790 = vmatprep.subr.bf16.mxu0 0
  %3791 = vmatpush1.bf16.xpose.msra.mxu0 %v3722
  %3792 = vmatprep.subr.bf16.mxu0 0
  %3793 = vmatpush1.bf16.xpose.msra.mxu0 %v3723
  %3794 = vmatprep.subr.bf16.mxu0 0
  %3795 = vmatpush1.bf16.xpose.msra.mxu0 %v3724
  %3796 = vmatprep.subr.bf16.mxu0 0
  %3797 = vmatpush1.bf16.xpose.msra.mxu0 %v3725
  %3798 = vmatprep.subr.bf16.mxu0 0
  %3799 = vmatpush1.bf16.xpose.msra.mxu0 %v3726
  %3800 = vmatprep.subr.bf16.mxu0 0
  %3801 = vmatpush1.bf16.xpose.msra.mxu0 0
  %3802 = vmatprep.subr.bf16.mxu0 0
  %3803 = vmatpush1.bf16.xpose.msra.mxu0 0
  %3804 = vmatprep.subr.bf16.mxu0 0
  %3805 = vmatpush1.bf16.xpose.msra.mxu0 0
  %3806 = vmatprep.subr.bf16.mxu0 0
  %3807 = vmatpush1.bf16.xpose.msra.mxu0 0
  %3808 = vmatprep.subr.bf16.mxu0 0
  %3809 = vmatpush1.bf16.xpose.msra.mxu0 0
  %3810 = vmatprep.subr.bf16.mxu0 0
  %3811 = vmatpush1.bf16.xpose.msra.mxu0 0
  %3812 = vmatprep.subr.bf16.mxu0 0
  %3813 = vmatpush1.bf16.xpose.msra.mxu0 0
  %3814 = vmatprep.subr.bf16.mxu0 0
  %3815 = vmatpush1.bf16.xpose.msra.mxu0 0
  %3816 = vmatprep.mubr.bf16.mxu0 0
  %3817 = vmatmul.mubr.bf16.gmra.mrb[0].mxu0 %v2584
  %v3818 = vpop.f32.mrb[0].mxu0
  %v3819 = vadd.f32 0.0, %v3818
  %v3820 = vpop.f32.mrb[0].mxu0
  %v3821 = vpop.f32.mrb[0].mxu0
  %v3822 = vadd.f32 0.0, %v3821
  %v3823 = vpop.f32.mrb[0].mxu0
  %3824 = vdwg.mxu0
  %3825 = vmatprep.subr.bf16.mxu0 0
  %3826 = vmatpush1.bf16.xpose.msra.mxu0 %v3727
  %3827 = vmatprep.subr.bf16.mxu0 0
  %3828 = vmatpush1.bf16.xpose.msra.mxu0 %v3728
  %3829 = vmatprep.subr.bf16.mxu0 0
  %3830 = vmatpush1.bf16.xpose.msra.mxu0 %v3729
  %3831 = vmatprep.subr.bf16.mxu0 0
  %3832 = vmatpush1.bf16.xpose.msra.mxu0 %v3730
  %3833 = vmatprep.subr.bf16.mxu0 0
  %3834 = vmatpush1.bf16.xpose.msra.mxu0 %v3731
  %3835 = vmatprep.subr.bf16.mxu0 0
  %3836 = vmatpush1.bf16.xpose.msra.mxu0 %v3732
  %3837 = vmatprep.subr.bf16.mxu0 0
  %3838 = vmatpush1.bf16.xpose.msra.mxu0 %v3733
  %3839 = vmatprep.subr.bf16.mxu0 0
  %3840 = vmatpush1.bf16.xpose.msra.mxu0 %v3734
  %3841 = vmatprep.subr.bf16.mxu0 0
  %3842 = vmatpush1.bf16.xpose.msra.mxu0 0
  %3843 = vmatprep.subr.bf16.mxu0 0
  %3844 = vmatpush1.bf16.xpose.msra.mxu0 0
  %3845 = vmatprep.subr.bf16.mxu0 0
  %3846 = vmatpush1.bf16.xpose.msra.mxu0 0
  %3847 = vmatprep.subr.bf16.mxu0 0
  %3848 = vmatpush1.bf16.xpose.msra.mxu0 0
  %3849 = vmatprep.subr.bf16.mxu0 0
  %3850 = vmatpush1.bf16.xpose.msra.mxu0 0
  %3851 = vmatprep.subr.bf16.mxu0 0
  %3852 = vmatpush1.bf16.xpose.msra.mxu0 0
  %3853 = vmatprep.subr.bf16.mxu0 0
  %3854 = vmatpush1.bf16.xpose.msra.mxu0 0
  %3855 = vmatprep.subr.bf16.mxu0 0
  %3856 = vmatpush1.bf16.xpose.msra.mxu0 0
  %3857 = vmatprep.mubr.bf16.mxu0 0
  %3858 = vmatmul.mubr.bf16.gmra.mrb[0].mxu0 %v2585
  %v3859 = vpop.f32.mrb[0].mxu0
  %v3860 = vadd.f32 0.0, %v3859
  %v3861 = vpop.f32.mrb[0].mxu0
  %v3862 = vpop.f32.mrb[0].mxu0
  %v3863 = vadd.f32 0.0, %v3862
  %v3864 = vpop.f32.mrb[0].mxu0
  %3865 = vdwg.mxu0
  %3866 = vmatprep.subr.bf16.mxu0 0
  %3867 = vmatpush1.bf16.xpose.msra.mxu0 %v3735
  %3868 = vmatprep.subr.bf16.mxu0 0
  %3869 = vmatpush1.bf16.xpose.msra.mxu0 %v3736
  %3870 = vmatprep.subr.bf16.mxu0 0
  %3871 = vmatpush1.bf16.xpose.msra.mxu0 %v3737
  %3872 = vmatprep.subr.bf16.mxu0 0
  %3873 = vmatpush1.bf16.xpose.msra.mxu0 %v3738
  %3874 = vmatprep.subr.bf16.mxu0 0
  %3875 = vmatpush1.bf16.xpose.msra.mxu0 %v3739
  %3876 = vmatprep.subr.bf16.mxu0 0
  %3877 = vmatpush1.bf16.xpose.msra.mxu0 %v3740
  %3878 = vmatprep.subr.bf16.mxu0 0
  %3879 = vmatpush1.bf16.xpose.msra.mxu0 %v3741
  %3880 = vmatprep.subr.bf16.mxu0 0
  %3881 = vmatpush1.bf16.xpose.msra.mxu0 %v3742
  %3882 = vmatprep.subr.bf16.mxu0 0
  %3883 = vmatpush1.bf16.xpose.msra.mxu0 0
  %3884 = vmatprep.subr.bf16.mxu0 0
  %3885 = vmatpush1.bf16.xpose.msra.mxu0 0
  %3886 = vmatprep.subr.bf16.mxu0 0
  %3887 = vmatpush1.bf16.xpose.msra.mxu0 0
  %3888 = vmatprep.subr.bf16.mxu0 0
  %3889 = vmatpush1.bf16.xpose.msra.mxu0 0
  %3890 = vmatprep.subr.bf16.mxu0 0
  %3891 = vmatpush1.bf16.xpose.msra.mxu0 0
  %3892 = vmatprep.subr.bf16.mxu0 0
  %3893 = vmatpush1.bf16.xpose.msra.mxu0 0
  %3894 = vmatprep.subr.bf16.mxu0 0
  %3895 = vmatpush1.bf16.xpose.msra.mxu0 0
  %3896 = vmatprep.subr.bf16.mxu0 0
  %3897 = vmatpush1.bf16.xpose.msra.mxu0 0
  %3898 = vmatprep.mubr.bf16.mxu0 0
  %3899 = vmatmul.mubr.bf16.gmra.mrb[0].mxu0 %v2586
  %v3900 = vpop.f32.mrb[0].mxu0
  %v3901 = vadd.f32 0.0, %v3900
  %v3902 = vpop.f32.mrb[0].mxu0
  %v3903 = vpop.f32.mrb[0].mxu0
  %v3904 = vadd.f32 0.0, %v3903
  %v3905 = vpop.f32.mrb[0].mxu0
  %3906 = vdwg.mxu0
  %v3907 = vpack.c.bf16 %v3781, %v3778
  %v3908 = vpack.c.bf16 %v3822, %v3819
  %v3909 = vpack.c.bf16 %v3863, %v3860
  %v3910 = vpack.c.bf16 %v3904, %v3901
  %v3911 = vmul.f32 %v888, 0.17677669
  %v3912 = vmul.f32 %v891, 0.17677669
  %v3913 = vmul.f32 %v896, 0.17677669
  %v3914 = vmul.f32 %v899, 0.17677669
  %v3915 = vmul.f32 %v904, 0.17677669
  %v3916 = vmul.f32 %v907, 0.17677669
  %v3917 = vmul.f32 %v912, 0.17677669
  %v3918 = vmul.f32 %v915, 0.17677669
  %v3919 = vpack.c.bf16 %v3912, %v3911
  %v3920 = vpack.c.bf16 %v3914, %v3913
  %v3921 = vpack.c.bf16 %v3916, %v3915
  %v3922 = vpack.c.bf16 %v3918, %v3917
  %v3923 = vpack.c.bf16 %v1019, %v1016
  %v3924 = vpack.c.bf16 %v1027, %v1024
  %v3925 = vpack.c.bf16 %v1035, %v1032
  %v3926 = vpack.c.bf16 %v1043, %v1040
  %v3927 = vpack.c.bf16 %v1147, %v1144
  %v3928 = vpack.c.bf16 %v1155, %v1152
  %v3929 = vpack.c.bf16 %v1163, %v1160
  %v3930 = vpack.c.bf16 %v1171, %v1168
  %3931 = vxpose.xlu0.c.b16.start [1/8] %v3919, 128
  %3932 = vxpose.xlu0.c.b16.cont [2/8] 0, 128
  %3933 = vxpose.xlu0.c.b16.cont [3/8] 0, 128
  %3934 = vxpose.xlu0.c.b16.cont [4/8] 0, 128
  %3935 = vxpose.xlu0.c.b16.cont [5/8] 0, 128
  %3936 = vxpose.xlu0.c.b16.cont [6/8] 0, 128
  %3937 = vxpose.xlu0.c.b16.cont [7/8] 0, 128
  %3938 = vxpose.xlu0.c.b16.end [8/8] 0, 128
  %v3939 = vpop.trf.xlu0
  %v3940 = vpop.trf.xlu0
  %v3941 = vpop.trf.xlu0
  %v3942 = vpop.trf.xlu0
  %v3943 = vpop.trf.xlu0
  %v3944 = vpop.trf.xlu0
  %v3945 = vpop.trf.xlu0
  %v3946 = vpop.trf.xlu0
  %v3948 = vsel %vm1258, %v3939, 0
  %v3951 = vsel %vm1258, %v3940, 0
  %v3954 = vsel %vm1258, %v3941, 0
  %v3957 = vsel %vm1258, %v3942, 0
  %v3960 = vsel %vm1258, %v3943, 0
  %v3963 = vsel %vm1258, %v3944, 0
  %v3966 = vsel %vm1258, %v3945, 0
  %v3969 = vsel %vm1258, %v3946, 0
  %3971 = vmatprep.subr.bf16.mxu0 0
  %3972 = vmatpush1.bf16.msra.mxu0 %v3923
  %3973 = vmatprep.subr.bf16.mxu0 0
  %3974 = vmatpush1.bf16.msra.mxu0 0
  %3975 = vmatprep.subr.bf16.mxu0 0
  %3976 = vmatpush1.bf16.msra.mxu0 0
  %3977 = vmatprep.subr.bf16.mxu0 0
  %3978 = vmatpush1.bf16.msra.mxu0 0
  %3979 = vmatprep.subr.bf16.mxu0 0
  %3980 = vmatpush1.bf16.msra.mxu0 0
  %3981 = vmatprep.subr.bf16.mxu0 0
  %3982 = vmatpush1.bf16.msra.mxu0 0
  %3983 = vmatprep.subr.bf16.mxu0 0
  %3984 = vmatpush1.bf16.msra.mxu0 0
  %3985 = vmatprep.subr.bf16.mxu0 0
  %3986 = vmatpush1.bf16.msra.mxu0 0
  %3987 = vmatprep.subr.bf16.mxu0 0
  %3988 = vmatpush1.bf16.msra.mxu0 0
  %3989 = vmatprep.subr.bf16.mxu0 0
  %3990 = vmatpush1.bf16.msra.mxu0 0
  %3991 = vmatprep.subr.bf16.mxu0 0
  %3992 = vmatpush1.bf16.msra.mxu0 0
  %3993 = vmatprep.subr.bf16.mxu0 0
  %3994 = vmatpush1.bf16.msra.mxu0 0
  %3995 = vmatprep.subr.bf16.mxu0 0
  %3996 = vmatpush1.bf16.msra.mxu0 0
  %3997 = vmatprep.subr.bf16.mxu0 0
  %3998 = vmatpush1.bf16.msra.mxu0 0
  %3999 = vmatprep.subr.bf16.mxu0 0
  %4000 = vmatpush1.bf16.msra.mxu0 0
  %4001 = vmatprep.subr.bf16.mxu0 0
  %4002 = vmatpush1.bf16.msra.mxu0 0
  %4003 = vmatprep.mubr.bf16.mxu0 0
  %4004 = vmatmul.mubr.bf16.gmra.mrb[0].mxu0 %v3948
  %v4005 = vpop.f32.mrb[0].mxu0
  %v4006 = vadd.f32 %v1206, %v4005
  %v4007 = vpop.f32.mrb[0].mxu0
  %v4008 = vpop.f32.mrb[0].mxu0
  %v4009 = vadd.f32 %v1207, %v4008
  %v4010 = vpop.f32.mrb[0].mxu0
  %4011 = vmatprep.mubr.bf16.mxu0 0
  %4012 = vmatmul.mubr.bf16.gmra.mrb[0].mxu0 %v3951
  %v4013 = vpop.f32.mrb[0].mxu0
  %v4014 = vadd.f32 %v1208, %v4013
  %v4015 = vpop.f32.mrb[0].mxu0
  %v4016 = vpop.f32.mrb[0].mxu0
  %v4017 = vadd.f32 %v1209, %v4016
  %v4018 = vpop.f32.mrb[0].mxu0
  %4019 = vmatprep.mubr.bf16.mxu0 0
  %4020 = vmatmul.mubr.bf16.gmra.mrb[0].mxu0 %v3954
  %v4021 = vpop.f32.mrb[0].mxu0
  %v4022 = vadd.f32 %v1210, %v4021
  %v4023 = vpop.f32.mrb[0].mxu0
  %v4024 = vpop.f32.mrb[0].mxu0
  %v4025 = vadd.f32 %v1211, %v4024
  %v4026 = vpop.f32.mrb[0].mxu0
  %4027 = vmatprep.mubr.bf16.mxu0 0
  %4028 = vmatmul.mubr.bf16.gmra.mrb[0].mxu0 %v3957
  %v4029 = vpop.f32.mrb[0].mxu0
  %v4030 = vadd.f32 %v1212, %v4029
  %v4031 = vpop.f32.mrb[0].mxu0
  %v4032 = vpop.f32.mrb[0].mxu0
  %v4033 = vadd.f32 %v1213, %v4032
  %v4034 = vpop.f32.mrb[0].mxu0
  %4035 = vmatprep.mubr.bf16.mxu0 0
  %4036 = vmatmul.mubr.bf16.gmra.mrb[0].mxu0 %v3960
  %v4037 = vpop.f32.mrb[0].mxu0
  %v4038 = vadd.f32 %v1214, %v4037
  %v4039 = vpop.f32.mrb[0].mxu0
  %v4040 = vpop.f32.mrb[0].mxu0
  %v4041 = vadd.f32 %v1215, %v4040
  %v4042 = vpop.f32.mrb[0].mxu0
  %4043 = vmatprep.mubr.bf16.mxu0 0
  %4044 = vmatmul.mubr.bf16.gmra.mrb[0].mxu0 %v3963
  %v4045 = vpop.f32.mrb[0].mxu0
  %v4046 = vadd.f32 %v1216, %v4045
  %v4047 = vpop.f32.mrb[0].mxu0
  %v4048 = vpop.f32.mrb[0].mxu0
  %v4049 = vadd.f32 %v1217, %v4048
  %v4050 = vpop.f32.mrb[0].mxu0
  %4051 = vmatprep.mubr.bf16.mxu0 0
  %4052 = vmatmul.mubr.bf16.gmra.mrb[0].mxu0 %v3966
  %v4053 = vpop.f32.mrb[0].mxu0
  %v4054 = vadd.f32 %v1218, %v4053
  %v4055 = vpop.f32.mrb[0].mxu0
  %v4056 = vpop.f32.mrb[0].mxu0
  %v4057 = vadd.f32 %v1219, %v4056
  %v4058 = vpop.f32.mrb[0].mxu0
  %4059 = vmatprep.mubr.bf16.mxu0 0
  %4060 = vmatmul.mubr.bf16.gmra.mrb[0].mxu0 %v3969
  %v4061 = vpop.f32.mrb[0].mxu0
  %v4062 = vadd.f32 %v1220, %v4061
  %v4063 = vpop.f32.mrb[0].mxu0
  %v4064 = vpop.f32.mrb[0].mxu0
  %v4065 = vadd.f32 %v1221, %v4064
  %v4066 = vpop.f32.mrb[0].mxu0
  %4067 = vdwg.mxu0
  %4068 = vxpose.xlu0.c.b16.start [1/8] %v3920, 128
  %4069 = vxpose.xlu0.c.b16.cont [2/8] 0, 128
  %4070 = vxpose.xlu0.c.b16.cont [3/8] 0, 128
  %4071 = vxpose.xlu0.c.b16.cont [4/8] 0, 128
  %4072 = vxpose.xlu0.c.b16.cont [5/8] 0, 128
  %4073 = vxpose.xlu0.c.b16.cont [6/8] 0, 128
  %4074 = vxpose.xlu0.c.b16.cont [7/8] 0, 128
  %4075 = vxpose.xlu0.c.b16.end [8/8] 0, 128
  %v4076 = vpop.trf.xlu0
  %v4077 = vpop.trf.xlu0
  %v4078 = vpop.trf.xlu0
  %v4079 = vpop.trf.xlu0
  %v4080 = vpop.trf.xlu0
  %v4081 = vpop.trf.xlu0
  %v4082 = vpop.trf.xlu0
  %v4083 = vpop.trf.xlu0
  %v4085 = vsel %vm1258, %v4076, 0
  %v4088 = vsel %vm1258, %v4077, 0
  %v4091 = vsel %vm1258, %v4078, 0
  %v4094 = vsel %vm1258, %v4079, 0
  %v4097 = vsel %vm1258, %v4080, 0
  %v4100 = vsel %vm1258, %v4081, 0
  %v4103 = vsel %vm1258, %v4082, 0
  %v4106 = vsel %vm1258, %v4083, 0
  %4108 = vmatprep.subr.bf16.mxu0 0
  %4109 = vmatpush1.bf16.msra.mxu0 %v3924
  %4110 = vmatprep.subr.bf16.mxu0 0
  %4111 = vmatpush1.bf16.msra.mxu0 0
  %4112 = vmatprep.subr.bf16.mxu0 0
  %4113 = vmatpush1.bf16.msra.mxu0 0
  %4114 = vmatprep.subr.bf16.mxu0 0
  %4115 = vmatpush1.bf16.msra.mxu0 0
  %4116 = vmatprep.subr.bf16.mxu0 0
  %4117 = vmatpush1.bf16.msra.mxu0 0
  %4118 = vmatprep.subr.bf16.mxu0 0
  %4119 = vmatpush1.bf16.msra.mxu0 0
  %4120 = vmatprep.subr.bf16.mxu0 0
  %4121 = vmatpush1.bf16.msra.mxu0 0
  %4122 = vmatprep.subr.bf16.mxu0 0
  %4123 = vmatpush1.bf16.msra.mxu0 0
  %4124 = vmatprep.subr.bf16.mxu0 0
  %4125 = vmatpush1.bf16.msra.mxu0 0
  %4126 = vmatprep.subr.bf16.mxu0 0
  %4127 = vmatpush1.bf16.msra.mxu0 0
  %4128 = vmatprep.subr.bf16.mxu0 0
  %4129 = vmatpush1.bf16.msra.mxu0 0
  %4130 = vmatprep.subr.bf16.mxu0 0
  %4131 = vmatpush1.bf16.msra.mxu0 0
  %4132 = vmatprep.subr.bf16.mxu0 0
  %4133 = vmatpush1.bf16.msra.mxu0 0
  %4134 = vmatprep.subr.bf16.mxu0 0
  %4135 = vmatpush1.bf16.msra.mxu0 0
  %4136 = vmatprep.subr.bf16.mxu0 0
  %4137 = vmatpush1.bf16.msra.mxu0 0
  %4138 = vmatprep.subr.bf16.mxu0 0
  %4139 = vmatpush1.bf16.msra.mxu0 0
  %4140 = vmatprep.mubr.bf16.mxu0 0
  %4141 = vmatmul.mubr.bf16.gmra.mrb[0].mxu0 %v4085
  %v4142 = vpop.f32.mrb[0].mxu0
  %v4143 = vadd.f32 %v1206, %v4142
  %v4144 = vpop.f32.mrb[0].mxu0
  %v4145 = vpop.f32.mrb[0].mxu0
  %v4146 = vadd.f32 %v1207, %v4145
  %v4147 = vpop.f32.mrb[0].mxu0
  %4148 = vmatprep.mubr.bf16.mxu0 0
  %4149 = vmatmul.mubr.bf16.gmra.mrb[0].mxu0 %v4088
  %v4150 = vpop.f32.mrb[0].mxu0
  %v4151 = vadd.f32 %v1208, %v4150
  %v4152 = vpop.f32.mrb[0].mxu0
  %v4153 = vpop.f32.mrb[0].mxu0
  %v4154 = vadd.f32 %v1209, %v4153
  %v4155 = vpop.f32.mrb[0].mxu0
  %4156 = vmatprep.mubr.bf16.mxu0 0
  %4157 = vmatmul.mubr.bf16.gmra.mrb[0].mxu0 %v4091
  %v4158 = vpop.f32.mrb[0].mxu0
  %v4159 = vadd.f32 %v1210, %v4158
  %v4160 = vpop.f32.mrb[0].mxu0
  %v4161 = vpop.f32.mrb[0].mxu0
  %v4162 = vadd.f32 %v1211, %v4161
  %v4163 = vpop.f32.mrb[0].mxu0
  %4164 = vmatprep.mubr.bf16.mxu0 0
  %4165 = vmatmul.mubr.bf16.gmra.mrb[0].mxu0 %v4094
  %v4166 = vpop.f32.mrb[0].mxu0
  %v4167 = vadd.f32 %v1212, %v4166
  %v4168 = vpop.f32.mrb[0].mxu0
  %v4169 = vpop.f32.mrb[0].mxu0
  %v4170 = vadd.f32 %v1213, %v4169
  %v4171 = vpop.f32.mrb[0].mxu0
  %4172 = vmatprep.mubr.bf16.mxu0 0
  %4173 = vmatmul.mubr.bf16.gmra.mrb[0].mxu0 %v4097
  %v4174 = vpop.f32.mrb[0].mxu0
  %v4175 = vadd.f32 %v1214, %v4174
  %v4176 = vpop.f32.mrb[0].mxu0
  %v4177 = vpop.f32.mrb[0].mxu0
  %v4178 = vadd.f32 %v1215, %v4177
  %v4179 = vpop.f32.mrb[0].mxu0
  %4180 = vmatprep.mubr.bf16.mxu0 0
  %4181 = vmatmul.mubr.bf16.gmra.mrb[0].mxu0 %v4100
  %v4182 = vpop.f32.mrb[0].mxu0
  %v4183 = vadd.f32 %v1216, %v4182
  %v4184 = vpop.f32.mrb[0].mxu0
  %v4185 = vpop.f32.mrb[0].mxu0
  %v4186 = vadd.f32 %v1217, %v4185
  %v4187 = vpop.f32.mrb[0].mxu0
  %4188 = vmatprep.mubr.bf16.mxu0 0
  %4189 = vmatmul.mubr.bf16.gmra.mrb[0].mxu0 %v4103
  %v4190 = vpop.f32.mrb[0].mxu0
  %v4191 = vadd.f32 %v1218, %v4190
  %v4192 = vpop.f32.mrb[0].mxu0
  %v4193 = vpop.f32.mrb[0].mxu0
  %v4194 = vadd.f32 %v1219, %v4193
  %v4195 = vpop.f32.mrb[0].mxu0
  %4196 = vmatprep.mubr.bf16.mxu0 0
  %4197 = vmatmul.mubr.bf16.gmra.mrb[0].mxu0 %v4106
  %v4198 = vpop.f32.mrb[0].mxu0
  %v4199 = vadd.f32 %v1220, %v4198
  %v4200 = vpop.f32.mrb[0].mxu0
  %v4201 = vpop.f32.mrb[0].mxu0
  %v4202 = vadd.f32 %v1221, %v4201
  %v4203 = vpop.f32.mrb[0].mxu0
  %4204 = vdwg.mxu0
  %4205 = vxpose.xlu0.c.b16.start [1/8] %v3921, 128
  %4206 = vxpose.xlu0.c.b16.cont [2/8] 0, 128
  %4207 = vxpose.xlu0.c.b16.cont [3/8] 0, 128
  %4208 = vxpose.xlu0.c.b16.cont [4/8] 0, 128
  %4209 = vxpose.xlu0.c.b16.cont [5/8] 0, 128
  %4210 = vxpose.xlu0.c.b16.cont [6/8] 0, 128
  %4211 = vxpose.xlu0.c.b16.cont [7/8] 0, 128
  %4212 = vxpose.xlu0.c.b16.end [8/8] 0, 128
  %v4213 = vpop.trf.xlu0
  %v4214 = vpop.trf.xlu0
  %v4215 = vpop.trf.xlu0
  %v4216 = vpop.trf.xlu0
  %v4217 = vpop.trf.xlu0
  %v4218 = vpop.trf.xlu0
  %v4219 = vpop.trf.xlu0
  %v4220 = vpop.trf.xlu0
  %v4222 = vsel %vm1258, %v4213, 0
  %v4225 = vsel %vm1258, %v4214, 0
  %v4228 = vsel %vm1258, %v4215, 0
  %v4231 = vsel %vm1258, %v4216, 0
  %v4234 = vsel %vm1258, %v4217, 0
  %v4237 = vsel %vm1258, %v4218, 0
  %v4240 = vsel %vm1258, %v4219, 0
  %v4243 = vsel %vm1258, %v4220, 0
  %4245 = vmatprep.subr.bf16.mxu0 0
  %4246 = vmatpush1.bf16.msra.mxu0 %v3925
  %4247 = vmatprep.subr.bf16.mxu0 0
  %4248 = vmatpush1.bf16.msra.mxu0 0
  %4249 = vmatprep.subr.bf16.mxu0 0
  %4250 = vmatpush1.bf16.msra.mxu0 0
  %4251 = vmatprep.subr.bf16.mxu0 0
  %4252 = vmatpush1.bf16.msra.mxu0 0
  %4253 = vmatprep.subr.bf16.mxu0 0
  %4254 = vmatpush1.bf16.msra.mxu0 0
  %4255 = vmatprep.subr.bf16.mxu0 0
  %4256 = vmatpush1.bf16.msra.mxu0 0
  %4257 = vmatprep.subr.bf16.mxu0 0
  %4258 = vmatpush1.bf16.msra.mxu0 0
  %4259 = vmatprep.subr.bf16.mxu0 0
  %4260 = vmatpush1.bf16.msra.mxu0 0
  %4261 = vmatprep.subr.bf16.mxu0 0
  %4262 = vmatpush1.bf16.msra.mxu0 0
  %4263 = vmatprep.subr.bf16.mxu0 0
  %4264 = vmatpush1.bf16.msra.mxu0 0
  %4265 = vmatprep.subr.bf16.mxu0 0
  %4266 = vmatpush1.bf16.msra.mxu0 0
  %4267 = vmatprep.subr.bf16.mxu0 0
  %4268 = vmatpush1.bf16.msra.mxu0 0
  %4269 = vmatprep.subr.bf16.mxu0 0
  %4270 = vmatpush1.bf16.msra.mxu0 0
  %4271 = vmatprep.subr.bf16.mxu0 0
  %4272 = vmatpush1.bf16.msra.mxu0 0
  %4273 = vmatprep.subr.bf16.mxu0 0
  %4274 = vmatpush1.bf16.msra.mxu0 0
  %4275 = vmatprep.subr.bf16.mxu0 0
  %4276 = vmatpush1.bf16.msra.mxu0 0
  %4277 = vmatprep.mubr.bf16.mxu0 0
  %4278 = vmatmul.mubr.bf16.gmra.mrb[0].mxu0 %v4222
  %v4279 = vpop.f32.mrb[0].mxu0
  %v4280 = vadd.f32 %v1206, %v4279
  %v4281 = vpop.f32.mrb[0].mxu0
  %v4282 = vpop.f32.mrb[0].mxu0
  %v4283 = vadd.f32 %v1207, %v4282
  %v4284 = vpop.f32.mrb[0].mxu0
  %4285 = vmatprep.mubr.bf16.mxu0 0
  %4286 = vmatmul.mubr.bf16.gmra.mrb[0].mxu0 %v4225
  %v4287 = vpop.f32.mrb[0].mxu0
  %v4288 = vadd.f32 %v1208, %v4287
  %v4289 = vpop.f32.mrb[0].mxu0
  %v4290 = vpop.f32.mrb[0].mxu0
  %v4291 = vadd.f32 %v1209, %v4290
  %v4292 = vpop.f32.mrb[0].mxu0
  %4293 = vmatprep.mubr.bf16.mxu0 0
  %4294 = vmatmul.mubr.bf16.gmra.mrb[0].mxu0 %v4228
  %v4295 = vpop.f32.mrb[0].mxu0
  %v4296 = vadd.f32 %v1210, %v4295
  %v4297 = vpop.f32.mrb[0].mxu0
  %v4298 = vpop.f32.mrb[0].mxu0
  %v4299 = vadd.f32 %v1211, %v4298
  %v4300 = vpop.f32.mrb[0].mxu0
  %4301 = vmatprep.mubr.bf16.mxu0 0
  %4302 = vmatmul.mubr.bf16.gmra.mrb[0].mxu0 %v4231
  %v4303 = vpop.f32.mrb[0].mxu0
  %v4304 = vadd.f32 %v1212, %v4303
  %v4305 = vpop.f32.mrb[0].mxu0
  %v4306 = vpop.f32.mrb[0].mxu0
  %v4307 = vadd.f32 %v1213, %v4306
  %v4308 = vpop.f32.mrb[0].mxu0
  %4309 = vmatprep.mubr.bf16.mxu0 0
  %4310 = vmatmul.mubr.bf16.gmra.mrb[0].mxu0 %v4234
  %v4311 = vpop.f32.mrb[0].mxu0
  %v4312 = vadd.f32 %v1214, %v4311
  %v4313 = vpop.f32.mrb[0].mxu0
  %v4314 = vpop.f32.mrb[0].mxu0
  %v4315 = vadd.f32 %v1215, %v4314
  %v4316 = vpop.f32.mrb[0].mxu0
  %4317 = vmatprep.mubr.bf16.mxu0 0
  %4318 = vmatmul.mubr.bf16.gmra.mrb[0].mxu0 %v4237
  %v4319 = vpop.f32.mrb[0].mxu0
  %v4320 = vadd.f32 %v1216, %v4319
  %v4321 = vpop.f32.mrb[0].mxu0
  %v4322 = vpop.f32.mrb[0].mxu0
  %v4323 = vadd.f32 %v1217, %v4322
  %v4324 = vpop.f32.mrb[0].mxu0
  %4325 = vmatprep.mubr.bf16.mxu0 0
  %4326 = vmatmul.mubr.bf16.gmra.mrb[0].mxu0 %v4240
  %v4327 = vpop.f32.mrb[0].mxu0
  %v4328 = vadd.f32 %v1218, %v4327
  %v4329 = vpop.f32.mrb[0].mxu0
  %v4330 = vpop.f32.mrb[0].mxu0
  %v4331 = vadd.f32 %v1219, %v4330
  %v4332 = vpop.f32.mrb[0].mxu0
  %4333 = vmatprep.mubr.bf16.mxu0 0
  %4334 = vmatmul.mubr.bf16.gmra.mrb[0].mxu0 %v4243
  %v4335 = vpop.f32.mrb[0].mxu0
  %v4336 = vadd.f32 %v1220, %v4335
  %v4337 = vpop.f32.mrb[0].mxu0
  %v4338 = vpop.f32.mrb[0].mxu0
  %v4339 = vadd.f32 %v1221, %v4338
  %v4340 = vpop.f32.mrb[0].mxu0
  %4341 = vdwg.mxu0
  %4342 = vxpose.xlu0.c.b16.start [1/8] %v3922, 128
  %4343 = vxpose.xlu0.c.b16.cont [2/8] 0, 128
  %4344 = vxpose.xlu0.c.b16.cont [3/8] 0, 128
  %4345 = vxpose.xlu0.c.b16.cont [4/8] 0, 128
  %4346 = vxpose.xlu0.c.b16.cont [5/8] 0, 128
  %4347 = vxpose.xlu0.c.b16.cont [6/8] 0, 128
  %4348 = vxpose.xlu0.c.b16.cont [7/8] 0, 128
  %4349 = vxpose.xlu0.c.b16.end [8/8] 0, 128
  %v4350 = vpop.trf.xlu0
  %v4351 = vpop.trf.xlu0
  %v4352 = vpop.trf.xlu0
  %v4353 = vpop.trf.xlu0
  %v4354 = vpop.trf.xlu0
  %v4355 = vpop.trf.xlu0
  %v4356 = vpop.trf.xlu0
  %v4357 = vpop.trf.xlu0
  %v4359 = vsel %vm1258, %v4350, 0
  %v4362 = vsel %vm1258, %v4351, 0
  %v4365 = vsel %vm1258, %v4352, 0
  %v4368 = vsel %vm1258, %v4353, 0
  %v4371 = vsel %vm1258, %v4354, 0
  %v4374 = vsel %vm1258, %v4355, 0
  %v4377 = vsel %vm1258, %v4356, 0
  %v4380 = vsel %vm1258, %v4357, 0
  %4382 = vmatprep.subr.bf16.mxu0 0
  %4383 = vmatpush1.bf16.msra.mxu0 %v3926
  %4384 = vmatprep.subr.bf16.mxu0 0
  %4385 = vmatpush1.bf16.msra.mxu0 0
  %4386 = vmatprep.subr.bf16.mxu0 0
  %4387 = vmatpush1.bf16.msra.mxu0 0
  %4388 = vmatprep.subr.bf16.mxu0 0
  %4389 = vmatpush1.bf16.msra.mxu0 0
  %4390 = vmatprep.subr.bf16.mxu0 0
  %4391 = vmatpush1.bf16.msra.mxu0 0
  %4392 = vmatprep.subr.bf16.mxu0 0
  %4393 = vmatpush1.bf16.msra.mxu0 0
  %4394 = vmatprep.subr.bf16.mxu0 0
  %4395 = vmatpush1.bf16.msra.mxu0 0
  %4396 = vmatprep.subr.bf16.mxu0 0
  %4397 = vmatpush1.bf16.msra.mxu0 0
  %4398 = vmatprep.subr.bf16.mxu0 0
  %4399 = vmatpush1.bf16.msra.mxu0 0
  %4400 = vmatprep.subr.bf16.mxu0 0
  %4401 = vmatpush1.bf16.msra.mxu0 0
  %4402 = vmatprep.subr.bf16.mxu0 0
  %4403 = vmatpush1.bf16.msra.mxu0 0
  %4404 = vmatprep.subr.bf16.mxu0 0
  %4405 = vmatpush1.bf16.msra.mxu0 0
  %4406 = vmatprep.subr.bf16.mxu0 0
  %4407 = vmatpush1.bf16.msra.mxu0 0
  %4408 = vmatprep.subr.bf16.mxu0 0
  %4409 = vmatpush1.bf16.msra.mxu0 0
  %4410 = vmatprep.subr.bf16.mxu0 0
  %4411 = vmatpush1.bf16.msra.mxu0 0
  %4412 = vmatprep.subr.bf16.mxu0 0
  %4413 = vmatpush1.bf16.msra.mxu0 0
  %4414 = vmatprep.mubr.bf16.mxu0 0
  %4415 = vmatmul.mubr.bf16.gmra.mrb[0].mxu0 %v4359
  %v4416 = vpop.f32.mrb[0].mxu0
  %v4417 = vadd.f32 %v1206, %v4416
  %v4418 = vpop.f32.mrb[0].mxu0
  %v4419 = vpop.f32.mrb[0].mxu0
  %v4420 = vadd.f32 %v1207, %v4419
  %v4421 = vpop.f32.mrb[0].mxu0
  %4422 = vmatprep.mubr.bf16.mxu0 0
  %4423 = vmatmul.mubr.bf16.gmra.mrb[0].mxu0 %v4362
  %v4424 = vpop.f32.mrb[0].mxu0
  %v4425 = vadd.f32 %v1208, %v4424
  %v4426 = vpop.f32.mrb[0].mxu0
  %v4427 = vpop.f32.mrb[0].mxu0
  %v4428 = vadd.f32 %v1209, %v4427
  %v4429 = vpop.f32.mrb[0].mxu0
  %4430 = vmatprep.mubr.bf16.mxu0 0
  %4431 = vmatmul.mubr.bf16.gmra.mrb[0].mxu0 %v4365
  %v4432 = vpop.f32.mrb[0].mxu0
  %v4433 = vadd.f32 %v1210, %v4432
  %v4434 = vpop.f32.mrb[0].mxu0
  %v4435 = vpop.f32.mrb[0].mxu0
  %v4436 = vadd.f32 %v1211, %v4435
  %v4437 = vpop.f32.mrb[0].mxu0
  %4438 = vmatprep.mubr.bf16.mxu0 0
  %4439 = vmatmul.mubr.bf16.gmra.mrb[0].mxu0 %v4368
  %v4440 = vpop.f32.mrb[0].mxu0
  %v4441 = vadd.f32 %v1212, %v4440
  %v4442 = vpop.f32.mrb[0].mxu0
  %v4443 = vpop.f32.mrb[0].mxu0
  %v4444 = vadd.f32 %v1213, %v4443
  %v4445 = vpop.f32.mrb[0].mxu0
  %4446 = vmatprep.mubr.bf16.mxu0 0
  %4447 = vmatmul.mubr.bf16.gmra.mrb[0].mxu0 %v4371
  %v4448 = vpop.f32.mrb[0].mxu0
  %v4449 = vadd.f32 %v1214, %v4448
  %v4450 = vpop.f32.mrb[0].mxu0
  %v4451 = vpop.f32.mrb[0].mxu0
  %v4452 = vadd.f32 %v1215, %v4451
  %v4453 = vpop.f32.mrb[0].mxu0
  %4454 = vmatprep.mubr.bf16.mxu0 0
  %4455 = vmatmul.mubr.bf16.gmra.mrb[0].mxu0 %v4374
  %v4456 = vpop.f32.mrb[0].mxu0
  %v4457 = vadd.f32 %v1216, %v4456
  %v4458 = vpop.f32.mrb[0].mxu0
  %v4459 = vpop.f32.mrb[0].mxu0
  %v4460 = vadd.f32 %v1217, %v4459
  %v4461 = vpop.f32.mrb[0].mxu0
  %4462 = vmatprep.mubr.bf16.mxu0 0
  %4463 = vmatmul.mubr.bf16.gmra.mrb[0].mxu0 %v4377
  %v4464 = vpop.f32.mrb[0].mxu0
  %v4465 = vadd.f32 %v1218, %v4464
  %v4466 = vpop.f32.mrb[0].mxu0
  %v4467 = vpop.f32.mrb[0].mxu0
  %v4468 = vadd.f32 %v1219, %v4467
  %v4469 = vpop.f32.mrb[0].mxu0
  %4470 = vmatprep.mubr.bf16.mxu0 0
  %4471 = vmatmul.mubr.bf16.gmra.mrb[0].mxu0 %v4380
  %v4472 = vpop.f32.mrb[0].mxu0
  %v4473 = vadd.f32 %v1220, %v4472
  %v4474 = vpop.f32.mrb[0].mxu0
  %v4475 = vpop.f32.mrb[0].mxu0
  %v4476 = vadd.f32 %v1221, %v4475
  %v4477 = vpop.f32.mrb[0].mxu0
  %4478 = vdwg.mxu0
  %4479 = vmax.xlane.f32.xlu0 %v4006
  %v4480 = vpop.xlane.xlu0 %4479
  %4481 = vmax.xlane.f32.xlu0 %v4009
  %v4482 = vpop.xlane.xlu0 %4481
  %4483 = vmax.xlane.f32.xlu0 %v4014
  %v4484 = vpop.xlane.xlu0 %4483
  %4485 = vmax.xlane.f32.xlu0 %v4017
  %v4486 = vpop.xlane.xlu0 %4485
  %4487 = vmax.xlane.f32.xlu0 %v4022
  %v4488 = vpop.xlane.xlu0 %4487
  %4489 = vmax.xlane.f32.xlu0 %v4025
  %v4490 = vpop.xlane.xlu0 %4489
  %4491 = vmax.xlane.f32.xlu0 %v4030
  %v4492 = vpop.xlane.xlu0 %4491
  %4493 = vmax.xlane.f32.xlu0 %v4033
  %v4494 = vpop.xlane.xlu0 %4493
  %4495 = vmax.xlane.f32.xlu0 %v4038
  %v4496 = vpop.xlane.xlu0 %4495
  %4497 = vmax.xlane.f32.xlu0 %v4041
  %v4498 = vpop.xlane.xlu0 %4497
  %4499 = vmax.xlane.f32.xlu0 %v4046
  %v4500 = vpop.xlane.xlu0 %4499
  %4501 = vmax.xlane.f32.xlu0 %v4049
  %v4502 = vpop.xlane.xlu0 %4501
  %4503 = vmax.xlane.f32.xlu0 %v4054
  %v4504 = vpop.xlane.xlu0 %4503
  %4505 = vmax.xlane.f32.xlu0 %v4057
  %v4506 = vpop.xlane.xlu0 %4505
  %4507 = vmax.xlane.f32.xlu0 %v4062
  %v4508 = vpop.xlane.xlu0 %4507
  %4509 = vmax.xlane.f32.xlu0 %v4065
  %v4510 = vpop.xlane.xlu0 %4509
  %4511 = vmax.xlane.f32.xlu0 %v4143
  %v4512 = vpop.xlane.xlu0 %4511
  %4513 = vmax.xlane.f32.xlu0 %v4146
  %v4514 = vpop.xlane.xlu0 %4513
  %4515 = vmax.xlane.f32.xlu0 %v4151
  %v4516 = vpop.xlane.xlu0 %4515
  %4517 = vmax.xlane.f32.xlu0 %v4154
  %v4518 = vpop.xlane.xlu0 %4517
  %4519 = vmax.xlane.f32.xlu0 %v4159
  %v4520 = vpop.xlane.xlu0 %4519
  %4521 = vmax.xlane.f32.xlu0 %v4162
  %v4522 = vpop.xlane.xlu0 %4521
  %4523 = vmax.xlane.f32.xlu0 %v4167
  %v4524 = vpop.xlane.xlu0 %4523
  %4525 = vmax.xlane.f32.xlu0 %v4170
  %v4526 = vpop.xlane.xlu0 %4525
  %4527 = vmax.xlane.f32.xlu0 %v4175
  %v4528 = vpop.xlane.xlu0 %4527
  %4529 = vmax.xlane.f32.xlu0 %v4178
  %v4530 = vpop.xlane.xlu0 %4529
  %4531 = vmax.xlane.f32.xlu0 %v4183
  %v4532 = vpop.xlane.xlu0 %4531
  %4533 = vmax.xlane.f32.xlu0 %v4186
  %v4534 = vpop.xlane.xlu0 %4533
  %4535 = vmax.xlane.f32.xlu0 %v4191
  %v4536 = vpop.xlane.xlu0 %4535
  %4537 = vmax.xlane.f32.xlu0 %v4194
  %v4538 = vpop.xlane.xlu0 %4537
  %4539 = vmax.xlane.f32.xlu0 %v4199
  %v4540 = vpop.xlane.xlu0 %4539
  %4541 = vmax.xlane.f32.xlu0 %v4202
  %v4542 = vpop.xlane.xlu0 %4541
  %4543 = vmax.xlane.f32.xlu0 %v4280
  %v4544 = vpop.xlane.xlu0 %4543
  %4545 = vmax.xlane.f32.xlu0 %v4283
  %v4546 = vpop.xlane.xlu0 %4545
  %4547 = vmax.xlane.f32.xlu0 %v4288
  %v4548 = vpop.xlane.xlu0 %4547
  %4549 = vmax.xlane.f32.xlu0 %v4291
  %v4550 = vpop.xlane.xlu0 %4549
  %4551 = vmax.xlane.f32.xlu0 %v4296
  %v4552 = vpop.xlane.xlu0 %4551
  %4553 = vmax.xlane.f32.xlu0 %v4299
  %v4554 = vpop.xlane.xlu0 %4553
  %4555 = vmax.xlane.f32.xlu0 %v4304
  %v4556 = vpop.xlane.xlu0 %4555
  %4557 = vmax.xlane.f32.xlu0 %v4307
  %v4558 = vpop.xlane.xlu0 %4557
  %4559 = vmax.xlane.f32.xlu0 %v4312
  %v4560 = vpop.xlane.xlu0 %4559
  %4561 = vmax.xlane.f32.xlu0 %v4315
  %v4562 = vpop.xlane.xlu0 %4561
  %4563 = vmax.xlane.f32.xlu0 %v4320
  %v4564 = vpop.xlane.xlu0 %4563
  %4565 = vmax.xlane.f32.xlu0 %v4323
  %v4566 = vpop.xlane.xlu0 %4565
  %4567 = vmax.xlane.f32.xlu0 %v4328
  %v4568 = vpop.xlane.xlu0 %4567
  %4569 = vmax.xlane.f32.xlu0 %v4331
  %v4570 = vpop.xlane.xlu0 %4569
  %4571 = vmax.xlane.f32.xlu0 %v4336
  %v4572 = vpop.xlane.xlu0 %4571
  %4573 = vmax.xlane.f32.xlu0 %v4339
  %v4574 = vpop.xlane.xlu0 %4573
  %4575 = vmax.xlane.f32.xlu0 %v4417
  %v4576 = vpop.xlane.xlu0 %4575
  %4577 = vmax.xlane.f32.xlu0 %v4420
  %v4578 = vpop.xlane.xlu0 %4577
  %4579 = vmax.xlane.f32.xlu0 %v4425
  %v4580 = vpop.xlane.xlu0 %4579
  %4581 = vmax.xlane.f32.xlu0 %v4428
  %v4582 = vpop.xlane.xlu0 %4581
  %4583 = vmax.xlane.f32.xlu0 %v4433
  %v4584 = vpop.xlane.xlu0 %4583
  %4585 = vmax.xlane.f32.xlu0 %v4436
  %v4586 = vpop.xlane.xlu0 %4585
  %4587 = vmax.xlane.f32.xlu0 %v4441
  %v4588 = vpop.xlane.xlu0 %4587
  %4589 = vmax.xlane.f32.xlu0 %v4444
  %v4590 = vpop.xlane.xlu0 %4589
  %4591 = vmax.xlane.f32.xlu0 %v4449
  %v4592 = vpop.xlane.xlu0 %4591
  %4593 = vmax.xlane.f32.xlu0 %v4452
  %v4594 = vpop.xlane.xlu0 %4593
  %4595 = vmax.xlane.f32.xlu0 %v4457
  %v4596 = vpop.xlane.xlu0 %4595
  %4597 = vmax.xlane.f32.xlu0 %v4460
  %v4598 = vpop.xlane.xlu0 %4597
  %4599 = vmax.xlane.f32.xlu0 %v4465
  %v4600 = vpop.xlane.xlu0 %4599
  %4601 = vmax.xlane.f32.xlu0 %v4468
  %v4602 = vpop.xlane.xlu0 %4601
  %4603 = vmax.xlane.f32.xlu0 %v4473
  %v4604 = vpop.xlane.xlu0 %4603
  %4605 = vmax.xlane.f32.xlu0 %v4476
  %v4606 = vpop.xlane.xlu0 %4605
  %v4607 = vsub.f32 %v4006, %v4480
  %v4608 = vsub.f32 %v4009, %v4482
  %v4609 = vsub.f32 %v4014, %v4484
  %v4610 = vsub.f32 %v4017, %v4486
  %v4611 = vsub.f32 %v4022, %v4488
  %v4612 = vsub.f32 %v4025, %v4490
  %v4613 = vsub.f32 %v4030, %v4492
  %v4614 = vsub.f32 %v4033, %v4494
  %v4615 = vsub.f32 %v4038, %v4496
  %v4616 = vsub.f32 %v4041, %v4498
  %v4617 = vsub.f32 %v4046, %v4500
  %v4618 = vsub.f32 %v4049, %v4502
  %v4619 = vsub.f32 %v4054, %v4504
  %v4620 = vsub.f32 %v4057, %v4506
  %v4621 = vsub.f32 %v4062, %v4508
  %v4622 = vsub.f32 %v4065, %v4510
  %v4623 = vsub.f32 %v4143, %v4512
  %v4624 = vsub.f32 %v4146, %v4514
  %v4625 = vsub.f32 %v4151, %v4516
  %v4626 = vsub.f32 %v4154, %v4518
  %v4627 = vsub.f32 %v4159, %v4520
  %v4628 = vsub.f32 %v4162, %v4522
  %v4629 = vsub.f32 %v4167, %v4524
  %v4630 = vsub.f32 %v4170, %v4526
  %v4631 = vsub.f32 %v4175, %v4528
  %v4632 = vsub.f32 %v4178, %v4530
  %v4633 = vsub.f32 %v4183, %v4532
  %v4634 = vsub.f32 %v4186, %v4534
  %v4635 = vsub.f32 %v4191, %v4536
  %v4636 = vsub.f32 %v4194, %v4538
  %v4637 = vsub.f32 %v4199, %v4540
  %v4638 = vsub.f32 %v4202, %v4542
  %v4639 = vsub.f32 %v4280, %v4544
  %v4640 = vsub.f32 %v4283, %v4546
  %v4641 = vsub.f32 %v4288, %v4548
  %v4642 = vsub.f32 %v4291, %v4550
  %v4643 = vsub.f32 %v4296, %v4552
  %v4644 = vsub.f32 %v4299, %v4554
  %v4645 = vsub.f32 %v4304, %v4556
  %v4646 = vsub.f32 %v4307, %v4558
  %v4647 = vsub.f32 %v4312, %v4560
  %v4648 = vsub.f32 %v4315, %v4562
  %v4649 = vsub.f32 %v4320, %v4564
  %v4650 = vsub.f32 %v4323, %v4566
  %v4651 = vsub.f32 %v4328, %v4568
  %v4652 = vsub.f32 %v4331, %v4570
  %v4653 = vsub.f32 %v4336, %v4572
  %v4654 = vsub.f32 %v4339, %v4574
  %v4655 = vsub.f32 %v4417, %v4576
  %v4656 = vsub.f32 %v4420, %v4578
  %v4657 = vsub.f32 %v4425, %v4580
  %v4658 = vsub.f32 %v4428, %v4582
  %v4659 = vsub.f32 %v4433, %v4584
  %v4660 = vsub.f32 %v4436, %v4586
  %v4661 = vsub.f32 %v4441, %v4588
  %v4662 = vsub.f32 %v4444, %v4590
  %v4663 = vsub.f32 %v4449, %v4592
  %v4664 = vsub.f32 %v4452, %v4594
  %v4665 = vsub.f32 %v4457, %v4596
  %v4666 = vsub.f32 %v4460, %v4598
  %v4667 = vsub.f32 %v4465, %v4600
  %v4668 = vsub.f32 %v4468, %v4602
  %v4669 = vsub.f32 %v4473, %v4604
  %v4670 = vsub.f32 %v4476, %v4606
  %v4671 = vmul.f32 %v4607, 1.442695
  %v4672 = vpow.pop %v4671
  %v4673 = vmul.f32 %v4608, 1.442695
  %v4674 = vpow.pop %v4673
  %v4675 = vmul.f32 %v4609, 1.442695
  %v4676 = vpow.pop %v4675
  %v4677 = vmul.f32 %v4610, 1.442695
  %v4678 = vpow.pop %v4677
  %v4679 = vmul.f32 %v4611, 1.442695
  %v4680 = vpow.pop %v4679
  %v4681 = vmul.f32 %v4612, 1.442695
  %v4682 = vpow.pop %v4681
  %v4683 = vmul.f32 %v4613, 1.442695
  %v4684 = vpow.pop %v4683
  %v4685 = vmul.f32 %v4614, 1.442695
  %v4686 = vpow.pop %v4685
  %v4687 = vmul.f32 %v4615, 1.442695
  %v4688 = vpow.pop %v4687
  %v4689 = vmul.f32 %v4616, 1.442695
  %v4690 = vpow.pop %v4689
  %v4691 = vmul.f32 %v4617, 1.442695
  %v4692 = vpow.pop %v4691
  %v4693 = vmul.f32 %v4618, 1.442695
  %v4694 = vpow.pop %v4693
  %v4695 = vmul.f32 %v4619, 1.442695
  %v4696 = vpow.pop %v4695
  %v4697 = vmul.f32 %v4620, 1.442695
  %v4698 = vpow.pop %v4697
  %v4699 = vmul.f32 %v4621, 1.442695
  %v4700 = vpow.pop %v4699
  %v4701 = vmul.f32 %v4622, 1.442695
  %v4702 = vpow.pop %v4701
  %v4703 = vmul.f32 %v4623, 1.442695
  %v4704 = vpow.pop %v4703
  %v4705 = vmul.f32 %v4624, 1.442695
  %v4706 = vpow.pop %v4705
  %v4707 = vmul.f32 %v4625, 1.442695
  %v4708 = vpow.pop %v4707
  %v4709 = vmul.f32 %v4626, 1.442695
  %v4710 = vpow.pop %v4709
  %v4711 = vmul.f32 %v4627, 1.442695
  %v4712 = vpow.pop %v4711
  %v4713 = vmul.f32 %v4628, 1.442695
  %v4714 = vpow.pop %v4713
  %v4715 = vmul.f32 %v4629, 1.442695
  %v4716 = vpow.pop %v4715
  %v4717 = vmul.f32 %v4630, 1.442695
  %v4718 = vpow.pop %v4717
  %v4719 = vmul.f32 %v4631, 1.442695
  %v4720 = vpow.pop %v4719
  %v4721 = vmul.f32 %v4632, 1.442695
  %v4722 = vpow.pop %v4721
  %v4723 = vmul.f32 %v4633, 1.442695
  %v4724 = vpow.pop %v4723
  %v4725 = vmul.f32 %v4634, 1.442695
  %v4726 = vpow.pop %v4725
  %v4727 = vmul.f32 %v4635, 1.442695
  %v4728 = vpow.pop %v4727
  %v4729 = vmul.f32 %v4636, 1.442695
  %v4730 = vpow.pop %v4729
  %v4731 = vmul.f32 %v4637, 1.442695
  %v4732 = vpow.pop %v4731
  %v4733 = vmul.f32 %v4638, 1.442695
  %v4734 = vpow.pop %v4733
  %v4735 = vmul.f32 %v4639, 1.442695
  %v4736 = vpow.pop %v4735
  %v4737 = vmul.f32 %v4640, 1.442695
  %v4738 = vpow.pop %v4737
  %v4739 = vmul.f32 %v4641, 1.442695
  %v4740 = vpow.pop %v4739
  %v4741 = vmul.f32 %v4642, 1.442695
  %v4742 = vpow.pop %v4741
  %v4743 = vmul.f32 %v4643, 1.442695
  %v4744 = vpow.pop %v4743
  %v4745 = vmul.f32 %v4644, 1.442695
  %v4746 = vpow.pop %v4745
  %v4747 = vmul.f32 %v4645, 1.442695
  %v4748 = vpow.pop %v4747
  %v4749 = vmul.f32 %v4646, 1.442695
  %v4750 = vpow.pop %v4749
  %v4751 = vmul.f32 %v4647, 1.442695
  %v4752 = vpow.pop %v4751
  %v4753 = vmul.f32 %v4648, 1.442695
  %v4754 = vpow.pop %v4753
  %v4755 = vmul.f32 %v4649, 1.442695
  %v4756 = vpow.pop %v4755
  %v4757 = vmul.f32 %v4650, 1.442695
  %v4758 = vpow.pop %v4757
  %v4759 = vmul.f32 %v4651, 1.442695
  %v4760 = vpow.pop %v4759
  %v4761 = vmul.f32 %v4652, 1.442695
  %v4762 = vpow.pop %v4761
  %v4763 = vmul.f32 %v4653, 1.442695
  %v4764 = vpow.pop %v4763
  %v4765 = vmul.f32 %v4654, 1.442695
  %v4766 = vpow.pop %v4765
  %v4767 = vmul.f32 %v4655, 1.442695
  %v4768 = vpow.pop %v4767
  %v4769 = vmul.f32 %v4656, 1.442695
  %v4770 = vpow.pop %v4769
  %v4771 = vmul.f32 %v4657, 1.442695
  %v4772 = vpow.pop %v4771
  %v4773 = vmul.f32 %v4658, 1.442695
  %v4774 = vpow.pop %v4773
  %v4775 = vmul.f32 %v4659, 1.442695
  %v4776 = vpow.pop %v4775
  %v4777 = vmul.f32 %v4660, 1.442695
  %v4778 = vpow.pop %v4777
  %v4779 = vmul.f32 %v4661, 1.442695
  %v4780 = vpow.pop %v4779
  %v4781 = vmul.f32 %v4662, 1.442695
  %v4782 = vpow.pop %v4781
  %v4783 = vmul.f32 %v4663, 1.442695
  %v4784 = vpow.pop %v4783
  %v4785 = vmul.f32 %v4664, 1.442695
  %v4786 = vpow.pop %v4785
  %v4787 = vmul.f32 %v4665, 1.442695
  %v4788 = vpow.pop %v4787
  %v4789 = vmul.f32 %v4666, 1.442695
  %v4790 = vpow.pop %v4789
  %v4791 = vmul.f32 %v4667, 1.442695
  %v4792 = vpow.pop %v4791
  %v4793 = vmul.f32 %v4668, 1.442695
  %v4794 = vpow.pop %v4793
  %v4795 = vmul.f32 %v4669, 1.442695
  %v4796 = vpow.pop %v4795
  %v4797 = vmul.f32 %v4670, 1.442695
  %v4798 = vpow.pop %v4797
  %4799 = vadd.xlane.f32.xlu0 %v4672
  %v4800 = vpop.xlane.xlu0 %4799
  %4801 = vadd.xlane.f32.xlu0 %v4674
  %v4802 = vpop.xlane.xlu0 %4801
  %4803 = vadd.xlane.f32.xlu0 %v4676
  %v4804 = vpop.xlane.xlu0 %4803
  %4805 = vadd.xlane.f32.xlu0 %v4678
  %v4806 = vpop.xlane.xlu0 %4805
  %4807 = vadd.xlane.f32.xlu0 %v4680
  %v4808 = vpop.xlane.xlu0 %4807
  %4809 = vadd.xlane.f32.xlu0 %v4682
  %v4810 = vpop.xlane.xlu0 %4809
  %4811 = vadd.xlane.f32.xlu0 %v4684
  %v4812 = vpop.xlane.xlu0 %4811
  %4813 = vadd.xlane.f32.xlu0 %v4686
  %v4814 = vpop.xlane.xlu0 %4813
  %4815 = vadd.xlane.f32.xlu0 %v4688
  %v4816 = vpop.xlane.xlu0 %4815
  %4817 = vadd.xlane.f32.xlu0 %v4690
  %v4818 = vpop.xlane.xlu0 %4817
  %4819 = vadd.xlane.f32.xlu0 %v4692
  %v4820 = vpop.xlane.xlu0 %4819
  %4821 = vadd.xlane.f32.xlu0 %v4694
  %v4822 = vpop.xlane.xlu0 %4821
  %4823 = vadd.xlane.f32.xlu0 %v4696
  %v4824 = vpop.xlane.xlu0 %4823
  %4825 = vadd.xlane.f32.xlu0 %v4698
  %v4826 = vpop.xlane.xlu0 %4825
  %4827 = vadd.xlane.f32.xlu0 %v4700
  %v4828 = vpop.xlane.xlu0 %4827
  %4829 = vadd.xlane.f32.xlu0 %v4702
  %v4830 = vpop.xlane.xlu0 %4829
  %4831 = vadd.xlane.f32.xlu0 %v4704
  %v4832 = vpop.xlane.xlu0 %4831
  %4833 = vadd.xlane.f32.xlu0 %v4706
  %v4834 = vpop.xlane.xlu0 %4833
  %4835 = vadd.xlane.f32.xlu0 %v4708
  %v4836 = vpop.xlane.xlu0 %4835
  %4837 = vadd.xlane.f32.xlu0 %v4710
  %v4838 = vpop.xlane.xlu0 %4837
  %4839 = vadd.xlane.f32.xlu0 %v4712
  %v4840 = vpop.xlane.xlu0 %4839
  %4841 = vadd.xlane.f32.xlu0 %v4714
  %v4842 = vpop.xlane.xlu0 %4841
  %4843 = vadd.xlane.f32.xlu0 %v4716
  %v4844 = vpop.xlane.xlu0 %4843
  %4845 = vadd.xlane.f32.xlu0 %v4718
  %v4846 = vpop.xlane.xlu0 %4845
  %4847 = vadd.xlane.f32.xlu0 %v4720
  %v4848 = vpop.xlane.xlu0 %4847
  %4849 = vadd.xlane.f32.xlu0 %v4722
  %v4850 = vpop.xlane.xlu0 %4849
  %4851 = vadd.xlane.f32.xlu0 %v4724
  %v4852 = vpop.xlane.xlu0 %4851
  %4853 = vadd.xlane.f32.xlu0 %v4726
  %v4854 = vpop.xlane.xlu0 %4853
  %4855 = vadd.xlane.f32.xlu0 %v4728
  %v4856 = vpop.xlane.xlu0 %4855
  %4857 = vadd.xlane.f32.xlu0 %v4730
  %v4858 = vpop.xlane.xlu0 %4857
  %4859 = vadd.xlane.f32.xlu0 %v4732
  %v4860 = vpop.xlane.xlu0 %4859
  %4861 = vadd.xlane.f32.xlu0 %v4734
  %v4862 = vpop.xlane.xlu0 %4861
  %4863 = vadd.xlane.f32.xlu0 %v4736
  %v4864 = vpop.xlane.xlu0 %4863
  %4865 = vadd.xlane.f32.xlu0 %v4738
  %v4866 = vpop.xlane.xlu0 %4865
  %4867 = vadd.xlane.f32.xlu0 %v4740
  %v4868 = vpop.xlane.xlu0 %4867
  %4869 = vadd.xlane.f32.xlu0 %v4742
  %v4870 = vpop.xlane.xlu0 %4869
  %4871 = vadd.xlane.f32.xlu0 %v4744
  %v4872 = vpop.xlane.xlu0 %4871
  %4873 = vadd.xlane.f32.xlu0 %v4746
  %v4874 = vpop.xlane.xlu0 %4873
  %4875 = vadd.xlane.f32.xlu0 %v4748
  %v4876 = vpop.xlane.xlu0 %4875
  %4877 = vadd.xlane.f32.xlu0 %v4750
  %v4878 = vpop.xlane.xlu0 %4877
  %4879 = vadd.xlane.f32.xlu0 %v4752
  %v4880 = vpop.xlane.xlu0 %4879
  %4881 = vadd.xlane.f32.xlu0 %v4754
  %v4882 = vpop.xlane.xlu0 %4881
  %4883 = vadd.xlane.f32.xlu0 %v4756
  %v4884 = vpop.xlane.xlu0 %4883
  %4885 = vadd.xlane.f32.xlu0 %v4758
  %v4886 = vpop.xlane.xlu0 %4885
  %4887 = vadd.xlane.f32.xlu0 %v4760
  %v4888 = vpop.xlane.xlu0 %4887
  %4889 = vadd.xlane.f32.xlu0 %v4762
  %v4890 = vpop.xlane.xlu0 %4889
  %4891 = vadd.xlane.f32.xlu0 %v4764
  %v4892 = vpop.xlane.xlu0 %4891
  %4893 = vadd.xlane.f32.xlu0 %v4766
  %v4894 = vpop.xlane.xlu0 %4893
  %4895 = vadd.xlane.f32.xlu0 %v4768
  %v4896 = vpop.xlane.xlu0 %4895
  %4897 = vadd.xlane.f32.xlu0 %v4770
  %v4898 = vpop.xlane.xlu0 %4897
  %4899 = vadd.xlane.f32.xlu0 %v4772
  %v4900 = vpop.xlane.xlu0 %4899
  %4901 = vadd.xlane.f32.xlu0 %v4774
  %v4902 = vpop.xlane.xlu0 %4901
  %4903 = vadd.xlane.f32.xlu0 %v4776
  %v4904 = vpop.xlane.xlu0 %4903
  %4905 = vadd.xlane.f32.xlu0 %v4778
  %v4906 = vpop.xlane.xlu0 %4905
  %4907 = vadd.xlane.f32.xlu0 %v4780
  %v4908 = vpop.xlane.xlu0 %4907
  %4909 = vadd.xlane.f32.xlu0 %v4782
  %v4910 = vpop.xlane.xlu0 %4909
  %4911 = vadd.xlane.f32.xlu0 %v4784
  %v4912 = vpop.xlane.xlu0 %4911
  %4913 = vadd.xlane.f32.xlu0 %v4786
  %v4914 = vpop.xlane.xlu0 %4913
  %4915 = vadd.xlane.f32.xlu0 %v4788
  %v4916 = vpop.xlane.xlu0 %4915
  %4917 = vadd.xlane.f32.xlu0 %v4790
  %v4918 = vpop.xlane.xlu0 %4917
  %4919 = vadd.xlane.f32.xlu0 %v4792
  %v4920 = vpop.xlane.xlu0 %4919
  %4921 = vadd.xlane.f32.xlu0 %v4794
  %v4922 = vpop.xlane.xlu0 %4921
  %4923 = vadd.xlane.f32.xlu0 %v4796
  %v4924 = vpop.xlane.xlu0 %4923
  %4925 = vadd.xlane.f32.xlu0 %v4798
  %v4926 = vpop.xlane.xlu0 %4925
  %v4927 = vrcp.pop %v4800
  %v4928 = vrcp.pop %v4802
  %v4929 = vrcp.pop %v4804
  %v4930 = vrcp.pop %v4806
  %v4931 = vrcp.pop %v4808
  %v4932 = vrcp.pop %v4810
  %v4933 = vrcp.pop %v4812
  %v4934 = vrcp.pop %v4814
  %v4935 = vrcp.pop %v4816
  %v4936 = vrcp.pop %v4818
  %v4937 = vrcp.pop %v4820
  %v4938 = vrcp.pop %v4822
  %v4939 = vrcp.pop %v4824
  %v4940 = vrcp.pop %v4826
  %v4941 = vrcp.pop %v4828
  %v4942 = vrcp.pop %v4830
  %v4943 = vrcp.pop %v4832
  %v4944 = vrcp.pop %v4834
  %v4945 = vrcp.pop %v4836
  %v4946 = vrcp.pop %v4838
  %v4947 = vrcp.pop %v4840
  %v4948 = vrcp.pop %v4842
  %v4949 = vrcp.pop %v4844
  %v4950 = vrcp.pop %v4846
  %v4951 = vrcp.pop %v4848
  %v4952 = vrcp.pop %v4850
  %v4953 = vrcp.pop %v4852
  %v4954 = vrcp.pop %v4854
  %v4955 = vrcp.pop %v4856
  %v4956 = vrcp.pop %v4858
  %v4957 = vrcp.pop %v4860
  %v4958 = vrcp.pop %v4862
  %v4959 = vrcp.pop %v4864
  %v4960 = vrcp.pop %v4866
  %v4961 = vrcp.pop %v4868
  %v4962 = vrcp.pop %v4870
  %v4963 = vrcp.pop %v4872
  %v4964 = vrcp.pop %v4874
  %v4965 = vrcp.pop %v4876
  %v4966 = vrcp.pop %v4878
  %v4967 = vrcp.pop %v4880
  %v4968 = vrcp.pop %v4882
  %v4969 = vrcp.pop %v4884
  %v4970 = vrcp.pop %v4886
  %v4971 = vrcp.pop %v4888
  %v4972 = vrcp.pop %v4890
  %v4973 = vrcp.pop %v4892
  %v4974 = vrcp.pop %v4894
  %v4975 = vrcp.pop %v4896
  %v4976 = vrcp.pop %v4898
  %v4977 = vrcp.pop %v4900
  %v4978 = vrcp.pop %v4902
  %v4979 = vrcp.pop %v4904
  %v4980 = vrcp.pop %v4906
  %v4981 = vrcp.pop %v4908
  %v4982 = vrcp.pop %v4910
  %v4983 = vrcp.pop %v4912
  %v4984 = vrcp.pop %v4914
  %v4985 = vrcp.pop %v4916
  %v4986 = vrcp.pop %v4918
  %v4987 = vrcp.pop %v4920
  %v4988 = vrcp.pop %v4922
  %v4989 = vrcp.pop %v4924
  %v4990 = vrcp.pop %v4926
  %v4991 = vmul.f32 %v4672, %v4927
  %v4992 = vmul.f32 %v4674, %v4928
  %v4993 = vmul.f32 %v4676, %v4929
  %v4994 = vmul.f32 %v4678, %v4930
  %v4995 = vmul.f32 %v4680, %v4931
  %v4996 = vmul.f32 %v4682, %v4932
  %v4997 = vmul.f32 %v4684, %v4933
  %v4998 = vmul.f32 %v4686, %v4934
  %v4999 = vmul.f32 %v4688, %v4935
  %v5000 = vmul.f32 %v4690, %v4936
  %v5001 = vmul.f32 %v4692, %v4937
  %v5002 = vmul.f32 %v4694, %v4938
  %v5003 = vmul.f32 %v4696, %v4939
  %v5004 = vmul.f32 %v4698, %v4940
  %v5005 = vmul.f32 %v4700, %v4941
  %v5006 = vmul.f32 %v4702, %v4942
  %v5007 = vmul.f32 %v4704, %v4943
  %v5008 = vmul.f32 %v4706, %v4944
  %v5009 = vmul.f32 %v4708, %v4945
  %v5010 = vmul.f32 %v4710, %v4946
  %v5011 = vmul.f32 %v4712, %v4947
  %v5012 = vmul.f32 %v4714, %v4948
  %v5013 = vmul.f32 %v4716, %v4949
  %v5014 = vmul.f32 %v4718, %v4950
  %v5015 = vmul.f32 %v4720, %v4951
  %v5016 = vmul.f32 %v4722, %v4952
  %v5017 = vmul.f32 %v4724, %v4953
  %v5018 = vmul.f32 %v4726, %v4954
  %v5019 = vmul.f32 %v4728, %v4955
  %v5020 = vmul.f32 %v4730, %v4956
  %v5021 = vmul.f32 %v4732, %v4957
  %v5022 = vmul.f32 %v4734, %v4958
  %v5023 = vmul.f32 %v4736, %v4959
  %v5024 = vmul.f32 %v4738, %v4960
  %v5025 = vmul.f32 %v4740, %v4961
  %v5026 = vmul.f32 %v4742, %v4962
  %v5027 = vmul.f32 %v4744, %v4963
  %v5028 = vmul.f32 %v4746, %v4964
  %v5029 = vmul.f32 %v4748, %v4965
  %v5030 = vmul.f32 %v4750, %v4966
  %v5031 = vmul.f32 %v4752, %v4967
  %v5032 = vmul.f32 %v4754, %v4968
  %v5033 = vmul.f32 %v4756, %v4969
  %v5034 = vmul.f32 %v4758, %v4970
  %v5035 = vmul.f32 %v4760, %v4971
  %v5036 = vmul.f32 %v4762, %v4972
  %v5037 = vmul.f32 %v4764, %v4973
  %v5038 = vmul.f32 %v4766, %v4974
  %v5039 = vmul.f32 %v4768, %v4975
  %v5040 = vmul.f32 %v4770, %v4976
  %v5041 = vmul.f32 %v4772, %v4977
  %v5042 = vmul.f32 %v4774, %v4978
  %v5043 = vmul.f32 %v4776, %v4979
  %v5044 = vmul.f32 %v4778, %v4980
  %v5045 = vmul.f32 %v4780, %v4981
  %v5046 = vmul.f32 %v4782, %v4982
  %v5047 = vmul.f32 %v4784, %v4983
  %v5048 = vmul.f32 %v4786, %v4984
  %v5049 = vmul.f32 %v4788, %v4985
  %v5050 = vmul.f32 %v4790, %v4986
  %v5051 = vmul.f32 %v4792, %v4987
  %v5052 = vmul.f32 %v4794, %v4988
  %v5053 = vmul.f32 %v4796, %v4989
  %v5054 = vmul.f32 %v4798, %v4990
  %v5055 = vpack.c.bf16 %v4992, %v4991
  %v5056 = vpack.c.bf16 %v4994, %v4993
  %v5057 = vpack.c.bf16 %v4996, %v4995
  %v5058 = vpack.c.bf16 %v4998, %v4997
  %v5059 = vpack.c.bf16 %v5000, %v4999
  %v5060 = vpack.c.bf16 %v5002, %v5001
  %v5061 = vpack.c.bf16 %v5004, %v5003
  %v5062 = vpack.c.bf16 %v5006, %v5005
  %v5063 = vpack.c.bf16 %v5008, %v5007
  %v5064 = vpack.c.bf16 %v5010, %v5009
  %v5065 = vpack.c.bf16 %v5012, %v5011
  %v5066 = vpack.c.bf16 %v5014, %v5013
  %v5067 = vpack.c.bf16 %v5016, %v5015
  %v5068 = vpack.c.bf16 %v5018, %v5017
  %v5069 = vpack.c.bf16 %v5020, %v5019
  %v5070 = vpack.c.bf16 %v5022, %v5021
  %v5071 = vpack.c.bf16 %v5024, %v5023
  %v5072 = vpack.c.bf16 %v5026, %v5025
  %v5073 = vpack.c.bf16 %v5028, %v5027
  %v5074 = vpack.c.bf16 %v5030, %v5029
  %v5075 = vpack.c.bf16 %v5032, %v5031
  %v5076 = vpack.c.bf16 %v5034, %v5033
  %v5077 = vpack.c.bf16 %v5036, %v5035
  %v5078 = vpack.c.bf16 %v5038, %v5037
  %v5079 = vpack.c.bf16 %v5040, %v5039
  %v5080 = vpack.c.bf16 %v5042, %v5041
  %v5081 = vpack.c.bf16 %v5044, %v5043
  %v5082 = vpack.c.bf16 %v5046, %v5045
  %v5083 = vpack.c.bf16 %v5048, %v5047
  %v5084 = vpack.c.bf16 %v5050, %v5049
  %v5085 = vpack.c.bf16 %v5052, %v5051
  %v5086 = vpack.c.bf16 %v5054, %v5053
  %5087 = vmatprep.subr.bf16.mxu0 0
  %5088 = vmatpush1.bf16.xpose.msra.mxu0 %v5055
  %5089 = vmatprep.subr.bf16.mxu0 0
  %5090 = vmatpush1.bf16.xpose.msra.mxu0 %v5056
  %5091 = vmatprep.subr.bf16.mxu0 0
  %5092 = vmatpush1.bf16.xpose.msra.mxu0 %v5057
  %5093 = vmatprep.subr.bf16.mxu0 0
  %5094 = vmatpush1.bf16.xpose.msra.mxu0 %v5058
  %5095 = vmatprep.subr.bf16.mxu0 0
  %5096 = vmatpush1.bf16.xpose.msra.mxu0 %v5059
  %5097 = vmatprep.subr.bf16.mxu0 0
  %5098 = vmatpush1.bf16.xpose.msra.mxu0 %v5060
  %5099 = vmatprep.subr.bf16.mxu0 0
  %5100 = vmatpush1.bf16.xpose.msra.mxu0 %v5061
  %5101 = vmatprep.subr.bf16.mxu0 0
  %5102 = vmatpush1.bf16.xpose.msra.mxu0 %v5062
  %5103 = vmatprep.subr.bf16.mxu0 0
  %5104 = vmatpush1.bf16.xpose.msra.mxu0 0
  %5105 = vmatprep.subr.bf16.mxu0 0
  %5106 = vmatpush1.bf16.xpose.msra.mxu0 0
  %5107 = vmatprep.subr.bf16.mxu0 0
  %5108 = vmatpush1.bf16.xpose.msra.mxu0 0
  %5109 = vmatprep.subr.bf16.mxu0 0
  %5110 = vmatpush1.bf16.xpose.msra.mxu0 0
  %5111 = vmatprep.subr.bf16.mxu0 0
  %5112 = vmatpush1.bf16.xpose.msra.mxu0 0
  %5113 = vmatprep.subr.bf16.mxu0 0
  %5114 = vmatpush1.bf16.xpose.msra.mxu0 0
  %5115 = vmatprep.subr.bf16.mxu0 0
  %5116 = vmatpush1.bf16.xpose.msra.mxu0 0
  %5117 = vmatprep.subr.bf16.mxu0 0
  %5118 = vmatpush1.bf16.xpose.msra.mxu0 0
  %5119 = vmatprep.mubr.bf16.mxu0 0
  %5120 = vmatmul.mubr.bf16.gmra.mrb[0].mxu0 %v3927
  %v5121 = vpop.f32.mrb[0].mxu0
  %v5122 = vadd.f32 0.0, %v5121
  %v5123 = vpop.f32.mrb[0].mxu0
  %v5124 = vpop.f32.mrb[0].mxu0
  %v5125 = vadd.f32 0.0, %v5124
  %v5126 = vpop.f32.mrb[0].mxu0
  %5127 = vdwg.mxu0
  %5128 = vmatprep.subr.bf16.mxu0 0
  %5129 = vmatpush1.bf16.xpose.msra.mxu0 %v5063
  %5130 = vmatprep.subr.bf16.mxu0 0
  %5131 = vmatpush1.bf16.xpose.msra.mxu0 %v5064
  %5132 = vmatprep.subr.bf16.mxu0 0
  %5133 = vmatpush1.bf16.xpose.msra.mxu0 %v5065
  %5134 = vmatprep.subr.bf16.mxu0 0
  %5135 = vmatpush1.bf16.xpose.msra.mxu0 %v5066
  %5136 = vmatprep.subr.bf16.mxu0 0
  %5137 = vmatpush1.bf16.xpose.msra.mxu0 %v5067
  %5138 = vmatprep.subr.bf16.mxu0 0
  %5139 = vmatpush1.bf16.xpose.msra.mxu0 %v5068
  %5140 = vmatprep.subr.bf16.mxu0 0
  %5141 = vmatpush1.bf16.xpose.msra.mxu0 %v5069
  %5142 = vmatprep.subr.bf16.mxu0 0
  %5143 = vmatpush1.bf16.xpose.msra.mxu0 %v5070
  %5144 = vmatprep.subr.bf16.mxu0 0
  %5145 = vmatpush1.bf16.xpose.msra.mxu0 0
  %5146 = vmatprep.subr.bf16.mxu0 0
  %5147 = vmatpush1.bf16.xpose.msra.mxu0 0
  %5148 = vmatprep.subr.bf16.mxu0 0
  %5149 = vmatpush1.bf16.xpose.msra.mxu0 0
  %5150 = vmatprep.subr.bf16.mxu0 0
  %5151 = vmatpush1.bf16.xpose.msra.mxu0 0
  %5152 = vmatprep.subr.bf16.mxu0 0
  %5153 = vmatpush1.bf16.xpose.msra.mxu0 0
  %5154 = vmatprep.subr.bf16.mxu0 0
  %5155 = vmatpush1.bf16.xpose.msra.mxu0 0
  %5156 = vmatprep.subr.bf16.mxu0 0
  %5157 = vmatpush1.bf16.xpose.msra.mxu0 0
  %5158 = vmatprep.subr.bf16.mxu0 0
  %5159 = vmatpush1.bf16.xpose.msra.mxu0 0
  %5160 = vmatprep.mubr.bf16.mxu0 0
  %5161 = vmatmul.mubr.bf16.gmra.mrb[0].mxu0 %v3928
  %v5162 = vpop.f32.mrb[0].mxu0
  %v5163 = vadd.f32 0.0, %v5162
  %v5164 = vpop.f32.mrb[0].mxu0
  %v5165 = vpop.f32.mrb[0].mxu0
  %v5166 = vadd.f32 0.0, %v5165
  %v5167 = vpop.f32.mrb[0].mxu0
  %5168 = vdwg.mxu0
  %5169 = vmatprep.subr.bf16.mxu0 0
  %5170 = vmatpush1.bf16.xpose.msra.mxu0 %v5071
  %5171 = vmatprep.subr.bf16.mxu0 0
  %5172 = vmatpush1.bf16.xpose.msra.mxu0 %v5072
  %5173 = vmatprep.subr.bf16.mxu0 0
  %5174 = vmatpush1.bf16.xpose.msra.mxu0 %v5073
  %5175 = vmatprep.subr.bf16.mxu0 0
  %5176 = vmatpush1.bf16.xpose.msra.mxu0 %v5074
  %5177 = vmatprep.subr.bf16.mxu0 0
  %5178 = vmatpush1.bf16.xpose.msra.mxu0 %v5075
  %5179 = vmatprep.subr.bf16.mxu0 0
  %5180 = vmatpush1.bf16.xpose.msra.mxu0 %v5076
  %5181 = vmatprep.subr.bf16.mxu0 0
  %5182 = vmatpush1.bf16.xpose.msra.mxu0 %v5077
  %5183 = vmatprep.subr.bf16.mxu0 0
  %5184 = vmatpush1.bf16.xpose.msra.mxu0 %v5078
  %5185 = vmatprep.subr.bf16.mxu0 0
  %5186 = vmatpush1.bf16.xpose.msra.mxu0 0
  %5187 = vmatprep.subr.bf16.mxu0 0
  %5188 = vmatpush1.bf16.xpose.msra.mxu0 0
  %5189 = vmatprep.subr.bf16.mxu0 0
  %5190 = vmatpush1.bf16.xpose.msra.mxu0 0
  %5191 = vmatprep.subr.bf16.mxu0 0
  %5192 = vmatpush1.bf16.xpose.msra.mxu0 0
  %5193 = vmatprep.subr.bf16.mxu0 0
  %5194 = vmatpush1.bf16.xpose.msra.mxu0 0
  %5195 = vmatprep.subr.bf16.mxu0 0
  %5196 = vmatpush1.bf16.xpose.msra.mxu0 0
  %5197 = vmatprep.subr.bf16.mxu0 0
  %5198 = vmatpush1.bf16.xpose.msra.mxu0 0
  %5199 = vmatprep.subr.bf16.mxu0 0
  %5200 = vmatpush1.bf16.xpose.msra.mxu0 0
  %5201 = vmatprep.mubr.bf16.mxu0 0
  %5202 = vmatmul.mubr.bf16.gmra.mrb[0].mxu0 %v3929
  %v5203 = vpop.f32.mrb[0].mxu0
  %v5204 = vadd.f32 0.0, %v5203
  %v5205 = vpop.f32.mrb[0].mxu0
  %v5206 = vpop.f32.mrb[0].mxu0
  %v5207 = vadd.f32 0.0, %v5206
  %v5208 = vpop.f32.mrb[0].mxu0
  %5209 = vdwg.mxu0
  %5210 = vmatprep.subr.bf16.mxu0 0
  %5211 = vmatpush1.bf16.xpose.msra.mxu0 %v5079
  %5212 = vmatprep.subr.bf16.mxu0 0
  %5213 = vmatpush1.bf16.xpose.msra.mxu0 %v5080
  %5214 = vmatprep.subr.bf16.mxu0 0
  %5215 = vmatpush1.bf16.xpose.msra.mxu0 %v5081
  %5216 = vmatprep.subr.bf16.mxu0 0
  %5217 = vmatpush1.bf16.xpose.msra.mxu0 %v5082
  %5218 = vmatprep.subr.bf16.mxu0 0
  %5219 = vmatpush1.bf16.xpose.msra.mxu0 %v5083
  %5220 = vmatprep.subr.bf16.mxu0 0
  %5221 = vmatpush1.bf16.xpose.msra.mxu0 %v5084
  %5222 = vmatprep.subr.bf16.mxu0 0
  %5223 = vmatpush1.bf16.xpose.msra.mxu0 %v5085
  %5224 = vmatprep.subr.bf16.mxu0 0
  %5225 = vmatpush1.bf16.xpose.msra.mxu0 %v5086
  %5226 = vmatprep.subr.bf16.mxu0 0
  %5227 = vmatpush1.bf16.xpose.msra.mxu0 0
  %5228 = vmatprep.subr.bf16.mxu0 0
  %5229 = vmatpush1.bf16.xpose.msra.mxu0 0
  %5230 = vmatprep.subr.bf16.mxu0 0
  %5231 = vmatpush1.bf16.xpose.msra.mxu0 0
  %5232 = vmatprep.subr.bf16.mxu0 0
  %5233 = vmatpush1.bf16.xpose.msra.mxu0 0
  %5234 = vmatprep.subr.bf16.mxu0 0
  %5235 = vmatpush1.bf16.xpose.msra.mxu0 0
  %5236 = vmatprep.subr.bf16.mxu0 0
  %5237 = vmatpush1.bf16.xpose.msra.mxu0 0
  %5238 = vmatprep.subr.bf16.mxu0 0
  %5239 = vmatpush1.bf16.xpose.msra.mxu0 0
  %5240 = vmatprep.subr.bf16.mxu0 0
  %5241 = vmatpush1.bf16.xpose.msra.mxu0 0
  %5242 = vmatprep.mubr.bf16.mxu0 0
  %5243 = vmatmul.mubr.bf16.gmra.mrb[0].mxu0 %v3930
  %v5244 = vpop.f32.mrb[0].mxu0
  %v5245 = vadd.f32 0.0, %v5244
  %v5246 = vpop.f32.mrb[0].mxu0
  %v5247 = vpop.f32.mrb[0].mxu0
  %v5248 = vadd.f32 0.0, %v5247
  %v5249 = vpop.f32.mrb[0].mxu0
  %5250 = vdwg.mxu0
  %v5251 = vpack.c.bf16 %v5125, %v5122
  %v5252 = vpack.c.bf16 %v5166, %v5163
  %v5253 = vpack.c.bf16 %v5207, %v5204
  %v5254 = vpack.c.bf16 %v5248, %v5245
  %v5255 = vmul.f32 %v920, 0.17677669
  %v5256 = vmul.f32 %v923, 0.17677669
  %v5257 = vmul.f32 %v928, 0.17677669
  %v5258 = vmul.f32 %v931, 0.17677669
  %v5259 = vmul.f32 %v936, 0.17677669
  %v5260 = vmul.f32 %v939, 0.17677669
  %v5261 = vmul.f32 %v944, 0.17677669
  %v5262 = vmul.f32 %v947, 0.17677669
  %v5263 = vpack.c.bf16 %v5256, %v5255
  %v5264 = vpack.c.bf16 %v5258, %v5257
  %v5265 = vpack.c.bf16 %v5260, %v5259
  %v5266 = vpack.c.bf16 %v5262, %v5261
  %v5267 = vpack.c.bf16 %v1051, %v1048
  %v5268 = vpack.c.bf16 %v1059, %v1056
  %v5269 = vpack.c.bf16 %v1067, %v1064
  %v5270 = vpack.c.bf16 %v1075, %v1072
  %v5271 = vpack.c.bf16 %v1179, %v1176
  %v5272 = vpack.c.bf16 %v1187, %v1184
  %v5273 = vpack.c.bf16 %v1195, %v1192
  %v5274 = vpack.c.bf16 %v1203, %v1200
  %5275 = vxpose.xlu0.c.b16.start [1/8] %v5263, 128
  %5276 = vxpose.xlu0.c.b16.cont [2/8] 0, 128
  %5277 = vxpose.xlu0.c.b16.cont [3/8] 0, 128
  %5278 = vxpose.xlu0.c.b16.cont [4/8] 0, 128
  %5279 = vxpose.xlu0.c.b16.cont [5/8] 0, 128
  %5280 = vxpose.xlu0.c.b16.cont [6/8] 0, 128
  %5281 = vxpose.xlu0.c.b16.cont [7/8] 0, 128
  %5282 = vxpose.xlu0.c.b16.end [8/8] 0, 128
  %v5283 = vpop.trf.xlu0
  %v5284 = vpop.trf.xlu0
  %v5285 = vpop.trf.xlu0
  %v5286 = vpop.trf.xlu0
  %v5287 = vpop.trf.xlu0
  %v5288 = vpop.trf.xlu0
  %v5289 = vpop.trf.xlu0
  %v5290 = vpop.trf.xlu0
  %v5292 = vsel %vm1258, %v5283, 0
  %v5295 = vsel %vm1258, %v5284, 0
  %v5298 = vsel %vm1258, %v5285, 0
  %v5301 = vsel %vm1258, %v5286, 0
  %v5304 = vsel %vm1258, %v5287, 0
  %v5307 = vsel %vm1258, %v5288, 0
  %v5310 = vsel %vm1258, %v5289, 0
  %v5313 = vsel %vm1258, %v5290, 0
  %5315 = vmatprep.subr.bf16.mxu0 0
  %5316 = vmatpush1.bf16.msra.mxu0 %v5267
  %5317 = vmatprep.subr.bf16.mxu0 0
  %5318 = vmatpush1.bf16.msra.mxu0 0
  %5319 = vmatprep.subr.bf16.mxu0 0
  %5320 = vmatpush1.bf16.msra.mxu0 0
  %5321 = vmatprep.subr.bf16.mxu0 0
  %5322 = vmatpush1.bf16.msra.mxu0 0
  %5323 = vmatprep.subr.bf16.mxu0 0
  %5324 = vmatpush1.bf16.msra.mxu0 0
  %5325 = vmatprep.subr.bf16.mxu0 0
  %5326 = vmatpush1.bf16.msra.mxu0 0
  %5327 = vmatprep.subr.bf16.mxu0 0
  %5328 = vmatpush1.bf16.msra.mxu0 0
  %5329 = vmatprep.subr.bf16.mxu0 0
  %5330 = vmatpush1.bf16.msra.mxu0 0
  %5331 = vmatprep.subr.bf16.mxu0 0
  %5332 = vmatpush1.bf16.msra.mxu0 0
  %5333 = vmatprep.subr.bf16.mxu0 0
  %5334 = vmatpush1.bf16.msra.mxu0 0
  %5335 = vmatprep.subr.bf16.mxu0 0
  %5336 = vmatpush1.bf16.msra.mxu0 0
  %5337 = vmatprep.subr.bf16.mxu0 0
  %5338 = vmatpush1.bf16.msra.mxu0 0
  %5339 = vmatprep.subr.bf16.mxu0 0
  %5340 = vmatpush1.bf16.msra.mxu0 0
  %5341 = vmatprep.subr.bf16.mxu0 0
  %5342 = vmatpush1.bf16.msra.mxu0 0
  %5343 = vmatprep.subr.bf16.mxu0 0
  %5344 = vmatpush1.bf16.msra.mxu0 0
  %5345 = vmatprep.subr.bf16.mxu0 0
  %5346 = vmatpush1.bf16.msra.mxu0 0
  %5347 = vmatprep.mubr.bf16.mxu0 0
  %5348 = vmatmul.mubr.bf16.gmra.mrb[0].mxu0 %v5292
  %v5349 = vpop.f32.mrb[0].mxu0
  %v5350 = vadd.f32 %v1206, %v5349
  %v5351 = vpop.f32.mrb[0].mxu0
  %v5352 = vpop.f32.mrb[0].mxu0
  %v5353 = vadd.f32 %v1207, %v5352
  %v5354 = vpop.f32.mrb[0].mxu0
  %5355 = vmatprep.mubr.bf16.mxu0 0
  %5356 = vmatmul.mubr.bf16.gmra.mrb[0].mxu0 %v5295
  %v5357 = vpop.f32.mrb[0].mxu0
  %v5358 = vadd.f32 %v1208, %v5357
  %v5359 = vpop.f32.mrb[0].mxu0
  %v5360 = vpop.f32.mrb[0].mxu0
  %v5361 = vadd.f32 %v1209, %v5360
  %v5362 = vpop.f32.mrb[0].mxu0
  %5363 = vmatprep.mubr.bf16.mxu0 0
  %5364 = vmatmul.mubr.bf16.gmra.mrb[0].mxu0 %v5298
  %v5365 = vpop.f32.mrb[0].mxu0
  %v5366 = vadd.f32 %v1210, %v5365
  %v5367 = vpop.f32.mrb[0].mxu0
  %v5368 = vpop.f32.mrb[0].mxu0
  %v5369 = vadd.f32 %v1211, %v5368
  %v5370 = vpop.f32.mrb[0].mxu0
  %5371 = vmatprep.mubr.bf16.mxu0 0
  %5372 = vmatmul.mubr.bf16.gmra.mrb[0].mxu0 %v5301
  %v5373 = vpop.f32.mrb[0].mxu0
  %v5374 = vadd.f32 %v1212, %v5373
  %v5375 = vpop.f32.mrb[0].mxu0
  %v5376 = vpop.f32.mrb[0].mxu0
  %v5377 = vadd.f32 %v1213, %v5376
  %v5378 = vpop.f32.mrb[0].mxu0
  %5379 = vmatprep.mubr.bf16.mxu0 0
  %5380 = vmatmul.mubr.bf16.gmra.mrb[0].mxu0 %v5304
  %v5381 = vpop.f32.mrb[0].mxu0
  %v5382 = vadd.f32 %v1214, %v5381
  %v5383 = vpop.f32.mrb[0].mxu0
  %v5384 = vpop.f32.mrb[0].mxu0
  %v5385 = vadd.f32 %v1215, %v5384
  %v5386 = vpop.f32.mrb[0].mxu0
  %5387 = vmatprep.mubr.bf16.mxu0 0
  %5388 = vmatmul.mubr.bf16.gmra.mrb[0].mxu0 %v5307
  %v5389 = vpop.f32.mrb[0].mxu0
  %v5390 = vadd.f32 %v1216, %v5389
  %v5391 = vpop.f32.mrb[0].mxu0
  %v5392 = vpop.f32.mrb[0].mxu0
  %v5393 = vadd.f32 %v1217, %v5392
  %v5394 = vpop.f32.mrb[0].mxu0
  %5395 = vmatprep.mubr.bf16.mxu0 0
  %5396 = vmatmul.mubr.bf16.gmra.mrb[0].mxu0 %v5310
  %v5397 = vpop.f32.mrb[0].mxu0
  %v5398 = vadd.f32 %v1218, %v5397
  %v5399 = vpop.f32.mrb[0].mxu0
  %v5400 = vpop.f32.mrb[0].mxu0
  %v5401 = vadd.f32 %v1219, %v5400
  %v5402 = vpop.f32.mrb[0].mxu0
  %5403 = vmatprep.mubr.bf16.mxu0 0
  %5404 = vmatmul.mubr.bf16.gmra.mrb[0].mxu0 %v5313
  %v5405 = vpop.f32.mrb[0].mxu0
  %v5406 = vadd.f32 %v1220, %v5405
  %v5407 = vpop.f32.mrb[0].mxu0
  %v5408 = vpop.f32.mrb[0].mxu0
  %v5409 = vadd.f32 %v1221, %v5408
  %v5410 = vpop.f32.mrb[0].mxu0
  %5411 = vdwg.mxu0
  %5412 = vxpose.xlu0.c.b16.start [1/8] %v5264, 128
  %5413 = vxpose.xlu0.c.b16.cont [2/8] 0, 128
  %5414 = vxpose.xlu0.c.b16.cont [3/8] 0, 128
  %5415 = vxpose.xlu0.c.b16.cont [4/8] 0, 128
  %5416 = vxpose.xlu0.c.b16.cont [5/8] 0, 128
  %5417 = vxpose.xlu0.c.b16.cont [6/8] 0, 128
  %5418 = vxpose.xlu0.c.b16.cont [7/8] 0, 128
  %5419 = vxpose.xlu0.c.b16.end [8/8] 0, 128
  %v5420 = vpop.trf.xlu0
  %v5421 = vpop.trf.xlu0
  %v5422 = vpop.trf.xlu0
  %v5423 = vpop.trf.xlu0
  %v5424 = vpop.trf.xlu0
  %v5425 = vpop.trf.xlu0
  %v5426 = vpop.trf.xlu0
  %v5427 = vpop.trf.xlu0
  %v5429 = vsel %vm1258, %v5420, 0
  %v5432 = vsel %vm1258, %v5421, 0
  %v5435 = vsel %vm1258, %v5422, 0
  %v5438 = vsel %vm1258, %v5423, 0
  %v5441 = vsel %vm1258, %v5424, 0
  %v5444 = vsel %vm1258, %v5425, 0
  %v5447 = vsel %vm1258, %v5426, 0
  %v5450 = vsel %vm1258, %v5427, 0
  %5452 = vmatprep.subr.bf16.mxu0 0
  %5453 = vmatpush1.bf16.msra.mxu0 %v5268
  %5454 = vmatprep.subr.bf16.mxu0 0
  %5455 = vmatpush1.bf16.msra.mxu0 0
  %5456 = vmatprep.subr.bf16.mxu0 0
  %5457 = vmatpush1.bf16.msra.mxu0 0
  %5458 = vmatprep.subr.bf16.mxu0 0
  %5459 = vmatpush1.bf16.msra.mxu0 0
  %5460 = vmatprep.subr.bf16.mxu0 0
  %5461 = vmatpush1.bf16.msra.mxu0 0
  %5462 = vmatprep.subr.bf16.mxu0 0
  %5463 = vmatpush1.bf16.msra.mxu0 0
  %5464 = vmatprep.subr.bf16.mxu0 0
  %5465 = vmatpush1.bf16.msra.mxu0 0
  %5466 = vmatprep.subr.bf16.mxu0 0
  %5467 = vmatpush1.bf16.msra.mxu0 0
  %5468 = vmatprep.subr.bf16.mxu0 0
  %5469 = vmatpush1.bf16.msra.mxu0 0
  %5470 = vmatprep.subr.bf16.mxu0 0
  %5471 = vmatpush1.bf16.msra.mxu0 0
  %5472 = vmatprep.subr.bf16.mxu0 0
  %5473 = vmatpush1.bf16.msra.mxu0 0
  %5474 = vmatprep.subr.bf16.mxu0 0
  %5475 = vmatpush1.bf16.msra.mxu0 0
  %5476 = vmatprep.subr.bf16.mxu0 0
  %5477 = vmatpush1.bf16.msra.mxu0 0
  %5478 = vmatprep.subr.bf16.mxu0 0
  %5479 = vmatpush1.bf16.msra.mxu0 0
  %5480 = vmatprep.subr.bf16.mxu0 0
  %5481 = vmatpush1.bf16.msra.mxu0 0
  %5482 = vmatprep.subr.bf16.mxu0 0
  %5483 = vmatpush1.bf16.msra.mxu0 0
  %5484 = vmatprep.mubr.bf16.mxu0 0
  %5485 = vmatmul.mubr.bf16.gmra.mrb[0].mxu0 %v5429
  %v5486 = vpop.f32.mrb[0].mxu0
  %v5487 = vadd.f32 %v1206, %v5486
  %v5488 = vpop.f32.mrb[0].mxu0
  %v5489 = vpop.f32.mrb[0].mxu0
  %v5490 = vadd.f32 %v1207, %v5489
  %v5491 = vpop.f32.mrb[0].mxu0
  %5492 = vmatprep.mubr.bf16.mxu0 0
  %5493 = vmatmul.mubr.bf16.gmra.mrb[0].mxu0 %v5432
  %v5494 = vpop.f32.mrb[0].mxu0
  %v5495 = vadd.f32 %v1208, %v5494
  %v5496 = vpop.f32.mrb[0].mxu0
  %v5497 = vpop.f32.mrb[0].mxu0
  %v5498 = vadd.f32 %v1209, %v5497
  %v5499 = vpop.f32.mrb[0].mxu0
  %5500 = vmatprep.mubr.bf16.mxu0 0
  %5501 = vmatmul.mubr.bf16.gmra.mrb[0].mxu0 %v5435
  %v5502 = vpop.f32.mrb[0].mxu0
  %v5503 = vadd.f32 %v1210, %v5502
  %v5504 = vpop.f32.mrb[0].mxu0
  %v5505 = vpop.f32.mrb[0].mxu0
  %v5506 = vadd.f32 %v1211, %v5505
  %v5507 = vpop.f32.mrb[0].mxu0
  %5508 = vmatprep.mubr.bf16.mxu0 0
  %5509 = vmatmul.mubr.bf16.gmra.mrb[0].mxu0 %v5438
  %v5510 = vpop.f32.mrb[0].mxu0
  %v5511 = vadd.f32 %v1212, %v5510
  %v5512 = vpop.f32.mrb[0].mxu0
  %v5513 = vpop.f32.mrb[0].mxu0
  %v5514 = vadd.f32 %v1213, %v5513
  %v5515 = vpop.f32.mrb[0].mxu0
  %5516 = vmatprep.mubr.bf16.mxu0 0
  %5517 = vmatmul.mubr.bf16.gmra.mrb[0].mxu0 %v5441
  %v5518 = vpop.f32.mrb[0].mxu0
  %v5519 = vadd.f32 %v1214, %v5518
  %v5520 = vpop.f32.mrb[0].mxu0
  %v5521 = vpop.f32.mrb[0].mxu0
  %v5522 = vadd.f32 %v1215, %v5521
  %v5523 = vpop.f32.mrb[0].mxu0
  %5524 = vmatprep.mubr.bf16.mxu0 0
  %5525 = vmatmul.mubr.bf16.gmra.mrb[0].mxu0 %v5444
  %v5526 = vpop.f32.mrb[0].mxu0
  %v5527 = vadd.f32 %v1216, %v5526
  %v5528 = vpop.f32.mrb[0].mxu0
  %v5529 = vpop.f32.mrb[0].mxu0
  %v5530 = vadd.f32 %v1217, %v5529
  %v5531 = vpop.f32.mrb[0].mxu0
  %5532 = vmatprep.mubr.bf16.mxu0 0
  %5533 = vmatmul.mubr.bf16.gmra.mrb[0].mxu0 %v5447
  %v5534 = vpop.f32.mrb[0].mxu0
  %v5535 = vadd.f32 %v1218, %v5534
  %v5536 = vpop.f32.mrb[0].mxu0
  %v5537 = vpop.f32.mrb[0].mxu0
  %v5538 = vadd.f32 %v1219, %v5537
  %v5539 = vpop.f32.mrb[0].mxu0
  %5540 = vmatprep.mubr.bf16.mxu0 0
  %5541 = vmatmul.mubr.bf16.gmra.mrb[0].mxu0 %v5450
  %v5542 = vpop.f32.mrb[0].mxu0
  %v5543 = vadd.f32 %v1220, %v5542
  %v5544 = vpop.f32.mrb[0].mxu0
  %v5545 = vpop.f32.mrb[0].mxu0
  %v5546 = vadd.f32 %v1221, %v5545
  %v5547 = vpop.f32.mrb[0].mxu0
  %5548 = vdwg.mxu0
  %5549 = vxpose.xlu0.c.b16.start [1/8] %v5265, 128
  %5550 = vxpose.xlu0.c.b16.cont [2/8] 0, 128
  %5551 = vxpose.xlu0.c.b16.cont [3/8] 0, 128
  %5552 = vxpose.xlu0.c.b16.cont [4/8] 0, 128
  %5553 = vxpose.xlu0.c.b16.cont [5/8] 0, 128
  %5554 = vxpose.xlu0.c.b16.cont [6/8] 0, 128
  %5555 = vxpose.xlu0.c.b16.cont [7/8] 0, 128
  %5556 = vxpose.xlu0.c.b16.end [8/8] 0, 128
  %v5557 = vpop.trf.xlu0
  %v5558 = vpop.trf.xlu0
  %v5559 = vpop.trf.xlu0
  %v5560 = vpop.trf.xlu0
  %v5561 = vpop.trf.xlu0
  %v5562 = vpop.trf.xlu0
  %v5563 = vpop.trf.xlu0
  %v5564 = vpop.trf.xlu0
  %v5566 = vsel %vm1258, %v5557, 0
  %v5569 = vsel %vm1258, %v5558, 0
  %v5572 = vsel %vm1258, %v5559, 0
  %v5575 = vsel %vm1258, %v5560, 0
  %v5578 = vsel %vm1258, %v5561, 0
  %v5581 = vsel %vm1258, %v5562, 0
  %v5584 = vsel %vm1258, %v5563, 0
  %v5587 = vsel %vm1258, %v5564, 0
  %5589 = vmatprep.subr.bf16.mxu0 0
  %5590 = vmatpush1.bf16.msra.mxu0 %v5269
  %5591 = vmatprep.subr.bf16.mxu0 0
  %5592 = vmatpush1.bf16.msra.mxu0 0
  %5593 = vmatprep.subr.bf16.mxu0 0
  %5594 = vmatpush1.bf16.msra.mxu0 0
  %5595 = vmatprep.subr.bf16.mxu0 0
  %5596 = vmatpush1.bf16.msra.mxu0 0
  %5597 = vmatprep.subr.bf16.mxu0 0
  %5598 = vmatpush1.bf16.msra.mxu0 0
  %5599 = vmatprep.subr.bf16.mxu0 0
  %5600 = vmatpush1.bf16.msra.mxu0 0
  %5601 = vmatprep.subr.bf16.mxu0 0
  %5602 = vmatpush1.bf16.msra.mxu0 0
  %5603 = vmatprep.subr.bf16.mxu0 0
  %5604 = vmatpush1.bf16.msra.mxu0 0
  %5605 = vmatprep.subr.bf16.mxu0 0
  %5606 = vmatpush1.bf16.msra.mxu0 0
  %5607 = vmatprep.subr.bf16.mxu0 0
  %5608 = vmatpush1.bf16.msra.mxu0 0
  %5609 = vmatprep.subr.bf16.mxu0 0
  %5610 = vmatpush1.bf16.msra.mxu0 0
  %5611 = vmatprep.subr.bf16.mxu0 0
  %5612 = vmatpush1.bf16.msra.mxu0 0
  %5613 = vmatprep.subr.bf16.mxu0 0
  %5614 = vmatpush1.bf16.msra.mxu0 0
  %5615 = vmatprep.subr.bf16.mxu0 0
  %5616 = vmatpush1.bf16.msra.mxu0 0
  %5617 = vmatprep.subr.bf16.mxu0 0
  %5618 = vmatpush1.bf16.msra.mxu0 0
  %5619 = vmatprep.subr.bf16.mxu0 0
  %5620 = vmatpush1.bf16.msra.mxu0 0
  %5621 = vmatprep.mubr.bf16.mxu0 0
  %5622 = vmatmul.mubr.bf16.gmra.mrb[0].mxu0 %v5566
  %v5623 = vpop.f32.mrb[0].mxu0
  %v5624 = vadd.f32 %v1206, %v5623
  %v5625 = vpop.f32.mrb[0].mxu0
  %v5626 = vpop.f32.mrb[0].mxu0
  %v5627 = vadd.f32 %v1207, %v5626
  %v5628 = vpop.f32.mrb[0].mxu0
  %5629 = vmatprep.mubr.bf16.mxu0 0
  %5630 = vmatmul.mubr.bf16.gmra.mrb[0].mxu0 %v5569
  %v5631 = vpop.f32.mrb[0].mxu0
  %v5632 = vadd.f32 %v1208, %v5631
  %v5633 = vpop.f32.mrb[0].mxu0
  %v5634 = vpop.f32.mrb[0].mxu0
  %v5635 = vadd.f32 %v1209, %v5634
  %v5636 = vpop.f32.mrb[0].mxu0
  %5637 = vmatprep.mubr.bf16.mxu0 0
  %5638 = vmatmul.mubr.bf16.gmra.mrb[0].mxu0 %v5572
  %v5639 = vpop.f32.mrb[0].mxu0
  %v5640 = vadd.f32 %v1210, %v5639
  %v5641 = vpop.f32.mrb[0].mxu0
  %v5642 = vpop.f32.mrb[0].mxu0
  %v5643 = vadd.f32 %v1211, %v5642
  %v5644 = vpop.f32.mrb[0].mxu0
  %5645 = vmatprep.mubr.bf16.mxu0 0
  %5646 = vmatmul.mubr.bf16.gmra.mrb[0].mxu0 %v5575
  %v5647 = vpop.f32.mrb[0].mxu0
  %v5648 = vadd.f32 %v1212, %v5647
  %v5649 = vpop.f32.mrb[0].mxu0
  %v5650 = vpop.f32.mrb[0].mxu0
  %v5651 = vadd.f32 %v1213, %v5650
  %v5652 = vpop.f32.mrb[0].mxu0
  %5653 = vmatprep.mubr.bf16.mxu0 0
  %5654 = vmatmul.mubr.bf16.gmra.mrb[0].mxu0 %v5578
  %v5655 = vpop.f32.mrb[0].mxu0
  %v5656 = vadd.f32 %v1214, %v5655
  %v5657 = vpop.f32.mrb[0].mxu0
  %v5658 = vpop.f32.mrb[0].mxu0
  %v5659 = vadd.f32 %v1215, %v5658
  %v5660 = vpop.f32.mrb[0].mxu0
  %5661 = vmatprep.mubr.bf16.mxu0 0
  %5662 = vmatmul.mubr.bf16.gmra.mrb[0].mxu0 %v5581
  %v5663 = vpop.f32.mrb[0].mxu0
  %v5664 = vadd.f32 %v1216, %v5663
  %v5665 = vpop.f32.mrb[0].mxu0
  %v5666 = vpop.f32.mrb[0].mxu0
  %v5667 = vadd.f32 %v1217, %v5666
  %v5668 = vpop.f32.mrb[0].mxu0
  %5669 = vmatprep.mubr.bf16.mxu0 0
  %5670 = vmatmul.mubr.bf16.gmra.mrb[0].mxu0 %v5584
  %v5671 = vpop.f32.mrb[0].mxu0
  %v5672 = vadd.f32 %v1218, %v5671
  %v5673 = vpop.f32.mrb[0].mxu0
  %v5674 = vpop.f32.mrb[0].mxu0
  %v5675 = vadd.f32 %v1219, %v5674
  %v5676 = vpop.f32.mrb[0].mxu0
  %5677 = vmatprep.mubr.bf16.mxu0 0
  %5678 = vmatmul.mubr.bf16.gmra.mrb[0].mxu0 %v5587
  %v5679 = vpop.f32.mrb[0].mxu0
  %v5680 = vadd.f32 %v1220, %v5679
  %v5681 = vpop.f32.mrb[0].mxu0
  %v5682 = vpop.f32.mrb[0].mxu0
  %v5683 = vadd.f32 %v1221, %v5682
  %v5684 = vpop.f32.mrb[0].mxu0
  %5685 = vdwg.mxu0
  %5686 = vxpose.xlu0.c.b16.start [1/8] %v5266, 128
  %5687 = vxpose.xlu0.c.b16.cont [2/8] 0, 128
  %5688 = vxpose.xlu0.c.b16.cont [3/8] 0, 128
  %5689 = vxpose.xlu0.c.b16.cont [4/8] 0, 128
  %5690 = vxpose.xlu0.c.b16.cont [5/8] 0, 128
  %5691 = vxpose.xlu0.c.b16.cont [6/8] 0, 128
  %5692 = vxpose.xlu0.c.b16.cont [7/8] 0, 128
  %5693 = vxpose.xlu0.c.b16.end [8/8] 0, 128
  %v5694 = vpop.trf.xlu0
  %v5695 = vpop.trf.xlu0
  %v5696 = vpop.trf.xlu0
  %v5697 = vpop.trf.xlu0
  %v5698 = vpop.trf.xlu0
  %v5699 = vpop.trf.xlu0
  %v5700 = vpop.trf.xlu0
  %v5701 = vpop.trf.xlu0
  %v5703 = vsel %vm1258, %v5694, 0
  %v5706 = vsel %vm1258, %v5695, 0
  %v5709 = vsel %vm1258, %v5696, 0
  %v5712 = vsel %vm1258, %v5697, 0
  %v5715 = vsel %vm1258, %v5698, 0
  %v5718 = vsel %vm1258, %v5699, 0
  %v5721 = vsel %vm1258, %v5700, 0
  %v5724 = vsel %vm1258, %v5701, 0
  %5726 = vmatprep.subr.bf16.mxu0 0
  %5727 = vmatpush1.bf16.msra.mxu0 %v5270
  %5728 = vmatprep.subr.bf16.mxu0 0
  %5729 = vmatpush1.bf16.msra.mxu0 0
  %5730 = vmatprep.subr.bf16.mxu0 0
  %5731 = vmatpush1.bf16.msra.mxu0 0
  %5732 = vmatprep.subr.bf16.mxu0 0
  %5733 = vmatpush1.bf16.msra.mxu0 0
  %5734 = vmatprep.subr.bf16.mxu0 0
  %5735 = vmatpush1.bf16.msra.mxu0 0
  %5736 = vmatprep.subr.bf16.mxu0 0
  %5737 = vmatpush1.bf16.msra.mxu0 0
  %5738 = vmatprep.subr.bf16.mxu0 0
  %5739 = vmatpush1.bf16.msra.mxu0 0
  %5740 = vmatprep.subr.bf16.mxu0 0
  %5741 = vmatpush1.bf16.msra.mxu0 0
  %5742 = vmatprep.subr.bf16.mxu0 0
  %5743 = vmatpush1.bf16.msra.mxu0 0
  %5744 = vmatprep.subr.bf16.mxu0 0
  %5745 = vmatpush1.bf16.msra.mxu0 0
  %5746 = vmatprep.subr.bf16.mxu0 0
  %5747 = vmatpush1.bf16.msra.mxu0 0
  %5748 = vmatprep.subr.bf16.mxu0 0
  %5749 = vmatpush1.bf16.msra.mxu0 0
  %5750 = vmatprep.subr.bf16.mxu0 0
  %5751 = vmatpush1.bf16.msra.mxu0 0
  %5752 = vmatprep.subr.bf16.mxu0 0
  %5753 = vmatpush1.bf16.msra.mxu0 0
  %5754 = vmatprep.subr.bf16.mxu0 0
  %5755 = vmatpush1.bf16.msra.mxu0 0
  %5756 = vmatprep.subr.bf16.mxu0 0
  %5757 = vmatpush1.bf16.msra.mxu0 0
  %5758 = vmatprep.mubr.bf16.mxu0 0
  %5759 = vmatmul.mubr.bf16.gmra.mrb[0].mxu0 %v5703
  %v5760 = vpop.f32.mrb[0].mxu0
  %v5761 = vadd.f32 %v1206, %v5760
  %v5762 = vpop.f32.mrb[0].mxu0
  %v5763 = vpop.f32.mrb[0].mxu0
  %v5764 = vadd.f32 %v1207, %v5763
  %v5765 = vpop.f32.mrb[0].mxu0
  %5766 = vmatprep.mubr.bf16.mxu0 0
  %5767 = vmatmul.mubr.bf16.gmra.mrb[0].mxu0 %v5706
  %v5768 = vpop.f32.mrb[0].mxu0
  %v5769 = vadd.f32 %v1208, %v5768
  %v5770 = vpop.f32.mrb[0].mxu0
  %v5771 = vpop.f32.mrb[0].mxu0
  %v5772 = vadd.f32 %v1209, %v5771
  %v5773 = vpop.f32.mrb[0].mxu0
  %5774 = vmatprep.mubr.bf16.mxu0 0
  %5775 = vmatmul.mubr.bf16.gmra.mrb[0].mxu0 %v5709
  %v5776 = vpop.f32.mrb[0].mxu0
  %v5777 = vadd.f32 %v1210, %v5776
  %v5778 = vpop.f32.mrb[0].mxu0
  %v5779 = vpop.f32.mrb[0].mxu0
  %v5780 = vadd.f32 %v1211, %v5779
  %v5781 = vpop.f32.mrb[0].mxu0
  %5782 = vmatprep.mubr.bf16.mxu0 0
  %5783 = vmatmul.mubr.bf16.gmra.mrb[0].mxu0 %v5712
  %v5784 = vpop.f32.mrb[0].mxu0
  %v5785 = vadd.f32 %v1212, %v5784
  %v5786 = vpop.f32.mrb[0].mxu0
  %v5787 = vpop.f32.mrb[0].mxu0
  %v5788 = vadd.f32 %v1213, %v5787
  %v5789 = vpop.f32.mrb[0].mxu0
  %5790 = vmatprep.mubr.bf16.mxu0 0
  %5791 = vmatmul.mubr.bf16.gmra.mrb[0].mxu0 %v5715
  %v5792 = vpop.f32.mrb[0].mxu0
  %v5793 = vadd.f32 %v1214, %v5792
  %v5794 = vpop.f32.mrb[0].mxu0
  %v5795 = vpop.f32.mrb[0].mxu0
  %v5796 = vadd.f32 %v1215, %v5795
  %v5797 = vpop.f32.mrb[0].mxu0
  %5798 = vmatprep.mubr.bf16.mxu0 0
  %5799 = vmatmul.mubr.bf16.gmra.mrb[0].mxu0 %v5718
  %v5800 = vpop.f32.mrb[0].mxu0
  %v5801 = vadd.f32 %v1216, %v5800
  %v5802 = vpop.f32.mrb[0].mxu0
  %v5803 = vpop.f32.mrb[0].mxu0
  %v5804 = vadd.f32 %v1217, %v5803
  %v5805 = vpop.f32.mrb[0].mxu0
  %5806 = vmatprep.mubr.bf16.mxu0 0
  %5807 = vmatmul.mubr.bf16.gmra.mrb[0].mxu0 %v5721
  %v5808 = vpop.f32.mrb[0].mxu0
  %v5809 = vadd.f32 %v1218, %v5808
  %v5810 = vpop.f32.mrb[0].mxu0
  %v5811 = vpop.f32.mrb[0].mxu0
  %v5812 = vadd.f32 %v1219, %v5811
  %v5813 = vpop.f32.mrb[0].mxu0
  %5814 = vmatprep.mubr.bf16.mxu0 0
  %5815 = vmatmul.mubr.bf16.gmra.mrb[0].mxu0 %v5724
  %v5816 = vpop.f32.mrb[0].mxu0
  %v5817 = vadd.f32 %v1220, %v5816
  %v5818 = vpop.f32.mrb[0].mxu0
  %v5819 = vpop.f32.mrb[0].mxu0
  %v5820 = vadd.f32 %v1221, %v5819
  %v5821 = vpop.f32.mrb[0].mxu0
  %5822 = vdwg.mxu0
  %5823 = vmax.xlane.f32.xlu0 %v5350
  %v5824 = vpop.xlane.xlu0 %5823
  %5825 = vmax.xlane.f32.xlu0 %v5353
  %v5826 = vpop.xlane.xlu0 %5825
  %5827 = vmax.xlane.f32.xlu0 %v5358
  %v5828 = vpop.xlane.xlu0 %5827
  %5829 = vmax.xlane.f32.xlu0 %v5361
  %v5830 = vpop.xlane.xlu0 %5829
  %5831 = vmax.xlane.f32.xlu0 %v5366
  %v5832 = vpop.xlane.xlu0 %5831
  %5833 = vmax.xlane.f32.xlu0 %v5369
  %v5834 = vpop.xlane.xlu0 %5833
  %5835 = vmax.xlane.f32.xlu0 %v5374
  %v5836 = vpop.xlane.xlu0 %5835
  %5837 = vmax.xlane.f32.xlu0 %v5377
  %v5838 = vpop.xlane.xlu0 %5837
  %5839 = vmax.xlane.f32.xlu0 %v5382
  %v5840 = vpop.xlane.xlu0 %5839
  %5841 = vmax.xlane.f32.xlu0 %v5385
  %v5842 = vpop.xlane.xlu0 %5841
  %5843 = vmax.xlane.f32.xlu0 %v5390
  %v5844 = vpop.xlane.xlu0 %5843
  %5845 = vmax.xlane.f32.xlu0 %v5393
  %v5846 = vpop.xlane.xlu0 %5845
  %5847 = vmax.xlane.f32.xlu0 %v5398
  %v5848 = vpop.xlane.xlu0 %5847
  %5849 = vmax.xlane.f32.xlu0 %v5401
  %v5850 = vpop.xlane.xlu0 %5849
  %5851 = vmax.xlane.f32.xlu0 %v5406
  %v5852 = vpop.xlane.xlu0 %5851
  %5853 = vmax.xlane.f32.xlu0 %v5409
  %v5854 = vpop.xlane.xlu0 %5853
  %5855 = vmax.xlane.f32.xlu0 %v5487
  %v5856 = vpop.xlane.xlu0 %5855
  %5857 = vmax.xlane.f32.xlu0 %v5490
  %v5858 = vpop.xlane.xlu0 %5857
  %5859 = vmax.xlane.f32.xlu0 %v5495
  %v5860 = vpop.xlane.xlu0 %5859
  %5861 = vmax.xlane.f32.xlu0 %v5498
  %v5862 = vpop.xlane.xlu0 %5861
  %5863 = vmax.xlane.f32.xlu0 %v5503
  %v5864 = vpop.xlane.xlu0 %5863
  %5865 = vmax.xlane.f32.xlu0 %v5506
  %v5866 = vpop.xlane.xlu0 %5865
  %5867 = vmax.xlane.f32.xlu0 %v5511
  %v5868 = vpop.xlane.xlu0 %5867
  %5869 = vmax.xlane.f32.xlu0 %v5514
  %v5870 = vpop.xlane.xlu0 %5869
  %5871 = vmax.xlane.f32.xlu0 %v5519
  %v5872 = vpop.xlane.xlu0 %5871
  %5873 = vmax.xlane.f32.xlu0 %v5522
  %v5874 = vpop.xlane.xlu0 %5873
  %5875 = vmax.xlane.f32.xlu0 %v5527
  %v5876 = vpop.xlane.xlu0 %5875
  %5877 = vmax.xlane.f32.xlu0 %v5530
  %v5878 = vpop.xlane.xlu0 %5877
  %5879 = vmax.xlane.f32.xlu0 %v5535
  %v5880 = vpop.xlane.xlu0 %5879
  %5881 = vmax.xlane.f32.xlu0 %v5538
  %v5882 = vpop.xlane.xlu0 %5881
  %5883 = vmax.xlane.f32.xlu0 %v5543
  %v5884 = vpop.xlane.xlu0 %5883
  %5885 = vmax.xlane.f32.xlu0 %v5546
  %v5886 = vpop.xlane.xlu0 %5885
  %5887 = vmax.xlane.f32.xlu0 %v5624
  %v5888 = vpop.xlane.xlu0 %5887
  %5889 = vmax.xlane.f32.xlu0 %v5627
  %v5890 = vpop.xlane.xlu0 %5889
  %5891 = vmax.xlane.f32.xlu0 %v5632
  %v5892 = vpop.xlane.xlu0 %5891
  %5893 = vmax.xlane.f32.xlu0 %v5635
  %v5894 = vpop.xlane.xlu0 %5893
  %5895 = vmax.xlane.f32.xlu0 %v5640
  %v5896 = vpop.xlane.xlu0 %5895
  %5897 = vmax.xlane.f32.xlu0 %v5643
  %v5898 = vpop.xlane.xlu0 %5897
  %5899 = vmax.xlane.f32.xlu0 %v5648
  %v5900 = vpop.xlane.xlu0 %5899
  %5901 = vmax.xlane.f32.xlu0 %v5651
  %v5902 = vpop.xlane.xlu0 %5901
  %5903 = vmax.xlane.f32.xlu0 %v5656
  %v5904 = vpop.xlane.xlu0 %5903
  %5905 = vmax.xlane.f32.xlu0 %v5659
  %v5906 = vpop.xlane.xlu0 %5905
  %5907 = vmax.xlane.f32.xlu0 %v5664
  %v5908 = vpop.xlane.xlu0 %5907
  %5909 = vmax.xlane.f32.xlu0 %v5667
  %v5910 = vpop.xlane.xlu0 %5909
  %5911 = vmax.xlane.f32.xlu0 %v5672
  %v5912 = vpop.xlane.xlu0 %5911
  %5913 = vmax.xlane.f32.xlu0 %v5675
  %v5914 = vpop.xlane.xlu0 %5913
  %5915 = vmax.xlane.f32.xlu0 %v5680
  %v5916 = vpop.xlane.xlu0 %5915
  %5917 = vmax.xlane.f32.xlu0 %v5683
  %v5918 = vpop.xlane.xlu0 %5917
  %5919 = vmax.xlane.f32.xlu0 %v5761
  %v5920 = vpop.xlane.xlu0 %5919
  %5921 = vmax.xlane.f32.xlu0 %v5764
  %v5922 = vpop.xlane.xlu0 %5921
  %5923 = vmax.xlane.f32.xlu0 %v5769
  %v5924 = vpop.xlane.xlu0 %5923
  %5925 = vmax.xlane.f32.xlu0 %v5772
  %v5926 = vpop.xlane.xlu0 %5925
  %5927 = vmax.xlane.f32.xlu0 %v5777
  %v5928 = vpop.xlane.xlu0 %5927
  %5929 = vmax.xlane.f32.xlu0 %v5780
  %v5930 = vpop.xlane.xlu0 %5929
  %5931 = vmax.xlane.f32.xlu0 %v5785
  %v5932 = vpop.xlane.xlu0 %5931
  %5933 = vmax.xlane.f32.xlu0 %v5788
  %v5934 = vpop.xlane.xlu0 %5933
  %5935 = vmax.xlane.f32.xlu0 %v5793
  %v5936 = vpop.xlane.xlu0 %5935
  %5937 = vmax.xlane.f32.xlu0 %v5796
  %v5938 = vpop.xlane.xlu0 %5937
  %5939 = vmax.xlane.f32.xlu0 %v5801
  %v5940 = vpop.xlane.xlu0 %5939
  %5941 = vmax.xlane.f32.xlu0 %v5804
  %v5942 = vpop.xlane.xlu0 %5941
  %5943 = vmax.xlane.f32.xlu0 %v5809
  %v5944 = vpop.xlane.xlu0 %5943
  %5945 = vmax.xlane.f32.xlu0 %v5812
  %v5946 = vpop.xlane.xlu0 %5945
  %5947 = vmax.xlane.f32.xlu0 %v5817
  %v5948 = vpop.xlane.xlu0 %5947
  %5949 = vmax.xlane.f32.xlu0 %v5820
  %v5950 = vpop.xlane.xlu0 %5949
  %v5951 = vsub.f32 %v5350, %v5824
  %v5952 = vsub.f32 %v5353, %v5826
  %v5953 = vsub.f32 %v5358, %v5828
  %v5954 = vsub.f32 %v5361, %v5830
  %v5955 = vsub.f32 %v5366, %v5832
  %v5956 = vsub.f32 %v5369, %v5834
  %v5957 = vsub.f32 %v5374, %v5836
  %v5958 = vsub.f32 %v5377, %v5838
  %v5959 = vsub.f32 %v5382, %v5840
  %v5960 = vsub.f32 %v5385, %v5842
  %v5961 = vsub.f32 %v5390, %v5844
  %v5962 = vsub.f32 %v5393, %v5846
  %v5963 = vsub.f32 %v5398, %v5848
  %v5964 = vsub.f32 %v5401, %v5850
  %v5965 = vsub.f32 %v5406, %v5852
  %v5966 = vsub.f32 %v5409, %v5854
  %v5967 = vsub.f32 %v5487, %v5856
  %v5968 = vsub.f32 %v5490, %v5858
  %v5969 = vsub.f32 %v5495, %v5860
  %v5970 = vsub.f32 %v5498, %v5862
  %v5971 = vsub.f32 %v5503, %v5864
  %v5972 = vsub.f32 %v5506, %v5866
  %v5973 = vsub.f32 %v5511, %v5868
  %v5974 = vsub.f32 %v5514, %v5870
  %v5975 = vsub.f32 %v5519, %v5872
  %v5976 = vsub.f32 %v5522, %v5874
  %v5977 = vsub.f32 %v5527, %v5876
  %v5978 = vsub.f32 %v5530, %v5878
  %v5979 = vsub.f32 %v5535, %v5880
  %v5980 = vsub.f32 %v5538, %v5882
  %v5981 = vsub.f32 %v5543, %v5884
  %v5982 = vsub.f32 %v5546, %v5886
  %v5983 = vsub.f32 %v5624, %v5888
  %v5984 = vsub.f32 %v5627, %v5890
  %v5985 = vsub.f32 %v5632, %v5892
  %v5986 = vsub.f32 %v5635, %v5894
  %v5987 = vsub.f32 %v5640, %v5896
  %v5988 = vsub.f32 %v5643, %v5898
  %v5989 = vsub.f32 %v5648, %v5900
  %v5990 = vsub.f32 %v5651, %v5902
  %v5991 = vsub.f32 %v5656, %v5904
  %v5992 = vsub.f32 %v5659, %v5906
  %v5993 = vsub.f32 %v5664, %v5908
  %v5994 = vsub.f32 %v5667, %v5910
  %v5995 = vsub.f32 %v5672, %v5912
  %v5996 = vsub.f32 %v5675, %v5914
  %v5997 = vsub.f32 %v5680, %v5916
  %v5998 = vsub.f32 %v5683, %v5918
  %v5999 = vsub.f32 %v5761, %v5920
  %v6000 = vsub.f32 %v5764, %v5922
  %v6001 = vsub.f32 %v5769, %v5924
  %v6002 = vsub.f32 %v5772, %v5926
  %v6003 = vsub.f32 %v5777, %v5928
  %v6004 = vsub.f32 %v5780, %v5930
  %v6005 = vsub.f32 %v5785, %v5932
  %v6006 = vsub.f32 %v5788, %v5934
  %v6007 = vsub.f32 %v5793, %v5936
  %v6008 = vsub.f32 %v5796, %v5938
  %v6009 = vsub.f32 %v5801, %v5940
  %v6010 = vsub.f32 %v5804, %v5942
  %v6011 = vsub.f32 %v5809, %v5944
  %v6012 = vsub.f32 %v5812, %v5946
  %v6013 = vsub.f32 %v5817, %v5948
  %v6014 = vsub.f32 %v5820, %v5950
  %v6015 = vmul.f32 %v5951, 1.442695
  %v6016 = vpow.pop %v6015
  %v6017 = vmul.f32 %v5952, 1.442695
  %v6018 = vpow.pop %v6017
  %v6019 = vmul.f32 %v5953, 1.442695
  %v6020 = vpow.pop %v6019
  %v6021 = vmul.f32 %v5954, 1.442695
  %v6022 = vpow.pop %v6021
  %v6023 = vmul.f32 %v5955, 1.442695
  %v6024 = vpow.pop %v6023
  %v6025 = vmul.f32 %v5956, 1.442695
  %v6026 = vpow.pop %v6025
  %v6027 = vmul.f32 %v5957, 1.442695
  %v6028 = vpow.pop %v6027
  %v6029 = vmul.f32 %v5958, 1.442695
  %v6030 = vpow.pop %v6029
  %v6031 = vmul.f32 %v5959, 1.442695
  %v6032 = vpow.pop %v6031
  %v6033 = vmul.f32 %v5960, 1.442695
  %v6034 = vpow.pop %v6033
  %v6035 = vmul.f32 %v5961, 1.442695
  %v6036 = vpow.pop %v6035
  %v6037 = vmul.f32 %v5962, 1.442695
  %v6038 = vpow.pop %v6037
  %v6039 = vmul.f32 %v5963, 1.442695
  %v6040 = vpow.pop %v6039
  %v6041 = vmul.f32 %v5964, 1.442695
  %v6042 = vpow.pop %v6041
  %v6043 = vmul.f32 %v5965, 1.442695
  %v6044 = vpow.pop %v6043
  %v6045 = vmul.f32 %v5966, 1.442695
  %v6046 = vpow.pop %v6045
  %v6047 = vmul.f32 %v5967, 1.442695
  %v6048 = vpow.pop %v6047
  %v6049 = vmul.f32 %v5968, 1.442695
  %v6050 = vpow.pop %v6049
  %v6051 = vmul.f32 %v5969, 1.442695
  %v6052 = vpow.pop %v6051
  %v6053 = vmul.f32 %v5970, 1.442695
  %v6054 = vpow.pop %v6053
  %v6055 = vmul.f32 %v5971, 1.442695
  %v6056 = vpow.pop %v6055
  %v6057 = vmul.f32 %v5972, 1.442695
  %v6058 = vpow.pop %v6057
  %v6059 = vmul.f32 %v5973, 1.442695
  %v6060 = vpow.pop %v6059
  %v6061 = vmul.f32 %v5974, 1.442695
  %v6062 = vpow.pop %v6061
  %v6063 = vmul.f32 %v5975, 1.442695
  %v6064 = vpow.pop %v6063
  %v6065 = vmul.f32 %v5976, 1.442695
  %v6066 = vpow.pop %v6065
  %v6067 = vmul.f32 %v5977, 1.442695
  %v6068 = vpow.pop %v6067
  %v6069 = vmul.f32 %v5978, 1.442695
  %v6070 = vpow.pop %v6069
  %v6071 = vmul.f32 %v5979, 1.442695
  %v6072 = vpow.pop %v6071
  %v6073 = vmul.f32 %v5980, 1.442695
  %v6074 = vpow.pop %v6073
  %v6075 = vmul.f32 %v5981, 1.442695
  %v6076 = vpow.pop %v6075
  %v6077 = vmul.f32 %v5982, 1.442695
  %v6078 = vpow.pop %v6077
  %v6079 = vmul.f32 %v5983, 1.442695
  %v6080 = vpow.pop %v6079
  %v6081 = vmul.f32 %v5984, 1.442695
  %v6082 = vpow.pop %v6081
  %v6083 = vmul.f32 %v5985, 1.442695
  %v6084 = vpow.pop %v6083
  %v6085 = vmul.f32 %v5986, 1.442695
  %v6086 = vpow.pop %v6085
  %v6087 = vmul.f32 %v5987, 1.442695
  %v6088 = vpow.pop %v6087
  %v6089 = vmul.f32 %v5988, 1.442695
  %v6090 = vpow.pop %v6089
  %v6091 = vmul.f32 %v5989, 1.442695
  %v6092 = vpow.pop %v6091
  %v6093 = vmul.f32 %v5990, 1.442695
  %v6094 = vpow.pop %v6093
  %v6095 = vmul.f32 %v5991, 1.442695
  %v6096 = vpow.pop %v6095
  %v6097 = vmul.f32 %v5992, 1.442695
  %v6098 = vpow.pop %v6097
  %v6099 = vmul.f32 %v5993, 1.442695
  %v6100 = vpow.pop %v6099
  %v6101 = vmul.f32 %v5994, 1.442695
  %v6102 = vpow.pop %v6101
  %v6103 = vmul.f32 %v5995, 1.442695
  %v6104 = vpow.pop %v6103
  %v6105 = vmul.f32 %v5996, 1.442695
  %v6106 = vpow.pop %v6105
  %v6107 = vmul.f32 %v5997, 1.442695
  %v6108 = vpow.pop %v6107
  %v6109 = vmul.f32 %v5998, 1.442695
  %v6110 = vpow.pop %v6109
  %v6111 = vmul.f32 %v5999, 1.442695
  %v6112 = vpow.pop %v6111
  %v6113 = vmul.f32 %v6000, 1.442695
  %v6114 = vpow.pop %v6113
  %v6115 = vmul.f32 %v6001, 1.442695
  %v6116 = vpow.pop %v6115
  %v6117 = vmul.f32 %v6002, 1.442695
  %v6118 = vpow.pop %v6117
  %v6119 = vmul.f32 %v6003, 1.442695
  %v6120 = vpow.pop %v6119
  %v6121 = vmul.f32 %v6004, 1.442695
  %v6122 = vpow.pop %v6121
  %v6123 = vmul.f32 %v6005, 1.442695
  %v6124 = vpow.pop %v6123
  %v6125 = vmul.f32 %v6006, 1.442695
  %v6126 = vpow.pop %v6125
  %v6127 = vmul.f32 %v6007, 1.442695
  %v6128 = vpow.pop %v6127
  %v6129 = vmul.f32 %v6008, 1.442695
  %v6130 = vpow.pop %v6129
  %v6131 = vmul.f32 %v6009, 1.442695
  %v6132 = vpow.pop %v6131
  %v6133 = vmul.f32 %v6010, 1.442695
  %v6134 = vpow.pop %v6133
  %v6135 = vmul.f32 %v6011, 1.442695
  %v6136 = vpow.pop %v6135
  %v6137 = vmul.f32 %v6012, 1.442695
  %v6138 = vpow.pop %v6137
  %v6139 = vmul.f32 %v6013, 1.442695
  %v6140 = vpow.pop %v6139
  %v6141 = vmul.f32 %v6014, 1.442695
  %v6142 = vpow.pop %v6141
  %6143 = vadd.xlane.f32.xlu0 %v6016
  %v6144 = vpop.xlane.xlu0 %6143
  %6145 = vadd.xlane.f32.xlu0 %v6018
  %v6146 = vpop.xlane.xlu0 %6145
  %6147 = vadd.xlane.f32.xlu0 %v6020
  %v6148 = vpop.xlane.xlu0 %6147
  %6149 = vadd.xlane.f32.xlu0 %v6022
  %v6150 = vpop.xlane.xlu0 %6149
  %6151 = vadd.xlane.f32.xlu0 %v6024
  %v6152 = vpop.xlane.xlu0 %6151
  %6153 = vadd.xlane.f32.xlu0 %v6026
  %v6154 = vpop.xlane.xlu0 %6153
  %6155 = vadd.xlane.f32.xlu0 %v6028
  %v6156 = vpop.xlane.xlu0 %6155
  %6157 = vadd.xlane.f32.xlu0 %v6030
  %v6158 = vpop.xlane.xlu0 %6157
  %6159 = vadd.xlane.f32.xlu0 %v6032
  %v6160 = vpop.xlane.xlu0 %6159
  %6161 = vadd.xlane.f32.xlu0 %v6034
  %v6162 = vpop.xlane.xlu0 %6161
  %6163 = vadd.xlane.f32.xlu0 %v6036
  %v6164 = vpop.xlane.xlu0 %6163
  %6165 = vadd.xlane.f32.xlu0 %v6038
  %v6166 = vpop.xlane.xlu0 %6165
  %6167 = vadd.xlane.f32.xlu0 %v6040
  %v6168 = vpop.xlane.xlu0 %6167
  %6169 = vadd.xlane.f32.xlu0 %v6042
  %v6170 = vpop.xlane.xlu0 %6169
  %6171 = vadd.xlane.f32.xlu0 %v6044
  %v6172 = vpop.xlane.xlu0 %6171
  %6173 = vadd.xlane.f32.xlu0 %v6046
  %v6174 = vpop.xlane.xlu0 %6173
  %6175 = vadd.xlane.f32.xlu0 %v6048
  %v6176 = vpop.xlane.xlu0 %6175
  %6177 = vadd.xlane.f32.xlu0 %v6050
  %v6178 = vpop.xlane.xlu0 %6177
  %6179 = vadd.xlane.f32.xlu0 %v6052
  %v6180 = vpop.xlane.xlu0 %6179
  %6181 = vadd.xlane.f32.xlu0 %v6054
  %v6182 = vpop.xlane.xlu0 %6181
  %6183 = vadd.xlane.f32.xlu0 %v6056
  %v6184 = vpop.xlane.xlu0 %6183
  %6185 = vadd.xlane.f32.xlu0 %v6058
  %v6186 = vpop.xlane.xlu0 %6185
  %6187 = vadd.xlane.f32.xlu0 %v6060
  %v6188 = vpop.xlane.xlu0 %6187
  %6189 = vadd.xlane.f32.xlu0 %v6062
  %v6190 = vpop.xlane.xlu0 %6189
  %6191 = vadd.xlane.f32.xlu0 %v6064
  %v6192 = vpop.xlane.xlu0 %6191
  %6193 = vadd.xlane.f32.xlu0 %v6066
  %v6194 = vpop.xlane.xlu0 %6193
  %6195 = vadd.xlane.f32.xlu0 %v6068
  %v6196 = vpop.xlane.xlu0 %6195
  %6197 = vadd.xlane.f32.xlu0 %v6070
  %v6198 = vpop.xlane.xlu0 %6197
  %6199 = vadd.xlane.f32.xlu0 %v6072
  %v6200 = vpop.xlane.xlu0 %6199
  %6201 = vadd.xlane.f32.xlu0 %v6074
  %v6202 = vpop.xlane.xlu0 %6201
  %6203 = vadd.xlane.f32.xlu0 %v6076
  %v6204 = vpop.xlane.xlu0 %6203
  %6205 = vadd.xlane.f32.xlu0 %v6078
  %v6206 = vpop.xlane.xlu0 %6205
  %6207 = vadd.xlane.f32.xlu0 %v6080
  %v6208 = vpop.xlane.xlu0 %6207
  %6209 = vadd.xlane.f32.xlu0 %v6082
  %v6210 = vpop.xlane.xlu0 %6209
  %6211 = vadd.xlane.f32.xlu0 %v6084
  %v6212 = vpop.xlane.xlu0 %6211
  %6213 = vadd.xlane.f32.xlu0 %v6086
  %v6214 = vpop.xlane.xlu0 %6213
  %6215 = vadd.xlane.f32.xlu0 %v6088
  %v6216 = vpop.xlane.xlu0 %6215
  %6217 = vadd.xlane.f32.xlu0 %v6090
  %v6218 = vpop.xlane.xlu0 %6217
  %6219 = vadd.xlane.f32.xlu0 %v6092
  %v6220 = vpop.xlane.xlu0 %6219
  %6221 = vadd.xlane.f32.xlu0 %v6094
  %v6222 = vpop.xlane.xlu0 %6221
  %6223 = vadd.xlane.f32.xlu0 %v6096
  %v6224 = vpop.xlane.xlu0 %6223
  %6225 = vadd.xlane.f32.xlu0 %v6098
  %v6226 = vpop.xlane.xlu0 %6225
  %6227 = vadd.xlane.f32.xlu0 %v6100
  %v6228 = vpop.xlane.xlu0 %6227
  %6229 = vadd.xlane.f32.xlu0 %v6102
  %v6230 = vpop.xlane.xlu0 %6229
  %6231 = vadd.xlane.f32.xlu0 %v6104
  %v6232 = vpop.xlane.xlu0 %6231
  %6233 = vadd.xlane.f32.xlu0 %v6106
  %v6234 = vpop.xlane.xlu0 %6233
  %6235 = vadd.xlane.f32.xlu0 %v6108
  %v6236 = vpop.xlane.xlu0 %6235
  %6237 = vadd.xlane.f32.xlu0 %v6110
  %v6238 = vpop.xlane.xlu0 %6237
  %6239 = vadd.xlane.f32.xlu0 %v6112
  %v6240 = vpop.xlane.xlu0 %6239
  %6241 = vadd.xlane.f32.xlu0 %v6114
  %v6242 = vpop.xlane.xlu0 %6241
  %6243 = vadd.xlane.f32.xlu0 %v6116
  %v6244 = vpop.xlane.xlu0 %6243
  %6245 = vadd.xlane.f32.xlu0 %v6118
  %v6246 = vpop.xlane.xlu0 %6245
  %6247 = vadd.xlane.f32.xlu0 %v6120
  %v6248 = vpop.xlane.xlu0 %6247
  %6249 = vadd.xlane.f32.xlu0 %v6122
  %v6250 = vpop.xlane.xlu0 %6249
  %6251 = vadd.xlane.f32.xlu0 %v6124
  %v6252 = vpop.xlane.xlu0 %6251
  %6253 = vadd.xlane.f32.xlu0 %v6126
  %v6254 = vpop.xlane.xlu0 %6253
  %6255 = vadd.xlane.f32.xlu0 %v6128
  %v6256 = vpop.xlane.xlu0 %6255
  %6257 = vadd.xlane.f32.xlu0 %v6130
  %v6258 = vpop.xlane.xlu0 %6257
  %6259 = vadd.xlane.f32.xlu0 %v6132
  %v6260 = vpop.xlane.xlu0 %6259
  %6261 = vadd.xlane.f32.xlu0 %v6134
  %v6262 = vpop.xlane.xlu0 %6261
  %6263 = vadd.xlane.f32.xlu0 %v6136
  %v6264 = vpop.xlane.xlu0 %6263
  %6265 = vadd.xlane.f32.xlu0 %v6138
  %v6266 = vpop.xlane.xlu0 %6265
  %6267 = vadd.xlane.f32.xlu0 %v6140
  %v6268 = vpop.xlane.xlu0 %6267
  %6269 = vadd.xlane.f32.xlu0 %v6142
  %v6270 = vpop.xlane.xlu0 %6269
  %v6271 = vrcp.pop %v6144
  %v6272 = vrcp.pop %v6146
  %v6273 = vrcp.pop %v6148
  %v6274 = vrcp.pop %v6150
  %v6275 = vrcp.pop %v6152
  %v6276 = vrcp.pop %v6154
  %v6277 = vrcp.pop %v6156
  %v6278 = vrcp.pop %v6158
  %v6279 = vrcp.pop %v6160
  %v6280 = vrcp.pop %v6162
  %v6281 = vrcp.pop %v6164
  %v6282 = vrcp.pop %v6166
  %v6283 = vrcp.pop %v6168
  %v6284 = vrcp.pop %v6170
  %v6285 = vrcp.pop %v6172
  %v6286 = vrcp.pop %v6174
  %v6287 = vrcp.pop %v6176
  %v6288 = vrcp.pop %v6178
  %v6289 = vrcp.pop %v6180
  %v6290 = vrcp.pop %v6182
  %v6291 = vrcp.pop %v6184
  %v6292 = vrcp.pop %v6186
  %v6293 = vrcp.pop %v6188
  %v6294 = vrcp.pop %v6190
  %v6295 = vrcp.pop %v6192
  %v6296 = vrcp.pop %v6194
  %v6297 = vrcp.pop %v6196
  %v6298 = vrcp.pop %v6198
  %v6299 = vrcp.pop %v6200
  %v6300 = vrcp.pop %v6202
  %v6301 = vrcp.pop %v6204
  %v6302 = vrcp.pop %v6206
  %v6303 = vrcp.pop %v6208
  %v6304 = vrcp.pop %v6210
  %v6305 = vrcp.pop %v6212
  %v6306 = vrcp.pop %v6214
  %v6307 = vrcp.pop %v6216
  %v6308 = vrcp.pop %v6218
  %v6309 = vrcp.pop %v6220
  %v6310 = vrcp.pop %v6222
  %v6311 = vrcp.pop %v6224
  %v6312 = vrcp.pop %v6226
  %v6313 = vrcp.pop %v6228
  %v6314 = vrcp.pop %v6230
  %v6315 = vrcp.pop %v6232
  %v6316 = vrcp.pop %v6234
  %v6317 = vrcp.pop %v6236
  %v6318 = vrcp.pop %v6238
  %v6319 = vrcp.pop %v6240
  %v6320 = vrcp.pop %v6242
  %v6321 = vrcp.pop %v6244
  %v6322 = vrcp.pop %v6246
  %v6323 = vrcp.pop %v6248
  %v6324 = vrcp.pop %v6250
  %v6325 = vrcp.pop %v6252
  %v6326 = vrcp.pop %v6254
  %v6327 = vrcp.pop %v6256
  %v6328 = vrcp.pop %v6258
  %v6329 = vrcp.pop %v6260
  %v6330 = vrcp.pop %v6262
  %v6331 = vrcp.pop %v6264
  %v6332 = vrcp.pop %v6266
  %v6333 = vrcp.pop %v6268
  %v6334 = vrcp.pop %v6270
  %v6335 = vmul.f32 %v6016, %v6271
  %v6336 = vmul.f32 %v6018, %v6272
  %v6337 = vmul.f32 %v6020, %v6273
  %v6338 = vmul.f32 %v6022, %v6274
  %v6339 = vmul.f32 %v6024, %v6275
  %v6340 = vmul.f32 %v6026, %v6276
  %v6341 = vmul.f32 %v6028, %v6277
  %v6342 = vmul.f32 %v6030, %v6278
  %v6343 = vmul.f32 %v6032, %v6279
  %v6344 = vmul.f32 %v6034, %v6280
  %v6345 = vmul.f32 %v6036, %v6281
  %v6346 = vmul.f32 %v6038, %v6282
  %v6347 = vmul.f32 %v6040, %v6283
  %v6348 = vmul.f32 %v6042, %v6284
  %v6349 = vmul.f32 %v6044, %v6285
  %v6350 = vmul.f32 %v6046, %v6286
  %v6351 = vmul.f32 %v6048, %v6287
  %v6352 = vmul.f32 %v6050, %v6288
  %v6353 = vmul.f32 %v6052, %v6289
  %v6354 = vmul.f32 %v6054, %v6290
  %v6355 = vmul.f32 %v6056, %v6291
  %v6356 = vmul.f32 %v6058, %v6292
  %v6357 = vmul.f32 %v6060, %v6293
  %v6358 = vmul.f32 %v6062, %v6294
  %v6359 = vmul.f32 %v6064, %v6295
  %v6360 = vmul.f32 %v6066, %v6296
  %v6361 = vmul.f32 %v6068, %v6297
  %v6362 = vmul.f32 %v6070, %v6298
  %v6363 = vmul.f32 %v6072, %v6299
  %v6364 = vmul.f32 %v6074, %v6300
  %v6365 = vmul.f32 %v6076, %v6301
  %v6366 = vmul.f32 %v6078, %v6302
  %v6367 = vmul.f32 %v6080, %v6303
  %v6368 = vmul.f32 %v6082, %v6304
  %v6369 = vmul.f32 %v6084, %v6305
  %v6370 = vmul.f32 %v6086, %v6306
  %v6371 = vmul.f32 %v6088, %v6307
  %v6372 = vmul.f32 %v6090, %v6308
  %v6373 = vmul.f32 %v6092, %v6309
  %v6374 = vmul.f32 %v6094, %v6310
  %v6375 = vmul.f32 %v6096, %v6311
  %v6376 = vmul.f32 %v6098, %v6312
  %v6377 = vmul.f32 %v6100, %v6313
  %v6378 = vmul.f32 %v6102, %v6314
  %v6379 = vmul.f32 %v6104, %v6315
  %v6380 = vmul.f32 %v6106, %v6316
  %v6381 = vmul.f32 %v6108, %v6317
  %v6382 = vmul.f32 %v6110, %v6318
  %v6383 = vmul.f32 %v6112, %v6319
  %v6384 = vmul.f32 %v6114, %v6320
  %v6385 = vmul.f32 %v6116, %v6321
  %v6386 = vmul.f32 %v6118, %v6322
  %v6387 = vmul.f32 %v6120, %v6323
  %v6388 = vmul.f32 %v6122, %v6324
  %v6389 = vmul.f32 %v6124, %v6325
  %v6390 = vmul.f32 %v6126, %v6326
  %v6391 = vmul.f32 %v6128, %v6327
  %v6392 = vmul.f32 %v6130, %v6328
  %v6393 = vmul.f32 %v6132, %v6329
  %v6394 = vmul.f32 %v6134, %v6330
  %v6395 = vmul.f32 %v6136, %v6331
  %v6396 = vmul.f32 %v6138, %v6332
  %v6397 = vmul.f32 %v6140, %v6333
  %v6398 = vmul.f32 %v6142, %v6334
  %v6399 = vpack.c.bf16 %v6336, %v6335
  %v6400 = vpack.c.bf16 %v6338, %v6337
  %v6401 = vpack.c.bf16 %v6340, %v6339
  %v6402 = vpack.c.bf16 %v6342, %v6341
  %v6403 = vpack.c.bf16 %v6344, %v6343
  %v6404 = vpack.c.bf16 %v6346, %v6345
  %v6405 = vpack.c.bf16 %v6348, %v6347
  %v6406 = vpack.c.bf16 %v6350, %v6349
  %v6407 = vpack.c.bf16 %v6352, %v6351
  %v6408 = vpack.c.bf16 %v6354, %v6353
  %v6409 = vpack.c.bf16 %v6356, %v6355
  %v6410 = vpack.c.bf16 %v6358, %v6357
  %v6411 = vpack.c.bf16 %v6360, %v6359
  %v6412 = vpack.c.bf16 %v6362, %v6361
  %v6413 = vpack.c.bf16 %v6364, %v6363
  %v6414 = vpack.c.bf16 %v6366, %v6365
  %v6415 = vpack.c.bf16 %v6368, %v6367
  %v6416 = vpack.c.bf16 %v6370, %v6369
  %v6417 = vpack.c.bf16 %v6372, %v6371
  %v6418 = vpack.c.bf16 %v6374, %v6373
  %v6419 = vpack.c.bf16 %v6376, %v6375
  %v6420 = vpack.c.bf16 %v6378, %v6377
  %v6421 = vpack.c.bf16 %v6380, %v6379
  %v6422 = vpack.c.bf16 %v6382, %v6381
  %v6423 = vpack.c.bf16 %v6384, %v6383
  %v6424 = vpack.c.bf16 %v6386, %v6385
  %v6425 = vpack.c.bf16 %v6388, %v6387
  %v6426 = vpack.c.bf16 %v6390, %v6389
  %v6427 = vpack.c.bf16 %v6392, %v6391
  %v6428 = vpack.c.bf16 %v6394, %v6393
  %v6429 = vpack.c.bf16 %v6396, %v6395
  %v6430 = vpack.c.bf16 %v6398, %v6397
  %6431 = vmatprep.subr.bf16.mxu0 0
  %6432 = vmatpush1.bf16.xpose.msra.mxu0 %v6399
  %6433 = vmatprep.subr.bf16.mxu0 0
  %6434 = vmatpush1.bf16.xpose.msra.mxu0 %v6400
  %6435 = vmatprep.subr.bf16.mxu0 0
  %6436 = vmatpush1.bf16.xpose.msra.mxu0 %v6401
  %6437 = vmatprep.subr.bf16.mxu0 0
  %6438 = vmatpush1.bf16.xpose.msra.mxu0 %v6402
  %6439 = vmatprep.subr.bf16.mxu0 0
  %6440 = vmatpush1.bf16.xpose.msra.mxu0 %v6403
  %6441 = vmatprep.subr.bf16.mxu0 0
  %6442 = vmatpush1.bf16.xpose.msra.mxu0 %v6404
  %6443 = vmatprep.subr.bf16.mxu0 0
  %6444 = vmatpush1.bf16.xpose.msra.mxu0 %v6405
  %6445 = vmatprep.subr.bf16.mxu0 0
  %6446 = vmatpush1.bf16.xpose.msra.mxu0 %v6406
  %6447 = vmatprep.subr.bf16.mxu0 0
  %6448 = vmatpush1.bf16.xpose.msra.mxu0 0
  %6449 = vmatprep.subr.bf16.mxu0 0
  %6450 = vmatpush1.bf16.xpose.msra.mxu0 0
  %6451 = vmatprep.subr.bf16.mxu0 0
  %6452 = vmatpush1.bf16.xpose.msra.mxu0 0
  %6453 = vmatprep.subr.bf16.mxu0 0
  %6454 = vmatpush1.bf16.xpose.msra.mxu0 0
  %6455 = vmatprep.subr.bf16.mxu0 0
  %6456 = vmatpush1.bf16.xpose.msra.mxu0 0
  %6457 = vmatprep.subr.bf16.mxu0 0
  %6458 = vmatpush1.bf16.xpose.msra.mxu0 0
  %6459 = vmatprep.subr.bf16.mxu0 0
  %6460 = vmatpush1.bf16.xpose.msra.mxu0 0
  %6461 = vmatprep.subr.bf16.mxu0 0
  %6462 = vmatpush1.bf16.xpose.msra.mxu0 0
  %6463 = vmatprep.mubr.bf16.mxu0 0
  %6464 = vmatmul.mubr.bf16.gmra.mrb[0].mxu0 %v5271
  %v6465 = vpop.f32.mrb[0].mxu0
  %v6466 = vadd.f32 0.0, %v6465
  %v6467 = vpop.f32.mrb[0].mxu0
  %v6468 = vpop.f32.mrb[0].mxu0
  %v6469 = vadd.f32 0.0, %v6468
  %v6470 = vpop.f32.mrb[0].mxu0
  %6471 = vdwg.mxu0
  %6472 = vmatprep.subr.bf16.mxu0 0
  %6473 = vmatpush1.bf16.xpose.msra.mxu0 %v6407
  %6474 = vmatprep.subr.bf16.mxu0 0
  %6475 = vmatpush1.bf16.xpose.msra.mxu0 %v6408
  %6476 = vmatprep.subr.bf16.mxu0 0
  %6477 = vmatpush1.bf16.xpose.msra.mxu0 %v6409
  %6478 = vmatprep.subr.bf16.mxu0 0
  %6479 = vmatpush1.bf16.xpose.msra.mxu0 %v6410
  %6480 = vmatprep.subr.bf16.mxu0 0
  %6481 = vmatpush1.bf16.xpose.msra.mxu0 %v6411
  %6482 = vmatprep.subr.bf16.mxu0 0
  %6483 = vmatpush1.bf16.xpose.msra.mxu0 %v6412
  %6484 = vmatprep.subr.bf16.mxu0 0
  %6485 = vmatpush1.bf16.xpose.msra.mxu0 %v6413
  %6486 = vmatprep.subr.bf16.mxu0 0
  %6487 = vmatpush1.bf16.xpose.msra.mxu0 %v6414
  %6488 = vmatprep.subr.bf16.mxu0 0
  %6489 = vmatpush1.bf16.xpose.msra.mxu0 0
  %6490 = vmatprep.subr.bf16.mxu0 0
  %6491 = vmatpush1.bf16.xpose.msra.mxu0 0
  %6492 = vmatprep.subr.bf16.mxu0 0
  %6493 = vmatpush1.bf16.xpose.msra.mxu0 0
  %6494 = vmatprep.subr.bf16.mxu0 0
  %6495 = vmatpush1.bf16.xpose.msra.mxu0 0
  %6496 = vmatprep.subr.bf16.mxu0 0
  %6497 = vmatpush1.bf16.xpose.msra.mxu0 0
  %6498 = vmatprep.subr.bf16.mxu0 0
  %6499 = vmatpush1.bf16.xpose.msra.mxu0 0
  %6500 = vmatprep.subr.bf16.mxu0 0
  %6501 = vmatpush1.bf16.xpose.msra.mxu0 0
  %6502 = vmatprep.subr.bf16.mxu0 0
  %6503 = vmatpush1.bf16.xpose.msra.mxu0 0
  %6504 = vmatprep.mubr.bf16.mxu0 0
  %6505 = vmatmul.mubr.bf16.gmra.mrb[0].mxu0 %v5272
  %v6506 = vpop.f32.mrb[0].mxu0
  %v6507 = vadd.f32 0.0, %v6506
  %v6508 = vpop.f32.mrb[0].mxu0
  %v6509 = vpop.f32.mrb[0].mxu0
  %v6510 = vadd.f32 0.0, %v6509
  %v6511 = vpop.f32.mrb[0].mxu0
  %6512 = vdwg.mxu0
  %6513 = vmatprep.subr.bf16.mxu0 0
  %6514 = vmatpush1.bf16.xpose.msra.mxu0 %v6415
  %6515 = vmatprep.subr.bf16.mxu0 0
  %6516 = vmatpush1.bf16.xpose.msra.mxu0 %v6416
  %6517 = vmatprep.subr.bf16.mxu0 0
  %6518 = vmatpush1.bf16.xpose.msra.mxu0 %v6417
  %6519 = vmatprep.subr.bf16.mxu0 0
  %6520 = vmatpush1.bf16.xpose.msra.mxu0 %v6418
  %6521 = vmatprep.subr.bf16.mxu0 0
  %6522 = vmatpush1.bf16.xpose.msra.mxu0 %v6419
  %6523 = vmatprep.subr.bf16.mxu0 0
  %6524 = vmatpush1.bf16.xpose.msra.mxu0 %v6420
  %6525 = vmatprep.subr.bf16.mxu0 0
  %6526 = vmatpush1.bf16.xpose.msra.mxu0 %v6421
  %6527 = vmatprep.subr.bf16.mxu0 0
  %6528 = vmatpush1.bf16.xpose.msra.mxu0 %v6422
  %6529 = vmatprep.subr.bf16.mxu0 0
  %6530 = vmatpush1.bf16.xpose.msra.mxu0 0
  %6531 = vmatprep.subr.bf16.mxu0 0
  %6532 = vmatpush1.bf16.xpose.msra.mxu0 0
  %6533 = vmatprep.subr.bf16.mxu0 0
  %6534 = vmatpush1.bf16.xpose.msra.mxu0 0
  %6535 = vmatprep.subr.bf16.mxu0 0
  %6536 = vmatpush1.bf16.xpose.msra.mxu0 0
  %6537 = vmatprep.subr.bf16.mxu0 0
  %6538 = vmatpush1.bf16.xpose.msra.mxu0 0
  %6539 = vmatprep.subr.bf16.mxu0 0
  %6540 = vmatpush1.bf16.xpose.msra.mxu0 0
  %6541 = vmatprep.subr.bf16.mxu0 0
  %6542 = vmatpush1.bf16.xpose.msra.mxu0 0
  %6543 = vmatprep.subr.bf16.mxu0 0
  %6544 = vmatpush1.bf16.xpose.msra.mxu0 0
  %6545 = vmatprep.mubr.bf16.mxu0 0
  %6546 = vmatmul.mubr.bf16.gmra.mrb[0].mxu0 %v5273
  %v6547 = vpop.f32.mrb[0].mxu0
  %v6548 = vadd.f32 0.0, %v6547
  %v6549 = vpop.f32.mrb[0].mxu0
  %v6550 = vpop.f32.mrb[0].mxu0
  %v6551 = vadd.f32 0.0, %v6550
  %v6552 = vpop.f32.mrb[0].mxu0
  %6553 = vdwg.mxu0
  %6554 = vmatprep.subr.bf16.mxu0 0
  %6555 = vmatpush1.bf16.xpose.msra.mxu0 %v6423
  %6556 = vmatprep.subr.bf16.mxu0 0
  %6557 = vmatpush1.bf16.xpose.msra.mxu0 %v6424
  %6558 = vmatprep.subr.bf16.mxu0 0
  %6559 = vmatpush1.bf16.xpose.msra.mxu0 %v6425
  %6560 = vmatprep.subr.bf16.mxu0 0
  %6561 = vmatpush1.bf16.xpose.msra.mxu0 %v6426
  %6562 = vmatprep.subr.bf16.mxu0 0
  %6563 = vmatpush1.bf16.xpose.msra.mxu0 %v6427
  %6564 = vmatprep.subr.bf16.mxu0 0
  %6565 = vmatpush1.bf16.xpose.msra.mxu0 %v6428
  %6566 = vmatprep.subr.bf16.mxu0 0
  %6567 = vmatpush1.bf16.xpose.msra.mxu0 %v6429
  %6568 = vmatprep.subr.bf16.mxu0 0
  %6569 = vmatpush1.bf16.xpose.msra.mxu0 %v6430
  %6570 = vmatprep.subr.bf16.mxu0 0
  %6571 = vmatpush1.bf16.xpose.msra.mxu0 0
  %6572 = vmatprep.subr.bf16.mxu0 0
  %6573 = vmatpush1.bf16.xpose.msra.mxu0 0
  %6574 = vmatprep.subr.bf16.mxu0 0
  %6575 = vmatpush1.bf16.xpose.msra.mxu0 0
  %6576 = vmatprep.subr.bf16.mxu0 0
  %6577 = vmatpush1.bf16.xpose.msra.mxu0 0
  %6578 = vmatprep.subr.bf16.mxu0 0
  %6579 = vmatpush1.bf16.xpose.msra.mxu0 0
  %6580 = vmatprep.subr.bf16.mxu0 0
  %6581 = vmatpush1.bf16.xpose.msra.mxu0 0
  %6582 = vmatprep.subr.bf16.mxu0 0
  %6583 = vmatpush1.bf16.xpose.msra.mxu0 0
  %6584 = vmatprep.subr.bf16.mxu0 0
  %6585 = vmatpush1.bf16.xpose.msra.mxu0 0
  %6586 = vmatprep.mubr.bf16.mxu0 0
  %6587 = vmatmul.mubr.bf16.gmra.mrb[0].mxu0 %v5274
  %v6588 = vpop.f32.mrb[0].mxu0
  %v6589 = vadd.f32 0.0, %v6588
  %v6590 = vpop.f32.mrb[0].mxu0
  %v6591 = vpop.f32.mrb[0].mxu0
  %v6592 = vadd.f32 0.0, %v6591
  %v6593 = vpop.f32.mrb[0].mxu0
  %6594 = vdwg.mxu0
  %v6595 = vpack.c.bf16 %v6469, %v6466
  %v6596 = vpack.c.bf16 %v6510, %v6507
  %v6597 = vpack.c.bf16 %v6551, %v6548
  %v6598 = vpack.c.bf16 %v6592, %v6589
  %6600 = vset.pattern.permute.xlu0 0
  %6601 = vperm.xlu0 %6600, %v181
  %v6602 = vpop.permute.xlu0 %6601
  %6605 = vset.pattern.permute.xlu0 0
  %6606 = vperm.xlu0 %6605, %v182
  %v6607 = vpop.permute.xlu0 %6606
  %6610 = vset.pattern.permute.xlu0 0
  %6611 = vperm.xlu0 %6610, %v183
  %v6612 = vpop.permute.xlu0 %6611
  %6615 = vset.pattern.permute.xlu0 0
  %6616 = vperm.xlu0 %6615, %v184
  %v6617 = vpop.permute.xlu0 %6616
  %6620 = vset.pattern.permute.xlu0 0
  %6621 = vperm.xlu0 %6620, %v185
  %v6622 = vpop.permute.xlu0 %6621
  %6625 = vset.pattern.permute.xlu0 0
  %6626 = vperm.xlu0 %6625, %v186
  %v6627 = vpop.permute.xlu0 %6626
  %6630 = vset.pattern.permute.xlu0 0
  %6631 = vperm.xlu0 %6630, %v187
  %v6632 = vpop.permute.xlu0 %6631
  %6635 = vset.pattern.permute.xlu0 0
  %6636 = vperm.xlu0 %6635, %v188
  %v6637 = vpop.permute.xlu0 %6636
  %6640 = vset.pattern.permute.xlu0 0
  %6641 = vperm.xlu0 %6640, %v189
  %v6642 = vpop.permute.xlu0 %6641
  %6645 = vset.pattern.permute.xlu0 0
  %6646 = vperm.xlu0 %6645, %v190
  %v6647 = vpop.permute.xlu0 %6646
  %6650 = vset.pattern.permute.xlu0 0
  %6651 = vperm.xlu0 %6650, %v191
  %v6652 = vpop.permute.xlu0 %6651
  %6655 = vset.pattern.permute.xlu0 0
  %6656 = vperm.xlu0 %6655, %v192
  %v6657 = vpop.permute.xlu0 %6656
  %6660 = vset.pattern.permute.xlu0 0
  %6661 = vperm.xlu0 %6660, %v193
  %v6662 = vpop.permute.xlu0 %6661
  %6665 = vset.pattern.permute.xlu0 0
  %6666 = vperm.xlu0 %6665, %v194
  %v6667 = vpop.permute.xlu0 %6666
  %6670 = vset.pattern.permute.xlu0 0
  %6671 = vperm.xlu0 %6670, %v195
  %v6672 = vpop.permute.xlu0 %6671
  %6675 = vset.pattern.permute.xlu0 0
  %6676 = vperm.xlu0 %6675, %v196
  %v6677 = vpop.permute.xlu0 %6676
  %6680 = vset.pattern.permute.xlu0 0
  %6681 = vperm.xlu0 %6680, %v197
  %v6682 = vpop.permute.xlu0 %6681
  %6685 = vset.pattern.permute.xlu0 0
  %6686 = vperm.xlu0 %6685, %v198
  %v6687 = vpop.permute.xlu0 %6686
  %6690 = vset.pattern.permute.xlu0 0
  %6691 = vperm.xlu0 %6690, %v199
  %v6692 = vpop.permute.xlu0 %6691
  %6695 = vset.pattern.permute.xlu0 0
  %6696 = vperm.xlu0 %6695, %v200
  %v6697 = vpop.permute.xlu0 %6696
  %6700 = vset.pattern.permute.xlu0 0
  %6701 = vperm.xlu0 %6700, %v201
  %v6702 = vpop.permute.xlu0 %6701
  %6705 = vset.pattern.permute.xlu0 0
  %6706 = vperm.xlu0 %6705, %v202
  %v6707 = vpop.permute.xlu0 %6706
  %6710 = vset.pattern.permute.xlu0 0
  %6711 = vperm.xlu0 %6710, %v203
  %v6712 = vpop.permute.xlu0 %6711
  %6715 = vset.pattern.permute.xlu0 0
  %6716 = vperm.xlu0 %6715, %v204
  %v6717 = vpop.permute.xlu0 %6716
  %6720 = vset.pattern.permute.xlu0 0
  %6721 = vperm.xlu0 %6720, %v205
  %v6722 = vpop.permute.xlu0 %6721
  %6725 = vset.pattern.permute.xlu0 0
  %6726 = vperm.xlu0 %6725, %v206
  %v6727 = vpop.permute.xlu0 %6726
  %6730 = vset.pattern.permute.xlu0 0
  %6731 = vperm.xlu0 %6730, %v207
  %v6732 = vpop.permute.xlu0 %6731
  %6735 = vset.pattern.permute.xlu0 0
  %6736 = vperm.xlu0 %6735, %v208
  %v6737 = vpop.permute.xlu0 %6736
  %6740 = vset.pattern.permute.xlu0 0
  %6741 = vperm.xlu0 %6740, %v209
  %v6742 = vpop.permute.xlu0 %6741
  %6745 = vset.pattern.permute.xlu0 0
  %6746 = vperm.xlu0 %6745, %v210
  %v6747 = vpop.permute.xlu0 %6746
  %6750 = vset.pattern.permute.xlu0 0
  %6751 = vperm.xlu0 %6750, %v211
  %v6752 = vpop.permute.xlu0 %6751
  %6755 = vset.pattern.permute.xlu0 0
  %6756 = vperm.xlu0 %6755, %v212
  %v6757 = vpop.permute.xlu0 %6756
  %v6791 = vunpack.c.l.b16 %v149
  %v6792 = vunpack.c.h.b16 %v149
  %v6793 = vunpack.c.l.b16 %v150
  %v6794 = vunpack.c.h.b16 %v150
  %v6795 = vunpack.c.l.b16 %v151
  %v6796 = vunpack.c.h.b16 %v151
  %v6797 = vunpack.c.l.b16 %v152
  %v6798 = vunpack.c.h.b16 %v152
  %v6799 = vunpack.c.l.b16 %v153
  %v6800 = vunpack.c.h.b16 %v153
  %v6801 = vunpack.c.l.b16 %v154
  %v6802 = vunpack.c.h.b16 %v154
  %v6803 = vunpack.c.l.b16 %v155
  %v6804 = vunpack.c.h.b16 %v155
  %v6805 = vunpack.c.l.b16 %v156
  %v6806 = vunpack.c.h.b16 %v156
  %v6807 = vunpack.c.l.b16 %v157
  %v6808 = vunpack.c.h.b16 %v157
  %v6809 = vunpack.c.l.b16 %v158
  %v6810 = vunpack.c.h.b16 %v158
  %v6811 = vunpack.c.l.b16 %v159
  %v6812 = vunpack.c.h.b16 %v159
  %v6813 = vunpack.c.l.b16 %v160
  %v6814 = vunpack.c.h.b16 %v160
  %v6815 = vunpack.c.l.b16 %v161
  %v6816 = vunpack.c.h.b16 %v161
  %v6817 = vunpack.c.l.b16 %v162
  %v6818 = vunpack.c.h.b16 %v162
  %v6819 = vunpack.c.l.b16 %v163
  %v6820 = vunpack.c.h.b16 %v163
  %v6821 = vunpack.c.l.b16 %v164
  %v6822 = vunpack.c.h.b16 %v164
  %v6823 = vunpack.c.l.b16 %v165
  %v6824 = vunpack.c.h.b16 %v165
  %v6825 = vunpack.c.l.b16 %v166
  %v6826 = vunpack.c.h.b16 %v166
  %v6827 = vunpack.c.l.b16 %v167
  %v6828 = vunpack.c.h.b16 %v167
  %v6829 = vunpack.c.l.b16 %v168
  %v6830 = vunpack.c.h.b16 %v168
  %v6831 = vunpack.c.l.b16 %v169
  %v6832 = vunpack.c.h.b16 %v169
  %v6833 = vunpack.c.l.b16 %v170
  %v6834 = vunpack.c.h.b16 %v170
  %v6835 = vunpack.c.l.b16 %v171
  %v6836 = vunpack.c.h.b16 %v171
  %v6837 = vunpack.c.l.b16 %v172
  %v6838 = vunpack.c.h.b16 %v172
  %v6839 = vunpack.c.l.b16 %v173
  %v6840 = vunpack.c.h.b16 %v173
  %v6841 = vunpack.c.l.b16 %v174
  %v6842 = vunpack.c.h.b16 %v174
  %v6843 = vunpack.c.l.b16 %v175
  %v6844 = vunpack.c.h.b16 %v175
  %v6845 = vunpack.c.l.b16 %v176
  %v6846 = vunpack.c.h.b16 %v176
  %v6847 = vunpack.c.l.b16 %v177
  %v6848 = vunpack.c.h.b16 %v177
  %v6849 = vunpack.c.l.b16 %v178
  %v6850 = vunpack.c.h.b16 %v178
  %v6851 = vunpack.c.l.b16 %v179
  %v6852 = vunpack.c.h.b16 %v179
  %v6853 = vunpack.c.l.b16 %v180
  %v6854 = vunpack.c.h.b16 %v180
  %v6855 = vpack.c.b16 %v6793, %v6791
  %v6856 = vpack.c.b16 %v6794, %v6792
  %v6857 = vpack.c.b16 %v6797, %v6795
  %v6858 = vpack.c.b16 %v6798, %v6796
  %v6859 = vpack.c.b16 %v6801, %v6799
  %v6860 = vpack.c.b16 %v6802, %v6800
  %v6861 = vpack.c.b16 %v6805, %v6803
  %v6862 = vpack.c.b16 %v6806, %v6804
  %v6863 = vpack.c.b16 %v6809, %v6807
  %v6864 = vpack.c.b16 %v6810, %v6808
  %v6865 = vpack.c.b16 %v6813, %v6811
  %v6866 = vpack.c.b16 %v6814, %v6812
  %v6867 = vpack.c.b16 %v6817, %v6815
  %v6868 = vpack.c.b16 %v6818, %v6816
  %v6869 = vpack.c.b16 %v6821, %v6819
  %v6870 = vpack.c.b16 %v6822, %v6820
  %v6871 = vpack.c.b16 %v6825, %v6823
  %v6872 = vpack.c.b16 %v6826, %v6824
  %v6873 = vpack.c.b16 %v6829, %v6827
  %v6874 = vpack.c.b16 %v6830, %v6828
  %v6875 = vpack.c.b16 %v6833, %v6831
  %v6876 = vpack.c.b16 %v6834, %v6832
  %v6877 = vpack.c.b16 %v6837, %v6835
  %v6878 = vpack.c.b16 %v6838, %v6836
  %v6879 = vpack.c.b16 %v6841, %v6839
  %v6880 = vpack.c.b16 %v6842, %v6840
  %v6881 = vpack.c.b16 %v6845, %v6843
  %v6882 = vpack.c.b16 %v6846, %v6844
  %v6883 = vpack.c.b16 %v6849, %v6847
  %v6884 = vpack.c.b16 %v6850, %v6848
  %v6885 = vpack.c.b16 %v6853, %v6851
  %v6886 = vpack.c.b16 %v6854, %v6852
  %6919 = vmatprep.subr.bf16.mxu0 0
  %6920 = vmatpush1.bf16.msra.mxu0 %v2563
  %6921 = vmatprep.subr.bf16.mxu0 0
  %6922 = vmatpush1.bf16.msra.mxu0 %v2564
  %6923 = vmatprep.subr.bf16.mxu0 0
  %6924 = vmatpush1.bf16.msra.mxu0 %v2565
  %6925 = vmatprep.subr.bf16.mxu0 0
  %6926 = vmatpush1.bf16.msra.mxu0 %v2566
  %6927 = vmatprep.subr.bf16.mxu0 0
  %6928 = vmatpush1.bf16.msra.mxu0 %v3907
  %6929 = vmatprep.subr.bf16.mxu0 0
  %6930 = vmatpush1.bf16.msra.mxu0 %v3908
  %6931 = vmatprep.subr.bf16.mxu0 0
  %6932 = vmatpush1.bf16.msra.mxu0 %v3909
  %6933 = vmatprep.subr.bf16.mxu0 0
  %6934 = vmatpush1.bf16.msra.mxu0 %v3910
  %6935 = vmatprep.subr.bf16.mxu0 0
  %6936 = vmatpush1.bf16.msra.mxu0 %v5251
  %6937 = vmatprep.subr.bf16.mxu0 0
  %6938 = vmatpush1.bf16.msra.mxu0 %v5252
  %6939 = vmatprep.subr.bf16.mxu0 0
  %6940 = vmatpush1.bf16.msra.mxu0 %v5253
  %6941 = vmatprep.subr.bf16.mxu0 0
  %6942 = vmatpush1.bf16.msra.mxu0 %v5254
  %6943 = vmatprep.subr.bf16.mxu0 0
  %6944 = vmatpush1.bf16.msra.mxu0 %v6595
  %6945 = vmatprep.subr.bf16.mxu0 0
  %6946 = vmatpush1.bf16.msra.mxu0 %v6596
  %6947 = vmatprep.subr.bf16.mxu0 0
  %6948 = vmatpush1.bf16.msra.mxu0 %v6597
  %6949 = vmatprep.subr.bf16.mxu0 0
  %6950 = vmatpush1.bf16.msra.mxu0 %v6598
  %6951 = vmatprep.mubr.bf16.mxu0 %v6856
  %6952 = vmatmul.mubr.bf16.gmra.mrb[0].mxu0 %v6855
  %v6953 = vpop.f32.mrb[0].mxu0
  %v6954 = vadd.f32 %v6602, %v6953
  %v6955 = vpop.f32.mrb[0].mxu0
  %v6956 = vpop.f32.mrb[0].mxu0
  %v6957 = vadd.f32 %v6607, %v6956
  %v6958 = vpop.f32.mrb[0].mxu0
  %6959 = vmatprep.mubr.bf16.mxu0 %v6858
  %6960 = vmatmul.mubr.bf16.gmra.mrb[0].mxu0 %v6857
  %v6961 = vpop.f32.mrb[0].mxu0
  %v6962 = vadd.f32 %v6612, %v6961
  %v6963 = vpop.f32.mrb[0].mxu0
  %v6964 = vpop.f32.mrb[0].mxu0
  %v6965 = vadd.f32 %v6617, %v6964
  %v6966 = vpop.f32.mrb[0].mxu0
  %6967 = vmatprep.mubr.bf16.mxu0 %v6860
  %6968 = vmatmul.mubr.bf16.gmra.mrb[0].mxu0 %v6859
  %v6969 = vpop.f32.mrb[0].mxu0
  %v6970 = vadd.f32 %v6622, %v6969
  %v6971 = vpop.f32.mrb[0].mxu0
  %v6972 = vpop.f32.mrb[0].mxu0
  %v6973 = vadd.f32 %v6627, %v6972
  %v6974 = vpop.f32.mrb[0].mxu0
  %6975 = vmatprep.mubr.bf16.mxu0 %v6862
  %6976 = vmatmul.mubr.bf16.gmra.mrb[0].mxu0 %v6861
  %v6977 = vpop.f32.mrb[0].mxu0
  %v6978 = vadd.f32 %v6632, %v6977
  %v6979 = vpop.f32.mrb[0].mxu0
  %v6980 = vpop.f32.mrb[0].mxu0
  %v6981 = vadd.f32 %v6637, %v6980
  %v6982 = vpop.f32.mrb[0].mxu0
  %6983 = vmatprep.mubr.bf16.mxu0 %v6864
  %6984 = vmatmul.mubr.bf16.gmra.mrb[0].mxu0 %v6863
  %v6985 = vpop.f32.mrb[0].mxu0
  %v6986 = vadd.f32 %v6642, %v6985
  %v6987 = vpop.f32.mrb[0].mxu0
  %v6988 = vpop.f32.mrb[0].mxu0
  %v6989 = vadd.f32 %v6647, %v6988
  %v6990 = vpop.f32.mrb[0].mxu0
  %6991 = vmatprep.mubr.bf16.mxu0 %v6866
  %6992 = vmatmul.mubr.bf16.gmra.mrb[0].mxu0 %v6865
  %v6993 = vpop.f32.mrb[0].mxu0
  %v6994 = vadd.f32 %v6652, %v6993
  %v6995 = vpop.f32.mrb[0].mxu0
  %v6996 = vpop.f32.mrb[0].mxu0
  %v6997 = vadd.f32 %v6657, %v6996
  %v6998 = vpop.f32.mrb[0].mxu0
  %6999 = vmatprep.mubr.bf16.mxu0 %v6868
  %7000 = vmatmul.mubr.bf16.gmra.mrb[0].mxu0 %v6867
  %v7001 = vpop.f32.mrb[0].mxu0
  %v7002 = vadd.f32 %v6662, %v7001
  %v7003 = vpop.f32.mrb[0].mxu0
  %v7004 = vpop.f32.mrb[0].mxu0
  %v7005 = vadd.f32 %v6667, %v7004
  %v7006 = vpop.f32.mrb[0].mxu0
  %7007 = vmatprep.mubr.bf16.mxu0 %v6870
  %7008 = vmatmul.mubr.bf16.gmra.mrb[0].mxu0 %v6869
  %v7009 = vpop.f32.mrb[0].mxu0
  %v7010 = vadd.f32 %v6672, %v7009
  %v7011 = vpop.f32.mrb[0].mxu0
  %v7012 = vpop.f32.mrb[0].mxu0
  %v7013 = vadd.f32 %v6677, %v7012
  %v7014 = vpop.f32.mrb[0].mxu0
  %7015 = vmatprep.mubr.bf16.mxu0 %v6872
  %7016 = vmatmul.mubr.bf16.gmra.mrb[0].mxu0 %v6871
  %v7017 = vpop.f32.mrb[0].mxu0
  %v7018 = vadd.f32 %v6682, %v7017
  %v7019 = vpop.f32.mrb[0].mxu0
  %v7020 = vpop.f32.mrb[0].mxu0
  %v7021 = vadd.f32 %v6687, %v7020
  %v7022 = vpop.f32.mrb[0].mxu0
  %7023 = vmatprep.mubr.bf16.mxu0 %v6874
  %7024 = vmatmul.mubr.bf16.gmra.mrb[0].mxu0 %v6873
  %v7025 = vpop.f32.mrb[0].mxu0
  %v7026 = vadd.f32 %v6692, %v7025
  %v7027 = vpop.f32.mrb[0].mxu0
  %v7028 = vpop.f32.mrb[0].mxu0
  %v7029 = vadd.f32 %v6697, %v7028
  %v7030 = vpop.f32.mrb[0].mxu0
  %7031 = vmatprep.mubr.bf16.mxu0 %v6876
  %7032 = vmatmul.mubr.bf16.gmra.mrb[0].mxu0 %v6875
  %v7033 = vpop.f32.mrb[0].mxu0
  %v7034 = vadd.f32 %v6702, %v7033
  %v7035 = vpop.f32.mrb[0].mxu0
  %v7036 = vpop.f32.mrb[0].mxu0
  %v7037 = vadd.f32 %v6707, %v7036
  %v7038 = vpop.f32.mrb[0].mxu0
  %7039 = vmatprep.mubr.bf16.mxu0 %v6878
  %7040 = vmatmul.mubr.bf16.gmra.mrb[0].mxu0 %v6877
  %v7041 = vpop.f32.mrb[0].mxu0
  %v7042 = vadd.f32 %v6712, %v7041
  %v7043 = vpop.f32.mrb[0].mxu0
  %v7044 = vpop.f32.mrb[0].mxu0
  %v7045 = vadd.f32 %v6717, %v7044
  %v7046 = vpop.f32.mrb[0].mxu0
  %7047 = vmatprep.mubr.bf16.mxu0 %v6880
  %7048 = vmatmul.mubr.bf16.gmra.mrb[0].mxu0 %v6879
  %v7049 = vpop.f32.mrb[0].mxu0
  %v7050 = vadd.f32 %v6722, %v7049
  %v7051 = vpop.f32.mrb[0].mxu0
  %v7052 = vpop.f32.mrb[0].mxu0
  %v7053 = vadd.f32 %v6727, %v7052
  %v7054 = vpop.f32.mrb[0].mxu0
  %7055 = vmatprep.mubr.bf16.mxu0 %v6882
  %7056 = vmatmul.mubr.bf16.gmra.mrb[0].mxu0 %v6881
  %v7057 = vpop.f32.mrb[0].mxu0
  %v7058 = vadd.f32 %v6732, %v7057
  %v7059 = vpop.f32.mrb[0].mxu0
  %v7060 = vpop.f32.mrb[0].mxu0
  %v7061 = vadd.f32 %v6737, %v7060
  %v7062 = vpop.f32.mrb[0].mxu0
  %7063 = vmatprep.mubr.bf16.mxu0 %v6884
  %7064 = vmatmul.mubr.bf16.gmra.mrb[0].mxu0 %v6883
  %v7065 = vpop.f32.mrb[0].mxu0
  %v7066 = vadd.f32 %v6742, %v7065
  %v7067 = vpop.f32.mrb[0].mxu0
  %v7068 = vpop.f32.mrb[0].mxu0
  %v7069 = vadd.f32 %v6747, %v7068
  %v7070 = vpop.f32.mrb[0].mxu0
  %7071 = vmatprep.mubr.bf16.mxu0 %v6886
  %7072 = vmatmul.mubr.bf16.gmra.mrb[0].mxu0 %v6885
  %v7073 = vpop.f32.mrb[0].mxu0
  %v7074 = vadd.f32 %v6752, %v7073
  %v7075 = vpop.f32.mrb[0].mxu0
  %v7076 = vpop.f32.mrb[0].mxu0
  %v7077 = vadd.f32 %v6757, %v7076
  %v7078 = vpop.f32.mrb[0].mxu0
  %7079 = vdwg.mxu0
  %7080 = vst [vmem:[%s5] sm:$0xff] %v6954
  %7081 = vst [vmem:[%s5 + $0x8] sm:$0xff] %v6957
  %7082 = vst [vmem:[%s5 + $0x10] sm:$0xff] %v6962
  %7083 = vst [vmem:[%s5 + $0x18] sm:$0xff] %v6965
  %7084 = vst [vmem:[%s5 + $0x20] sm:$0xff] %v6970
  %7085 = vst [vmem:[%s5 + $0x28] sm:$0xff] %v6973
  %7086 = vst [vmem:[%s5 + $0x30] sm:$0xff] %v6978
  %7087 = vst [vmem:[%s5 + $0x38] sm:$0xff] %v6981
  %7088 = vst [vmem:[%s5 + $0x40] sm:$0xff] %v6986
  %7089 = vst [vmem:[%s5 + $0x48] sm:$0xff] %v6989
  %7090 = vst [vmem:[%s5 + $0x50] sm:$0xff] %v6994
  %7091 = vst [vmem:[%s5 + $0x58] sm:$0xff] %v6997
  %7092 = vst [vmem:[%s5 + $0x60] sm:$0xff] %v7002
  %7093 = vst [vmem:[%s5 + $0x68] sm:$0xff] %v7005
  %7094 = vst [vmem:[%s5 + $0x70] sm:$0xff] %v7010
  %7095 = vst [vmem:[%s5 + $0x78] sm:$0xff] %v7013
  %7096 = vst [vmem:[%s5 + $0x80] sm:$0xff] %v7018
  %7097 = vst [vmem:[%s5 + $0x88] sm:$0xff] %v7021
  %7098 = vst [vmem:[%s5 + $0x90] sm:$0xff] %v7026
  %7099 = vst [vmem:[%s5 + $0x98] sm:$0xff] %v7029
  %7100 = vst [vmem:[%s5 + $0xa0] sm:$0xff] %v7034
  %7101 = vst [vmem:[%s5 + $0xa8] sm:$0xff] %v7037
  %7102 = vst [vmem:[%s5 + $0xb0] sm:$0xff] %v7042
  %7103 = vst [vmem:[%s5 + $0xb8] sm:$0xff] %v7045
  %7104 = vst [vmem:[%s5 + $0xc0] sm:$0xff] %v7050
  %7105 = vst [vmem:[%s5 + $0xc8] sm:$0xff] %v7053
  %7106 = vst [vmem:[%s5 + $0xd0] sm:$0xff] %v7058
  %7107 = vst [vmem:[%s5 + $0xd8] sm:$0xff] %v7061
  %7108 = vst [vmem:[%s5 + $0xe0] sm:$0xff] %v7066
  %7109 = vst [vmem:[%s5 + $0xe8] sm:$0xff] %v7069
  %7110 = vst [vmem:[%s5 + $0xf0] sm:$0xff] %v7074
  %7111 = vst [vmem:[%s5 + $0xf8] sm:$0xff] %v7077
  // Predicated region
  $region22: #{attention_d_forward.1} parent=0 // pred_check
    _
  $region23: #{attention_d_forward.1} parent=0 // pred_check_branch
    %7113 = sbr.rel (0) target = $region25
  $region24: #{attention_d_forward.1} parent=0 // pred_region
    _
  $region25: #{attention_d_forward.1} parent=0 // pred_fallthru
    _
  // Predicated region
  $region26: #{attention_d_forward.1} parent=0 // pred_check
    _
  $region27: #{attention_d_forward.1} parent=0 // pred_check_branch
    %7115 = sbr.rel (0) target = $region29
  $region28: #{attention_d_forward.1} parent=0 // pred_region
    _
  $region29: #{attention_d_forward.1} parent=0 // pred_fallthru
    _

</llo_original>
